<compile_context>
chip_gen: v7x
topology: tpu7x:2x2x1
jax: 0.10.0
libtpu: 0.0.40
codegen_flags: <defaults>
</compile_context>

<pallas_src>
import functools

import jax
import jax.numpy as jnp
from jax import lax
from jax.experimental import pallas as pl
from jax.experimental.pallas import tpu as pltpu

# ---------------- small synthetic AST config ----------------
N_MELS = 16           # spectrogram mel bins   (real AST: 128)
MAX_LENGTH = 24       # max time frames        (real AST: 1024)
PATCH = 8             # conv patch size        (real AST: 16)
F_STRIDE = 4          # frequency stride       (real AST: 10)
T_STRIDE = 4          # time stride            (real AST: 10)
HIDDEN = 128          # hidden size            (real AST: 768)
NUM_HEADS = 4
HEAD_DIM = HIDDEN // NUM_HEADS
INTERMEDIATE = 256
NUM_LAYERS = 2
NUM_LABELS = 8
LN_EPS = 1e-12
EXTRACTOR_MEAN = -4.2677393   # AST feature-extractor normalization constants
EXTRACTOR_STD = 4.5689974

PP = PATCH * PATCH                         # 64 raw patch features
PP_PAD = 128                               # lane-dense patch feature dim
NF = (N_MELS - PATCH) // F_STRIDE + 1
NT = (MAX_LENGTH - PATCH) // T_STRIDE + 1
NP = NF * NT                               # number of patches (15)
S_REAL = NP + 2                            # [CLS] + [DIST] + patches (17)
S_PAD = ((S_REAL + 7) // 8) * 8            # sublane-aligned token count (24)
ATTN_SCALE = 1.0 / float(HEAD_DIM) ** 0.5
LOGITS_PAD = 128                           # lane-dense classifier output width
MXU_TARGET_ROWS = 256                      # batch-fusion target (v6e/v7x; ~128 on v5e)


# ---------------- fused forward kernel ----------------
def _layernorm(x, gamma, beta):
    mu = jnp.mean(x, axis=-1, keepdims=True)
    xc = x - mu
    var = jnp.mean(xc * xc, axis=-1, keepdims=True)
    return xc * lax.rsqrt(var + LN_EPS) * gamma + beta


def _ast_fused_kernel(
    patches_ref,              # (TILE_M, PP_PAD)        f32  raw patches, token-row layout
    patch_w_ref,              # (PP_PAD, HIDDEN)        bf16 patch-embed weight (norm folded)
    base_ref,                 # (TILE_M, HIDDEN)        f32  cls/dist + pos + eff. patch bias
    key_bias_ref,             # (1, S_PAD)              f32  0 for real keys, -1e30 for pad
    pool_ref,                 # (B_TILE, TILE_M)        f32  block-diag masked mean-pool
    lnf_g_ref, lnf_b_ref,     # (1, HIDDEN)
    cls_w_ref, cls_b_ref,     # (HIDDEN, LOGITS_PAD), (1, LOGITS_PAD)
    ln1_g_ref, ln1_b_ref,     # (L, 1, HIDDEN)
    wqkv_ref, bqkv_ref,       # (L, HIDDEN, 3*HIDDEN) bf16 / (L, 1, 3*HIDDEN) f32
    wo_ref, bo_ref,           # (L, HIDDEN, HIDDEN)   bf16 / (L, 1, HIDDEN)
    ln2_g_ref, ln2_b_ref,     # (L, 1, HIDDEN)
    wfc1_ref, bfc1_ref,       # (L, HIDDEN, INTERMEDIATE) bf16 / (L, 1, INTERMEDIATE)
    wfc2_ref, bfc2_ref,       # (L, INTERMEDIATE, HIDDEN) bf16 / (L, 1, HIDDEN)
    logits_ref,               # (1, B_TILE, LOGITS_PAD) out
    *, b_tile,
):
    D = HIDDEN

    # ---- patch embedding (feature-extractor norm + patch bias folded into W / base) ----
    x = jnp.dot(patches_ref[...].astype(jnp.bfloat16), patch_w_ref[...],
                preferred_element_type=jnp.float32) + base_ref[...]        # (TILE_M, D) f32

    key_bias = key_bias_ref[...]                                           # (1, S_PAD)

    # ---- transformer layers, unrolled; all weights VMEM-resident ----
    for l in range(NUM_LAYERS):
        # ----- multi-head self-attention (pre-LN) -----
        n1 = _layernorm(x, ln1_g_ref[l], ln1_b_ref[l])
        qkv = jnp.dot(n1.astype(jnp.bfloat16), wqkv_ref[l],
                      preferred_element_type=jnp.float32) + bqkv_ref[l]    # (TILE_M, 3D)
        q = qkv[:, :D]                                                     # scale pre-folded
        k = qkv[:, D:2 * D]
        v = qkv[:, 2 * D:]
        wo = wo_ref[l]                                                     # (D, D) bf16

        attn_rows = []
        for b in range(b_tile):                                            # per-batch attention
            r0 = b * S_PAD
            qb = q[r0:r0 + S_PAD]
            kb = k[r0:r0 + S_PAD]
            vb = v[r0:r0 + S_PAD]
            ob = None
            for hh in range(NUM_HEADS):                                    # heads = 32-lane slices
                c0 = hh * HEAD_DIM
                qh = qb[:, c0:c0 + HEAD_DIM].astype(jnp.bfloat16)
                kh = kb[:, c0:c0 + HEAD_DIM].astype(jnp.bfloat16)
                vh = vb[:, c0:c0 + HEAD_DIM].astype(jnp.bfloat16)
                # q·kᵀ without an explicit transpose: contract both last dims.
                s = lax.dot_general(qh, kh, (((1,), (1,)), ((), ())),
                                    preferred_element_type=jnp.float32)    # (S_PAD, S_PAD)
                s = s + key_bias                                           # mask pad keys
                m = jnp.max(s, axis=-1, keepdims=True)
                p = jnp.exp(s - m)
                p = p * pl.reciprocal(jnp.sum(p, axis=-1, keepdims=True), approx=True)
                ctx = jnp.dot(p.astype(jnp.bfloat16), vh,
                              preferred_element_type=jnp.float32)          # (S_PAD, HEAD_DIM)
                # fold head context straight into the output projection (no lane concat)
                proj = jnp.dot(ctx.astype(jnp.bfloat16), wo[c0:c0 + HEAD_DIM, :],
                               preferred_element_type=jnp.float32)         # (S_PAD, D)
                ob = proj if ob is None else ob + proj
            attn_rows.append(ob)
        attn = jnp.concatenate(attn_rows, axis=0)                          # (TILE_M, D) sublane cat
        x = x + attn + bo_ref[l]

        # ----- MLP (pre-LN) -----
        n2 = _layernorm(x, ln2_g_ref[l], ln2_b_ref[l])
        inter = jnp.dot(n2.astype(jnp.bfloat16), wfc1_ref[l],
                        preferred_element_type=jnp.float32) + bfc1_ref[l]
        # TODO(synk): HF AST uses exact erf-GELU; tanh approximation used for guaranteed lowering.
        inter = jax.nn.gelu(inter, approximate=True)
        x = x + jnp.dot(inter.astype(jnp.bfloat16), wfc2_ref[l],
                        preferred_element_type=jnp.float32) + bfc2_ref[l]

    # ---- final LN -> masked mean-pool (block-diagonal matmul) -> classifier head ----
    nrm = _layernorm(x, lnf_g_ref[...], lnf_b_ref[...])
    pooled = jnp.dot(pool_ref[...], nrm, preferred_element_type=jnp.float32)   # (B_TILE, D)
    # TODO(synk): nn.Dropout(p=0.3) is the identity at inference time; omitted.
    logits = jnp.dot(pooled, cls_w_ref[...],
                     preferred_element_type=jnp.float32) + cls_b_ref[...]      # (B_TILE, 128)
    logits_ref[0] = logits.astype(logits_ref.dtype)


# ---------------- deterministic synthetic parameters ----------------
def init_params(key, seq_len):
    def lin(k, fan_in, fan_out, scale=0.02):
        kw, kb = jax.random.split(k)
        w = scale * jax.random.normal(kw, (fan_in, fan_out), jnp.float32)
        b = scale * jax.random.normal(kb, (fan_out,), jnp.float32)
        return w, b

    n_keys = 5 + 4 * NUM_LAYERS
    keys = list(jax.random.split(key, n_keys))
    ki = iter(keys)

    params = {}
    params["patch_w"], params["patch_b"] = lin(next(ki), PP, HIDDEN)
    params["cls_token"] = 0.02 * jax.random.normal(next(ki), (1, 1, HIDDEN), jnp.float32)
    params["dist_token"] = 0.02 * jax.random.normal(next(ki), (1, 1, HIDDEN), jnp.float32)
    params["pos_embed"] = 0.02 * jax.random.normal(next(ki), (1, seq_len, HIDDEN), jnp.float32)

    layers = []
    for _ in range(NUM_LAYERS):
        layer = {}
        layer["ln1_g"] = jnp.ones((HIDDEN,), jnp.float32)
        layer["ln1_b"] = jnp.zeros((HIDDEN,), jnp.float32)
        layer["w_qkv"], layer["b_qkv"] = lin(next(ki), HIDDEN, 3 * HIDDEN)
        layer["w_o"], layer["b_o"] = lin(next(ki), HIDDEN, HIDDEN)
        layer["ln2_g"] = jnp.ones((HIDDEN,), jnp.float32)
        layer["ln2_b"] = jnp.zeros((HIDDEN,), jnp.float32)
        layer["w_fc1"], layer["b_fc1"] = lin(next(ki), HIDDEN, INTERMEDIATE)
        layer["w_fc2"], layer["b_fc2"] = lin(next(ki), INTERMEDIATE, HIDDEN)
        layers.append(layer)
    params["layers"] = layers

    params["ln_f_g"] = jnp.ones((HIDDEN,), jnp.float32)
    params["ln_f_b"] = jnp.zeros((HIDDEN,), jnp.float32)
    params["cls_w"], params["cls_b"] = lin(next(ki), HIDDEN, NUM_LABELS)
    return params


def prepare_params(params):
    """Restructure params for the fused kernel:
      * feature-extractor normalization folded into the patch-embed weight / bias,
      * 1/sqrt(head_dim) attention scale folded into the q projection,
      * per-layer weights stacked with a leading L dim, MXU weights in bf16,
      * lane-dense padding of the patch-feature dim (64->128) and classifier (8->128),
      * fused 'base' token table = [cls; dist; eff_patch_bias*NP; 0_pad] + pos-embed."""
    D, L = HIDDEN, NUM_LAYERS
    inv_std = 1.0 / EXTRACTOR_STD
    prep = {}

    # (p - mean)/std @ W + b  ==  p @ (W/std) + (b - (mean/std) * colsum(W))
    w_patch = params["patch_w"] * inv_std                                        # (PP, D)
    patch_bias_eff = params["patch_b"] - (EXTRACTOR_MEAN * inv_std) * jnp.sum(
        params["patch_w"], axis=0)
    prep["patch_w"] = jnp.pad(w_patch, ((0, PP_PAD - PP), (0, 0))).astype(jnp.bfloat16)

    base = jnp.concatenate([
        params["cls_token"][0],                                                  # (1, D)
        params["dist_token"][0],                                                 # (1, D)
        jnp.broadcast_to(patch_bias_eff[None, :], (NP, D)),                      # (NP, D)
        jnp.zeros((S_PAD - S_REAL, D), jnp.float32)], axis=0)
    pos = jnp.concatenate([params["pos_embed"][0],
                           jnp.zeros((S_PAD - S_REAL, D), jnp.float32)], axis=0)
    prep["base"] = base + pos                                                    # (S_PAD, D)

    prep["ln_f_g"] = params["ln_f_g"].reshape(1, D)
    prep["ln_f_b"] = params["ln_f_b"].reshape(1, D)
    prep["cls_w"] = jnp.pad(params["cls_w"], ((0, 0), (0, LOGITS_PAD - NUM_LABELS)))
    prep["cls_b"] = jnp.pad(params["cls_b"], (0, LOGITS_PAD - NUM_LABELS)).reshape(1, LOGITS_PAD)

    def stack(name):
        return jnp.stack([lyr[name] for lyr in params["layers"]], axis=0)

    prep["ln1_g"] = stack("ln1_g").reshape(L, 1, D)
    prep["ln1_b"] = stack("ln1_b").reshape(L, 1, D)
    # fold the attention scale into the q columns of W_qkv / b_qkv
    qscale = jnp.concatenate([jnp.full((D,), ATTN_SCALE, jnp.float32),
                              jnp.ones((2 * D,), jnp.float32)])
    prep["w_qkv"] = (stack("w_qkv") * qscale).astype(jnp.bfloat16)               # (L, D, 3D)
    prep["b_qkv"] = (stack("b_qkv") * qscale).reshape(L, 1, 3 * D)
    prep["w_o"] = stack("w_o").astype(jnp.bfloat16)
    prep["b_o"] = stack("b_o").reshape(L, 1, D)
    prep["ln2_g"] = stack("ln2_g").reshape(L, 1, D)
    prep["ln2_b"] = stack("ln2_b").reshape(L, 1, D)
    prep["w_fc1"] = stack("w_fc1").astype(jnp.bfloat16)
    prep["b_fc1"] = stack("b_fc1").reshape(L, 1, INTERMEDIATE)
    prep["w_fc2"] = stack("w_fc2").astype(jnp.bfloat16)
    prep["b_fc2"] = stack("b_fc2").reshape(L, 1, D)
    return prep


# ---------------- forward pass (single fused pallas_call, jitted wrapper) ----------------
def _forward_impl(prep, specs):
    if specs.ndim != 3:
        raise ValueError(f"Expected specs.shape==(B,{N_MELS},T), got {specs.ndim} dimensions")
    B, _, T = specs.shape
    D = HIDDEN

    # pad / truncate time dimension to max_length (raw-zero padding; the feature-extractor
    # normalization is folded into the patch-embed weights, matching (0-mean)/std exactly).
    if T < MAX_LENGTH:
        specs = jnp.pad(specs, ((0, 0), (0, 0), (0, MAX_LENGTH - T)))
    elif T > MAX_LENGTH:
        specs = specs[:, :, :MAX_LENGTH]

    # specs is already (B, F, T) — the reference's permute(0,2,1) and the model-internal
    # transpose back cancel, so both are skipped.
    # TODO(synk): verify conv_general_dilated_patches channel ordering against the real
    #             AST checkpoint's conv weight flattening when loading pretrained weights.
    patches = lax.conv_general_dilated_patches(
        specs[:, None, :, :], (PATCH, PATCH), (F_STRIDE, T_STRIDE), "VALID")   # (B, PP, NF, NT)
    patches = jnp.transpose(patches.reshape(B, PP, NP), (0, 2, 1))             # (B, NP, PP)
    # token rows: [cls, dist, patches..., pad]; cls/dist/pad rows read zero patches and get
    # their value from `base`.  Lane-pad patch features 64 -> 128.
    patches = jnp.pad(patches, ((0, 0), (2, S_PAD - 2 - NP), (0, PP_PAD - PP)))  # (B, S_PAD, 128)

    # batch-fuse into the matmul M dimension: B_TILE elements per grid step
    b_tile = max(1, min(B, MXU_TARGET_ROWS // S_PAD))
    n_tiles = pl.cdiv(B, b_tile)
    b_padded = n_tiles * b_tile
    if b_padded != B:
        patches = jnp.pad(patches, ((0, b_padded - B), (0, 0), (0, 0)))
    tile_m = b_tile * S_PAD
    patches_flat = patches.reshape(b_padded * S_PAD, PP_PAD)

    # precomputed constants: tiled base table, key-validity bias, block-diag mean-pool
    base_tiled = jnp.tile(prep["base"], (b_tile, 1))                            # (tile_m, D)
    tok = jnp.arange(S_PAD)
    key_bias = jnp.where(tok < S_REAL, 0.0, -1e30).astype(jnp.float32).reshape(1, S_PAD)
    pool_row = jnp.where(tok < S_REAL, 1.0 / S_REAL, 0.0).astype(jnp.float32).reshape(1, S_PAD)
    pool_mat = jnp.kron(jnp.eye(b_tile, dtype=jnp.float32), pool_row)           # (b_tile, tile_m)

    c2 = lambda a: pl.BlockSpec(a.shape, lambda i: (0, 0))
    c3 = lambda a: pl.BlockSpec(a.shape, lambda i: (0, 0, 0))

    in_specs = [
        pl.BlockSpec((tile_m, PP_PAD), lambda i: (i, 0)),     # patches (per batch tile)
        c2(prep["patch_w"]),                                  # patch embed weight
        pl.BlockSpec((tile_m, D), lambda i: (0, 0)),          # base token table (tiled)
        pl.BlockSpec((1, S_PAD), lambda i: (0, 0)),           # key-validity bias
        pl.BlockSpec((b_tile, tile_m), lambda i: (0, 0)),     # mean-pool matrix
        c2(prep["ln_f_g"]), c2(prep["ln_f_b"]),               # final LN gamma/beta
        c2(prep["cls_w"]), c2(prep["cls_b"]),                 # classifier w/b (lane-padded)
        c3(prep["ln1_g"]), c3(prep["ln1_b"]),                 # stacked per-layer weights ...
        c3(prep["w_qkv"]), c3(prep["b_qkv"]),
        c3(prep["w_o"]), c3(prep["b_o"]),
        c3(prep["ln2_g"]), c3(prep["ln2_b"]),
        c3(prep["w_fc1"]), c3(prep["b_fc1"]),
        c3(prep["w_fc2"]), c3(prep["b_fc2"]),
    ]

    # TODO(synk): at real AST sizes (D=768, 12 layers) set vmem_limit_bytes / Buffered(1)
    #             on the big weight specs; at these toy sizes defaults are ample.
    logits = pl.pallas_call(
        functools.partial(_ast_fused_kernel, b_tile=b_tile),
        out_shape=jax.ShapeDtypeStruct((n_tiles, b_tile, LOGITS_PAD), jnp.float32),
        grid=(n_tiles,),
        in_specs=in_specs,
        out_specs=pl.BlockSpec((1, b_tile, LOGITS_PAD), lambda i: (i, 0, 0)),
        compiler_params=pltpu.CompilerParams(dimension_semantics=("parallel",)),
    )(
        patches_flat, prep["patch_w"], base_tiled, key_bias, pool_mat,
        prep["ln_f_g"], prep["ln_f_b"], prep["cls_w"], prep["cls_b"],
        prep["ln1_g"], prep["ln1_b"], prep["w_qkv"], prep["b_qkv"],
        prep["w_o"], prep["b_o"], prep["ln2_g"], prep["ln2_b"],
        prep["w_fc1"], prep["b_fc1"], prep["w_fc2"], prep["b_fc2"],
    )
    return logits.reshape(b_padded, LOGITS_PAD)[:B, :NUM_LABELS]


audio_classifier_forward = jax.jit(_forward_impl)


if __name__ == "__main__":
    key = jax.random.PRNGKey(0)
    k_spec, k_param = jax.random.split(key)

    # specs: (batch, n_mels, time_frames) — time < MAX_LENGTH to exercise the padding path
    specs = jax.random.normal(k_spec, (2, N_MELS, 20), jnp.float32)

    params = init_params(k_param, S_REAL)
    prep = prepare_params(params)

    logits = audio_classifier_forward(prep, specs)
    jax.block_until_ready(logits)
    assert logits.shape == (2, NUM_LABELS), logits.shape
    assert bool(jnp.all(jnp.isfinite(logits)))
    print("KERNEL_OK")
</pallas_src>

<mosaic_0001>
module attributes {stable_mosaic.version = 11 : i64} {
  func.func @_ast_fused_kernel(%arg0: i32, %arg1: memref<48x128xf32, #tpu.memory_space<vmem>>, %arg2: memref<128x128xbf16, #tpu.memory_space<vmem>>, %arg3: memref<48x128xf32, #tpu.memory_space<vmem>>, %arg4: memref<1x24xf32, #tpu.memory_space<vmem>>, %arg5: memref<2x48xf32, #tpu.memory_space<vmem>>, %arg6: memref<1x128xf32, #tpu.memory_space<vmem>>, %arg7: memref<1x128xf32, #tpu.memory_space<vmem>>, %arg8: memref<128x128xf32, #tpu.memory_space<vmem>>, %arg9: memref<1x128xf32, #tpu.memory_space<vmem>>, %arg10: memref<2x1x128xf32, #tpu.memory_space<vmem>>, %arg11: memref<2x1x128xf32, #tpu.memory_space<vmem>>, %arg12: memref<2x128x384xbf16, #tpu.memory_space<vmem>>, %arg13: memref<2x1x384xf32, #tpu.memory_space<vmem>>, %arg14: memref<2x128x128xbf16, #tpu.memory_space<vmem>>, %arg15: memref<2x1x128xf32, #tpu.memory_space<vmem>>, %arg16: memref<2x1x128xf32, #tpu.memory_space<vmem>>, %arg17: memref<2x1x128xf32, #tpu.memory_space<vmem>>, %arg18: memref<2x128x256xbf16, #tpu.memory_space<vmem>>, %arg19: memref<2x1x256xf32, #tpu.memory_space<vmem>>, %arg20: memref<2x256x128xbf16, #tpu.memory_space<vmem>>, %arg21: memref<2x1x128xf32, #tpu.memory_space<vmem>>, %arg22: memref<1x2x128xf32, #tpu.memory_space<vmem>>) attributes {dimension_semantics = [#tpu.dimension_semantics<parallel>], iteration_bounds = array<i64: 1>, scalar_prefetch = 0 : i64, scratch_operands = 0 : i64, tpu.core_type = #tpu.core_type<tc>, window_params = [{transform_indices = @transform_0, window_bounds = array<i64: 48, 128>}, {pipeline_mode = #tpu.pipeline_mode<synchronous>, transform_indices = @transform_1, window_bounds = array<i64: 128, 128>}, {pipeline_mode = #tpu.pipeline_mode<synchronous>, transform_indices = @transform_2, window_bounds = array<i64: 48, 128>}, {pipeline_mode = #tpu.pipeline_mode<synchronous>, transform_indices = @transform_3, window_bounds = array<i64: 1, 24>}, {pipeline_mode = #tpu.pipeline_mode<synchronous>, transform_indices = @transform_4, window_bounds = array<i64: 2, 48>}, {pipeline_mode = #tpu.pipeline_mode<synchronous>, transform_indices = @transform_5, window_bounds = array<i64: 1, 128>}, {pipeline_mode = #tpu.pipeline_mode<synchronous>, transform_indices = @transform_6, window_bounds = array<i64: 1, 128>}, {pipeline_mode = #tpu.pipeline_mode<synchronous>, transform_indices = @transform_7, window_bounds = array<i64: 128, 128>}, {pipeline_mode = #tpu.pipeline_mode<synchronous>, transform_indices = @transform_8, window_bounds = array<i64: 1, 128>}, {pipeline_mode = #tpu.pipeline_mode<synchronous>, transform_indices = @transform_9, window_bounds = array<i64: 2, 1, 128>}, {pipeline_mode = #tpu.pipeline_mode<synchronous>, transform_indices = @transform_10, window_bounds = array<i64: 2, 1, 128>}, {pipeline_mode = #tpu.pipeline_mode<synchronous>, transform_indices = @transform_11, window_bounds = array<i64: 2, 128, 384>}, {pipeline_mode = #tpu.pipeline_mode<synchronous>, transform_indices = @transform_12, window_bounds = array<i64: 2, 1, 384>}, {pipeline_mode = #tpu.pipeline_mode<synchronous>, transform_indices = @transform_13, window_bounds = array<i64: 2, 128, 128>}, {pipeline_mode = #tpu.pipeline_mode<synchronous>, transform_indices = @transform_14, window_bounds = array<i64: 2, 1, 128>}, {pipeline_mode = #tpu.pipeline_mode<synchronous>, transform_indices = @transform_15, window_bounds = array<i64: 2, 1, 128>}, {pipeline_mode = #tpu.pipeline_mode<synchronous>, transform_indices = @transform_16, window_bounds = array<i64: 2, 1, 128>}, {pipeline_mode = #tpu.pipeline_mode<synchronous>, transform_indices = @transform_17, window_bounds = array<i64: 2, 128, 256>}, {pipeline_mode = #tpu.pipeline_mode<synchronous>, transform_indices = @transform_18, window_bounds = array<i64: 2, 1, 256>}, {pipeline_mode = #tpu.pipeline_mode<synchronous>, transform_indices = @transform_19, window_bounds = array<i64: 2, 256, 128>}, {pipeline_mode = #tpu.pipeline_mode<synchronous>, transform_indices = @transform_20, window_bounds = array<i64: 2, 1, 128>}, {transform_indices = @transform_21, window_bounds = array<i64: 1, 2, 128>}]} {
    %c0 = arith.constant 0 : index
    %c0_0 = arith.constant 0 : index
    %0 = vector.load %arg1[%c0, %c0_0] : memref<48x128xf32, #tpu.memory_space<vmem>>, vector<48x128xf32>
    %1 = arith.truncf %0 : vector<48x128xf32> to vector<48x128xbf16>
    %c0_1 = arith.constant 0 : index
    %c0_2 = arith.constant 0 : index
    %2 = vector.load %arg2[%c0_1, %c0_2] : memref<128x128xbf16, #tpu.memory_space<vmem>>, vector<128x128xbf16>
    %cst = arith.constant dense<0.000000e+00> : vector<48x128xf32>
    %3 = tpu.matmul %1, %2, %cst {dimension_numbers = #tpu.dot_dimension_numbers<[1], [0], [0], [1], [0, 0, 1, 1], [], []>} : vector<48x128xbf16>, vector<128x128xbf16>, vector<48x128xf32> -> vector<48x128xf32>
    %c0_3 = arith.constant 0 : index
    %c0_4 = arith.constant 0 : index
    %4 = vector.load %arg3[%c0_3, %c0_4] : memref<48x128xf32, #tpu.memory_space<vmem>>, vector<48x128xf32>
    %5 = arith.addf %3, %4 : vector<48x128xf32>
    %c0_5 = arith.constant 0 : index
    %c0_6 = arith.constant 0 : index
    %6 = vector.load %arg4[%c0_5, %c0_6] : memref<1x24xf32, #tpu.memory_space<vmem>>, vector<1x24xf32>
    %c0_7 = arith.constant 0 : index
    %c0_8 = arith.constant 0 : index
    %c0_9 = arith.constant 0 : index
    %7 = vector.load %arg10[%c0_7, %c0_8, %c0_9] : memref<2x1x128xf32, #tpu.memory_space<vmem>>, vector<1x1x128xf32>
    %8 = vector.shape_cast %7 : vector<1x1x128xf32> to vector<1x128xf32>
    %c0_10 = arith.constant 0 : index
    %c0_11 = arith.constant 0 : index
    %c0_12 = arith.constant 0 : index
    %9 = vector.load %arg11[%c0_10, %c0_11, %c0_12] : memref<2x1x128xf32, #tpu.memory_space<vmem>>, vector<1x1x128xf32>
    %10 = vector.shape_cast %9 : vector<1x1x128xf32> to vector<1x128xf32>
    %cst_13 = arith.constant dense<0.000000e+00> : vector<48xf32>
    %11 = vector.multi_reduction <add>, %5, %cst_13 [1] : vector<48x128xf32> to vector<48xf32>
    %12 = vector.shape_cast %11 : vector<48xf32> to vector<48x1xf32>
    %cst_14 = arith.constant 1.280000e+02 : f32
    %13 = vector.broadcast %cst_14 : f32 to vector<48x1xf32>
    %14 = arith.divf %12, %13 : vector<48x1xf32>
    %15 = vector.broadcast %14 : vector<48x1xf32> to vector<48x128xf32>
    %16 = arith.subf %5, %15 : vector<48x128xf32>
    %17 = arith.mulf %16, %16 : vector<48x128xf32>
    %cst_15 = arith.constant dense<0.000000e+00> : vector<48xf32>
    %18 = vector.multi_reduction <add>, %17, %cst_15 [1] : vector<48x128xf32> to vector<48xf32>
    %19 = vector.shape_cast %18 : vector<48xf32> to vector<48x1xf32>
    %cst_16 = arith.constant 1.280000e+02 : f32
    %20 = vector.broadcast %cst_16 : f32 to vector<48x1xf32>
    %21 = arith.divf %19, %20 : vector<48x1xf32>
    %cst_17 = arith.constant 9.99999996E-13 : f32
    %22 = vector.broadcast %cst_17 : f32 to vector<48x1xf32>
    %23 = arith.addf %21, %22 : vector<48x1xf32>
    %24 = math.rsqrt %23 : vector<48x1xf32>
    %25 = vector.broadcast %24 : vector<48x1xf32> to vector<48x128xf32>
    %26 = arith.mulf %16, %25 : vector<48x128xf32>
    %27 = vector.broadcast %8 : vector<1x128xf32> to vector<48x128xf32>
    %28 = arith.mulf %26, %27 : vector<48x128xf32>
    %29 = vector.broadcast %10 : vector<1x128xf32> to vector<48x128xf32>
    %30 = arith.addf %28, %29 : vector<48x128xf32>
    %31 = arith.truncf %30 : vector<48x128xf32> to vector<48x128xbf16>
    %c0_18 = arith.constant 0 : index
    %c0_19 = arith.constant 0 : index
    %c0_20 = arith.constant 0 : index
    %32 = vector.load %arg12[%c0_18, %c0_19, %c0_20] : memref<2x128x384xbf16, #tpu.memory_space<vmem>>, vector<1x128x384xbf16>
    %33 = vector.shape_cast %32 : vector<1x128x384xbf16> to vector<128x384xbf16>
    %cst_21 = arith.constant dense<0.000000e+00> : vector<48x384xf32>
    %34 = tpu.matmul %31, %33, %cst_21 {dimension_numbers = #tpu.dot_dimension_numbers<[1], [0], [0], [1], [0, 0, 1, 1], [], []>} : vector<48x128xbf16>, vector<128x384xbf16>, vector<48x384xf32> -> vector<48x384xf32>
    %c0_22 = arith.constant 0 : index
    %c0_23 = arith.constant 0 : index
    %c0_24 = arith.constant 0 : index
    %35 = vector.load %arg13[%c0_22, %c0_23, %c0_24] : memref<2x1x384xf32, #tpu.memory_space<vmem>>, vector<1x1x384xf32>
    %36 = vector.shape_cast %35 : vector<1x1x384xf32> to vector<1x384xf32>
    %37 = vector.broadcast %36 : vector<1x384xf32> to vector<48x384xf32>
    %38 = arith.addf %34, %37 : vector<48x384xf32>
    %39 = vector.extract_strided_slice %38 {offsets = [0, 0], sizes = [48, 128], strides = [1, 1]} : vector<48x384xf32> to vector<48x128xf32>
    %40 = vector.extract_strided_slice %38 {offsets = [0, 128], sizes = [48, 128], strides = [1, 1]} : vector<48x384xf32> to vector<48x128xf32>
    %41 = vector.extract_strided_slice %38 {offsets = [0, 256], sizes = [48, 128], strides = [1, 1]} : vector<48x384xf32> to vector<48x128xf32>
    %c0_25 = arith.constant 0 : index
    %c0_26 = arith.constant 0 : index
    %c0_27 = arith.constant 0 : index
    %42 = vector.load %arg14[%c0_25, %c0_26, %c0_27] : memref<2x128x128xbf16, #tpu.memory_space<vmem>>, vector<1x128x128xbf16>
    %43 = vector.shape_cast %42 : vector<1x128x128xbf16> to vector<128x128xbf16>
    %44 = vector.extract_strided_slice %39 {offsets = [0, 0], sizes = [24, 128], strides = [1, 1]} : vector<48x128xf32> to vector<24x128xf32>
    %45 = vector.extract_strided_slice %40 {offsets = [0, 0], sizes = [24, 128], strides = [1, 1]} : vector<48x128xf32> to vector<24x128xf32>
    %46 = vector.extract_strided_slice %41 {offsets = [0, 0], sizes = [24, 128], strides = [1, 1]} : vector<48x128xf32> to vector<24x128xf32>
    %47 = vector.extract_strided_slice %44 {offsets = [0, 0], sizes = [24, 32], strides = [1, 1]} : vector<24x128xf32> to vector<24x32xf32>
    %48 = arith.truncf %47 : vector<24x32xf32> to vector<24x32xbf16>
    %49 = vector.extract_strided_slice %45 {offsets = [0, 0], sizes = [24, 32], strides = [1, 1]} : vector<24x128xf32> to vector<24x32xf32>
    %50 = arith.truncf %49 : vector<24x32xf32> to vector<24x32xbf16>
    %51 = vector.extract_strided_slice %46 {offsets = [0, 0], sizes = [24, 32], strides = [1, 1]} : vector<24x128xf32> to vector<24x32xf32>
    %52 = arith.truncf %51 : vector<24x32xf32> to vector<24x32xbf16>
    %cst_28 = arith.constant dense<0.000000e+00> : vector<24x24xf32>
    %53 = tpu.matmul %48, %50, %cst_28 {dimension_numbers = #tpu.dot_dimension_numbers<[1], [1], [0], [0], [0, 0, 1, 0], [], []>} : vector<24x32xbf16>, vector<24x32xbf16>, vector<24x24xf32> -> vector<24x24xf32>
    %54 = vector.broadcast %6 : vector<1x24xf32> to vector<24x24xf32>
    %55 = arith.addf %53, %54 : vector<24x24xf32>
    %cst_29 = arith.constant dense<0xFF800000> : vector<24xf32>
    %56 = vector.multi_reduction <maximumf>, %55, %cst_29 [1] : vector<24x24xf32> to vector<24xf32>
    %57 = vector.shape_cast %56 : vector<24xf32> to vector<24x1xf32>
    %58 = vector.broadcast %57 : vector<24x1xf32> to vector<24x24xf32>
    %59 = arith.subf %55, %58 : vector<24x24xf32>
    %60 = math.exp %59 : vector<24x24xf32>
    %cst_30 = arith.constant dense<0.000000e+00> : vector<24xf32>
    %61 = vector.multi_reduction <add>, %60, %cst_30 [1] : vector<24x24xf32> to vector<24xf32>
    %62 = vector.shape_cast %61 : vector<24xf32> to vector<24x1xf32>
    %63 = tpu.reciprocal %62 {approx = true} : vector<24x1xf32> -> vector<24x1xf32>
    %64 = vector.broadcast %63 : vector<24x1xf32> to vector<24x24xf32>
    %65 = arith.mulf %60, %64 : vector<24x24xf32>
    %66 = arith.truncf %65 : vector<24x24xf32> to vector<24x24xbf16>
    %cst_31 = arith.constant dense<0.000000e+00> : vector<24x32xf32>
    %67 = tpu.matmul %66, %52, %cst_31 {dimension_numbers = #tpu.dot_dimension_numbers<[1], [0], [0], [1], [0, 0, 1, 1], [], []>} : vector<24x24xbf16>, vector<24x32xbf16>, vector<24x32xf32> -> vector<24x32xf32>
    %68 = arith.truncf %67 : vector<24x32xf32> to vector<24x32xbf16>
    %69 = vector.extract_strided_slice %43 {offsets = [0, 0], sizes = [32, 128], strides = [1, 1]} : vector<128x128xbf16> to vector<32x128xbf16>
    %cst_32 = arith.constant dense<0.000000e+00> : vector<24x128xf32>
    %70 = tpu.matmul %68, %69, %cst_32 {dimension_numbers = #tpu.dot_dimension_numbers<[1], [0], [0], [1], [0, 0, 1, 1], [], []>} : vector<24x32xbf16>, vector<32x128xbf16>, vector<24x128xf32> -> vector<24x128xf32>
    %71 = vector.extract_strided_slice %44 {offsets = [0, 32], sizes = [24, 32], strides = [1, 1]} : vector<24x128xf32> to vector<24x32xf32>
    %72 = arith.truncf %71 : vector<24x32xf32> to vector<24x32xbf16>
    %73 = vector.extract_strided_slice %45 {offsets = [0, 32], sizes = [24, 32], strides = [1, 1]} : vector<24x128xf32> to vector<24x32xf32>
    %74 = arith.truncf %73 : vector<24x32xf32> to vector<24x32xbf16>
    %75 = vector.extract_strided_slice %46 {offsets = [0, 32], sizes = [24, 32], strides = [1, 1]} : vector<24x128xf32> to vector<24x32xf32>
    %76 = arith.truncf %75 : vector<24x32xf32> to vector<24x32xbf16>
    %cst_33 = arith.constant dense<0.000000e+00> : vector<24x24xf32>
    %77 = tpu.matmul %72, %74, %cst_33 {dimension_numbers = #tpu.dot_dimension_numbers<[1], [1], [0], [0], [0, 0, 1, 0], [], []>} : vector<24x32xbf16>, vector<24x32xbf16>, vector<24x24xf32> -> vector<24x24xf32>
    %78 = vector.broadcast %6 : vector<1x24xf32> to vector<24x24xf32>
    %79 = arith.addf %77, %78 : vector<24x24xf32>
    %cst_34 = arith.constant dense<0xFF800000> : vector<24xf32>
    %80 = vector.multi_reduction <maximumf>, %79, %cst_34 [1] : vector<24x24xf32> to vector<24xf32>
    %81 = vector.shape_cast %80 : vector<24xf32> to vector<24x1xf32>
    %82 = vector.broadcast %81 : vector<24x1xf32> to vector<24x24xf32>
    %83 = arith.subf %79, %82 : vector<24x24xf32>
    %84 = math.exp %83 : vector<24x24xf32>
    %cst_35 = arith.constant dense<0.000000e+00> : vector<24xf32>
    %85 = vector.multi_reduction <add>, %84, %cst_35 [1] : vector<24x24xf32> to vector<24xf32>
    %86 = vector.shape_cast %85 : vector<24xf32> to vector<24x1xf32>
    %87 = tpu.reciprocal %86 {approx = true} : vector<24x1xf32> -> vector<24x1xf32>
    %88 = vector.broadcast %87 : vector<24x1xf32> to vector<24x24xf32>
    %89 = arith.mulf %84, %88 : vector<24x24xf32>
    %90 = arith.truncf %89 : vector<24x24xf32> to vector<24x24xbf16>
    %cst_36 = arith.constant dense<0.000000e+00> : vector<24x32xf32>
    %91 = tpu.matmul %90, %76, %cst_36 {dimension_numbers = #tpu.dot_dimension_numbers<[1], [0], [0], [1], [0, 0, 1, 1], [], []>} : vector<24x24xbf16>, vector<24x32xbf16>, vector<24x32xf32> -> vector<24x32xf32>
    %92 = arith.truncf %91 : vector<24x32xf32> to vector<24x32xbf16>
    %93 = vector.extract_strided_slice %43 {offsets = [32, 0], sizes = [32, 128], strides = [1, 1]} : vector<128x128xbf16> to vector<32x128xbf16>
    %cst_37 = arith.constant dense<0.000000e+00> : vector<24x128xf32>
    %94 = tpu.matmul %92, %93, %cst_37 {dimension_numbers = #tpu.dot_dimension_numbers<[1], [0], [0], [1], [0, 0, 1, 1], [], []>} : vector<24x32xbf16>, vector<32x128xbf16>, vector<24x128xf32> -> vector<24x128xf32>
    %95 = arith.addf %70, %94 : vector<24x128xf32>
    %96 = vector.extract_strided_slice %44 {offsets = [0, 64], sizes = [24, 32], strides = [1, 1]} : vector<24x128xf32> to vector<24x32xf32>
    %97 = arith.truncf %96 : vector<24x32xf32> to vector<24x32xbf16>
    %98 = vector.extract_strided_slice %45 {offsets = [0, 64], sizes = [24, 32], strides = [1, 1]} : vector<24x128xf32> to vector<24x32xf32>
    %99 = arith.truncf %98 : vector<24x32xf32> to vector<24x32xbf16>
    %100 = vector.extract_strided_slice %46 {offsets = [0, 64], sizes = [24, 32], strides = [1, 1]} : vector<24x128xf32> to vector<24x32xf32>
    %101 = arith.truncf %100 : vector<24x32xf32> to vector<24x32xbf16>
    %cst_38 = arith.constant dense<0.000000e+00> : vector<24x24xf32>
    %102 = tpu.matmul %97, %99, %cst_38 {dimension_numbers = #tpu.dot_dimension_numbers<[1], [1], [0], [0], [0, 0, 1, 0], [], []>} : vector<24x32xbf16>, vector<24x32xbf16>, vector<24x24xf32> -> vector<24x24xf32>
    %103 = vector.broadcast %6 : vector<1x24xf32> to vector<24x24xf32>
    %104 = arith.addf %102, %103 : vector<24x24xf32>
    %cst_39 = arith.constant dense<0xFF800000> : vector<24xf32>
    %105 = vector.multi_reduction <maximumf>, %104, %cst_39 [1] : vector<24x24xf32> to vector<24xf32>
    %106 = vector.shape_cast %105 : vector<24xf32> to vector<24x1xf32>
    %107 = vector.broadcast %106 : vector<24x1xf32> to vector<24x24xf32>
    %108 = arith.subf %104, %107 : vector<24x24xf32>
    %109 = math.exp %108 : vector<24x24xf32>
    %cst_40 = arith.constant dense<0.000000e+00> : vector<24xf32>
    %110 = vector.multi_reduction <add>, %109, %cst_40 [1] : vector<24x24xf32> to vector<24xf32>
    %111 = vector.shape_cast %110 : vector<24xf32> to vector<24x1xf32>
    %112 = tpu.reciprocal %111 {approx = true} : vector<24x1xf32> -> vector<24x1xf32>
    %113 = vector.broadcast %112 : vector<24x1xf32> to vector<24x24xf32>
    %114 = arith.mulf %109, %113 : vector<24x24xf32>
    %115 = arith.truncf %114 : vector<24x24xf32> to vector<24x24xbf16>
    %cst_41 = arith.constant dense<0.000000e+00> : vector<24x32xf32>
    %116 = tpu.matmul %115, %101, %cst_41 {dimension_numbers = #tpu.dot_dimension_numbers<[1], [0], [0], [1], [0, 0, 1, 1], [], []>} : vector<24x24xbf16>, vector<24x32xbf16>, vector<24x32xf32> -> vector<24x32xf32>
    %117 = arith.truncf %116 : vector<24x32xf32> to vector<24x32xbf16>
    %118 = vector.extract_strided_slice %43 {offsets = [64, 0], sizes = [32, 128], strides = [1, 1]} : vector<128x128xbf16> to vector<32x128xbf16>
    %cst_42 = arith.constant dense<0.000000e+00> : vector<24x128xf32>
    %119 = tpu.matmul %117, %118, %cst_42 {dimension_numbers = #tpu.dot_dimension_numbers<[1], [0], [0], [1], [0, 0, 1, 1], [], []>} : vector<24x32xbf16>, vector<32x128xbf16>, vector<24x128xf32> -> vector<24x128xf32>
    %120 = arith.addf %95, %119 : vector<24x128xf32>
    %121 = vector.extract_strided_slice %44 {offsets = [0, 96], sizes = [24, 32], strides = [1, 1]} : vector<24x128xf32> to vector<24x32xf32>
    %122 = arith.truncf %121 : vector<24x32xf32> to vector<24x32xbf16>
    %123 = vector.extract_strided_slice %45 {offsets = [0, 96], sizes = [24, 32], strides = [1, 1]} : vector<24x128xf32> to vector<24x32xf32>
    %124 = arith.truncf %123 : vector<24x32xf32> to vector<24x32xbf16>
    %125 = vector.extract_strided_slice %46 {offsets = [0, 96], sizes = [24, 32], strides = [1, 1]} : vector<24x128xf32> to vector<24x32xf32>
    %126 = arith.truncf %125 : vector<24x32xf32> to vector<24x32xbf16>
    %cst_43 = arith.constant dense<0.000000e+00> : vector<24x24xf32>
    %127 = tpu.matmul %122, %124, %cst_43 {dimension_numbers = #tpu.dot_dimension_numbers<[1], [1], [0], [0], [0, 0, 1, 0], [], []>} : vector<24x32xbf16>, vector<24x32xbf16>, vector<24x24xf32> -> vector<24x24xf32>
    %128 = vector.broadcast %6 : vector<1x24xf32> to vector<24x24xf32>
    %129 = arith.addf %127, %128 : vector<24x24xf32>
    %cst_44 = arith.constant dense<0xFF800000> : vector<24xf32>
    %130 = vector.multi_reduction <maximumf>, %129, %cst_44 [1] : vector<24x24xf32> to vector<24xf32>
    %131 = vector.shape_cast %130 : vector<24xf32> to vector<24x1xf32>
    %132 = vector.broadcast %131 : vector<24x1xf32> to vector<24x24xf32>
    %133 = arith.subf %129, %132 : vector<24x24xf32>
    %134 = math.exp %133 : vector<24x24xf32>
    %cst_45 = arith.constant dense<0.000000e+00> : vector<24xf32>
    %135 = vector.multi_reduction <add>, %134, %cst_45 [1] : vector<24x24xf32> to vector<24xf32>
    %136 = vector.shape_cast %135 : vector<24xf32> to vector<24x1xf32>
    %137 = tpu.reciprocal %136 {approx = true} : vector<24x1xf32> -> vector<24x1xf32>
    %138 = vector.broadcast %137 : vector<24x1xf32> to vector<24x24xf32>
    %139 = arith.mulf %134, %138 : vector<24x24xf32>
    %140 = arith.truncf %139 : vector<24x24xf32> to vector<24x24xbf16>
    %cst_46 = arith.constant dense<0.000000e+00> : vector<24x32xf32>
    %141 = tpu.matmul %140, %126, %cst_46 {dimension_numbers = #tpu.dot_dimension_numbers<[1], [0], [0], [1], [0, 0, 1, 1], [], []>} : vector<24x24xbf16>, vector<24x32xbf16>, vector<24x32xf32> -> vector<24x32xf32>
    %142 = arith.truncf %141 : vector<24x32xf32> to vector<24x32xbf16>
    %143 = vector.extract_strided_slice %43 {offsets = [96, 0], sizes = [32, 128], strides = [1, 1]} : vector<128x128xbf16> to vector<32x128xbf16>
    %cst_47 = arith.constant dense<0.000000e+00> : vector<24x128xf32>
    %144 = tpu.matmul %142, %143, %cst_47 {dimension_numbers = #tpu.dot_dimension_numbers<[1], [0], [0], [1], [0, 0, 1, 1], [], []>} : vector<24x32xbf16>, vector<32x128xbf16>, vector<24x128xf32> -> vector<24x128xf32>
    %145 = arith.addf %120, %144 : vector<24x128xf32>
    %146 = vector.extract_strided_slice %39 {offsets = [24, 0], sizes = [24, 128], strides = [1, 1]} : vector<48x128xf32> to vector<24x128xf32>
    %147 = vector.extract_strided_slice %40 {offsets = [24, 0], sizes = [24, 128], strides = [1, 1]} : vector<48x128xf32> to vector<24x128xf32>
    %148 = vector.extract_strided_slice %41 {offsets = [24, 0], sizes = [24, 128], strides = [1, 1]} : vector<48x128xf32> to vector<24x128xf32>
    %149 = vector.extract_strided_slice %146 {offsets = [0, 0], sizes = [24, 32], strides = [1, 1]} : vector<24x128xf32> to vector<24x32xf32>
    %150 = arith.truncf %149 : vector<24x32xf32> to vector<24x32xbf16>
    %151 = vector.extract_strided_slice %147 {offsets = [0, 0], sizes = [24, 32], strides = [1, 1]} : vector<24x128xf32> to vector<24x32xf32>
    %152 = arith.truncf %151 : vector<24x32xf32> to vector<24x32xbf16>
    %153 = vector.extract_strided_slice %148 {offsets = [0, 0], sizes = [24, 32], strides = [1, 1]} : vector<24x128xf32> to vector<24x32xf32>
    %154 = arith.truncf %153 : vector<24x32xf32> to vector<24x32xbf16>
    %cst_48 = arith.constant dense<0.000000e+00> : vector<24x24xf32>
    %155 = tpu.matmul %150, %152, %cst_48 {dimension_numbers = #tpu.dot_dimension_numbers<[1], [1], [0], [0], [0, 0, 1, 0], [], []>} : vector<24x32xbf16>, vector<24x32xbf16>, vector<24x24xf32> -> vector<24x24xf32>
    %156 = vector.broadcast %6 : vector<1x24xf32> to vector<24x24xf32>
    %157 = arith.addf %155, %156 : vector<24x24xf32>
    %cst_49 = arith.constant dense<0xFF800000> : vector<24xf32>
    %158 = vector.multi_reduction <maximumf>, %157, %cst_49 [1] : vector<24x24xf32> to vector<24xf32>
    %159 = vector.shape_cast %158 : vector<24xf32> to vector<24x1xf32>
    %160 = vector.broadcast %159 : vector<24x1xf32> to vector<24x24xf32>
    %161 = arith.subf %157, %160 : vector<24x24xf32>
    %162 = math.exp %161 : vector<24x24xf32>
    %cst_50 = arith.constant dense<0.000000e+00> : vector<24xf32>
    %163 = vector.multi_reduction <add>, %162, %cst_50 [1] : vector<24x24xf32> to vector<24xf32>
    %164 = vector.shape_cast %163 : vector<24xf32> to vector<24x1xf32>
    %165 = tpu.reciprocal %164 {approx = true} : vector<24x1xf32> -> vector<24x1xf32>
    %166 = vector.broadcast %165 : vector<24x1xf32> to vector<24x24xf32>
    %167 = arith.mulf %162, %166 : vector<24x24xf32>
    %168 = arith.truncf %167 : vector<24x24xf32> to vector<24x24xbf16>
    %cst_51 = arith.constant dense<0.000000e+00> : vector<24x32xf32>
    %169 = tpu.matmul %168, %154, %cst_51 {dimension_numbers = #tpu.dot_dimension_numbers<[1], [0], [0], [1], [0, 0, 1, 1], [], []>} : vector<24x24xbf16>, vector<24x32xbf16>, vector<24x32xf32> -> vector<24x32xf32>
    %170 = arith.truncf %169 : vector<24x32xf32> to vector<24x32xbf16>
    %171 = vector.extract_strided_slice %43 {offsets = [0, 0], sizes = [32, 128], strides = [1, 1]} : vector<128x128xbf16> to vector<32x128xbf16>
    %cst_52 = arith.constant dense<0.000000e+00> : vector<24x128xf32>
    %172 = tpu.matmul %170, %171, %cst_52 {dimension_numbers = #tpu.dot_dimension_numbers<[1], [0], [0], [1], [0, 0, 1, 1], [], []>} : vector<24x32xbf16>, vector<32x128xbf16>, vector<24x128xf32> -> vector<24x128xf32>
    %173 = vector.extract_strided_slice %146 {offsets = [0, 32], sizes = [24, 32], strides = [1, 1]} : vector<24x128xf32> to vector<24x32xf32>
    %174 = arith.truncf %173 : vector<24x32xf32> to vector<24x32xbf16>
    %175 = vector.extract_strided_slice %147 {offsets = [0, 32], sizes = [24, 32], strides = [1, 1]} : vector<24x128xf32> to vector<24x32xf32>
    %176 = arith.truncf %175 : vector<24x32xf32> to vector<24x32xbf16>
    %177 = vector.extract_strided_slice %148 {offsets = [0, 32], sizes = [24, 32], strides = [1, 1]} : vector<24x128xf32> to vector<24x32xf32>
    %178 = arith.truncf %177 : vector<24x32xf32> to vector<24x32xbf16>
    %cst_53 = arith.constant dense<0.000000e+00> : vector<24x24xf32>
    %179 = tpu.matmul %174, %176, %cst_53 {dimension_numbers = #tpu.dot_dimension_numbers<[1], [1], [0], [0], [0, 0, 1, 0], [], []>} : vector<24x32xbf16>, vector<24x32xbf16>, vector<24x24xf32> -> vector<24x24xf32>
    %180 = vector.broadcast %6 : vector<1x24xf32> to vector<24x24xf32>
    %181 = arith.addf %179, %180 : vector<24x24xf32>
    %cst_54 = arith.constant dense<0xFF800000> : vector<24xf32>
    %182 = vector.multi_reduction <maximumf>, %181, %cst_54 [1] : vector<24x24xf32> to vector<24xf32>
    %183 = vector.shape_cast %182 : vector<24xf32> to vector<24x1xf32>
    %184 = vector.broadcast %183 : vector<24x1xf32> to vector<24x24xf32>
    %185 = arith.subf %181, %184 : vector<24x24xf32>
    %186 = math.exp %185 : vector<24x24xf32>
    %cst_55 = arith.constant dense<0.000000e+00> : vector<24xf32>
    %187 = vector.multi_reduction <add>, %186, %cst_55 [1] : vector<24x24xf32> to vector<24xf32>
    %188 = vector.shape_cast %187 : vector<24xf32> to vector<24x1xf32>
    %189 = tpu.reciprocal %188 {approx = true} : vector<24x1xf32> -> vector<24x1xf32>
    %190 = vector.broadcast %189 : vector<24x1xf32> to vector<24x24xf32>
    %191 = arith.mulf %186, %190 : vector<24x24xf32>
    %192 = arith.truncf %191 : vector<24x24xf32> to vector<24x24xbf16>
    %cst_56 = arith.constant dense<0.000000e+00> : vector<24x32xf32>
    %193 = tpu.matmul %192, %178, %cst_56 {dimension_numbers = #tpu.dot_dimension_numbers<[1], [0], [0], [1], [0, 0, 1, 1], [], []>} : vector<24x24xbf16>, vector<24x32xbf16>, vector<24x32xf32> -> vector<24x32xf32>
    %194 = arith.truncf %193 : vector<24x32xf32> to vector<24x32xbf16>
    %195 = vector.extract_strided_slice %43 {offsets = [32, 0], sizes = [32, 128], strides = [1, 1]} : vector<128x128xbf16> to vector<32x128xbf16>
    %cst_57 = arith.constant dense<0.000000e+00> : vector<24x128xf32>
    %196 = tpu.matmul %194, %195, %cst_57 {dimension_numbers = #tpu.dot_dimension_numbers<[1], [0], [0], [1], [0, 0, 1, 1], [], []>} : vector<24x32xbf16>, vector<32x128xbf16>, vector<24x128xf32> -> vector<24x128xf32>
    %197 = arith.addf %172, %196 : vector<24x128xf32>
    %198 = vector.extract_strided_slice %146 {offsets = [0, 64], sizes = [24, 32], strides = [1, 1]} : vector<24x128xf32> to vector<24x32xf32>
    %199 = arith.truncf %198 : vector<24x32xf32> to vector<24x32xbf16>
    %200 = vector.extract_strided_slice %147 {offsets = [0, 64], sizes = [24, 32], strides = [1, 1]} : vector<24x128xf32> to vector<24x32xf32>
    %201 = arith.truncf %200 : vector<24x32xf32> to vector<24x32xbf16>
    %202 = vector.extract_strided_slice %148 {offsets = [0, 64], sizes = [24, 32], strides = [1, 1]} : vector<24x128xf32> to vector<24x32xf32>
    %203 = arith.truncf %202 : vector<24x32xf32> to vector<24x32xbf16>
    %cst_58 = arith.constant dense<0.000000e+00> : vector<24x24xf32>
    %204 = tpu.matmul %199, %201, %cst_58 {dimension_numbers = #tpu.dot_dimension_numbers<[1], [1], [0], [0], [0, 0, 1, 0], [], []>} : vector<24x32xbf16>, vector<24x32xbf16>, vector<24x24xf32> -> vector<24x24xf32>
    %205 = vector.broadcast %6 : vector<1x24xf32> to vector<24x24xf32>
    %206 = arith.addf %204, %205 : vector<24x24xf32>
    %cst_59 = arith.constant dense<0xFF800000> : vector<24xf32>
    %207 = vector.multi_reduction <maximumf>, %206, %cst_59 [1] : vector<24x24xf32> to vector<24xf32>
    %208 = vector.shape_cast %207 : vector<24xf32> to vector<24x1xf32>
    %209 = vector.broadcast %208 : vector<24x1xf32> to vector<24x24xf32>
    %210 = arith.subf %206, %209 : vector<24x24xf32>
    %211 = math.exp %210 : vector<24x24xf32>
    %cst_60 = arith.constant dense<0.000000e+00> : vector<24xf32>
    %212 = vector.multi_reduction <add>, %211, %cst_60 [1] : vector<24x24xf32> to vector<24xf32>
    %213 = vector.shape_cast %212 : vector<24xf32> to vector<24x1xf32>
    %214 = tpu.reciprocal %213 {approx = true} : vector<24x1xf32> -> vector<24x1xf32>
    %215 = vector.broadcast %214 : vector<24x1xf32> to vector<24x24xf32>
    %216 = arith.mulf %211, %215 : vector<24x24xf32>
    %217 = arith.truncf %216 : vector<24x24xf32> to vector<24x24xbf16>
    %cst_61 = arith.constant dense<0.000000e+00> : vector<24x32xf32>
    %218 = tpu.matmul %217, %203, %cst_61 {dimension_numbers = #tpu.dot_dimension_numbers<[1], [0], [0], [1], [0, 0, 1, 1], [], []>} : vector<24x24xbf16>, vector<24x32xbf16>, vector<24x32xf32> -> vector<24x32xf32>
    %219 = arith.truncf %218 : vector<24x32xf32> to vector<24x32xbf16>
    %220 = vector.extract_strided_slice %43 {offsets = [64, 0], sizes = [32, 128], strides = [1, 1]} : vector<128x128xbf16> to vector<32x128xbf16>
    %cst_62 = arith.constant dense<0.000000e+00> : vector<24x128xf32>
    %221 = tpu.matmul %219, %220, %cst_62 {dimension_numbers = #tpu.dot_dimension_numbers<[1], [0], [0], [1], [0, 0, 1, 1], [], []>} : vector<24x32xbf16>, vector<32x128xbf16>, vector<24x128xf32> -> vector<24x128xf32>
    %222 = arith.addf %197, %221 : vector<24x128xf32>
    %223 = vector.extract_strided_slice %146 {offsets = [0, 96], sizes = [24, 32], strides = [1, 1]} : vector<24x128xf32> to vector<24x32xf32>
    %224 = arith.truncf %223 : vector<24x32xf32> to vector<24x32xbf16>
    %225 = vector.extract_strided_slice %147 {offsets = [0, 96], sizes = [24, 32], strides = [1, 1]} : vector<24x128xf32> to vector<24x32xf32>
    %226 = arith.truncf %225 : vector<24x32xf32> to vector<24x32xbf16>
    %227 = vector.extract_strided_slice %148 {offsets = [0, 96], sizes = [24, 32], strides = [1, 1]} : vector<24x128xf32> to vector<24x32xf32>
    %228 = arith.truncf %227 : vector<24x32xf32> to vector<24x32xbf16>
    %cst_63 = arith.constant dense<0.000000e+00> : vector<24x24xf32>
    %229 = tpu.matmul %224, %226, %cst_63 {dimension_numbers = #tpu.dot_dimension_numbers<[1], [1], [0], [0], [0, 0, 1, 0], [], []>} : vector<24x32xbf16>, vector<24x32xbf16>, vector<24x24xf32> -> vector<24x24xf32>
    %230 = vector.broadcast %6 : vector<1x24xf32> to vector<24x24xf32>
    %231 = arith.addf %229, %230 : vector<24x24xf32>
    %cst_64 = arith.constant dense<0xFF800000> : vector<24xf32>
    %232 = vector.multi_reduction <maximumf>, %231, %cst_64 [1] : vector<24x24xf32> to vector<24xf32>
    %233 = vector.shape_cast %232 : vector<24xf32> to vector<24x1xf32>
    %234 = vector.broadcast %233 : vector<24x1xf32> to vector<24x24xf32>
    %235 = arith.subf %231, %234 : vector<24x24xf32>
    %236 = math.exp %235 : vector<24x24xf32>
    %cst_65 = arith.constant dense<0.000000e+00> : vector<24xf32>
    %237 = vector.multi_reduction <add>, %236, %cst_65 [1] : vector<24x24xf32> to vector<24xf32>
    %238 = vector.shape_cast %237 : vector<24xf32> to vector<24x1xf32>
    %239 = tpu.reciprocal %238 {approx = true} : vector<24x1xf32> -> vector<24x1xf32>
    %240 = vector.broadcast %239 : vector<24x1xf32> to vector<24x24xf32>
    %241 = arith.mulf %236, %240 : vector<24x24xf32>
    %242 = arith.truncf %241 : vector<24x24xf32> to vector<24x24xbf16>
    %cst_66 = arith.constant dense<0.000000e+00> : vector<24x32xf32>
    %243 = tpu.matmul %242, %228, %cst_66 {dimension_numbers = #tpu.dot_dimension_numbers<[1], [0], [0], [1], [0, 0, 1, 1], [], []>} : vector<24x24xbf16>, vector<24x32xbf16>, vector<24x32xf32> -> vector<24x32xf32>
    %244 = arith.truncf %243 : vector<24x32xf32> to vector<24x32xbf16>
    %245 = vector.extract_strided_slice %43 {offsets = [96, 0], sizes = [32, 128], strides = [1, 1]} : vector<128x128xbf16> to vector<32x128xbf16>
    %cst_67 = arith.constant dense<0.000000e+00> : vector<24x128xf32>
    %246 = tpu.matmul %244, %245, %cst_67 {dimension_numbers = #tpu.dot_dimension_numbers<[1], [0], [0], [1], [0, 0, 1, 1], [], []>} : vector<24x32xbf16>, vector<32x128xbf16>, vector<24x128xf32> -> vector<24x128xf32>
    %247 = arith.addf %222, %246 : vector<24x128xf32>
    %248 = tpu.concatenate %145, %247 in 0 : vector<24x128xf32>, vector<24x128xf32> -> vector<48x128xf32>
    %249 = arith.addf %5, %248 : vector<48x128xf32>
    %c0_68 = arith.constant 0 : index
    %c0_69 = arith.constant 0 : index
    %c0_70 = arith.constant 0 : index
    %250 = vector.load %arg15[%c0_68, %c0_69, %c0_70] : memref<2x1x128xf32, #tpu.memory_space<vmem>>, vector<1x1x128xf32>
    %251 = vector.shape_cast %250 : vector<1x1x128xf32> to vector<1x128xf32>
    %252 = vector.broadcast %251 : vector<1x128xf32> to vector<48x128xf32>
    %253 = arith.addf %249, %252 : vector<48x128xf32>
    %c0_71 = arith.constant 0 : index
    %c0_72 = arith.constant 0 : index
    %c0_73 = arith.constant 0 : index
    %254 = vector.load %arg16[%c0_71, %c0_72, %c0_73] : memref<2x1x128xf32, #tpu.memory_space<vmem>>, vector<1x1x128xf32>
    %255 = vector.shape_cast %254 : vector<1x1x128xf32> to vector<1x128xf32>
    %c0_74 = arith.constant 0 : index
    %c0_75 = arith.constant 0 : index
    %c0_76 = arith.constant 0 : index
    %256 = vector.load %arg17[%c0_74, %c0_75, %c0_76] : memref<2x1x128xf32, #tpu.memory_space<vmem>>, vector<1x1x128xf32>
    %257 = vector.shape_cast %256 : vector<1x1x128xf32> to vector<1x128xf32>
    %cst_77 = arith.constant dense<0.000000e+00> : vector<48xf32>
    %258 = vector.multi_reduction <add>, %253, %cst_77 [1] : vector<48x128xf32> to vector<48xf32>
    %259 = vector.shape_cast %258 : vector<48xf32> to vector<48x1xf32>
    %cst_78 = arith.constant 1.280000e+02 : f32
    %260 = vector.broadcast %cst_78 : f32 to vector<48x1xf32>
    %261 = arith.divf %259, %260 : vector<48x1xf32>
    %262 = vector.broadcast %261 : vector<48x1xf32> to vector<48x128xf32>
    %263 = arith.subf %253, %262 : vector<48x128xf32>
    %264 = arith.mulf %263, %263 : vector<48x128xf32>
    %cst_79 = arith.constant dense<0.000000e+00> : vector<48xf32>
    %265 = vector.multi_reduction <add>, %264, %cst_79 [1] : vector<48x128xf32> to vector<48xf32>
    %266 = vector.shape_cast %265 : vector<48xf32> to vector<48x1xf32>
    %cst_80 = arith.constant 1.280000e+02 : f32
    %267 = vector.broadcast %cst_80 : f32 to vector<48x1xf32>
    %268 = arith.divf %266, %267 : vector<48x1xf32>
    %cst_81 = arith.constant 9.99999996E-13 : f32
    %269 = vector.broadcast %cst_81 : f32 to vector<48x1xf32>
    %270 = arith.addf %268, %269 : vector<48x1xf32>
    %271 = math.rsqrt %270 : vector<48x1xf32>
    %272 = vector.broadcast %271 : vector<48x1xf32> to vector<48x128xf32>
    %273 = arith.mulf %263, %272 : vector<48x128xf32>
    %274 = vector.broadcast %255 : vector<1x128xf32> to vector<48x128xf32>
    %275 = arith.mulf %273, %274 : vector<48x128xf32>
    %276 = vector.broadcast %257 : vector<1x128xf32> to vector<48x128xf32>
    %277 = arith.addf %275, %276 : vector<48x128xf32>
    %278 = arith.truncf %277 : vector<48x128xf32> to vector<48x128xbf16>
    %c0_82 = arith.constant 0 : index
    %c0_83 = arith.constant 0 : index
    %c0_84 = arith.constant 0 : index
    %279 = vector.load %arg18[%c0_82, %c0_83, %c0_84] : memref<2x128x256xbf16, #tpu.memory_space<vmem>>, vector<1x128x256xbf16>
    %280 = vector.shape_cast %279 : vector<1x128x256xbf16> to vector<128x256xbf16>
    %cst_85 = arith.constant dense<0.000000e+00> : vector<48x256xf32>
    %281 = tpu.matmul %278, %280, %cst_85 {dimension_numbers = #tpu.dot_dimension_numbers<[1], [0], [0], [1], [0, 0, 1, 1], [], []>} : vector<48x128xbf16>, vector<128x256xbf16>, vector<48x256xf32> -> vector<48x256xf32>
    %c0_86 = arith.constant 0 : index
    %c0_87 = arith.constant 0 : index
    %c0_88 = arith.constant 0 : index
    %282 = vector.load %arg19[%c0_86, %c0_87, %c0_88] : memref<2x1x256xf32, #tpu.memory_space<vmem>>, vector<1x1x256xf32>
    %283 = vector.shape_cast %282 : vector<1x1x256xf32> to vector<1x256xf32>
    %284 = vector.broadcast %283 : vector<1x256xf32> to vector<48x256xf32>
    %285 = arith.addf %281, %284 : vector<48x256xf32>
    %286 = arith.mulf %285, %285 : vector<48x256xf32>
    %287 = arith.mulf %285, %286 : vector<48x256xf32>
    %cst_89 = arith.constant 4.471500e-02 : f32
    %288 = vector.broadcast %cst_89 : f32 to vector<48x256xf32>
    %289 = arith.mulf %288, %287 : vector<48x256xf32>
    %290 = arith.addf %285, %289 : vector<48x256xf32>
    %cst_90 = arith.constant 0.797884583 : f32
    %291 = vector.broadcast %cst_90 : f32 to vector<48x256xf32>
    %292 = arith.mulf %291, %290 : vector<48x256xf32>
    %293 = math.tanh %292 : vector<48x256xf32>
    %cst_91 = arith.constant 1.000000e+00 : f32
    %294 = vector.broadcast %cst_91 : f32 to vector<48x256xf32>
    %295 = arith.addf %294, %293 : vector<48x256xf32>
    %cst_92 = arith.constant 5.000000e-01 : f32
    %296 = vector.broadcast %cst_92 : f32 to vector<48x256xf32>
    %297 = arith.mulf %296, %295 : vector<48x256xf32>
    %298 = arith.mulf %285, %297 : vector<48x256xf32>
    %299 = arith.truncf %298 : vector<48x256xf32> to vector<48x256xbf16>
    %c0_93 = arith.constant 0 : index
    %c0_94 = arith.constant 0 : index
    %c0_95 = arith.constant 0 : index
    %300 = vector.load %arg20[%c0_93, %c0_94, %c0_95] : memref<2x256x128xbf16, #tpu.memory_space<vmem>>, vector<1x256x128xbf16>
    %301 = vector.shape_cast %300 : vector<1x256x128xbf16> to vector<256x128xbf16>
    %cst_96 = arith.constant dense<0.000000e+00> : vector<48x128xf32>
    %302 = tpu.matmul %299, %301, %cst_96 {dimension_numbers = #tpu.dot_dimension_numbers<[1], [0], [0], [1], [0, 0, 1, 1], [], []>} : vector<48x256xbf16>, vector<256x128xbf16>, vector<48x128xf32> -> vector<48x128xf32>
    %303 = arith.addf %253, %302 : vector<48x128xf32>
    %c0_97 = arith.constant 0 : index
    %c0_98 = arith.constant 0 : index
    %c0_99 = arith.constant 0 : index
    %304 = vector.load %arg21[%c0_97, %c0_98, %c0_99] : memref<2x1x128xf32, #tpu.memory_space<vmem>>, vector<1x1x128xf32>
    %305 = vector.shape_cast %304 : vector<1x1x128xf32> to vector<1x128xf32>
    %306 = vector.broadcast %305 : vector<1x128xf32> to vector<48x128xf32>
    %307 = arith.addf %303, %306 : vector<48x128xf32>
    %c1 = arith.constant 1 : index
    %c0_100 = arith.constant 0 : index
    %c0_101 = arith.constant 0 : index
    %308 = vector.load %arg10[%c1, %c0_100, %c0_101] : memref<2x1x128xf32, #tpu.memory_space<vmem>>, vector<1x1x128xf32>
    %309 = vector.shape_cast %308 : vector<1x1x128xf32> to vector<1x128xf32>
    %c1_102 = arith.constant 1 : index
    %c0_103 = arith.constant 0 : index
    %c0_104 = arith.constant 0 : index
    %310 = vector.load %arg11[%c1_102, %c0_103, %c0_104] : memref<2x1x128xf32, #tpu.memory_space<vmem>>, vector<1x1x128xf32>
    %311 = vector.shape_cast %310 : vector<1x1x128xf32> to vector<1x128xf32>
    %cst_105 = arith.constant dense<0.000000e+00> : vector<48xf32>
    %312 = vector.multi_reduction <add>, %307, %cst_105 [1] : vector<48x128xf32> to vector<48xf32>
    %313 = vector.shape_cast %312 : vector<48xf32> to vector<48x1xf32>
    %cst_106 = arith.constant 1.280000e+02 : f32
    %314 = vector.broadcast %cst_106 : f32 to vector<48x1xf32>
    %315 = arith.divf %313, %314 : vector<48x1xf32>
    %316 = vector.broadcast %315 : vector<48x1xf32> to vector<48x128xf32>
    %317 = arith.subf %307, %316 : vector<48x128xf32>
    %318 = arith.mulf %317, %317 : vector<48x128xf32>
    %cst_107 = arith.constant dense<0.000000e+00> : vector<48xf32>
    %319 = vector.multi_reduction <add>, %318, %cst_107 [1] : vector<48x128xf32> to vector<48xf32>
    %320 = vector.shape_cast %319 : vector<48xf32> to vector<48x1xf32>
    %cst_108 = arith.constant 1.280000e+02 : f32
    %321 = vector.broadcast %cst_108 : f32 to vector<48x1xf32>
    %322 = arith.divf %320, %321 : vector<48x1xf32>
    %cst_109 = arith.constant 9.99999996E-13 : f32
    %323 = vector.broadcast %cst_109 : f32 to vector<48x1xf32>
    %324 = arith.addf %322, %323 : vector<48x1xf32>
    %325 = math.rsqrt %324 : vector<48x1xf32>
    %326 = vector.broadcast %325 : vector<48x1xf32> to vector<48x128xf32>
    %327 = arith.mulf %317, %326 : vector<48x128xf32>
    %328 = vector.broadcast %309 : vector<1x128xf32> to vector<48x128xf32>
    %329 = arith.mulf %327, %328 : vector<48x128xf32>
    %330 = vector.broadcast %311 : vector<1x128xf32> to vector<48x128xf32>
    %331 = arith.addf %329, %330 : vector<48x128xf32>
    %332 = arith.truncf %331 : vector<48x128xf32> to vector<48x128xbf16>
    %c1_110 = arith.constant 1 : index
    %c0_111 = arith.constant 0 : index
    %c0_112 = arith.constant 0 : index
    %333 = vector.load %arg12[%c1_110, %c0_111, %c0_112] : memref<2x128x384xbf16, #tpu.memory_space<vmem>>, vector<1x128x384xbf16>
    %334 = vector.shape_cast %333 : vector<1x128x384xbf16> to vector<128x384xbf16>
    %cst_113 = arith.constant dense<0.000000e+00> : vector<48x384xf32>
    %335 = tpu.matmul %332, %334, %cst_113 {dimension_numbers = #tpu.dot_dimension_numbers<[1], [0], [0], [1], [0, 0, 1, 1], [], []>} : vector<48x128xbf16>, vector<128x384xbf16>, vector<48x384xf32> -> vector<48x384xf32>
    %c1_114 = arith.constant 1 : index
    %c0_115 = arith.constant 0 : index
    %c0_116 = arith.constant 0 : index
    %336 = vector.load %arg13[%c1_114, %c0_115, %c0_116] : memref<2x1x384xf32, #tpu.memory_space<vmem>>, vector<1x1x384xf32>
    %337 = vector.shape_cast %336 : vector<1x1x384xf32> to vector<1x384xf32>
    %338 = vector.broadcast %337 : vector<1x384xf32> to vector<48x384xf32>
    %339 = arith.addf %335, %338 : vector<48x384xf32>
    %340 = vector.extract_strided_slice %339 {offsets = [0, 0], sizes = [48, 128], strides = [1, 1]} : vector<48x384xf32> to vector<48x128xf32>
    %341 = vector.extract_strided_slice %339 {offsets = [0, 128], sizes = [48, 128], strides = [1, 1]} : vector<48x384xf32> to vector<48x128xf32>
    %342 = vector.extract_strided_slice %339 {offsets = [0, 256], sizes = [48, 128], strides = [1, 1]} : vector<48x384xf32> to vector<48x128xf32>
    %c1_117 = arith.constant 1 : index
    %c0_118 = arith.constant 0 : index
    %c0_119 = arith.constant 0 : index
    %343 = vector.load %arg14[%c1_117, %c0_118, %c0_119] : memref<2x128x128xbf16, #tpu.memory_space<vmem>>, vector<1x128x128xbf16>
    %344 = vector.shape_cast %343 : vector<1x128x128xbf16> to vector<128x128xbf16>
    %345 = vector.extract_strided_slice %340 {offsets = [0, 0], sizes = [24, 128], strides = [1, 1]} : vector<48x128xf32> to vector<24x128xf32>
    %346 = vector.extract_strided_slice %341 {offsets = [0, 0], sizes = [24, 128], strides = [1, 1]} : vector<48x128xf32> to vector<24x128xf32>
    %347 = vector.extract_strided_slice %342 {offsets = [0, 0], sizes = [24, 128], strides = [1, 1]} : vector<48x128xf32> to vector<24x128xf32>
    %348 = vector.extract_strided_slice %345 {offsets = [0, 0], sizes = [24, 32], strides = [1, 1]} : vector<24x128xf32> to vector<24x32xf32>
    %349 = arith.truncf %348 : vector<24x32xf32> to vector<24x32xbf16>
    %350 = vector.extract_strided_slice %346 {offsets = [0, 0], sizes = [24, 32], strides = [1, 1]} : vector<24x128xf32> to vector<24x32xf32>
    %351 = arith.truncf %350 : vector<24x32xf32> to vector<24x32xbf16>
    %352 = vector.extract_strided_slice %347 {offsets = [0, 0], sizes = [24, 32], strides = [1, 1]} : vector<24x128xf32> to vector<24x32xf32>
    %353 = arith.truncf %352 : vector<24x32xf32> to vector<24x32xbf16>
    %cst_120 = arith.constant dense<0.000000e+00> : vector<24x24xf32>
    %354 = tpu.matmul %349, %351, %cst_120 {dimension_numbers = #tpu.dot_dimension_numbers<[1], [1], [0], [0], [0, 0, 1, 0], [], []>} : vector<24x32xbf16>, vector<24x32xbf16>, vector<24x24xf32> -> vector<24x24xf32>
    %355 = vector.broadcast %6 : vector<1x24xf32> to vector<24x24xf32>
    %356 = arith.addf %354, %355 : vector<24x24xf32>
    %cst_121 = arith.constant dense<0xFF800000> : vector<24xf32>
    %357 = vector.multi_reduction <maximumf>, %356, %cst_121 [1] : vector<24x24xf32> to vector<24xf32>
    %358 = vector.shape_cast %357 : vector<24xf32> to vector<24x1xf32>
    %359 = vector.broadcast %358 : vector<24x1xf32> to vector<24x24xf32>
    %360 = arith.subf %356, %359 : vector<24x24xf32>
    %361 = math.exp %360 : vector<24x24xf32>
    %cst_122 = arith.constant dense<0.000000e+00> : vector<24xf32>
    %362 = vector.multi_reduction <add>, %361, %cst_122 [1] : vector<24x24xf32> to vector<24xf32>
    %363 = vector.shape_cast %362 : vector<24xf32> to vector<24x1xf32>
    %364 = tpu.reciprocal %363 {approx = true} : vector<24x1xf32> -> vector<24x1xf32>
    %365 = vector.broadcast %364 : vector<24x1xf32> to vector<24x24xf32>
    %366 = arith.mulf %361, %365 : vector<24x24xf32>
    %367 = arith.truncf %366 : vector<24x24xf32> to vector<24x24xbf16>
    %cst_123 = arith.constant dense<0.000000e+00> : vector<24x32xf32>
    %368 = tpu.matmul %367, %353, %cst_123 {dimension_numbers = #tpu.dot_dimension_numbers<[1], [0], [0], [1], [0, 0, 1, 1], [], []>} : vector<24x24xbf16>, vector<24x32xbf16>, vector<24x32xf32> -> vector<24x32xf32>
    %369 = arith.truncf %368 : vector<24x32xf32> to vector<24x32xbf16>
    %370 = vector.extract_strided_slice %344 {offsets = [0, 0], sizes = [32, 128], strides = [1, 1]} : vector<128x128xbf16> to vector<32x128xbf16>
    %cst_124 = arith.constant dense<0.000000e+00> : vector<24x128xf32>
    %371 = tpu.matmul %369, %370, %cst_124 {dimension_numbers = #tpu.dot_dimension_numbers<[1], [0], [0], [1], [0, 0, 1, 1], [], []>} : vector<24x32xbf16>, vector<32x128xbf16>, vector<24x128xf32> -> vector<24x128xf32>
    %372 = vector.extract_strided_slice %345 {offsets = [0, 32], sizes = [24, 32], strides = [1, 1]} : vector<24x128xf32> to vector<24x32xf32>
    %373 = arith.truncf %372 : vector<24x32xf32> to vector<24x32xbf16>
    %374 = vector.extract_strided_slice %346 {offsets = [0, 32], sizes = [24, 32], strides = [1, 1]} : vector<24x128xf32> to vector<24x32xf32>
    %375 = arith.truncf %374 : vector<24x32xf32> to vector<24x32xbf16>
    %376 = vector.extract_strided_slice %347 {offsets = [0, 32], sizes = [24, 32], strides = [1, 1]} : vector<24x128xf32> to vector<24x32xf32>
    %377 = arith.truncf %376 : vector<24x32xf32> to vector<24x32xbf16>
    %cst_125 = arith.constant dense<0.000000e+00> : vector<24x24xf32>
    %378 = tpu.matmul %373, %375, %cst_125 {dimension_numbers = #tpu.dot_dimension_numbers<[1], [1], [0], [0], [0, 0, 1, 0], [], []>} : vector<24x32xbf16>, vector<24x32xbf16>, vector<24x24xf32> -> vector<24x24xf32>
    %379 = vector.broadcast %6 : vector<1x24xf32> to vector<24x24xf32>
    %380 = arith.addf %378, %379 : vector<24x24xf32>
    %cst_126 = arith.constant dense<0xFF800000> : vector<24xf32>
    %381 = vector.multi_reduction <maximumf>, %380, %cst_126 [1] : vector<24x24xf32> to vector<24xf32>
    %382 = vector.shape_cast %381 : vector<24xf32> to vector<24x1xf32>
    %383 = vector.broadcast %382 : vector<24x1xf32> to vector<24x24xf32>
    %384 = arith.subf %380, %383 : vector<24x24xf32>
    %385 = math.exp %384 : vector<24x24xf32>
    %cst_127 = arith.constant dense<0.000000e+00> : vector<24xf32>
    %386 = vector.multi_reduction <add>, %385, %cst_127 [1] : vector<24x24xf32> to vector<24xf32>
    %387 = vector.shape_cast %386 : vector<24xf32> to vector<24x1xf32>
    %388 = tpu.reciprocal %387 {approx = true} : vector<24x1xf32> -> vector<24x1xf32>
    %389 = vector.broadcast %388 : vector<24x1xf32> to vector<24x24xf32>
    %390 = arith.mulf %385, %389 : vector<24x24xf32>
    %391 = arith.truncf %390 : vector<24x24xf32> to vector<24x24xbf16>
    %cst_128 = arith.constant dense<0.000000e+00> : vector<24x32xf32>
    %392 = tpu.matmul %391, %377, %cst_128 {dimension_numbers = #tpu.dot_dimension_numbers<[1], [0], [0], [1], [0, 0, 1, 1], [], []>} : vector<24x24xbf16>, vector<24x32xbf16>, vector<24x32xf32> -> vector<24x32xf32>
    %393 = arith.truncf %392 : vector<24x32xf32> to vector<24x32xbf16>
    %394 = vector.extract_strided_slice %344 {offsets = [32, 0], sizes = [32, 128], strides = [1, 1]} : vector<128x128xbf16> to vector<32x128xbf16>
    %cst_129 = arith.constant dense<0.000000e+00> : vector<24x128xf32>
    %395 = tpu.matmul %393, %394, %cst_129 {dimension_numbers = #tpu.dot_dimension_numbers<[1], [0], [0], [1], [0, 0, 1, 1], [], []>} : vector<24x32xbf16>, vector<32x128xbf16>, vector<24x128xf32> -> vector<24x128xf32>
    %396 = arith.addf %371, %395 : vector<24x128xf32>
    %397 = vector.extract_strided_slice %345 {offsets = [0, 64], sizes = [24, 32], strides = [1, 1]} : vector<24x128xf32> to vector<24x32xf32>
    %398 = arith.truncf %397 : vector<24x32xf32> to vector<24x32xbf16>
    %399 = vector.extract_strided_slice %346 {offsets = [0, 64], sizes = [24, 32], strides = [1, 1]} : vector<24x128xf32> to vector<24x32xf32>
    %400 = arith.truncf %399 : vector<24x32xf32> to vector<24x32xbf16>
    %401 = vector.extract_strided_slice %347 {offsets = [0, 64], sizes = [24, 32], strides = [1, 1]} : vector<24x128xf32> to vector<24x32xf32>
    %402 = arith.truncf %401 : vector<24x32xf32> to vector<24x32xbf16>
    %cst_130 = arith.constant dense<0.000000e+00> : vector<24x24xf32>
    %403 = tpu.matmul %398, %400, %cst_130 {dimension_numbers = #tpu.dot_dimension_numbers<[1], [1], [0], [0], [0, 0, 1, 0], [], []>} : vector<24x32xbf16>, vector<24x32xbf16>, vector<24x24xf32> -> vector<24x24xf32>
    %404 = vector.broadcast %6 : vector<1x24xf32> to vector<24x24xf32>
    %405 = arith.addf %403, %404 : vector<24x24xf32>
    %cst_131 = arith.constant dense<0xFF800000> : vector<24xf32>
    %406 = vector.multi_reduction <maximumf>, %405, %cst_131 [1] : vector<24x24xf32> to vector<24xf32>
    %407 = vector.shape_cast %406 : vector<24xf32> to vector<24x1xf32>
    %408 = vector.broadcast %407 : vector<24x1xf32> to vector<24x24xf32>
    %409 = arith.subf %405, %408 : vector<24x24xf32>
    %410 = math.exp %409 : vector<24x24xf32>
    %cst_132 = arith.constant dense<0.000000e+00> : vector<24xf32>
    %411 = vector.multi_reduction <add>, %410, %cst_132 [1] : vector<24x24xf32> to vector<24xf32>
    %412 = vector.shape_cast %411 : vector<24xf32> to vector<24x1xf32>
    %413 = tpu.reciprocal %412 {approx = true} : vector<24x1xf32> -> vector<24x1xf32>
    %414 = vector.broadcast %413 : vector<24x1xf32> to vector<24x24xf32>
    %415 = arith.mulf %410, %414 : vector<24x24xf32>
    %416 = arith.truncf %415 : vector<24x24xf32> to vector<24x24xbf16>
    %cst_133 = arith.constant dense<0.000000e+00> : vector<24x32xf32>
    %417 = tpu.matmul %416, %402, %cst_133 {dimension_numbers = #tpu.dot_dimension_numbers<[1], [0], [0], [1], [0, 0, 1, 1], [], []>} : vector<24x24xbf16>, vector<24x32xbf16>, vector<24x32xf32> -> vector<24x32xf32>
    %418 = arith.truncf %417 : vector<24x32xf32> to vector<24x32xbf16>
    %419 = vector.extract_strided_slice %344 {offsets = [64, 0], sizes = [32, 128], strides = [1, 1]} : vector<128x128xbf16> to vector<32x128xbf16>
    %cst_134 = arith.constant dense<0.000000e+00> : vector<24x128xf32>
    %420 = tpu.matmul %418, %419, %cst_134 {dimension_numbers = #tpu.dot_dimension_numbers<[1], [0], [0], [1], [0, 0, 1, 1], [], []>} : vector<24x32xbf16>, vector<32x128xbf16>, vector<24x128xf32> -> vector<24x128xf32>
    %421 = arith.addf %396, %420 : vector<24x128xf32>
    %422 = vector.extract_strided_slice %345 {offsets = [0, 96], sizes = [24, 32], strides = [1, 1]} : vector<24x128xf32> to vector<24x32xf32>
    %423 = arith.truncf %422 : vector<24x32xf32> to vector<24x32xbf16>
    %424 = vector.extract_strided_slice %346 {offsets = [0, 96], sizes = [24, 32], strides = [1, 1]} : vector<24x128xf32> to vector<24x32xf32>
    %425 = arith.truncf %424 : vector<24x32xf32> to vector<24x32xbf16>
    %426 = vector.extract_strided_slice %347 {offsets = [0, 96], sizes = [24, 32], strides = [1, 1]} : vector<24x128xf32> to vector<24x32xf32>
    %427 = arith.truncf %426 : vector<24x32xf32> to vector<24x32xbf16>
    %cst_135 = arith.constant dense<0.000000e+00> : vector<24x24xf32>
    %428 = tpu.matmul %423, %425, %cst_135 {dimension_numbers = #tpu.dot_dimension_numbers<[1], [1], [0], [0], [0, 0, 1, 0], [], []>} : vector<24x32xbf16>, vector<24x32xbf16>, vector<24x24xf32> -> vector<24x24xf32>
    %429 = vector.broadcast %6 : vector<1x24xf32> to vector<24x24xf32>
    %430 = arith.addf %428, %429 : vector<24x24xf32>
    %cst_136 = arith.constant dense<0xFF800000> : vector<24xf32>
    %431 = vector.multi_reduction <maximumf>, %430, %cst_136 [1] : vector<24x24xf32> to vector<24xf32>
    %432 = vector.shape_cast %431 : vector<24xf32> to vector<24x1xf32>
    %433 = vector.broadcast %432 : vector<24x1xf32> to vector<24x24xf32>
    %434 = arith.subf %430, %433 : vector<24x24xf32>
    %435 = math.exp %434 : vector<24x24xf32>
    %cst_137 = arith.constant dense<0.000000e+00> : vector<24xf32>
    %436 = vector.multi_reduction <add>, %435, %cst_137 [1] : vector<24x24xf32> to vector<24xf32>
    %437 = vector.shape_cast %436 : vector<24xf32> to vector<24x1xf32>
    %438 = tpu.reciprocal %437 {approx = true} : vector<24x1xf32> -> vector<24x1xf32>
    %439 = vector.broadcast %438 : vector<24x1xf32> to vector<24x24xf32>
    %440 = arith.mulf %435, %439 : vector<24x24xf32>
    %441 = arith.truncf %440 : vector<24x24xf32> to vector<24x24xbf16>
    %cst_138 = arith.constant dense<0.000000e+00> : vector<24x32xf32>
    %442 = tpu.matmul %441, %427, %cst_138 {dimension_numbers = #tpu.dot_dimension_numbers<[1], [0], [0], [1], [0, 0, 1, 1], [], []>} : vector<24x24xbf16>, vector<24x32xbf16>, vector<24x32xf32> -> vector<24x32xf32>
    %443 = arith.truncf %442 : vector<24x32xf32> to vector<24x32xbf16>
    %444 = vector.extract_strided_slice %344 {offsets = [96, 0], sizes = [32, 128], strides = [1, 1]} : vector<128x128xbf16> to vector<32x128xbf16>
    %cst_139 = arith.constant dense<0.000000e+00> : vector<24x128xf32>
    %445 = tpu.matmul %443, %444, %cst_139 {dimension_numbers = #tpu.dot_dimension_numbers<[1], [0], [0], [1], [0, 0, 1, 1], [], []>} : vector<24x32xbf16>, vector<32x128xbf16>, vector<24x128xf32> -> vector<24x128xf32>
    %446 = arith.addf %421, %445 : vector<24x128xf32>
    %447 = vector.extract_strided_slice %340 {offsets = [24, 0], sizes = [24, 128], strides = [1, 1]} : vector<48x128xf32> to vector<24x128xf32>
    %448 = vector.extract_strided_slice %341 {offsets = [24, 0], sizes = [24, 128], strides = [1, 1]} : vector<48x128xf32> to vector<24x128xf32>
    %449 = vector.extract_strided_slice %342 {offsets = [24, 0], sizes = [24, 128], strides = [1, 1]} : vector<48x128xf32> to vector<24x128xf32>
    %450 = vector.extract_strided_slice %447 {offsets = [0, 0], sizes = [24, 32], strides = [1, 1]} : vector<24x128xf32> to vector<24x32xf32>
    %451 = arith.truncf %450 : vector<24x32xf32> to vector<24x32xbf16>
    %452 = vector.extract_strided_slice %448 {offsets = [0, 0], sizes = [24, 32], strides = [1, 1]} : vector<24x128xf32> to vector<24x32xf32>
    %453 = arith.truncf %452 : vector<24x32xf32> to vector<24x32xbf16>
    %454 = vector.extract_strided_slice %449 {offsets = [0, 0], sizes = [24, 32], strides = [1, 1]} : vector<24x128xf32> to vector<24x32xf32>
    %455 = arith.truncf %454 : vector<24x32xf32> to vector<24x32xbf16>
    %cst_140 = arith.constant dense<0.000000e+00> : vector<24x24xf32>
    %456 = tpu.matmul %451, %453, %cst_140 {dimension_numbers = #tpu.dot_dimension_numbers<[1], [1], [0], [0], [0, 0, 1, 0], [], []>} : vector<24x32xbf16>, vector<24x32xbf16>, vector<24x24xf32> -> vector<24x24xf32>
    %457 = vector.broadcast %6 : vector<1x24xf32> to vector<24x24xf32>
    %458 = arith.addf %456, %457 : vector<24x24xf32>
    %cst_141 = arith.constant dense<0xFF800000> : vector<24xf32>
    %459 = vector.multi_reduction <maximumf>, %458, %cst_141 [1] : vector<24x24xf32> to vector<24xf32>
    %460 = vector.shape_cast %459 : vector<24xf32> to vector<24x1xf32>
    %461 = vector.broadcast %460 : vector<24x1xf32> to vector<24x24xf32>
    %462 = arith.subf %458, %461 : vector<24x24xf32>
    %463 = math.exp %462 : vector<24x24xf32>
    %cst_142 = arith.constant dense<0.000000e+00> : vector<24xf32>
    %464 = vector.multi_reduction <add>, %463, %cst_142 [1] : vector<24x24xf32> to vector<24xf32>
    %465 = vector.shape_cast %464 : vector<24xf32> to vector<24x1xf32>
    %466 = tpu.reciprocal %465 {approx = true} : vector<24x1xf32> -> vector<24x1xf32>
    %467 = vector.broadcast %466 : vector<24x1xf32> to vector<24x24xf32>
    %468 = arith.mulf %463, %467 : vector<24x24xf32>
    %469 = arith.truncf %468 : vector<24x24xf32> to vector<24x24xbf16>
    %cst_143 = arith.constant dense<0.000000e+00> : vector<24x32xf32>
    %470 = tpu.matmul %469, %455, %cst_143 {dimension_numbers = #tpu.dot_dimension_numbers<[1], [0], [0], [1], [0, 0, 1, 1], [], []>} : vector<24x24xbf16>, vector<24x32xbf16>, vector<24x32xf32> -> vector<24x32xf32>
    %471 = arith.truncf %470 : vector<24x32xf32> to vector<24x32xbf16>
    %472 = vector.extract_strided_slice %344 {offsets = [0, 0], sizes = [32, 128], strides = [1, 1]} : vector<128x128xbf16> to vector<32x128xbf16>
    %cst_144 = arith.constant dense<0.000000e+00> : vector<24x128xf32>
    %473 = tpu.matmul %471, %472, %cst_144 {dimension_numbers = #tpu.dot_dimension_numbers<[1], [0], [0], [1], [0, 0, 1, 1], [], []>} : vector<24x32xbf16>, vector<32x128xbf16>, vector<24x128xf32> -> vector<24x128xf32>
    %474 = vector.extract_strided_slice %447 {offsets = [0, 32], sizes = [24, 32], strides = [1, 1]} : vector<24x128xf32> to vector<24x32xf32>
    %475 = arith.truncf %474 : vector<24x32xf32> to vector<24x32xbf16>
    %476 = vector.extract_strided_slice %448 {offsets = [0, 32], sizes = [24, 32], strides = [1, 1]} : vector<24x128xf32> to vector<24x32xf32>
    %477 = arith.truncf %476 : vector<24x32xf32> to vector<24x32xbf16>
    %478 = vector.extract_strided_slice %449 {offsets = [0, 32], sizes = [24, 32], strides = [1, 1]} : vector<24x128xf32> to vector<24x32xf32>
    %479 = arith.truncf %478 : vector<24x32xf32> to vector<24x32xbf16>
    %cst_145 = arith.constant dense<0.000000e+00> : vector<24x24xf32>
    %480 = tpu.matmul %475, %477, %cst_145 {dimension_numbers = #tpu.dot_dimension_numbers<[1], [1], [0], [0], [0, 0, 1, 0], [], []>} : vector<24x32xbf16>, vector<24x32xbf16>, vector<24x24xf32> -> vector<24x24xf32>
    %481 = vector.broadcast %6 : vector<1x24xf32> to vector<24x24xf32>
    %482 = arith.addf %480, %481 : vector<24x24xf32>
    %cst_146 = arith.constant dense<0xFF800000> : vector<24xf32>
    %483 = vector.multi_reduction <maximumf>, %482, %cst_146 [1] : vector<24x24xf32> to vector<24xf32>
    %484 = vector.shape_cast %483 : vector<24xf32> to vector<24x1xf32>
    %485 = vector.broadcast %484 : vector<24x1xf32> to vector<24x24xf32>
    %486 = arith.subf %482, %485 : vector<24x24xf32>
    %487 = math.exp %486 : vector<24x24xf32>
    %cst_147 = arith.constant dense<0.000000e+00> : vector<24xf32>
    %488 = vector.multi_reduction <add>, %487, %cst_147 [1] : vector<24x24xf32> to vector<24xf32>
    %489 = vector.shape_cast %488 : vector<24xf32> to vector<24x1xf32>
    %490 = tpu.reciprocal %489 {approx = true} : vector<24x1xf32> -> vector<24x1xf32>
    %491 = vector.broadcast %490 : vector<24x1xf32> to vector<24x24xf32>
    %492 = arith.mulf %487, %491 : vector<24x24xf32>
    %493 = arith.truncf %492 : vector<24x24xf32> to vector<24x24xbf16>
    %cst_148 = arith.constant dense<0.000000e+00> : vector<24x32xf32>
    %494 = tpu.matmul %493, %479, %cst_148 {dimension_numbers = #tpu.dot_dimension_numbers<[1], [0], [0], [1], [0, 0, 1, 1], [], []>} : vector<24x24xbf16>, vector<24x32xbf16>, vector<24x32xf32> -> vector<24x32xf32>
    %495 = arith.truncf %494 : vector<24x32xf32> to vector<24x32xbf16>
    %496 = vector.extract_strided_slice %344 {offsets = [32, 0], sizes = [32, 128], strides = [1, 1]} : vector<128x128xbf16> to vector<32x128xbf16>
    %cst_149 = arith.constant dense<0.000000e+00> : vector<24x128xf32>
    %497 = tpu.matmul %495, %496, %cst_149 {dimension_numbers = #tpu.dot_dimension_numbers<[1], [0], [0], [1], [0, 0, 1, 1], [], []>} : vector<24x32xbf16>, vector<32x128xbf16>, vector<24x128xf32> -> vector<24x128xf32>
    %498 = arith.addf %473, %497 : vector<24x128xf32>
    %499 = vector.extract_strided_slice %447 {offsets = [0, 64], sizes = [24, 32], strides = [1, 1]} : vector<24x128xf32> to vector<24x32xf32>
    %500 = arith.truncf %499 : vector<24x32xf32> to vector<24x32xbf16>
    %501 = vector.extract_strided_slice %448 {offsets = [0, 64], sizes = [24, 32], strides = [1, 1]} : vector<24x128xf32> to vector<24x32xf32>
    %502 = arith.truncf %501 : vector<24x32xf32> to vector<24x32xbf16>
    %503 = vector.extract_strided_slice %449 {offsets = [0, 64], sizes = [24, 32], strides = [1, 1]} : vector<24x128xf32> to vector<24x32xf32>
    %504 = arith.truncf %503 : vector<24x32xf32> to vector<24x32xbf16>
    %cst_150 = arith.constant dense<0.000000e+00> : vector<24x24xf32>
    %505 = tpu.matmul %500, %502, %cst_150 {dimension_numbers = #tpu.dot_dimension_numbers<[1], [1], [0], [0], [0, 0, 1, 0], [], []>} : vector<24x32xbf16>, vector<24x32xbf16>, vector<24x24xf32> -> vector<24x24xf32>
    %506 = vector.broadcast %6 : vector<1x24xf32> to vector<24x24xf32>
    %507 = arith.addf %505, %506 : vector<24x24xf32>
    %cst_151 = arith.constant dense<0xFF800000> : vector<24xf32>
    %508 = vector.multi_reduction <maximumf>, %507, %cst_151 [1] : vector<24x24xf32> to vector<24xf32>
    %509 = vector.shape_cast %508 : vector<24xf32> to vector<24x1xf32>
    %510 = vector.broadcast %509 : vector<24x1xf32> to vector<24x24xf32>
    %511 = arith.subf %507, %510 : vector<24x24xf32>
    %512 = math.exp %511 : vector<24x24xf32>
    %cst_152 = arith.constant dense<0.000000e+00> : vector<24xf32>
    %513 = vector.multi_reduction <add>, %512, %cst_152 [1] : vector<24x24xf32> to vector<24xf32>
    %514 = vector.shape_cast %513 : vector<24xf32> to vector<24x1xf32>
    %515 = tpu.reciprocal %514 {approx = true} : vector<24x1xf32> -> vector<24x1xf32>
    %516 = vector.broadcast %515 : vector<24x1xf32> to vector<24x24xf32>
    %517 = arith.mulf %512, %516 : vector<24x24xf32>
    %518 = arith.truncf %517 : vector<24x24xf32> to vector<24x24xbf16>
    %cst_153 = arith.constant dense<0.000000e+00> : vector<24x32xf32>
    %519 = tpu.matmul %518, %504, %cst_153 {dimension_numbers = #tpu.dot_dimension_numbers<[1], [0], [0], [1], [0, 0, 1, 1], [], []>} : vector<24x24xbf16>, vector<24x32xbf16>, vector<24x32xf32> -> vector<24x32xf32>
    %520 = arith.truncf %519 : vector<24x32xf32> to vector<24x32xbf16>
    %521 = vector.extract_strided_slice %344 {offsets = [64, 0], sizes = [32, 128], strides = [1, 1]} : vector<128x128xbf16> to vector<32x128xbf16>
    %cst_154 = arith.constant dense<0.000000e+00> : vector<24x128xf32>
    %522 = tpu.matmul %520, %521, %cst_154 {dimension_numbers = #tpu.dot_dimension_numbers<[1], [0], [0], [1], [0, 0, 1, 1], [], []>} : vector<24x32xbf16>, vector<32x128xbf16>, vector<24x128xf32> -> vector<24x128xf32>
    %523 = arith.addf %498, %522 : vector<24x128xf32>
    %524 = vector.extract_strided_slice %447 {offsets = [0, 96], sizes = [24, 32], strides = [1, 1]} : vector<24x128xf32> to vector<24x32xf32>
    %525 = arith.truncf %524 : vector<24x32xf32> to vector<24x32xbf16>
    %526 = vector.extract_strided_slice %448 {offsets = [0, 96], sizes = [24, 32], strides = [1, 1]} : vector<24x128xf32> to vector<24x32xf32>
    %527 = arith.truncf %526 : vector<24x32xf32> to vector<24x32xbf16>
    %528 = vector.extract_strided_slice %449 {offsets = [0, 96], sizes = [24, 32], strides = [1, 1]} : vector<24x128xf32> to vector<24x32xf32>
    %529 = arith.truncf %528 : vector<24x32xf32> to vector<24x32xbf16>
    %cst_155 = arith.constant dense<0.000000e+00> : vector<24x24xf32>
    %530 = tpu.matmul %525, %527, %cst_155 {dimension_numbers = #tpu.dot_dimension_numbers<[1], [1], [0], [0], [0, 0, 1, 0], [], []>} : vector<24x32xbf16>, vector<24x32xbf16>, vector<24x24xf32> -> vector<24x24xf32>
    %531 = vector.broadcast %6 : vector<1x24xf32> to vector<24x24xf32>
    %532 = arith.addf %530, %531 : vector<24x24xf32>
    %cst_156 = arith.constant dense<0xFF800000> : vector<24xf32>
    %533 = vector.multi_reduction <maximumf>, %532, %cst_156 [1] : vector<24x24xf32> to vector<24xf32>
    %534 = vector.shape_cast %533 : vector<24xf32> to vector<24x1xf32>
    %535 = vector.broadcast %534 : vector<24x1xf32> to vector<24x24xf32>
    %536 = arith.subf %532, %535 : vector<24x24xf32>
    %537 = math.exp %536 : vector<24x24xf32>
    %cst_157 = arith.constant dense<0.000000e+00> : vector<24xf32>
    %538 = vector.multi_reduction <add>, %537, %cst_157 [1] : vector<24x24xf32> to vector<24xf32>
    %539 = vector.shape_cast %538 : vector<24xf32> to vector<24x1xf32>
    %540 = tpu.reciprocal %539 {approx = true} : vector<24x1xf32> -> vector<24x1xf32>
    %541 = vector.broadcast %540 : vector<24x1xf32> to vector<24x24xf32>
    %542 = arith.mulf %537, %541 : vector<24x24xf32>
    %543 = arith.truncf %542 : vector<24x24xf32> to vector<24x24xbf16>
    %cst_158 = arith.constant dense<0.000000e+00> : vector<24x32xf32>
    %544 = tpu.matmul %543, %529, %cst_158 {dimension_numbers = #tpu.dot_dimension_numbers<[1], [0], [0], [1], [0, 0, 1, 1], [], []>} : vector<24x24xbf16>, vector<24x32xbf16>, vector<24x32xf32> -> vector<24x32xf32>
    %545 = arith.truncf %544 : vector<24x32xf32> to vector<24x32xbf16>
    %546 = vector.extract_strided_slice %344 {offsets = [96, 0], sizes = [32, 128], strides = [1, 1]} : vector<128x128xbf16> to vector<32x128xbf16>
    %cst_159 = arith.constant dense<0.000000e+00> : vector<24x128xf32>
    %547 = tpu.matmul %545, %546, %cst_159 {dimension_numbers = #tpu.dot_dimension_numbers<[1], [0], [0], [1], [0, 0, 1, 1], [], []>} : vector<24x32xbf16>, vector<32x128xbf16>, vector<24x128xf32> -> vector<24x128xf32>
    %548 = arith.addf %523, %547 : vector<24x128xf32>
    %549 = tpu.concatenate %446, %548 in 0 : vector<24x128xf32>, vector<24x128xf32> -> vector<48x128xf32>
    %550 = arith.addf %307, %549 : vector<48x128xf32>
    %c1_160 = arith.constant 1 : index
    %c0_161 = arith.constant 0 : index
    %c0_162 = arith.constant 0 : index
    %551 = vector.load %arg15[%c1_160, %c0_161, %c0_162] : memref<2x1x128xf32, #tpu.memory_space<vmem>>, vector<1x1x128xf32>
    %552 = vector.shape_cast %551 : vector<1x1x128xf32> to vector<1x128xf32>
    %553 = vector.broadcast %552 : vector<1x128xf32> to vector<48x128xf32>
    %554 = arith.addf %550, %553 : vector<48x128xf32>
    %c1_163 = arith.constant 1 : index
    %c0_164 = arith.constant 0 : index
    %c0_165 = arith.constant 0 : index
    %555 = vector.load %arg16[%c1_163, %c0_164, %c0_165] : memref<2x1x128xf32, #tpu.memory_space<vmem>>, vector<1x1x128xf32>
    %556 = vector.shape_cast %555 : vector<1x1x128xf32> to vector<1x128xf32>
    %c1_166 = arith.constant 1 : index
    %c0_167 = arith.constant 0 : index
    %c0_168 = arith.constant 0 : index
    %557 = vector.load %arg17[%c1_166, %c0_167, %c0_168] : memref<2x1x128xf32, #tpu.memory_space<vmem>>, vector<1x1x128xf32>
    %558 = vector.shape_cast %557 : vector<1x1x128xf32> to vector<1x128xf32>
    %cst_169 = arith.constant dense<0.000000e+00> : vector<48xf32>
    %559 = vector.multi_reduction <add>, %554, %cst_169 [1] : vector<48x128xf32> to vector<48xf32>
    %560 = vector.shape_cast %559 : vector<48xf32> to vector<48x1xf32>
    %cst_170 = arith.constant 1.280000e+02 : f32
    %561 = vector.broadcast %cst_170 : f32 to vector<48x1xf32>
    %562 = arith.divf %560, %561 : vector<48x1xf32>
    %563 = vector.broadcast %562 : vector<48x1xf32> to vector<48x128xf32>
    %564 = arith.subf %554, %563 : vector<48x128xf32>
    %565 = arith.mulf %564, %564 : vector<48x128xf32>
    %cst_171 = arith.constant dense<0.000000e+00> : vector<48xf32>
    %566 = vector.multi_reduction <add>, %565, %cst_171 [1] : vector<48x128xf32> to vector<48xf32>
    %567 = vector.shape_cast %566 : vector<48xf32> to vector<48x1xf32>
    %cst_172 = arith.constant 1.280000e+02 : f32
    %568 = vector.broadcast %cst_172 : f32 to vector<48x1xf32>
    %569 = arith.divf %567, %568 : vector<48x1xf32>
    %cst_173 = arith.constant 9.99999996E-13 : f32
    %570 = vector.broadcast %cst_173 : f32 to vector<48x1xf32>
    %571 = arith.addf %569, %570 : vector<48x1xf32>
    %572 = math.rsqrt %571 : vector<48x1xf32>
    %573 = vector.broadcast %572 : vector<48x1xf32> to vector<48x128xf32>
    %574 = arith.mulf %564, %573 : vector<48x128xf32>
    %575 = vector.broadcast %556 : vector<1x128xf32> to vector<48x128xf32>
    %576 = arith.mulf %574, %575 : vector<48x128xf32>
    %577 = vector.broadcast %558 : vector<1x128xf32> to vector<48x128xf32>
    %578 = arith.addf %576, %577 : vector<48x128xf32>
    %579 = arith.truncf %578 : vector<48x128xf32> to vector<48x128xbf16>
    %c1_174 = arith.constant 1 : index
    %c0_175 = arith.constant 0 : index
    %c0_176 = arith.constant 0 : index
    %580 = vector.load %arg18[%c1_174, %c0_175, %c0_176] : memref<2x128x256xbf16, #tpu.memory_space<vmem>>, vector<1x128x256xbf16>
    %581 = vector.shape_cast %580 : vector<1x128x256xbf16> to vector<128x256xbf16>
    %cst_177 = arith.constant dense<0.000000e+00> : vector<48x256xf32>
    %582 = tpu.matmul %579, %581, %cst_177 {dimension_numbers = #tpu.dot_dimension_numbers<[1], [0], [0], [1], [0, 0, 1, 1], [], []>} : vector<48x128xbf16>, vector<128x256xbf16>, vector<48x256xf32> -> vector<48x256xf32>
    %c1_178 = arith.constant 1 : index
    %c0_179 = arith.constant 0 : index
    %c0_180 = arith.constant 0 : index
    %583 = vector.load %arg19[%c1_178, %c0_179, %c0_180] : memref<2x1x256xf32, #tpu.memory_space<vmem>>, vector<1x1x256xf32>
    %584 = vector.shape_cast %583 : vector<1x1x256xf32> to vector<1x256xf32>
    %585 = vector.broadcast %584 : vector<1x256xf32> to vector<48x256xf32>
    %586 = arith.addf %582, %585 : vector<48x256xf32>
    %587 = arith.mulf %586, %586 : vector<48x256xf32>
    %588 = arith.mulf %586, %587 : vector<48x256xf32>
    %cst_181 = arith.constant 4.471500e-02 : f32
    %589 = vector.broadcast %cst_181 : f32 to vector<48x256xf32>
    %590 = arith.mulf %589, %588 : vector<48x256xf32>
    %591 = arith.addf %586, %590 : vector<48x256xf32>
    %cst_182 = arith.constant 0.797884583 : f32
    %592 = vector.broadcast %cst_182 : f32 to vector<48x256xf32>
    %593 = arith.mulf %592, %591 : vector<48x256xf32>
    %594 = math.tanh %593 : vector<48x256xf32>
    %cst_183 = arith.constant 1.000000e+00 : f32
    %595 = vector.broadcast %cst_183 : f32 to vector<48x256xf32>
    %596 = arith.addf %595, %594 : vector<48x256xf32>
    %cst_184 = arith.constant 5.000000e-01 : f32
    %597 = vector.broadcast %cst_184 : f32 to vector<48x256xf32>
    %598 = arith.mulf %597, %596 : vector<48x256xf32>
    %599 = arith.mulf %586, %598 : vector<48x256xf32>
    %600 = arith.truncf %599 : vector<48x256xf32> to vector<48x256xbf16>
    %c1_185 = arith.constant 1 : index
    %c0_186 = arith.constant 0 : index
    %c0_187 = arith.constant 0 : index
    %601 = vector.load %arg20[%c1_185, %c0_186, %c0_187] : memref<2x256x128xbf16, #tpu.memory_space<vmem>>, vector<1x256x128xbf16>
    %602 = vector.shape_cast %601 : vector<1x256x128xbf16> to vector<256x128xbf16>
    %cst_188 = arith.constant dense<0.000000e+00> : vector<48x128xf32>
    %603 = tpu.matmul %600, %602, %cst_188 {dimension_numbers = #tpu.dot_dimension_numbers<[1], [0], [0], [1], [0, 0, 1, 1], [], []>} : vector<48x256xbf16>, vector<256x128xbf16>, vector<48x128xf32> -> vector<48x128xf32>
    %604 = arith.addf %554, %603 : vector<48x128xf32>
    %c1_189 = arith.constant 1 : index
    %c0_190 = arith.constant 0 : index
    %c0_191 = arith.constant 0 : index
    %605 = vector.load %arg21[%c1_189, %c0_190, %c0_191] : memref<2x1x128xf32, #tpu.memory_space<vmem>>, vector<1x1x128xf32>
    %606 = vector.shape_cast %605 : vector<1x1x128xf32> to vector<1x128xf32>
    %607 = vector.broadcast %606 : vector<1x128xf32> to vector<48x128xf32>
    %608 = arith.addf %604, %607 : vector<48x128xf32>
    %c0_192 = arith.constant 0 : index
    %c0_193 = arith.constant 0 : index
    %609 = vector.load %arg6[%c0_192, %c0_193] : memref<1x128xf32, #tpu.memory_space<vmem>>, vector<1x128xf32>
    %c0_194 = arith.constant 0 : index
    %c0_195 = arith.constant 0 : index
    %610 = vector.load %arg7[%c0_194, %c0_195] : memref<1x128xf32, #tpu.memory_space<vmem>>, vector<1x128xf32>
    %cst_196 = arith.constant dense<0.000000e+00> : vector<48xf32>
    %611 = vector.multi_reduction <add>, %608, %cst_196 [1] : vector<48x128xf32> to vector<48xf32>
    %612 = vector.shape_cast %611 : vector<48xf32> to vector<48x1xf32>
    %cst_197 = arith.constant 1.280000e+02 : f32
    %613 = vector.broadcast %cst_197 : f32 to vector<48x1xf32>
    %614 = arith.divf %612, %613 : vector<48x1xf32>
    %615 = vector.broadcast %614 : vector<48x1xf32> to vector<48x128xf32>
    %616 = arith.subf %608, %615 : vector<48x128xf32>
    %617 = arith.mulf %616, %616 : vector<48x128xf32>
    %cst_198 = arith.constant dense<0.000000e+00> : vector<48xf32>
    %618 = vector.multi_reduction <add>, %617, %cst_198 [1] : vector<48x128xf32> to vector<48xf32>
    %619 = vector.shape_cast %618 : vector<48xf32> to vector<48x1xf32>
    %cst_199 = arith.constant 1.280000e+02 : f32
    %620 = vector.broadcast %cst_199 : f32 to vector<48x1xf32>
    %621 = arith.divf %619, %620 : vector<48x1xf32>
    %cst_200 = arith.constant 9.99999996E-13 : f32
    %622 = vector.broadcast %cst_200 : f32 to vector<48x1xf32>
    %623 = arith.addf %621, %622 : vector<48x1xf32>
    %624 = math.rsqrt %623 : vector<48x1xf32>
    %625 = vector.broadcast %624 : vector<48x1xf32> to vector<48x128xf32>
    %626 = arith.mulf %616, %625 : vector<48x128xf32>
    %627 = vector.broadcast %609 : vector<1x128xf32> to vector<48x128xf32>
    %628 = arith.mulf %626, %627 : vector<48x128xf32>
    %629 = vector.broadcast %610 : vector<1x128xf32> to vector<48x128xf32>
    %630 = arith.addf %628, %629 : vector<48x128xf32>
    %c0_201 = arith.constant 0 : index
    %c0_202 = arith.constant 0 : index
    %631 = vector.load %arg5[%c0_201, %c0_202] : memref<2x48xf32, #tpu.memory_space<vmem>>, vector<2x48xf32>
    %cst_203 = arith.constant dense<0.000000e+00> : vector<2x128xf32>
    %632 = tpu.matmul %631, %630, %cst_203 {dimension_numbers = #tpu.dot_dimension_numbers<[1], [0], [0], [1], [0, 0, 1, 1], [], []>} : vector<2x48xf32>, vector<48x128xf32>, vector<2x128xf32> -> vector<2x128xf32>
    %c0_204 = arith.constant 0 : index
    %c0_205 = arith.constant 0 : index
    %633 = vector.load %arg8[%c0_204, %c0_205] : memref<128x128xf32, #tpu.memory_space<vmem>>, vector<128x128xf32>
    %cst_206 = arith.constant dense<0.000000e+00> : vector<2x128xf32>
    %634 = tpu.matmul %632, %633, %cst_206 {dimension_numbers = #tpu.dot_dimension_numbers<[1], [0], [0], [1], [0, 0, 1, 1], [], []>} : vector<2x128xf32>, vector<128x128xf32>, vector<2x128xf32> -> vector<2x128xf32>
    %c0_207 = arith.constant 0 : index
    %c0_208 = arith.constant 0 : index
    %635 = vector.load %arg9[%c0_207, %c0_208] : memref<1x128xf32, #tpu.memory_space<vmem>>, vector<1x128xf32>
    %636 = vector.broadcast %635 : vector<1x128xf32> to vector<2x128xf32>
    %637 = arith.addf %634, %636 : vector<2x128xf32>
    %c0_209 = arith.constant 0 : index
    %c0_210 = arith.constant 0 : index
    %c0_211 = arith.constant 0 : index
    %638 = vector.load %arg22[%c0_209, %c0_210, %c0_211] : memref<1x2x128xf32, #tpu.memory_space<vmem>>, vector<1x2x128xf32>
    %639 = vector.shape_cast %638 : vector<1x2x128xf32> to vector<2x128xf32>
    %640 = vector.shape_cast %637 : vector<2x128xf32> to vector<1x2x128xf32>
    tpu.vector_store %arg22[%c0_209, %c0_210, %c0_211], %640 {strides = array<i32>} : memref<1x2x128xf32, #tpu.memory_space<vmem>>, vector<1x2x128xf32>,
    return
  }
  func.func @transform_0(%arg0: i32) -> (i32, i32) {
    %c0_i32 = arith.constant 0 : i32
    %c0_i32_0 = arith.constant 0 : i32
    return %arg0, %c0_i32 : i32, i32
  }
  func.func @transform_1(%arg0: i32) -> (i32, i32) {
    %c0_i32 = arith.constant 0 : i32
    %c0_i32_0 = arith.constant 0 : i32
    %c0_i32_1 = arith.constant 0 : i32
    return %c0_i32, %c0_i32_0 : i32, i32
  }
  func.func @transform_2(%arg0: i32) -> (i32, i32) {
    %c0_i32 = arith.constant 0 : i32
    %c0_i32_0 = arith.constant 0 : i32
    %c0_i32_1 = arith.constant 0 : i32
    return %c0_i32, %c0_i32_0 : i32, i32
  }
  func.func @transform_3(%arg0: i32) -> (i32, i32) {
    %c0_i32 = arith.constant 0 : i32
    %c0_i32_0 = arith.constant 0 : i32
    %c0_i32_1 = arith.constant 0 : i32
    return %c0_i32, %c0_i32_0 : i32, i32
  }
  func.func @transform_4(%arg0: i32) -> (i32, i32) {
    %c0_i32 = arith.constant 0 : i32
    %c0_i32_0 = arith.constant 0 : i32
    %c0_i32_1 = arith.constant 0 : i32
    return %c0_i32, %c0_i32_0 : i32, i32
  }
  func.func @transform_5(%arg0: i32) -> (i32, i32) {
    %c0_i32 = arith.constant 0 : i32
    %c0_i32_0 = arith.constant 0 : i32
    %c0_i32_1 = arith.constant 0 : i32
    return %c0_i32, %c0_i32_0 : i32, i32
  }
  func.func @transform_6(%arg0: i32) -> (i32, i32) {
    %c0_i32 = arith.constant 0 : i32
    %c0_i32_0 = arith.constant 0 : i32
    %c0_i32_1 = arith.constant 0 : i32
    return %c0_i32, %c0_i32_0 : i32, i32
  }
  func.func @transform_7(%arg0: i32) -> (i32, i32) {
    %c0_i32 = arith.constant 0 : i32
    %c0_i32_0 = arith.constant 0 : i32
    %c0_i32_1 = arith.constant 0 : i32
    return %c0_i32, %c0_i32_0 : i32, i32
  }
  func.func @transform_8(%arg0: i32) -> (i32, i32) {
    %c0_i32 = arith.constant 0 : i32
    %c0_i32_0 = arith.constant 0 : i32
    %c0_i32_1 = arith.constant 0 : i32
    return %c0_i32, %c0_i32_0 : i32, i32
  }
  func.func @transform_9(%arg0: i32) -> (i32, i32, i32) {
    %c0_i32 = arith.constant 0 : i32
    %c0_i32_0 = arith.constant 0 : i32
    %c0_i32_1 = arith.constant 0 : i32
    %c0_i32_2 = arith.constant 0 : i32
    return %c0_i32, %c0_i32_0, %c0_i32_1 : i32, i32, i32
  }
  func.func @transform_10(%arg0: i32) -> (i32, i32, i32) {
    %c0_i32 = arith.constant 0 : i32
    %c0_i32_0 = arith.constant 0 : i32
    %c0_i32_1 = arith.constant 0 : i32
    %c0_i32_2 = arith.constant 0 : i32
    return %c0_i32, %c0_i32_0, %c0_i32_1 : i32, i32, i32
  }
  func.func @transform_11(%arg0: i32) -> (i32, i32, i32) {
    %c0_i32 = arith.constant 0 : i32
    %c0_i32_0 = arith.constant 0 : i32
    %c0_i32_1 = arith.constant 0 : i32
    %c0_i32_2 = arith.constant 0 : i32
    return %c0_i32, %c0_i32_0, %c0_i32_1 : i32, i32, i32
  }
  func.func @transform_12(%arg0: i32) -> (i32, i32, i32) {
    %c0_i32 = arith.constant 0 : i32
    %c0_i32_0 = arith.constant 0 : i32
    %c0_i32_1 = arith.constant 0 : i32
    %c0_i32_2 = arith.constant 0 : i32
    return %c0_i32, %c0_i32_0, %c0_i32_1 : i32, i32, i32
  }
  func.func @transform_13(%arg0: i32) -> (i32, i32, i32) {
    %c0_i32 = arith.constant 0 : i32
    %c0_i32_0 = arith.constant 0 : i32
    %c0_i32_1 = arith.constant 0 : i32
    %c0_i32_2 = arith.constant 0 : i32
    return %c0_i32, %c0_i32_0, %c0_i32_1 : i32, i32, i32
  }
  func.func @transform_14(%arg0: i32) -> (i32, i32, i32) {
    %c0_i32 = arith.constant 0 : i32
    %c0_i32_0 = arith.constant 0 : i32
    %c0_i32_1 = arith.constant 0 : i32
    %c0_i32_2 = arith.constant 0 : i32
    return %c0_i32, %c0_i32_0, %c0_i32_1 : i32, i32, i32
  }
  func.func @transform_15(%arg0: i32) -> (i32, i32, i32) {
    %c0_i32 = arith.constant 0 : i32
    %c0_i32_0 = arith.constant 0 : i32
    %c0_i32_1 = arith.constant 0 : i32
    %c0_i32_2 = arith.constant 0 : i32
    return %c0_i32, %c0_i32_0, %c0_i32_1 : i32, i32, i32
  }
  func.func @transform_16(%arg0: i32) -> (i32, i32, i32) {
    %c0_i32 = arith.constant 0 : i32
    %c0_i32_0 = arith.constant 0 : i32
    %c0_i32_1 = arith.constant 0 : i32
    %c0_i32_2 = arith.constant 0 : i32
    return %c0_i32, %c0_i32_0, %c0_i32_1 : i32, i32, i32
  }
  func.func @transform_17(%arg0: i32) -> (i32, i32, i32) {
    %c0_i32 = arith.constant 0 : i32
    %c0_i32_0 = arith.constant 0 : i32
    %c0_i32_1 = arith.constant 0 : i32
    %c0_i32_2 = arith.constant 0 : i32
    return %c0_i32, %c0_i32_0, %c0_i32_1 : i32, i32, i32
  }
  func.func @transform_18(%arg0: i32) -> (i32, i32, i32) {
    %c0_i32 = arith.constant 0 : i32
    %c0_i32_0 = arith.constant 0 : i32
    %c0_i32_1 = arith.constant 0 : i32
    %c0_i32_2 = arith.constant 0 : i32
    return %c0_i32, %c0_i32_0, %c0_i32_1 : i32, i32, i32
  }
  func.func @transform_19(%arg0: i32) -> (i32, i32, i32) {
    %c0_i32 = arith.constant 0 : i32
    %c0_i32_0 = arith.constant 0 : i32
    %c0_i32_1 = arith.constant 0 : i32
    %c0_i32_2 = arith.constant 0 : i32
    return %c0_i32, %c0_i32_0, %c0_i32_1 : i32, i32, i32
  }
  func.func @transform_20(%arg0: i32) -> (i32, i32, i32) {
    %c0_i32 = arith.constant 0 : i32
    %c0_i32_0 = arith.constant 0 : i32
    %c0_i32_1 = arith.constant 0 : i32
    %c0_i32_2 = arith.constant 0 : i32
    return %c0_i32, %c0_i32_0, %c0_i32_1 : i32, i32, i32
  }
  func.func @transform_21(%arg0: i32) -> (i32, i32, i32) {
    %c0_i32 = arith.constant 0 : i32
    %c0_i32_0 = arith.constant 0 : i32
    %c0_i32_1 = arith.constant 0 : i32
    return %arg0, %c0_i32, %c0_i32_0 : i32, i32, i32
  }
}

</mosaic_0001>

<llo_original>
// kernel: _forward_impl.1
$region0: #{_forward_impl.1}
  #allocation0 [shape = 'u32[]', space=smem, size = 0x4, offset = 0x4, fixed_abs, tag = 'smem constant byte address 0x4 - core index']
  #allocation1 [shape = 'u32[144,128]{1,0:T(1,128)}', space=vmem, size = 0x12000, scoped, tag = 'internal scratch']
  %s0 = inlined_call_operand.vmem [shape: f32[48,128], index: 0, kind: input, shape index: {}]
  %s1 = inlined_call_operand.vmem [shape: bf16[128,128], index: 1, kind: input, shape index: {}]
  %s2 = inlined_call_operand.vmem [shape: f32[48,128], index: 2, kind: input, shape index: {}]
  %s3 = inlined_call_operand.vmem [shape: f32[1,24], index: 3, kind: input, shape index: {}]
  %s4 = inlined_call_operand.vmem [shape: f32[2,48], index: 4, kind: input, shape index: {}]
  %s5 = inlined_call_operand.vmem [shape: f32[1,128], index: 5, kind: input, shape index: {}]
  %s6 = inlined_call_operand.vmem [shape: f32[1,128], index: 6, kind: input, shape index: {}]
  %s7 = inlined_call_operand.vmem [shape: f32[128,128], index: 7, kind: input, shape index: {}]
  %s8 = inlined_call_operand.vmem [shape: f32[1,128], index: 8, kind: input, shape index: {}]
  %s9 = inlined_call_operand.vmem [shape: f32[2,1,128], index: 9, kind: input, shape index: {}]
  %s10 = inlined_call_operand.vmem [shape: f32[2,1,128], index: 10, kind: input, shape index: {}]
  %s11 = inlined_call_operand.vmem [shape: bf16[2,128,384], index: 11, kind: input, shape index: {}]
  %s12 = inlined_call_operand.vmem [shape: f32[2,1,384], index: 12, kind: input, shape index: {}]
  %s13 = inlined_call_operand.vmem [shape: bf16[2,128,128], index: 13, kind: input, shape index: {}]
  %s14 = inlined_call_operand.vmem [shape: f32[2,1,128], index: 14, kind: input, shape index: {}]
  %s15 = inlined_call_operand.vmem [shape: f32[2,1,128], index: 15, kind: input, shape index: {}]
  %s16 = inlined_call_operand.vmem [shape: f32[2,1,128], index: 16, kind: input, shape index: {}]
  %s17 = inlined_call_operand.vmem [shape: bf16[2,128,256], index: 17, kind: input, shape index: {}]
  %s18 = inlined_call_operand.vmem [shape: f32[2,1,256], index: 18, kind: input, shape index: {}]
  %s19 = inlined_call_operand.vmem [shape: bf16[2,256,128], index: 19, kind: input, shape index: {}]
  %s20 = inlined_call_operand.vmem [shape: f32[2,1,128], index: 20, kind: input, shape index: {}]
  %s21 = inlined_call_operand.hbm [shape: f32[1,2,128], index: 21, kind: output, shape index: {}]
  %s22 = sld [smem:[#allocation0]]
  $region94: #{_forward_impl.1} parent=0
    _
  %s24 = ssub.s32 1, %s22
  %s25 = scalar_select 0, %s24, %s22
  $region1: #{_forward_impl.1} parent=0
    #allocation2 [shape = 'u8[1024]{0}', space=vmem, size = 0x400, scoped, tag = 'output window, operand 0, single buffered']
    #allocation3 [shape = 's32[1]{0}', space=sflag, size = 0x4, scoped, tag = 'scoped memory for _forward_impl.1']
    %26 = vsyncpa [#allocation3], 0
    // Predicated region
    $region2: #{_forward_impl.1} parent=1 // pred_check
      _
    $region3: #{_forward_impl.1} parent=1 // pred_check_branch
      %28 = sbr.rel (0) target = $region5
    $region4: #{_forward_impl.1} parent=1 // pred_region
      _
    $region5: #{_forward_impl.1} parent=1 // pred_fallthru
      _
    // Predicated region
    $region6: #{_forward_impl.1} parent=1 // pred_check
      _
    $region7: #{_forward_impl.1} parent=1 // pred_check_branch
      %30 = sbr.rel (0) target = $region9
    $region8: #{_forward_impl.1} parent=1 // pred_region
      _
    $region9: #{_forward_impl.1} parent=1 // pred_fallthru
      _
    // Predicated region
    $region10: #{_forward_impl.1} parent=1 // pred_check
      _
    $region11: #{_forward_impl.1} parent=1 // pred_check_branch
      %32 = sbr.rel (0) target = $region13
    $region12: #{_forward_impl.1} parent=1 // pred_region
      _
    $region13: #{_forward_impl.1} parent=1 // pred_fallthru
      _
    // Predicated region
    $region14: #{_forward_impl.1} parent=1 // pred_check
      _
    $region15: #{_forward_impl.1} parent=1 // pred_check_branch
      %34 = sbr.rel (0) target = $region17
    $region16: #{_forward_impl.1} parent=1 // pred_region
      _
    $region17: #{_forward_impl.1} parent=1 // pred_fallthru
      _
    // Predicated region
    $region18: #{_forward_impl.1} parent=1 // pred_check
      _
    $region19: #{_forward_impl.1} parent=1 // pred_check_branch
      %36 = sbr.rel (0) target = $region21
    $region20: #{_forward_impl.1} parent=1 // pred_region
      _
    $region21: #{_forward_impl.1} parent=1 // pred_fallthru
      _
    // Predicated region
    $region22: #{_forward_impl.1} parent=1 // pred_check
      _
    $region23: #{_forward_impl.1} parent=1 // pred_check_branch
      %38 = sbr.rel (0) target = $region25
    $region24: #{_forward_impl.1} parent=1 // pred_region
      _
    $region25: #{_forward_impl.1} parent=1 // pred_fallthru
      _
    // Predicated region
    $region26: #{_forward_impl.1} parent=1 // pred_check
      _
    $region27: #{_forward_impl.1} parent=1 // pred_check_branch
      %40 = sbr.rel (0) target = $region29
    $region28: #{_forward_impl.1} parent=1 // pred_region
      _
    $region29: #{_forward_impl.1} parent=1 // pred_fallthru
      _
    // Predicated region
    $region30: #{_forward_impl.1} parent=1 // pred_check
      _
    $region31: #{_forward_impl.1} parent=1 // pred_check_branch
      %42 = sbr.rel (0) target = $region33
    $region32: #{_forward_impl.1} parent=1 // pred_region
      _
    $region33: #{_forward_impl.1} parent=1 // pred_fallthru
      _
    // Predicated region
    $region34: #{_forward_impl.1} parent=1 // pred_check
      _
    $region35: #{_forward_impl.1} parent=1 // pred_check_branch
      %44 = sbr.rel (0) target = $region37
    $region36: #{_forward_impl.1} parent=1 // pred_region
      _
    $region37: #{_forward_impl.1} parent=1 // pred_fallthru
      _
    // Predicated region
    $region38: #{_forward_impl.1} parent=1 // pred_check
      _
    $region39: #{_forward_impl.1} parent=1 // pred_check_branch
      %46 = sbr.rel (0) target = $region41
    $region40: #{_forward_impl.1} parent=1 // pred_region
      _
    $region41: #{_forward_impl.1} parent=1 // pred_fallthru
      _
    // Predicated region
    $region42: #{_forward_impl.1} parent=1 // pred_check
      _
    $region43: #{_forward_impl.1} parent=1 // pred_check_branch
      %48 = sbr.rel (0) target = $region45
    $region44: #{_forward_impl.1} parent=1 // pred_region
      _
    $region45: #{_forward_impl.1} parent=1 // pred_fallthru
      _
    // Predicated region
    $region46: #{_forward_impl.1} parent=1 // pred_check
      _
    $region47: #{_forward_impl.1} parent=1 // pred_check_branch
      %50 = sbr.rel (0) target = $region49
    $region48: #{_forward_impl.1} parent=1 // pred_region
      _
    $region49: #{_forward_impl.1} parent=1 // pred_fallthru
      _
    // Predicated region
    $region50: #{_forward_impl.1} parent=1 // pred_check
      _
    $region51: #{_forward_impl.1} parent=1 // pred_check_branch
      %52 = sbr.rel (0) target = $region53
    $region52: #{_forward_impl.1} parent=1 // pred_region
      _
    $region53: #{_forward_impl.1} parent=1 // pred_fallthru
      _
    // Predicated region
    $region54: #{_forward_impl.1} parent=1 // pred_check
      _
    $region55: #{_forward_impl.1} parent=1 // pred_check_branch
      %54 = sbr.rel (0) target = $region57
    $region56: #{_forward_impl.1} parent=1 // pred_region
      _
    $region57: #{_forward_impl.1} parent=1 // pred_fallthru
      _
    // Predicated region
    $region58: #{_forward_impl.1} parent=1 // pred_check
      _
    $region59: #{_forward_impl.1} parent=1 // pred_check_branch
      %56 = sbr.rel (0) target = $region61
    $region60: #{_forward_impl.1} parent=1 // pred_region
      _
    $region61: #{_forward_impl.1} parent=1 // pred_fallthru
      _
    // Predicated region
    $region62: #{_forward_impl.1} parent=1 // pred_check
      _
    $region63: #{_forward_impl.1} parent=1 // pred_check_branch
      %58 = sbr.rel (0) target = $region65
    $region64: #{_forward_impl.1} parent=1 // pred_region
      _
    $region65: #{_forward_impl.1} parent=1 // pred_fallthru
      _
    // Predicated region
    $region66: #{_forward_impl.1} parent=1 // pred_check
      _
    $region67: #{_forward_impl.1} parent=1 // pred_check_branch
      %60 = sbr.rel (0) target = $region69
    $region68: #{_forward_impl.1} parent=1 // pred_region
      _
    $region69: #{_forward_impl.1} parent=1 // pred_fallthru
      _
    // Predicated region
    $region70: #{_forward_impl.1} parent=1 // pred_check
      _
    $region71: #{_forward_impl.1} parent=1 // pred_check_branch
      %62 = sbr.rel (0) target = $region73
    $region72: #{_forward_impl.1} parent=1 // pred_region
      _
    $region73: #{_forward_impl.1} parent=1 // pred_fallthru
      _
    // Predicated region
    $region74: #{_forward_impl.1} parent=1 // pred_check
      _
    $region75: #{_forward_impl.1} parent=1 // pred_check_branch
      %64 = sbr.rel (0) target = $region77
    $region76: #{_forward_impl.1} parent=1 // pred_region
      _
    $region77: #{_forward_impl.1} parent=1 // pred_fallthru
      _
    // Predicated region
    $region78: #{_forward_impl.1} parent=1 // pred_check
      _
    $region79: #{_forward_impl.1} parent=1 // pred_check_branch
      %66 = sbr.rel (0) target = $region81
    $region80: #{_forward_impl.1} parent=1 // pred_region
      _
    $region81: #{_forward_impl.1} parent=1 // pred_fallthru
      _
    // Predicated region
    $region82: #{_forward_impl.1} parent=1 // pred_check
      _
    $region83: #{_forward_impl.1} parent=1 // pred_check_branch
      %68 = sbr.rel (0) target = $region85
    $region84: #{_forward_impl.1} parent=1 // pred_region
      _
    $region85: #{_forward_impl.1} parent=1 // pred_fallthru
      _
    %v70 = vld [vmem:[%s0] sm:$0xff]
    %v71 = vld [vmem:[%s0 + $0x8] sm:$0xff]
    %v72 = vld [vmem:[%s0 + $0x10] sm:$0xff]
    %v73 = vld [vmem:[%s0 + $0x18] sm:$0xff]
    %v74 = vld [vmem:[%s0 + $0x20] sm:$0xff]
    %v75 = vld [vmem:[%s0 + $0x28] sm:$0xff]
    %v76 = vpack.c.bf16 %v71, %v70
    %v77 = vpack.c.bf16 %v73, %v72
    %v78 = vpack.c.bf16 %v75, %v74
    %v79 = vld [vmem:[%s1] sm:$0xf]
    %v80 = vld [vmem:[%s1 + $0x4] sm:$0xf]
    %v81 = vld [vmem:[%s1 + $0x8] sm:$0xf]
    %v82 = vld [vmem:[%s1 + $0xc] sm:$0xf]
    %v83 = vld [vmem:[%s1 + $0x10] sm:$0xf]
    %v84 = vld [vmem:[%s1 + $0x14] sm:$0xf]
    %v85 = vld [vmem:[%s1 + $0x18] sm:$0xf]
    %v86 = vld [vmem:[%s1 + $0x1c] sm:$0xf]
    %v87 = vld [vmem:[%s1 + $0x20] sm:$0xf]
    %v88 = vld [vmem:[%s1 + $0x24] sm:$0xf]
    %v89 = vld [vmem:[%s1 + $0x28] sm:$0xf]
    %v90 = vld [vmem:[%s1 + $0x2c] sm:$0xf]
    %v91 = vld [vmem:[%s1 + $0x30] sm:$0xf]
    %v92 = vld [vmem:[%s1 + $0x34] sm:$0xf]
    %v93 = vld [vmem:[%s1 + $0x38] sm:$0xf]
    %v94 = vld [vmem:[%s1 + $0x3c] sm:$0xf]
    %v95 = vld [vmem:[%s2] sm:$0xff]
    %v96 = vld [vmem:[%s2 + $0x8] sm:$0xff]
    %v97 = vld [vmem:[%s2 + $0x10] sm:$0xff]
    %v98 = vld [vmem:[%s2 + $0x18] sm:$0xff]
    %v99 = vld [vmem:[%s2 + $0x20] sm:$0xff]
    %v100 = vld [vmem:[%s2 + $0x28] sm:$0xff]
    %v117 = vunpack.c.l.b16 %v79
    %v118 = vunpack.c.l.b16 %v80
    %v119 = vunpack.c.l.b16 %v81
    %v120 = vunpack.c.l.b16 %v82
    %v121 = vunpack.c.l.b16 %v83
    %v122 = vunpack.c.l.b16 %v84
    %v123 = vunpack.c.l.b16 %v85
    %v124 = vunpack.c.l.b16 %v86
    %v125 = vunpack.c.l.b16 %v87
    %v126 = vunpack.c.l.b16 %v88
    %v127 = vunpack.c.l.b16 %v89
    %v128 = vunpack.c.l.b16 %v90
    %v129 = vunpack.c.l.b16 %v91
    %v130 = vunpack.c.l.b16 %v92
    %v131 = vunpack.c.l.b16 %v93
    %v132 = vunpack.c.l.b16 %v94
    %v133 = vpack.c.b16 %v118, %v117
    %v134 = vpack.c.b16 %v120, %v119
    %v135 = vpack.c.b16 %v122, %v121
    %v136 = vpack.c.b16 %v124, %v123
    %v137 = vpack.c.b16 %v126, %v125
    %v138 = vpack.c.b16 %v128, %v127
    %v139 = vpack.c.b16 %v130, %v129
    %v140 = vpack.c.b16 %v132, %v131
    %149 = vmatprep.subr.bf16.mxu0 0
    %150 = vmatpush1.bf16.msra.mxu0 %v133
    %151 = vmatprep.subr.bf16.mxu0 0
    %152 = vmatpush1.bf16.msra.mxu0 %v134
    %153 = vmatprep.subr.bf16.mxu0 0
    %154 = vmatpush1.bf16.msra.mxu0 %v135
    %155 = vmatprep.subr.bf16.mxu0 0
    %156 = vmatpush1.bf16.msra.mxu0 %v136
    %157 = vmatprep.subr.bf16.mxu0 0
    %158 = vmatpush1.bf16.msra.mxu0 %v137
    %159 = vmatprep.subr.bf16.mxu0 0
    %160 = vmatpush1.bf16.msra.mxu0 %v138
    %161 = vmatprep.subr.bf16.mxu0 0
    %162 = vmatpush1.bf16.msra.mxu0 %v139
    %163 = vmatprep.subr.bf16.mxu0 0
    %164 = vmatpush1.bf16.msra.mxu0 %v140
    %165 = vmatprep.subr.bf16.mxu0 0
    %166 = vmatpush1.bf16.msra.mxu0 0
    %167 = vmatprep.subr.bf16.mxu0 0
    %168 = vmatpush1.bf16.msra.mxu0 0
    %169 = vmatprep.subr.bf16.mxu0 0
    %170 = vmatpush1.bf16.msra.mxu0 0
    %171 = vmatprep.subr.bf16.mxu0 0
    %172 = vmatpush1.bf16.msra.mxu0 0
    %173 = vmatprep.subr.bf16.mxu0 0
    %174 = vmatpush1.bf16.msra.mxu0 0
    %175 = vmatprep.subr.bf16.mxu0 0
    %176 = vmatpush1.bf16.msra.mxu0 0
    %177 = vmatprep.subr.bf16.mxu0 0
    %178 = vmatpush1.bf16.msra.mxu0 0
    %179 = vmatprep.subr.bf16.mxu0 0
    %180 = vmatpush1.bf16.msra.mxu0 0
    %181 = vmatprep.mubr.bf16.mxu0 0
    %182 = vmatmul.mubr.bf16.gmra.mrb[0].mxu0 %v76
    %v183 = vpop.f32.mrb[0].mxu0
    %v184 = vadd.f32 %v95, %v183
    %v185 = vpop.f32.mrb[0].mxu0
    %v186 = vpop.f32.mrb[0].mxu0
    %v187 = vadd.f32 %v96, %v186
    %v188 = vpop.f32.mrb[0].mxu0
    %189 = vmatprep.mubr.bf16.mxu0 0
    %190 = vmatmul.mubr.bf16.gmra.mrb[0].mxu0 %v77
    %v191 = vpop.f32.mrb[0].mxu0
    %v192 = vadd.f32 %v97, %v191
    %v193 = vpop.f32.mrb[0].mxu0
    %v194 = vpop.f32.mrb[0].mxu0
    %v195 = vadd.f32 %v98, %v194
    %v196 = vpop.f32.mrb[0].mxu0
    %197 = vmatprep.mubr.bf16.mxu0 0
    %198 = vmatmul.mubr.bf16.gmra.mrb[0].mxu0 %v78
    %v199 = vpop.f32.mrb[0].mxu0
    %v200 = vadd.f32 %v99, %v199
    %v201 = vpop.f32.mrb[0].mxu0
    %v202 = vpop.f32.mrb[0].mxu0
    %v203 = vadd.f32 %v100, %v202
    %v204 = vpop.f32.mrb[0].mxu0
    %205 = vdwg.mxu0
    %v206 = vld [vmem:[%s3] sm:$0x1]
    %v207 = vld [vmem:[%s9] sm:$0x1]
    %v208 = vld [vmem:[%s10] sm:$0x1]
    %209 = vadd.xlane.f32.xlu0 %v184
    %v210 = vpop.xlane.xlu0 %209
    %211 = vadd.xlane.f32.xlu0 %v187
    %v212 = vpop.xlane.xlu0 %211
    %213 = vadd.xlane.f32.xlu0 %v192
    %v214 = vpop.xlane.xlu0 %213
    %215 = vadd.xlane.f32.xlu0 %v195
    %v216 = vpop.xlane.xlu0 %215
    %217 = vadd.xlane.f32.xlu0 %v200
    %v218 = vpop.xlane.xlu0 %217
    %219 = vadd.xlane.f32.xlu0 %v203
    %v220 = vpop.xlane.xlu0 %219
    %v221 = vrcp.pop 128.0
    %v222 = vmul.f32 %v210, %v221
    %v223 = vmul.f32 %v212, %v221
    %v224 = vmul.f32 %v214, %v221
    %v225 = vmul.f32 %v216, %v221
    %v226 = vmul.f32 %v218, %v221
    %v227 = vmul.f32 %v220, %v221
    %v228 = vsub.f32 %v184, %v222
    %v229 = vsub.f32 %v187, %v223
    %v230 = vsub.f32 %v192, %v224
    %v231 = vsub.f32 %v195, %v225
    %v232 = vsub.f32 %v200, %v226
    %v233 = vsub.f32 %v203, %v227
    %v234 = vmul.f32 %v228, %v228
    %v235 = vmul.f32 %v229, %v229
    %v236 = vmul.f32 %v230, %v230
    %v237 = vmul.f32 %v231, %v231
    %v238 = vmul.f32 %v232, %v232
    %v239 = vmul.f32 %v233, %v233
    %240 = vadd.xlane.f32.xlu0 %v234
    %v241 = vpop.xlane.xlu0 %240
    %242 = vadd.xlane.f32.xlu0 %v235
    %v243 = vpop.xlane.xlu0 %242
    %244 = vadd.xlane.f32.xlu0 %v236
    %v245 = vpop.xlane.xlu0 %244
    %246 = vadd.xlane.f32.xlu0 %v237
    %v247 = vpop.xlane.xlu0 %246
    %248 = vadd.xlane.f32.xlu0 %v238
    %v249 = vpop.xlane.xlu0 %248
    %250 = vadd.xlane.f32.xlu0 %v239
    %v251 = vpop.xlane.xlu0 %250
    %v252 = vmul.f32 %v241, %v221
    %v253 = vmul.f32 %v243, %v221
    %v254 = vmul.f32 %v245, %v221
    %v255 = vmul.f32 %v247, %v221
    %v256 = vmul.f32 %v249, %v221
    %v257 = vmul.f32 %v251, %v221
    %v258 = vadd.f32 %v252, 1e-12
    %v259 = vadd.f32 %v253, 1e-12
    %v260 = vadd.f32 %v254, 1e-12
    %v261 = vadd.f32 %v255, 1e-12
    %v262 = vadd.f32 %v256, 1e-12
    %v263 = vadd.f32 %v257, 1e-12
    %v264 = vrsqrt.pop %v258
    %v265 = vrsqrt.pop %v259
    %v266 = vrsqrt.pop %v260
    %v267 = vrsqrt.pop %v261
    %v268 = vrsqrt.pop %v262
    %v269 = vrsqrt.pop %v263
    %v270 = vmul.f32 %v228, %v264
    %v271 = vmul.f32 %v229, %v265
    %v272 = vmul.f32 %v230, %v266
    %v273 = vmul.f32 %v231, %v267
    %v274 = vmul.f32 %v232, %v268
    %v275 = vmul.f32 %v233, %v269
    %v277 = vlaneseq
    %v278 = vshrl.u32 %v277, 7
    %v279 = vsub.s32 0, %v278
    %v280 = vrot.slane %v207, %v279
    %v282 = vmul.f32 %v270, %v280
    %v283 = vmul.f32 %v271, %v280
    %v284 = vmul.f32 %v272, %v280
    %v285 = vmul.f32 %v273, %v280
    %v286 = vmul.f32 %v274, %v280
    %v287 = vmul.f32 %v275, %v280
    %v289 = vlaneseq
    %v290 = vshrl.u32 %v289, 7
    %v291 = vsub.s32 0, %v290
    %v292 = vrot.slane %v208, %v291
    %v294 = vadd.f32 %v282, %v292
    %v295 = vadd.f32 %v283, %v292
    %v296 = vadd.f32 %v284, %v292
    %v297 = vadd.f32 %v285, %v292
    %v298 = vadd.f32 %v286, %v292
    %v299 = vadd.f32 %v287, %v292
    %v300 = vpack.c.bf16 %v295, %v294
    %v301 = vpack.c.bf16 %v297, %v296
    %v302 = vpack.c.bf16 %v299, %v298
    %v303 = vld [vmem:[%s11] sm:$0xff]
    %v304 = vld [vmem:[%s11 + $0x8] sm:$0xf]
    %v305 = vld [vmem:[%s11 + $0xc] sm:$0xff]
    %v306 = vld [vmem:[%s11 + $0x14] sm:$0xf]
    %v307 = vld [vmem:[%s11 + $0x18] sm:$0xff]
    %v308 = vld [vmem:[%s11 + $0x20] sm:$0xf]
    %v309 = vld [vmem:[%s11 + $0x24] sm:$0xff]
    %v310 = vld [vmem:[%s11 + $0x2c] sm:$0xf]
    %v311 = vld [vmem:[%s11 + $0x30] sm:$0xff]
    %v312 = vld [vmem:[%s11 + $0x38] sm:$0xf]
    %v313 = vld [vmem:[%s11 + $0x3c] sm:$0xff]
    %v314 = vld [vmem:[%s11 + $0x44] sm:$0xf]
    %v315 = vld [vmem:[%s11 + $0x48] sm:$0xff]
    %v316 = vld [vmem:[%s11 + $0x50] sm:$0xf]
    %v317 = vld [vmem:[%s11 + $0x54] sm:$0xff]
    %v318 = vld [vmem:[%s11 + $0x5c] sm:$0xf]
    %v319 = vld [vmem:[%s11 + $0x60] sm:$0xff]
    %v320 = vld [vmem:[%s11 + $0x68] sm:$0xf]
    %v321 = vld [vmem:[%s11 + $0x6c] sm:$0xff]
    %v322 = vld [vmem:[%s11 + $0x74] sm:$0xf]
    %v323 = vld [vmem:[%s11 + $0x78] sm:$0xff]
    %v324 = vld [vmem:[%s11 + $0x80] sm:$0xf]
    %v325 = vld [vmem:[%s11 + $0x84] sm:$0xff]
    %v326 = vld [vmem:[%s11 + $0x8c] sm:$0xf]
    %v327 = vld [vmem:[%s11 + $0x90] sm:$0xff]
    %v328 = vld [vmem:[%s11 + $0x98] sm:$0xf]
    %v329 = vld [vmem:[%s11 + $0x9c] sm:$0xff]
    %v330 = vld [vmem:[%s11 + $0xa4] sm:$0xf]
    %v331 = vld [vmem:[%s11 + $0xa8] sm:$0xff]
    %v332 = vld [vmem:[%s11 + $0xb0] sm:$0xf]
    %v333 = vld [vmem:[%s11 + $0xb4] sm:$0xff]
    %v334 = vld [vmem:[%s11 + $0xbc] sm:$0xf]
    %v335 = vld [vmem:[%s12] sm:$0x7]
    %v337 = vlaneseq
    %v338 = vshrl.u32 %v337, 7
    %v339 = vsub.s32 0, %v338
    %v340 = vrot.slane %v335, %v339
    %v341 = vlaneseq
    %v342 = vshrl.u32 %v341, 7
    %v343 = vsub.s32 1, %v342
    %v344 = vrot.slane %v335, %v343
    %v345 = vlaneseq
    %v346 = vshrl.u32 %v345, 7
    %v347 = vsub.s32 2, %v346
    %v348 = vrot.slane %v335, %v347
    %v384 = vunpack.c.l.b16 %v303
    %v385 = vunpack.c.h.b16 %v303
    %v386 = vunpack.c.l.b16 %v304
    %v387 = vunpack.c.l.b16 %v305
    %v388 = vunpack.c.h.b16 %v305
    %v389 = vunpack.c.l.b16 %v306
    %v390 = vunpack.c.l.b16 %v307
    %v391 = vunpack.c.h.b16 %v307
    %v392 = vunpack.c.l.b16 %v308
    %v393 = vunpack.c.l.b16 %v309
    %v394 = vunpack.c.h.b16 %v309
    %v395 = vunpack.c.l.b16 %v310
    %v396 = vunpack.c.l.b16 %v311
    %v397 = vunpack.c.h.b16 %v311
    %v398 = vunpack.c.l.b16 %v312
    %v399 = vunpack.c.l.b16 %v313
    %v400 = vunpack.c.h.b16 %v313
    %v401 = vunpack.c.l.b16 %v314
    %v402 = vunpack.c.l.b16 %v315
    %v403 = vunpack.c.h.b16 %v315
    %v404 = vunpack.c.l.b16 %v316
    %v405 = vunpack.c.l.b16 %v317
    %v406 = vunpack.c.h.b16 %v317
    %v407 = vunpack.c.l.b16 %v318
    %v408 = vunpack.c.l.b16 %v319
    %v409 = vunpack.c.h.b16 %v319
    %v410 = vunpack.c.l.b16 %v320
    %v411 = vunpack.c.l.b16 %v321
    %v412 = vunpack.c.h.b16 %v321
    %v413 = vunpack.c.l.b16 %v322
    %v414 = vunpack.c.l.b16 %v323
    %v415 = vunpack.c.h.b16 %v323
    %v416 = vunpack.c.l.b16 %v324
    %v417 = vunpack.c.l.b16 %v325
    %v418 = vunpack.c.h.b16 %v325
    %v419 = vunpack.c.l.b16 %v326
    %v420 = vunpack.c.l.b16 %v327
    %v421 = vunpack.c.h.b16 %v327
    %v422 = vunpack.c.l.b16 %v328
    %v423 = vunpack.c.l.b16 %v329
    %v424 = vunpack.c.h.b16 %v329
    %v425 = vunpack.c.l.b16 %v330
    %v426 = vunpack.c.l.b16 %v331
    %v427 = vunpack.c.h.b16 %v331
    %v428 = vunpack.c.l.b16 %v332
    %v429 = vunpack.c.l.b16 %v333
    %v430 = vunpack.c.h.b16 %v333
    %v431 = vunpack.c.l.b16 %v334
    %v432 = vpack.c.b16 %v387, %v384
    %v433 = vpack.c.b16 %v388, %v385
    %v434 = vpack.c.b16 %v389, %v386
    %v435 = vpack.c.b16 %v393, %v390
    %v436 = vpack.c.b16 %v394, %v391
    %v437 = vpack.c.b16 %v395, %v392
    %v438 = vpack.c.b16 %v399, %v396
    %v439 = vpack.c.b16 %v400, %v397
    %v440 = vpack.c.b16 %v401, %v398
    %v441 = vpack.c.b16 %v405, %v402
    %v442 = vpack.c.b16 %v406, %v403
    %v443 = vpack.c.b16 %v407, %v404
    %v444 = vpack.c.b16 %v411, %v408
    %v445 = vpack.c.b16 %v412, %v409
    %v446 = vpack.c.b16 %v413, %v410
    %v447 = vpack.c.b16 %v417, %v414
    %v448 = vpack.c.b16 %v418, %v415
    %v449 = vpack.c.b16 %v419, %v416
    %v450 = vpack.c.b16 %v423, %v420
    %v451 = vpack.c.b16 %v424, %v421
    %v452 = vpack.c.b16 %v425, %v422
    %v453 = vpack.c.b16 %v429, %v426
    %v454 = vpack.c.b16 %v430, %v427
    %v455 = vpack.c.b16 %v431, %v428
    %480 = vmatprep.subr.bf16.mxu0 %v433
    %481 = vmatpush1.bf16.msra.mxu0 %v432
    %482 = vmatprep.subr.bf16.mxu0 %v436
    %483 = vmatpush1.bf16.msra.mxu0 %v435
    %484 = vmatprep.subr.bf16.mxu0 %v439
    %485 = vmatpush1.bf16.msra.mxu0 %v438
    %486 = vmatprep.subr.bf16.mxu0 %v442
    %487 = vmatpush1.bf16.msra.mxu0 %v441
    %488 = vmatprep.subr.bf16.mxu0 %v445
    %489 = vmatpush1.bf16.msra.mxu0 %v444
    %490 = vmatprep.subr.bf16.mxu0 %v448
    %491 = vmatpush1.bf16.msra.mxu0 %v447
    %492 = vmatprep.subr.bf16.mxu0 %v451
    %493 = vmatpush1.bf16.msra.mxu0 %v450
    %494 = vmatprep.subr.bf16.mxu0 %v454
    %495 = vmatpush1.bf16.msra.mxu0 %v453
    %496 = vmatprep.subr.bf16.mxu0 0
    %497 = vmatpush1.bf16.msra.mxu0 0
    %498 = vmatprep.subr.bf16.mxu0 0
    %499 = vmatpush1.bf16.msra.mxu0 0
    %500 = vmatprep.subr.bf16.mxu0 0
    %501 = vmatpush1.bf16.msra.mxu0 0
    %502 = vmatprep.subr.bf16.mxu0 0
    %503 = vmatpush1.bf16.msra.mxu0 0
    %504 = vmatprep.subr.bf16.mxu0 0
    %505 = vmatpush1.bf16.msra.mxu0 0
    %506 = vmatprep.subr.bf16.mxu0 0
    %507 = vmatpush1.bf16.msra.mxu0 0
    %508 = vmatprep.subr.bf16.mxu0 0
    %509 = vmatpush1.bf16.msra.mxu0 0
    %510 = vmatprep.subr.bf16.mxu0 0
    %511 = vmatpush1.bf16.msra.mxu0 0
    %512 = vmatprep.mubr.bf16.mxu0 0
    %513 = vmatmul.mubr.bf16.gmra.mrb[0].mxu0 %v300
    %v514 = vpop.f32.mrb[0].mxu0
    %v515 = vadd.f32 %v340, %v514
    %v516 = vpop.f32.mrb[0].mxu0
    %v517 = vadd.f32 %v344, %v516
    %v518 = vpop.f32.mrb[0].mxu0
    %v519 = vadd.f32 %v340, %v518
    %v520 = vpop.f32.mrb[0].mxu0
    %v521 = vadd.f32 %v344, %v520
    %522 = vmatprep.mubr.bf16.mxu0 0
    %523 = vmatmul.mubr.bf16.gmra.mrb[0].mxu0 %v301
    %v524 = vpop.f32.mrb[0].mxu0
    %v525 = vadd.f32 %v340, %v524
    %v526 = vpop.f32.mrb[0].mxu0
    %v527 = vadd.f32 %v344, %v526
    %v528 = vpop.f32.mrb[0].mxu0
    %v529 = vadd.f32 %v340, %v528
    %v530 = vpop.f32.mrb[0].mxu0
    %v531 = vadd.f32 %v344, %v530
    %532 = vmatprep.mubr.bf16.mxu0 0
    %533 = vmatmul.mubr.bf16.gmra.mrb[0].mxu0 %v302
    %v534 = vpop.f32.mrb[0].mxu0
    %v535 = vadd.f32 %v340, %v534
    %v536 = vpop.f32.mrb[0].mxu0
    %v537 = vadd.f32 %v344, %v536
    %v538 = vpop.f32.mrb[0].mxu0
    %v539 = vadd.f32 %v340, %v538
    %v540 = vpop.f32.mrb[0].mxu0
    %v541 = vadd.f32 %v344, %v540
    %542 = vdwg.mxu0
    %543 = vmatprep.subr.bf16.mxu0 0
    %544 = vmatpush1.bf16.msra.mxu0 %v434
    %545 = vmatprep.subr.bf16.mxu0 0
    %546 = vmatpush1.bf16.msra.mxu0 %v437
    %547 = vmatprep.subr.bf16.mxu0 0
    %548 = vmatpush1.bf16.msra.mxu0 %v440
    %549 = vmatprep.subr.bf16.mxu0 0
    %550 = vmatpush1.bf16.msra.mxu0 %v443
    %551 = vmatprep.subr.bf16.mxu0 0
    %552 = vmatpush1.bf16.msra.mxu0 %v446
    %553 = vmatprep.subr.bf16.mxu0 0
    %554 = vmatpush1.bf16.msra.mxu0 %v449
    %555 = vmatprep.subr.bf16.mxu0 0
    %556 = vmatpush1.bf16.msra.mxu0 %v452
    %557 = vmatprep.subr.bf16.mxu0 0
    %558 = vmatpush1.bf16.msra.mxu0 %v455
    %559 = vmatprep.subr.bf16.mxu0 0
    %560 = vmatpush1.bf16.msra.mxu0 0
    %561 = vmatprep.subr.bf16.mxu0 0
    %562 = vmatpush1.bf16.msra.mxu0 0
    %563 = vmatprep.subr.bf16.mxu0 0
    %564 = vmatpush1.bf16.msra.mxu0 0
    %565 = vmatprep.subr.bf16.mxu0 0
    %566 = vmatpush1.bf16.msra.mxu0 0
    %567 = vmatprep.subr.bf16.mxu0 0
    %568 = vmatpush1.bf16.msra.mxu0 0
    %569 = vmatprep.subr.bf16.mxu0 0
    %570 = vmatpush1.bf16.msra.mxu0 0
    %571 = vmatprep.subr.bf16.mxu0 0
    %572 = vmatpush1.bf16.msra.mxu0 0
    %573 = vmatprep.subr.bf16.mxu0 0
    %574 = vmatpush1.bf16.msra.mxu0 0
    %575 = vmatprep.mubr.bf16.mxu0 0
    %576 = vmatmul.mubr.bf16.gmra.mrb[0].mxu0 %v300
    %v577 = vpop.f32.mrb[0].mxu0
    %v578 = vadd.f32 %v348, %v577
    %v579 = vpop.f32.mrb[0].mxu0
    %v580 = vpop.f32.mrb[0].mxu0
    %v581 = vadd.f32 %v348, %v580
    %v582 = vpop.f32.mrb[0].mxu0
    %583 = vmatprep.mubr.bf16.mxu0 0
    %584 = vmatmul.mubr.bf16.gmra.mrb[0].mxu0 %v301
    %v585 = vpop.f32.mrb[0].mxu0
    %v586 = vadd.f32 %v348, %v585
    %v587 = vpop.f32.mrb[0].mxu0
    %v588 = vpop.f32.mrb[0].mxu0
    %v589 = vadd.f32 %v348, %v588
    %v590 = vpop.f32.mrb[0].mxu0
    %591 = vmatprep.mubr.bf16.mxu0 0
    %592 = vmatmul.mubr.bf16.gmra.mrb[0].mxu0 %v302
    %v593 = vpop.f32.mrb[0].mxu0
    %v594 = vadd.f32 %v348, %v593
    %v595 = vpop.f32.mrb[0].mxu0
    %v596 = vpop.f32.mrb[0].mxu0
    %v597 = vadd.f32 %v348, %v596
    %v598 = vpop.f32.mrb[0].mxu0
    %599 = vdwg.mxu0
    %v600 = vld [vmem:[%s13] sm:$0xf]
    %v601 = vld [vmem:[%s13 + $0x4] sm:$0xf]
    %v602 = vld [vmem:[%s13 + $0x8] sm:$0xf]
    %v603 = vld [vmem:[%s13 + $0xc] sm:$0xf]
    %v604 = vld [vmem:[%s13 + $0x10] sm:$0xf]
    %v605 = vld [vmem:[%s13 + $0x14] sm:$0xf]
    %v606 = vld [vmem:[%s13 + $0x18] sm:$0xf]
    %v607 = vld [vmem:[%s13 + $0x1c] sm:$0xf]
    %v608 = vld [vmem:[%s13 + $0x20] sm:$0xf]
    %v609 = vld [vmem:[%s13 + $0x24] sm:$0xf]
    %v610 = vld [vmem:[%s13 + $0x28] sm:$0xf]
    %v611 = vld [vmem:[%s13 + $0x2c] sm:$0xf]
    %v612 = vld [vmem:[%s13 + $0x30] sm:$0xf]
    %v613 = vld [vmem:[%s13 + $0x34] sm:$0xf]
    %v614 = vld [vmem:[%s13 + $0x38] sm:$0xf]
    %v615 = vld [vmem:[%s13 + $0x3c] sm:$0xf]
    %v616 = vpack.c.bf16 %v519, %v515
    %v617 = vpack.c.bf16 %v525, %v525
    %v618 = vpack.c.bf16 %v521, %v517
    %v619 = vpack.c.bf16 %v527, %v527
    %v620 = vpack.c.bf16 %v581, %v578
    %v621 = vpack.c.bf16 %v586, %v586
    %v623 = vlaneseq
    %v624 = vshrl.u32 %v623, 7
    %v625 = vsub.s32 0, %v624
    %v626 = vrot.slane %v206, %v625
    %vm628 = vcmask 261120
    %v630 = vsel %vm628, %v616, 0
    %v633 = vsel %vm628, %v617, 0
    %v636 = vsel %vm628, %v618, 0
    %v639 = vsel %vm628, %v619, 0
    %641 = vmatprep.subr.bf16.mxu0 0
    %642 = vmatpush1.bf16.xpose.msra.mxu0 %v636
    %643 = vmatprep.subr.bf16.mxu0 0
    %644 = vmatpush1.bf16.xpose.msra.mxu0 %v639
    %645 = vmatprep.subr.bf16.mxu0 0
    %646 = vmatpush1.bf16.xpose.msra.mxu0 0
    %647 = vmatprep.subr.bf16.mxu0 0
    %648 = vmatpush1.bf16.xpose.msra.mxu0 0
    %649 = vmatprep.subr.bf16.mxu0 0
    %650 = vmatpush1.bf16.xpose.msra.mxu0 0
    %651 = vmatprep.subr.bf16.mxu0 0
    %652 = vmatpush1.bf16.xpose.msra.mxu0 0
    %653 = vmatprep.subr.bf16.mxu0 0
    %654 = vmatpush1.bf16.xpose.msra.mxu0 0
    %655 = vmatprep.subr.bf16.mxu0 0
    %656 = vmatpush1.bf16.xpose.msra.mxu0 0
    %657 = vmatprep.subr.bf16.mxu0 0
    %658 = vmatpush1.bf16.xpose.msra.mxu0 0
    %659 = vmatprep.subr.bf16.mxu0 0
    %660 = vmatpush1.bf16.xpose.msra.mxu0 0
    %661 = vmatprep.subr.bf16.mxu0 0
    %662 = vmatpush1.bf16.xpose.msra.mxu0 0
    %663 = vmatprep.subr.bf16.mxu0 0
    %664 = vmatpush1.bf16.xpose.msra.mxu0 0
    %665 = vmatprep.subr.bf16.mxu0 0
    %666 = vmatpush1.bf16.xpose.msra.mxu0 0
    %667 = vmatprep.subr.bf16.mxu0 0
    %668 = vmatpush1.bf16.xpose.msra.mxu0 0
    %669 = vmatprep.subr.bf16.mxu0 0
    %670 = vmatpush1.bf16.xpose.msra.mxu0 0
    %671 = vmatprep.subr.bf16.mxu0 0
    %672 = vmatpush1.bf16.xpose.msra.mxu0 0
    %673 = vmatprep.mubr.bf16.mxu0 0
    %674 = vmatmul.mubr.bf16.gmra.mrb[0].mxu0 %v630
    %v675 = vpop.f32.mrb[0].mxu0
    %v676 = vadd.f32 %v626, %v675
    %v677 = vpop.f32.mrb[0].mxu0
    %v678 = vpop.f32.mrb[0].mxu0
    %v679 = vadd.f32 %v626, %v678
    %v680 = vpop.f32.mrb[0].mxu0
    %681 = vmatprep.mubr.bf16.mxu0 0
    %682 = vmatmul.mubr.bf16.gmra.mrb[0].mxu0 %v633
    %v683 = vpop.f32.mrb[0].mxu0
    %v684 = vadd.f32 %v626, %v683
    %v685 = vpop.f32.mrb[0].mxu0
    %v686 = vpop.f32.mrb[0].mxu0
    %v687 = vpop.f32.mrb[0].mxu0
    %688 = vdwg.mxu0
    %vm689 = vcmask 195584
    %v690 = vsel %vm689, %v676, -inf
    %691 = vmax.xlane.f32.xlu0 %v690
    %v692 = vpop.xlane.xlu0 %691
    %v693 = vsel %vm689, %v679, -inf
    %694 = vmax.xlane.f32.xlu0 %v693
    %v695 = vpop.xlane.xlu0 %694
    %v696 = vsel %vm689, %v684, -inf
    %697 = vmax.xlane.f32.xlu0 %v696
    %v698 = vpop.xlane.xlu0 %697
    %v699 = vsub.f32 %v676, %v692
    %v700 = vsub.f32 %v679, %v695
    %v701 = vsub.f32 %v684, %v698
    %v702 = vmul.f32 %v699, 1.442695
    %v703 = vpow.pop %v702
    %v704 = vmul.f32 %v700, 1.442695
    %v705 = vpow.pop %v704
    %v706 = vmul.f32 %v701, 1.442695
    %v707 = vpow.pop %v706
    %v708 = vsel %vm689, %v703, 0.0
    %709 = vadd.xlane.f32.xlu0 %v708
    %v710 = vpop.xlane.xlu0 %709
    %v711 = vsel %vm689, %v705, 0.0
    %712 = vadd.xlane.f32.xlu0 %v711
    %v713 = vpop.xlane.xlu0 %712
    %v714 = vsel %vm689, %v707, 0.0
    %715 = vadd.xlane.f32.xlu0 %v714
    %v716 = vpop.xlane.xlu0 %715
    %v717 = vrcp.pop %v710
    %v718 = vrcp.pop %v713
    %v719 = vrcp.pop %v716
    %v720 = vmul.f32 %v703, %v717
    %v721 = vmul.f32 %v705, %v718
    %v722 = vmul.f32 %v707, %v719
    %v723 = vpack.c.bf16 %v721, %v720
    %v724 = vpack.c.bf16 %v722, %v722
    %v726 = vsel %vm689, %v723, 0
    %v729 = vsel %vm689, %v724, 0
    %vm731 = vcmask 1043456
    %v733 = vsel %vm731, %v621, 0
    %735 = vmatprep.subr.bf16.mxu0 0
    %736 = vmatpush1.bf16.msra.mxu0 %v620
    %737 = vmatprep.subr.bf16.mxu0 0
    %738 = vmatpush1.bf16.msra.mxu0 %v733
    %739 = vmatprep.subr.bf16.mxu0 0
    %740 = vmatpush1.bf16.msra.mxu0 0
    %741 = vmatprep.subr.bf16.mxu0 0
    %742 = vmatpush1.bf16.msra.mxu0 0
    %743 = vmatprep.subr.bf16.mxu0 0
    %744 = vmatpush1.bf16.msra.mxu0 0
    %745 = vmatprep.subr.bf16.mxu0 0
    %746 = vmatpush1.bf16.msra.mxu0 0
    %747 = vmatprep.subr.bf16.mxu0 0
    %748 = vmatpush1.bf16.msra.mxu0 0
    %749 = vmatprep.subr.bf16.mxu0 0
    %750 = vmatpush1.bf16.msra.mxu0 0
    %751 = vmatprep.subr.bf16.mxu0 0
    %752 = vmatpush1.bf16.msra.mxu0 0
    %753 = vmatprep.subr.bf16.mxu0 0
    %754 = vmatpush1.bf16.msra.mxu0 0
    %755 = vmatprep.subr.bf16.mxu0 0
    %756 = vmatpush1.bf16.msra.mxu0 0
    %757 = vmatprep.subr.bf16.mxu0 0
    %758 = vmatpush1.bf16.msra.mxu0 0
    %759 = vmatprep.subr.bf16.mxu0 0
    %760 = vmatpush1.bf16.msra.mxu0 0
    %761 = vmatprep.subr.bf16.mxu0 0
    %762 = vmatpush1.bf16.msra.mxu0 0
    %763 = vmatprep.subr.bf16.mxu0 0
    %764 = vmatpush1.bf16.msra.mxu0 0
    %765 = vmatprep.subr.bf16.mxu0 0
    %766 = vmatpush1.bf16.msra.mxu0 0
    %767 = vmatprep.mubr.bf16.mxu0 0
    %768 = vmatmul.mubr.bf16.gmra.mrb[0].mxu0 %v726
    %v769 = vpop.f32.mrb[0].mxu0
    %v770 = vadd.f32 0.0, %v769
    %v771 = vpop.f32.mrb[0].mxu0
    %v772 = vpop.f32.mrb[0].mxu0
    %v773 = vadd.f32 0.0, %v772
    %v774 = vpop.f32.mrb[0].mxu0
    %775 = vmatprep.mubr.bf16.mxu0 0
    %776 = vmatmul.mubr.bf16.gmra.mrb[0].mxu0 %v729
    %v777 = vpop.f32.mrb[0].mxu0
    %v778 = vadd.f32 0.0, %v777
    %v779 = vpop.f32.mrb[0].mxu0
    %v780 = vpop.f32.mrb[0].mxu0
    %v781 = vpop.f32.mrb[0].mxu0
    %782 = vdwg.mxu0
    %v783 = vpack.c.bf16 %v773, %v770
    %v784 = vpack.c.bf16 %v778, %v778
    %787 = vrot.lane.b32.xlu0 %v616, 96
    %v788 = vpop.permute.xlu0 %787
    %789 = vrot.lane.b32.xlu0 %v617, 96
    %v790 = vpop.permute.xlu0 %789
    %793 = vrot.lane.b32.xlu0 %v618, 96
    %v794 = vpop.permute.xlu0 %793
    %795 = vrot.lane.b32.xlu0 %v619, 96
    %v796 = vpop.permute.xlu0 %795
    %v798 = vsel %vm628, %v788, 0
    %v801 = vsel %vm628, %v790, 0
    %v804 = vsel %vm628, %v794, 0
    %v807 = vsel %vm628, %v796, 0
    %809 = vmatprep.subr.bf16.mxu0 0
    %810 = vmatpush1.bf16.xpose.msra.mxu0 %v804
    %811 = vmatprep.subr.bf16.mxu0 0
    %812 = vmatpush1.bf16.xpose.msra.mxu0 %v807
    %813 = vmatprep.subr.bf16.mxu0 0
    %814 = vmatpush1.bf16.xpose.msra.mxu0 0
    %815 = vmatprep.subr.bf16.mxu0 0
    %816 = vmatpush1.bf16.xpose.msra.mxu0 0
    %817 = vmatprep.subr.bf16.mxu0 0
    %818 = vmatpush1.bf16.xpose.msra.mxu0 0
    %819 = vmatprep.subr.bf16.mxu0 0
    %820 = vmatpush1.bf16.xpose.msra.mxu0 0
    %821 = vmatprep.subr.bf16.mxu0 0
    %822 = vmatpush1.bf16.xpose.msra.mxu0 0
    %823 = vmatprep.subr.bf16.mxu0 0
    %824 = vmatpush1.bf16.xpose.msra.mxu0 0
    %825 = vmatprep.subr.bf16.mxu0 0
    %826 = vmatpush1.bf16.xpose.msra.mxu0 0
    %827 = vmatprep.subr.bf16.mxu0 0
    %828 = vmatpush1.bf16.xpose.msra.mxu0 0
    %829 = vmatprep.subr.bf16.mxu0 0
    %830 = vmatpush1.bf16.xpose.msra.mxu0 0
    %831 = vmatprep.subr.bf16.mxu0 0
    %832 = vmatpush1.bf16.xpose.msra.mxu0 0
    %833 = vmatprep.subr.bf16.mxu0 0
    %834 = vmatpush1.bf16.xpose.msra.mxu0 0
    %835 = vmatprep.subr.bf16.mxu0 0
    %836 = vmatpush1.bf16.xpose.msra.mxu0 0
    %837 = vmatprep.subr.bf16.mxu0 0
    %838 = vmatpush1.bf16.xpose.msra.mxu0 0
    %839 = vmatprep.subr.bf16.mxu0 0
    %840 = vmatpush1.bf16.xpose.msra.mxu0 0
    %841 = vmatprep.mubr.bf16.mxu0 0
    %842 = vmatmul.mubr.bf16.gmra.mrb[0].mxu0 %v798
    %v843 = vpop.f32.mrb[0].mxu0
    %v844 = vadd.f32 %v626, %v843
    %v845 = vpop.f32.mrb[0].mxu0
    %v846 = vpop.f32.mrb[0].mxu0
    %v847 = vadd.f32 %v626, %v846
    %v848 = vpop.f32.mrb[0].mxu0
    %849 = vmatprep.mubr.bf16.mxu0 0
    %850 = vmatmul.mubr.bf16.gmra.mrb[0].mxu0 %v801
    %v851 = vpop.f32.mrb[0].mxu0
    %v852 = vadd.f32 %v626, %v851
    %v853 = vpop.f32.mrb[0].mxu0
    %v854 = vpop.f32.mrb[0].mxu0
    %v855 = vpop.f32.mrb[0].mxu0
    %856 = vdwg.mxu0
    %v857 = vsel %vm689, %v844, -inf
    %858 = vmax.xlane.f32.xlu0 %v857
    %v859 = vpop.xlane.xlu0 %858
    %v860 = vsel %vm689, %v847, -inf
    %861 = vmax.xlane.f32.xlu0 %v860
    %v862 = vpop.xlane.xlu0 %861
    %v863 = vsel %vm689, %v852, -inf
    %864 = vmax.xlane.f32.xlu0 %v863
    %v865 = vpop.xlane.xlu0 %864
    %v866 = vsub.f32 %v844, %v859
    %v867 = vsub.f32 %v847, %v862
    %v868 = vsub.f32 %v852, %v865
    %v869 = vmul.f32 %v866, 1.442695
    %v870 = vpow.pop %v869
    %v871 = vmul.f32 %v867, 1.442695
    %v872 = vpow.pop %v871
    %v873 = vmul.f32 %v868, 1.442695
    %v874 = vpow.pop %v873
    %v875 = vsel %vm689, %v870, 0.0
    %876 = vadd.xlane.f32.xlu0 %v875
    %v877 = vpop.xlane.xlu0 %876
    %v878 = vsel %vm689, %v872, 0.0
    %879 = vadd.xlane.f32.xlu0 %v878
    %v880 = vpop.xlane.xlu0 %879
    %v881 = vsel %vm689, %v874, 0.0
    %882 = vadd.xlane.f32.xlu0 %v881
    %v883 = vpop.xlane.xlu0 %882
    %v884 = vrcp.pop %v877
    %v885 = vrcp.pop %v880
    %v886 = vrcp.pop %v883
    %v887 = vmul.f32 %v870, %v884
    %v888 = vmul.f32 %v872, %v885
    %v889 = vmul.f32 %v874, %v886
    %v890 = vpack.c.bf16 %v888, %v887
    %v891 = vpack.c.bf16 %v889, %v889
    %894 = vrot.lane.b32.xlu0 %v620, 96
    %v895 = vpop.permute.xlu0 %894
    %896 = vrot.lane.b32.xlu0 %v621, 96
    %v897 = vpop.permute.xlu0 %896
    %v900 = vsel %vm689, %v890, 0
    %v903 = vsel %vm689, %v891, 0
    %v906 = vsel %vm731, %v897, 0
    %908 = vmatprep.subr.bf16.mxu0 0
    %909 = vmatpush1.bf16.msra.mxu0 %v895
    %910 = vmatprep.subr.bf16.mxu0 0
    %911 = vmatpush1.bf16.msra.mxu0 %v906
    %912 = vmatprep.subr.bf16.mxu0 0
    %913 = vmatpush1.bf16.msra.mxu0 0
    %914 = vmatprep.subr.bf16.mxu0 0
    %915 = vmatpush1.bf16.msra.mxu0 0
    %916 = vmatprep.subr.bf16.mxu0 0
    %917 = vmatpush1.bf16.msra.mxu0 0
    %918 = vmatprep.subr.bf16.mxu0 0
    %919 = vmatpush1.bf16.msra.mxu0 0
    %920 = vmatprep.subr.bf16.mxu0 0
    %921 = vmatpush1.bf16.msra.mxu0 0
    %922 = vmatprep.subr.bf16.mxu0 0
    %923 = vmatpush1.bf16.msra.mxu0 0
    %924 = vmatprep.subr.bf16.mxu0 0
    %925 = vmatpush1.bf16.msra.mxu0 0
    %926 = vmatprep.subr.bf16.mxu0 0
    %927 = vmatpush1.bf16.msra.mxu0 0
    %928 = vmatprep.subr.bf16.mxu0 0
    %929 = vmatpush1.bf16.msra.mxu0 0
    %930 = vmatprep.subr.bf16.mxu0 0
    %931 = vmatpush1.bf16.msra.mxu0 0
    %932 = vmatprep.subr.bf16.mxu0 0
    %933 = vmatpush1.bf16.msra.mxu0 0
    %934 = vmatprep.subr.bf16.mxu0 0
    %935 = vmatpush1.bf16.msra.mxu0 0
    %936 = vmatprep.subr.bf16.mxu0 0
    %937 = vmatpush1.bf16.msra.mxu0 0
    %938 = vmatprep.subr.bf16.mxu0 0
    %939 = vmatpush1.bf16.msra.mxu0 0
    %940 = vmatprep.mubr.bf16.mxu0 0
    %941 = vmatmul.mubr.bf16.gmra.mrb[0].mxu0 %v900
    %v942 = vpop.f32.mrb[0].mxu0
    %v943 = vadd.f32 0.0, %v942
    %v944 = vpop.f32.mrb[0].mxu0
    %v945 = vpop.f32.mrb[0].mxu0
    %v946 = vadd.f32 0.0, %v945
    %v947 = vpop.f32.mrb[0].mxu0
    %948 = vmatprep.mubr.bf16.mxu0 0
    %949 = vmatmul.mubr.bf16.gmra.mrb[0].mxu0 %v903
    %v950 = vpop.f32.mrb[0].mxu0
    %v951 = vadd.f32 0.0, %v950
    %v952 = vpop.f32.mrb[0].mxu0
    %v953 = vpop.f32.mrb[0].mxu0
    %v954 = vpop.f32.mrb[0].mxu0
    %955 = vdwg.mxu0
    %v956 = vpack.c.bf16 %v946, %v943
    %v957 = vpack.c.bf16 %v951, %v951
    %v962 = vunpack.c.l.b16 %v604
    %v963 = vunpack.c.l.b16 %v605
    %v964 = vunpack.c.l.b16 %v606
    %v965 = vunpack.c.l.b16 %v607
    %v966 = vpack.c.b16 %v963, %v962
    %v967 = vpack.c.b16 %v965, %v964
    %v971 = vsel %vm628, %v956, 0
    %v974 = vsel %vm628, %v957, 0
    %976 = vmatprep.subr.bf16.mxu0 0
    %977 = vmatpush1.bf16.msra.mxu0 %v966
    %978 = vmatprep.subr.bf16.mxu0 0
    %979 = vmatpush1.bf16.msra.mxu0 %v967
    %980 = vmatprep.subr.bf16.mxu0 0
    %981 = vmatpush1.bf16.msra.mxu0 0
    %982 = vmatprep.subr.bf16.mxu0 0
    %983 = vmatpush1.bf16.msra.mxu0 0
    %984 = vmatprep.subr.bf16.mxu0 0
    %985 = vmatpush1.bf16.msra.mxu0 0
    %986 = vmatprep.subr.bf16.mxu0 0
    %987 = vmatpush1.bf16.msra.mxu0 0
    %988 = vmatprep.subr.bf16.mxu0 0
    %989 = vmatpush1.bf16.msra.mxu0 0
    %990 = vmatprep.subr.bf16.mxu0 0
    %991 = vmatpush1.bf16.msra.mxu0 0
    %992 = vmatprep.subr.bf16.mxu0 0
    %993 = vmatpush1.bf16.msra.mxu0 0
    %994 = vmatprep.subr.bf16.mxu0 0
    %995 = vmatpush1.bf16.msra.mxu0 0
    %996 = vmatprep.subr.bf16.mxu0 0
    %997 = vmatpush1.bf16.msra.mxu0 0
    %998 = vmatprep.subr.bf16.mxu0 0
    %999 = vmatpush1.bf16.msra.mxu0 0
    %1000 = vmatprep.subr.bf16.mxu0 0
    %1001 = vmatpush1.bf16.msra.mxu0 0
    %1002 = vmatprep.subr.bf16.mxu0 0
    %1003 = vmatpush1.bf16.msra.mxu0 0
    %1004 = vmatprep.subr.bf16.mxu0 0
    %1005 = vmatpush1.bf16.msra.mxu0 0
    %1006 = vmatprep.subr.bf16.mxu0 0
    %1007 = vmatpush1.bf16.msra.mxu0 0
    %1008 = vmatprep.mubr.bf16.mxu0 0
    %1009 = vmatmul.mubr.bf16.gmra.mrb[0].mxu0 %v971
    %v1010 = vpop.f32.mrb[0].mxu0
    %v1011 = vadd.f32 0.0, %v1010
    %v1012 = vpop.f32.mrb[0].mxu0
    %v1013 = vpop.f32.mrb[0].mxu0
    %v1014 = vadd.f32 0.0, %v1013
    %v1015 = vpop.f32.mrb[0].mxu0
    %1016 = vmatprep.mubr.bf16.mxu0 0
    %1017 = vmatmul.mubr.bf16.gmra.mrb[0].mxu0 %v974
    %v1018 = vpop.f32.mrb[0].mxu0
    %v1019 = vadd.f32 0.0, %v1018
    %v1020 = vpop.f32.mrb[0].mxu0
    %v1021 = vpop.f32.mrb[0].mxu0
    %v1022 = vpop.f32.mrb[0].mxu0
    %1023 = vdwg.mxu0
    %v1028 = vunpack.c.l.b16 %v600
    %v1029 = vunpack.c.l.b16 %v601
    %v1030 = vunpack.c.l.b16 %v602
    %v1031 = vunpack.c.l.b16 %v603
    %v1032 = vpack.c.b16 %v1029, %v1028
    %v1033 = vpack.c.b16 %v1031, %v1030
    %v1037 = vsel %vm628, %v783, 0
    %v1040 = vsel %vm628, %v784, 0
    %1042 = vmatprep.subr.bf16.mxu0 0
    %1043 = vmatpush1.bf16.msra.mxu0 %v1032
    %1044 = vmatprep.subr.bf16.mxu0 0
    %1045 = vmatpush1.bf16.msra.mxu0 %v1033
    %1046 = vmatprep.subr.bf16.mxu0 0
    %1047 = vmatpush1.bf16.msra.mxu0 0
    %1048 = vmatprep.subr.bf16.mxu0 0
    %1049 = vmatpush1.bf16.msra.mxu0 0
    %1050 = vmatprep.subr.bf16.mxu0 0
    %1051 = vmatpush1.bf16.msra.mxu0 0
    %1052 = vmatprep.subr.bf16.mxu0 0
    %1053 = vmatpush1.bf16.msra.mxu0 0
    %1054 = vmatprep.subr.bf16.mxu0 0
    %1055 = vmatpush1.bf16.msra.mxu0 0
    %1056 = vmatprep.subr.bf16.mxu0 0
    %1057 = vmatpush1.bf16.msra.mxu0 0
    %1058 = vmatprep.subr.bf16.mxu0 0
    %1059 = vmatpush1.bf16.msra.mxu0 0
    %1060 = vmatprep.subr.bf16.mxu0 0
    %1061 = vmatpush1.bf16.msra.mxu0 0
    %1062 = vmatprep.subr.bf16.mxu0 0
    %1063 = vmatpush1.bf16.msra.mxu0 0
    %1064 = vmatprep.subr.bf16.mxu0 0
    %1065 = vmatpush1.bf16.msra.mxu0 0
    %1066 = vmatprep.subr.bf16.mxu0 0
    %1067 = vmatpush1.bf16.msra.mxu0 0
    %1068 = vmatprep.subr.bf16.mxu0 0
    %1069 = vmatpush1.bf16.msra.mxu0 0
    %1070 = vmatprep.subr.bf16.mxu0 0
    %1071 = vmatpush1.bf16.msra.mxu0 0
    %1072 = vmatprep.subr.bf16.mxu0 0
    %1073 = vmatpush1.bf16.msra.mxu0 0
    %1074 = vmatprep.mubr.bf16.mxu0 0
    %1075 = vmatmul.mubr.bf16.gmra.mrb[0].mxu0 %v1037
    %v1076 = vpop.f32.mrb[0].mxu0
    %v1077 = vadd.f32 %v1011, %v1076
    %v1078 = vpop.f32.mrb[0].mxu0
    %v1079 = vpop.f32.mrb[0].mxu0
    %v1080 = vadd.f32 %v1014, %v1079
    %v1081 = vpop.f32.mrb[0].mxu0
    %1082 = vmatprep.mubr.bf16.mxu0 0
    %1083 = vmatmul.mubr.bf16.gmra.mrb[0].mxu0 %v1040
    %v1084 = vpop.f32.mrb[0].mxu0
    %v1085 = vadd.f32 %v1019, %v1084
    %v1086 = vpop.f32.mrb[0].mxu0
    %v1087 = vpop.f32.mrb[0].mxu0
    %v1088 = vpop.f32.mrb[0].mxu0
    %1089 = vdwg.mxu0
    %1090 = vrot.lane.b32.xlu0 %v616, 64
    %v1091 = vpop.permute.xlu0 %1090
    %1092 = vrot.lane.b32.xlu0 %v617, 64
    %v1093 = vpop.permute.xlu0 %1092
    %1094 = vrot.lane.b32.xlu0 %v618, 64
    %v1095 = vpop.permute.xlu0 %1094
    %1096 = vrot.lane.b32.xlu0 %v619, 64
    %v1097 = vpop.permute.xlu0 %1096
    %v1099 = vsel %vm628, %v1091, 0
    %v1102 = vsel %vm628, %v1093, 0
    %v1105 = vsel %vm628, %v1095, 0
    %v1108 = vsel %vm628, %v1097, 0
    %1110 = vmatprep.subr.bf16.mxu0 0
    %1111 = vmatpush1.bf16.xpose.msra.mxu0 %v1105
    %1112 = vmatprep.subr.bf16.mxu0 0
    %1113 = vmatpush1.bf16.xpose.msra.mxu0 %v1108
    %1114 = vmatprep.subr.bf16.mxu0 0
    %1115 = vmatpush1.bf16.xpose.msra.mxu0 0
    %1116 = vmatprep.subr.bf16.mxu0 0
    %1117 = vmatpush1.bf16.xpose.msra.mxu0 0
    %1118 = vmatprep.subr.bf16.mxu0 0
    %1119 = vmatpush1.bf16.xpose.msra.mxu0 0
    %1120 = vmatprep.subr.bf16.mxu0 0
    %1121 = vmatpush1.bf16.xpose.msra.mxu0 0
    %1122 = vmatprep.subr.bf16.mxu0 0
    %1123 = vmatpush1.bf16.xpose.msra.mxu0 0
    %1124 = vmatprep.subr.bf16.mxu0 0
    %1125 = vmatpush1.bf16.xpose.msra.mxu0 0
    %1126 = vmatprep.subr.bf16.mxu0 0
    %1127 = vmatpush1.bf16.xpose.msra.mxu0 0
    %1128 = vmatprep.subr.bf16.mxu0 0
    %1129 = vmatpush1.bf16.xpose.msra.mxu0 0
    %1130 = vmatprep.subr.bf16.mxu0 0
    %1131 = vmatpush1.bf16.xpose.msra.mxu0 0
    %1132 = vmatprep.subr.bf16.mxu0 0
    %1133 = vmatpush1.bf16.xpose.msra.mxu0 0
    %1134 = vmatprep.subr.bf16.mxu0 0
    %1135 = vmatpush1.bf16.xpose.msra.mxu0 0
    %1136 = vmatprep.subr.bf16.mxu0 0
    %1137 = vmatpush1.bf16.xpose.msra.mxu0 0
    %1138 = vmatprep.subr.bf16.mxu0 0
    %1139 = vmatpush1.bf16.xpose.msra.mxu0 0
    %1140 = vmatprep.subr.bf16.mxu0 0
    %1141 = vmatpush1.bf16.xpose.msra.mxu0 0
    %1142 = vmatprep.mubr.bf16.mxu0 0
    %1143 = vmatmul.mubr.bf16.gmra.mrb[0].mxu0 %v1099
    %v1144 = vpop.f32.mrb[0].mxu0
    %v1145 = vadd.f32 %v626, %v1144
    %v1146 = vpop.f32.mrb[0].mxu0
    %v1147 = vpop.f32.mrb[0].mxu0
    %v1148 = vadd.f32 %v626, %v1147
    %v1149 = vpop.f32.mrb[0].mxu0
    %1150 = vmatprep.mubr.bf16.mxu0 0
    %1151 = vmatmul.mubr.bf16.gmra.mrb[0].mxu0 %v1102
    %v1152 = vpop.f32.mrb[0].mxu0
    %v1153 = vadd.f32 %v626, %v1152
    %v1154 = vpop.f32.mrb[0].mxu0
    %v1155 = vpop.f32.mrb[0].mxu0
    %v1156 = vpop.f32.mrb[0].mxu0
    %1157 = vdwg.mxu0
    %v1158 = vsel %vm689, %v1145, -inf
    %1159 = vmax.xlane.f32.xlu0 %v1158
    %v1160 = vpop.xlane.xlu0 %1159
    %v1161 = vsel %vm689, %v1148, -inf
    %1162 = vmax.xlane.f32.xlu0 %v1161
    %v1163 = vpop.xlane.xlu0 %1162
    %v1164 = vsel %vm689, %v1153, -inf
    %1165 = vmax.xlane.f32.xlu0 %v1164
    %v1166 = vpop.xlane.xlu0 %1165
    %v1167 = vsub.f32 %v1145, %v1160
    %v1168 = vsub.f32 %v1148, %v1163
    %v1169 = vsub.f32 %v1153, %v1166
    %v1170 = vmul.f32 %v1167, 1.442695
    %v1171 = vpow.pop %v1170
    %v1172 = vmul.f32 %v1168, 1.442695
    %v1173 = vpow.pop %v1172
    %v1174 = vmul.f32 %v1169, 1.442695
    %v1175 = vpow.pop %v1174
    %v1176 = vsel %vm689, %v1171, 0.0
    %1177 = vadd.xlane.f32.xlu0 %v1176
    %v1178 = vpop.xlane.xlu0 %1177
    %v1179 = vsel %vm689, %v1173, 0.0
    %1180 = vadd.xlane.f32.xlu0 %v1179
    %v1181 = vpop.xlane.xlu0 %1180
    %v1182 = vsel %vm689, %v1175, 0.0
    %1183 = vadd.xlane.f32.xlu0 %v1182
    %v1184 = vpop.xlane.xlu0 %1183
    %v1185 = vrcp.pop %v1178
    %v1186 = vrcp.pop %v1181
    %v1187 = vrcp.pop %v1184
    %v1188 = vmul.f32 %v1171, %v1185
    %v1189 = vmul.f32 %v1173, %v1186
    %v1190 = vmul.f32 %v1175, %v1187
    %v1191 = vpack.c.bf16 %v1189, %v1188
    %v1192 = vpack.c.bf16 %v1190, %v1190
    %1193 = vrot.lane.b32.xlu0 %v620, 64
    %v1194 = vpop.permute.xlu0 %1193
    %1195 = vrot.lane.b32.xlu0 %v621, 64
    %v1196 = vpop.permute.xlu0 %1195
    %v1199 = vsel %vm689, %v1191, 0
    %v1202 = vsel %vm689, %v1192, 0
    %v1205 = vsel %vm731, %v1196, 0
    %1207 = vmatprep.subr.bf16.mxu0 0
    %1208 = vmatpush1.bf16.msra.mxu0 %v1194
    %1209 = vmatprep.subr.bf16.mxu0 0
    %1210 = vmatpush1.bf16.msra.mxu0 %v1205
    %1211 = vmatprep.subr.bf16.mxu0 0
    %1212 = vmatpush1.bf16.msra.mxu0 0
    %1213 = vmatprep.subr.bf16.mxu0 0
    %1214 = vmatpush1.bf16.msra.mxu0 0
    %1215 = vmatprep.subr.bf16.mxu0 0
    %1216 = vmatpush1.bf16.msra.mxu0 0
    %1217 = vmatprep.subr.bf16.mxu0 0
    %1218 = vmatpush1.bf16.msra.mxu0 0
    %1219 = vmatprep.subr.bf16.mxu0 0
    %1220 = vmatpush1.bf16.msra.mxu0 0
    %1221 = vmatprep.subr.bf16.mxu0 0
    %1222 = vmatpush1.bf16.msra.mxu0 0
    %1223 = vmatprep.subr.bf16.mxu0 0
    %1224 = vmatpush1.bf16.msra.mxu0 0
    %1225 = vmatprep.subr.bf16.mxu0 0
    %1226 = vmatpush1.bf16.msra.mxu0 0
    %1227 = vmatprep.subr.bf16.mxu0 0
    %1228 = vmatpush1.bf16.msra.mxu0 0
    %1229 = vmatprep.subr.bf16.mxu0 0
    %1230 = vmatpush1.bf16.msra.mxu0 0
    %1231 = vmatprep.subr.bf16.mxu0 0
    %1232 = vmatpush1.bf16.msra.mxu0 0
    %1233 = vmatprep.subr.bf16.mxu0 0
    %1234 = vmatpush1.bf16.msra.mxu0 0
    %1235 = vmatprep.subr.bf16.mxu0 0
    %1236 = vmatpush1.bf16.msra.mxu0 0
    %1237 = vmatprep.subr.bf16.mxu0 0
    %1238 = vmatpush1.bf16.msra.mxu0 0
    %1239 = vmatprep.mubr.bf16.mxu0 0
    %1240 = vmatmul.mubr.bf16.gmra.mrb[0].mxu0 %v1199
    %v1241 = vpop.f32.mrb[0].mxu0
    %v1242 = vadd.f32 0.0, %v1241
    %v1243 = vpop.f32.mrb[0].mxu0
    %v1244 = vpop.f32.mrb[0].mxu0
    %v1245 = vadd.f32 0.0, %v1244
    %v1246 = vpop.f32.mrb[0].mxu0
    %1247 = vmatprep.mubr.bf16.mxu0 0
    %1248 = vmatmul.mubr.bf16.gmra.mrb[0].mxu0 %v1202
    %v1249 = vpop.f32.mrb[0].mxu0
    %v1250 = vadd.f32 0.0, %v1249
    %v1251 = vpop.f32.mrb[0].mxu0
    %v1252 = vpop.f32.mrb[0].mxu0
    %v1253 = vpop.f32.mrb[0].mxu0
    %1254 = vdwg.mxu0
    %v1255 = vpack.c.bf16 %v1245, %v1242
    %v1256 = vpack.c.bf16 %v1250, %v1250
    %v1261 = vunpack.c.l.b16 %v608
    %v1262 = vunpack.c.l.b16 %v609
    %v1263 = vunpack.c.l.b16 %v610
    %v1264 = vunpack.c.l.b16 %v611
    %v1265 = vpack.c.b16 %v1262, %v1261
    %v1266 = vpack.c.b16 %v1264, %v1263
    %v1270 = vsel %vm628, %v1255, 0
    %v1273 = vsel %vm628, %v1256, 0
    %1275 = vmatprep.subr.bf16.mxu0 0
    %1276 = vmatpush1.bf16.msra.mxu0 %v1265
    %1277 = vmatprep.subr.bf16.mxu0 0
    %1278 = vmatpush1.bf16.msra.mxu0 %v1266
    %1279 = vmatprep.subr.bf16.mxu0 0
    %1280 = vmatpush1.bf16.msra.mxu0 0
    %1281 = vmatprep.subr.bf16.mxu0 0
    %1282 = vmatpush1.bf16.msra.mxu0 0
    %1283 = vmatprep.subr.bf16.mxu0 0
    %1284 = vmatpush1.bf16.msra.mxu0 0
    %1285 = vmatprep.subr.bf16.mxu0 0
    %1286 = vmatpush1.bf16.msra.mxu0 0
    %1287 = vmatprep.subr.bf16.mxu0 0
    %1288 = vmatpush1.bf16.msra.mxu0 0
    %1289 = vmatprep.subr.bf16.mxu0 0
    %1290 = vmatpush1.bf16.msra.mxu0 0
    %1291 = vmatprep.subr.bf16.mxu0 0
    %1292 = vmatpush1.bf16.msra.mxu0 0
    %1293 = vmatprep.subr.bf16.mxu0 0
    %1294 = vmatpush1.bf16.msra.mxu0 0
    %1295 = vmatprep.subr.bf16.mxu0 0
    %1296 = vmatpush1.bf16.msra.mxu0 0
    %1297 = vmatprep.subr.bf16.mxu0 0
    %1298 = vmatpush1.bf16.msra.mxu0 0
    %1299 = vmatprep.subr.bf16.mxu0 0
    %1300 = vmatpush1.bf16.msra.mxu0 0
    %1301 = vmatprep.subr.bf16.mxu0 0
    %1302 = vmatpush1.bf16.msra.mxu0 0
    %1303 = vmatprep.subr.bf16.mxu0 0
    %1304 = vmatpush1.bf16.msra.mxu0 0
    %1305 = vmatprep.subr.bf16.mxu0 0
    %1306 = vmatpush1.bf16.msra.mxu0 0
    %1307 = vmatprep.mubr.bf16.mxu0 0
    %1308 = vmatmul.mubr.bf16.gmra.mrb[0].mxu0 %v1270
    %v1309 = vpop.f32.mrb[0].mxu0
    %v1310 = vadd.f32 0.0, %v1309
    %v1311 = vpop.f32.mrb[0].mxu0
    %v1312 = vpop.f32.mrb[0].mxu0
    %v1313 = vadd.f32 0.0, %v1312
    %v1314 = vpop.f32.mrb[0].mxu0
    %1315 = vmatprep.mubr.bf16.mxu0 0
    %1316 = vmatmul.mubr.bf16.gmra.mrb[0].mxu0 %v1273
    %v1317 = vpop.f32.mrb[0].mxu0
    %v1318 = vadd.f32 0.0, %v1317
    %v1319 = vpop.f32.mrb[0].mxu0
    %v1320 = vpop.f32.mrb[0].mxu0
    %v1321 = vpop.f32.mrb[0].mxu0
    %1322 = vdwg.mxu0
    %v1323 = vadd.f32 %v1077, %v1310
    %v1324 = vadd.f32 %v1080, %v1313
    %v1325 = vadd.f32 %v1085, %v1318
    %1326 = vrot.lane.b32.xlu0 %v616, 32
    %v1327 = vpop.permute.xlu0 %1326
    %1328 = vrot.lane.b32.xlu0 %v617, 32
    %v1329 = vpop.permute.xlu0 %1328
    %1330 = vrot.lane.b32.xlu0 %v618, 32
    %v1331 = vpop.permute.xlu0 %1330
    %1332 = vrot.lane.b32.xlu0 %v619, 32
    %v1333 = vpop.permute.xlu0 %1332
    %v1335 = vsel %vm628, %v1327, 0
    %v1338 = vsel %vm628, %v1329, 0
    %v1341 = vsel %vm628, %v1331, 0
    %v1344 = vsel %vm628, %v1333, 0
    %1346 = vmatprep.subr.bf16.mxu0 0
    %1347 = vmatpush1.bf16.xpose.msra.mxu0 %v1341
    %1348 = vmatprep.subr.bf16.mxu0 0
    %1349 = vmatpush1.bf16.xpose.msra.mxu0 %v1344
    %1350 = vmatprep.subr.bf16.mxu0 0
    %1351 = vmatpush1.bf16.xpose.msra.mxu0 0
    %1352 = vmatprep.subr.bf16.mxu0 0
    %1353 = vmatpush1.bf16.xpose.msra.mxu0 0
    %1354 = vmatprep.subr.bf16.mxu0 0
    %1355 = vmatpush1.bf16.xpose.msra.mxu0 0
    %1356 = vmatprep.subr.bf16.mxu0 0
    %1357 = vmatpush1.bf16.xpose.msra.mxu0 0
    %1358 = vmatprep.subr.bf16.mxu0 0
    %1359 = vmatpush1.bf16.xpose.msra.mxu0 0
    %1360 = vmatprep.subr.bf16.mxu0 0
    %1361 = vmatpush1.bf16.xpose.msra.mxu0 0
    %1362 = vmatprep.subr.bf16.mxu0 0
    %1363 = vmatpush1.bf16.xpose.msra.mxu0 0
    %1364 = vmatprep.subr.bf16.mxu0 0
    %1365 = vmatpush1.bf16.xpose.msra.mxu0 0
    %1366 = vmatprep.subr.bf16.mxu0 0
    %1367 = vmatpush1.bf16.xpose.msra.mxu0 0
    %1368 = vmatprep.subr.bf16.mxu0 0
    %1369 = vmatpush1.bf16.xpose.msra.mxu0 0
    %1370 = vmatprep.subr.bf16.mxu0 0
    %1371 = vmatpush1.bf16.xpose.msra.mxu0 0
    %1372 = vmatprep.subr.bf16.mxu0 0
    %1373 = vmatpush1.bf16.xpose.msra.mxu0 0
    %1374 = vmatprep.subr.bf16.mxu0 0
    %1375 = vmatpush1.bf16.xpose.msra.mxu0 0
    %1376 = vmatprep.subr.bf16.mxu0 0
    %1377 = vmatpush1.bf16.xpose.msra.mxu0 0
    %1378 = vmatprep.mubr.bf16.mxu0 0
    %1379 = vmatmul.mubr.bf16.gmra.mrb[0].mxu0 %v1335
    %v1380 = vpop.f32.mrb[0].mxu0
    %v1381 = vadd.f32 %v626, %v1380
    %v1382 = vpop.f32.mrb[0].mxu0
    %v1383 = vpop.f32.mrb[0].mxu0
    %v1384 = vadd.f32 %v626, %v1383
    %v1385 = vpop.f32.mrb[0].mxu0
    %1386 = vmatprep.mubr.bf16.mxu0 0
    %1387 = vmatmul.mubr.bf16.gmra.mrb[0].mxu0 %v1338
    %v1388 = vpop.f32.mrb[0].mxu0
    %v1389 = vadd.f32 %v626, %v1388
    %v1390 = vpop.f32.mrb[0].mxu0
    %v1391 = vpop.f32.mrb[0].mxu0
    %v1392 = vpop.f32.mrb[0].mxu0
    %1393 = vdwg.mxu0
    %v1394 = vsel %vm689, %v1381, -inf
    %1395 = vmax.xlane.f32.xlu0 %v1394
    %v1396 = vpop.xlane.xlu0 %1395
    %v1397 = vsel %vm689, %v1384, -inf
    %1398 = vmax.xlane.f32.xlu0 %v1397
    %v1399 = vpop.xlane.xlu0 %1398
    %v1400 = vsel %vm689, %v1389, -inf
    %1401 = vmax.xlane.f32.xlu0 %v1400
    %v1402 = vpop.xlane.xlu0 %1401
    %v1403 = vsub.f32 %v1381, %v1396
    %v1404 = vsub.f32 %v1384, %v1399
    %v1405 = vsub.f32 %v1389, %v1402
    %v1406 = vmul.f32 %v1403, 1.442695
    %v1407 = vpow.pop %v1406
    %v1408 = vmul.f32 %v1404, 1.442695
    %v1409 = vpow.pop %v1408
    %v1410 = vmul.f32 %v1405, 1.442695
    %v1411 = vpow.pop %v1410
    %v1412 = vsel %vm689, %v1407, 0.0
    %1413 = vadd.xlane.f32.xlu0 %v1412
    %v1414 = vpop.xlane.xlu0 %1413
    %v1415 = vsel %vm689, %v1409, 0.0
    %1416 = vadd.xlane.f32.xlu0 %v1415
    %v1417 = vpop.xlane.xlu0 %1416
    %v1418 = vsel %vm689, %v1411, 0.0
    %1419 = vadd.xlane.f32.xlu0 %v1418
    %v1420 = vpop.xlane.xlu0 %1419
    %v1421 = vrcp.pop %v1414
    %v1422 = vrcp.pop %v1417
    %v1423 = vrcp.pop %v1420
    %v1424 = vmul.f32 %v1407, %v1421
    %v1425 = vmul.f32 %v1409, %v1422
    %v1426 = vmul.f32 %v1411, %v1423
    %v1427 = vpack.c.bf16 %v1425, %v1424
    %v1428 = vpack.c.bf16 %v1426, %v1426
    %1429 = vrot.lane.b32.xlu0 %v620, 32
    %v1430 = vpop.permute.xlu0 %1429
    %1431 = vrot.lane.b32.xlu0 %v621, 32
    %v1432 = vpop.permute.xlu0 %1431
    %v1435 = vsel %vm689, %v1427, 0
    %v1438 = vsel %vm689, %v1428, 0
    %v1441 = vsel %vm731, %v1432, 0
    %1443 = vmatprep.subr.bf16.mxu0 0
    %1444 = vmatpush1.bf16.msra.mxu0 %v1430
    %1445 = vmatprep.subr.bf16.mxu0 0
    %1446 = vmatpush1.bf16.msra.mxu0 %v1441
    %1447 = vmatprep.subr.bf16.mxu0 0
    %1448 = vmatpush1.bf16.msra.mxu0 0
    %1449 = vmatprep.subr.bf16.mxu0 0
    %1450 = vmatpush1.bf16.msra.mxu0 0
    %1451 = vmatprep.subr.bf16.mxu0 0
    %1452 = vmatpush1.bf16.msra.mxu0 0
    %1453 = vmatprep.subr.bf16.mxu0 0
    %1454 = vmatpush1.bf16.msra.mxu0 0
    %1455 = vmatprep.subr.bf16.mxu0 0
    %1456 = vmatpush1.bf16.msra.mxu0 0
    %1457 = vmatprep.subr.bf16.mxu0 0
    %1458 = vmatpush1.bf16.msra.mxu0 0
    %1459 = vmatprep.subr.bf16.mxu0 0
    %1460 = vmatpush1.bf16.msra.mxu0 0
    %1461 = vmatprep.subr.bf16.mxu0 0
    %1462 = vmatpush1.bf16.msra.mxu0 0
    %1463 = vmatprep.subr.bf16.mxu0 0
    %1464 = vmatpush1.bf16.msra.mxu0 0
    %1465 = vmatprep.subr.bf16.mxu0 0
    %1466 = vmatpush1.bf16.msra.mxu0 0
    %1467 = vmatprep.subr.bf16.mxu0 0
    %1468 = vmatpush1.bf16.msra.mxu0 0
    %1469 = vmatprep.subr.bf16.mxu0 0
    %1470 = vmatpush1.bf16.msra.mxu0 0
    %1471 = vmatprep.subr.bf16.mxu0 0
    %1472 = vmatpush1.bf16.msra.mxu0 0
    %1473 = vmatprep.subr.bf16.mxu0 0
    %1474 = vmatpush1.bf16.msra.mxu0 0
    %1475 = vmatprep.mubr.bf16.mxu0 0
    %1476 = vmatmul.mubr.bf16.gmra.mrb[0].mxu0 %v1435
    %v1477 = vpop.f32.mrb[0].mxu0
    %v1478 = vadd.f32 0.0, %v1477
    %v1479 = vpop.f32.mrb[0].mxu0
    %v1480 = vpop.f32.mrb[0].mxu0
    %v1481 = vadd.f32 0.0, %v1480
    %v1482 = vpop.f32.mrb[0].mxu0
    %1483 = vmatprep.mubr.bf16.mxu0 0
    %1484 = vmatmul.mubr.bf16.gmra.mrb[0].mxu0 %v1438
    %v1485 = vpop.f32.mrb[0].mxu0
    %v1486 = vadd.f32 0.0, %v1485
    %v1487 = vpop.f32.mrb[0].mxu0
    %v1488 = vpop.f32.mrb[0].mxu0
    %v1489 = vpop.f32.mrb[0].mxu0
    %1490 = vdwg.mxu0
    %v1491 = vpack.c.bf16 %v1481, %v1478
    %v1492 = vpack.c.bf16 %v1486, %v1486
    %v1497 = vunpack.c.l.b16 %v612
    %v1498 = vunpack.c.l.b16 %v613
    %v1499 = vunpack.c.l.b16 %v614
    %v1500 = vunpack.c.l.b16 %v615
    %v1501 = vpack.c.b16 %v1498, %v1497
    %v1502 = vpack.c.b16 %v1500, %v1499
    %v1506 = vsel %vm628, %v1491, 0
    %v1509 = vsel %vm628, %v1492, 0
    %1511 = vmatprep.subr.bf16.mxu0 0
    %1512 = vmatpush1.bf16.msra.mxu0 %v1501
    %1513 = vmatprep.subr.bf16.mxu0 0
    %1514 = vmatpush1.bf16.msra.mxu0 %v1502
    %1515 = vmatprep.subr.bf16.mxu0 0
    %1516 = vmatpush1.bf16.msra.mxu0 0
    %1517 = vmatprep.subr.bf16.mxu0 0
    %1518 = vmatpush1.bf16.msra.mxu0 0
    %1519 = vmatprep.subr.bf16.mxu0 0
    %1520 = vmatpush1.bf16.msra.mxu0 0
    %1521 = vmatprep.subr.bf16.mxu0 0
    %1522 = vmatpush1.bf16.msra.mxu0 0
    %1523 = vmatprep.subr.bf16.mxu0 0
    %1524 = vmatpush1.bf16.msra.mxu0 0
    %1525 = vmatprep.subr.bf16.mxu0 0
    %1526 = vmatpush1.bf16.msra.mxu0 0
    %1527 = vmatprep.subr.bf16.mxu0 0
    %1528 = vmatpush1.bf16.msra.mxu0 0
    %1529 = vmatprep.subr.bf16.mxu0 0
    %1530 = vmatpush1.bf16.msra.mxu0 0
    %1531 = vmatprep.subr.bf16.mxu0 0
    %1532 = vmatpush1.bf16.msra.mxu0 0
    %1533 = vmatprep.subr.bf16.mxu0 0
    %1534 = vmatpush1.bf16.msra.mxu0 0
    %1535 = vmatprep.subr.bf16.mxu0 0
    %1536 = vmatpush1.bf16.msra.mxu0 0
    %1537 = vmatprep.subr.bf16.mxu0 0
    %1538 = vmatpush1.bf16.msra.mxu0 0
    %1539 = vmatprep.subr.bf16.mxu0 0
    %1540 = vmatpush1.bf16.msra.mxu0 0
    %1541 = vmatprep.subr.bf16.mxu0 0
    %1542 = vmatpush1.bf16.msra.mxu0 0
    %1543 = vmatprep.mubr.bf16.mxu0 0
    %1544 = vmatmul.mubr.bf16.gmra.mrb[0].mxu0 %v1506
    %v1545 = vpop.f32.mrb[0].mxu0
    %v1546 = vadd.f32 0.0, %v1545
    %v1547 = vpop.f32.mrb[0].mxu0
    %v1548 = vpop.f32.mrb[0].mxu0
    %v1549 = vadd.f32 0.0, %v1548
    %v1550 = vpop.f32.mrb[0].mxu0
    %1551 = vmatprep.mubr.bf16.mxu0 0
    %1552 = vmatmul.mubr.bf16.gmra.mrb[0].mxu0 %v1509
    %v1553 = vpop.f32.mrb[0].mxu0
    %v1554 = vadd.f32 0.0, %v1553
    %v1555 = vpop.f32.mrb[0].mxu0
    %v1556 = vpop.f32.mrb[0].mxu0
    %v1557 = vpop.f32.mrb[0].mxu0
    %1558 = vdwg.mxu0
    %v1559 = vadd.f32 %v1323, %v1546
    %v1560 = vadd.f32 %v1324, %v1549
    %v1561 = vadd.f32 %v1325, %v1554
    %v1562 = vpack.c.bf16 %v535, %v529
    %v1563 = vpack.c.bf16 %v539, %v539
    %v1564 = vpack.c.bf16 %v537, %v531
    %v1565 = vpack.c.bf16 %v541, %v541
    %v1566 = vpack.c.bf16 %v594, %v589
    %v1567 = vpack.c.bf16 %v597, %v597
    %v1569 = vsel %vm628, %v1562, 0
    %v1572 = vsel %vm628, %v1563, 0
    %v1575 = vsel %vm628, %v1564, 0
    %v1578 = vsel %vm628, %v1565, 0
    %1580 = vmatprep.subr.bf16.mxu0 0
    %1581 = vmatpush1.bf16.xpose.msra.mxu0 %v1575
    %1582 = vmatprep.subr.bf16.mxu0 0
    %1583 = vmatpush1.bf16.xpose.msra.mxu0 %v1578
    %1584 = vmatprep.subr.bf16.mxu0 0
    %1585 = vmatpush1.bf16.xpose.msra.mxu0 0
    %1586 = vmatprep.subr.bf16.mxu0 0
    %1587 = vmatpush1.bf16.xpose.msra.mxu0 0
    %1588 = vmatprep.subr.bf16.mxu0 0
    %1589 = vmatpush1.bf16.xpose.msra.mxu0 0
    %1590 = vmatprep.subr.bf16.mxu0 0
    %1591 = vmatpush1.bf16.xpose.msra.mxu0 0
    %1592 = vmatprep.subr.bf16.mxu0 0
    %1593 = vmatpush1.bf16.xpose.msra.mxu0 0
    %1594 = vmatprep.subr.bf16.mxu0 0
    %1595 = vmatpush1.bf16.xpose.msra.mxu0 0
    %1596 = vmatprep.subr.bf16.mxu0 0
    %1597 = vmatpush1.bf16.xpose.msra.mxu0 0
    %1598 = vmatprep.subr.bf16.mxu0 0
    %1599 = vmatpush1.bf16.xpose.msra.mxu0 0
    %1600 = vmatprep.subr.bf16.mxu0 0
    %1601 = vmatpush1.bf16.xpose.msra.mxu0 0
    %1602 = vmatprep.subr.bf16.mxu0 0
    %1603 = vmatpush1.bf16.xpose.msra.mxu0 0
    %1604 = vmatprep.subr.bf16.mxu0 0
    %1605 = vmatpush1.bf16.xpose.msra.mxu0 0
    %1606 = vmatprep.subr.bf16.mxu0 0
    %1607 = vmatpush1.bf16.xpose.msra.mxu0 0
    %1608 = vmatprep.subr.bf16.mxu0 0
    %1609 = vmatpush1.bf16.xpose.msra.mxu0 0
    %1610 = vmatprep.subr.bf16.mxu0 0
    %1611 = vmatpush1.bf16.xpose.msra.mxu0 0
    %1612 = vmatprep.mubr.bf16.mxu0 0
    %1613 = vmatmul.mubr.bf16.gmra.mrb[0].mxu0 %v1569
    %v1614 = vpop.f32.mrb[0].mxu0
    %v1615 = vadd.f32 %v626, %v1614
    %v1616 = vpop.f32.mrb[0].mxu0
    %v1617 = vpop.f32.mrb[0].mxu0
    %v1618 = vadd.f32 %v626, %v1617
    %v1619 = vpop.f32.mrb[0].mxu0
    %1620 = vmatprep.mubr.bf16.mxu0 0
    %1621 = vmatmul.mubr.bf16.gmra.mrb[0].mxu0 %v1572
    %v1622 = vpop.f32.mrb[0].mxu0
    %v1623 = vadd.f32 %v626, %v1622
    %v1624 = vpop.f32.mrb[0].mxu0
    %v1625 = vpop.f32.mrb[0].mxu0
    %v1626 = vpop.f32.mrb[0].mxu0
    %1627 = vdwg.mxu0
    %v1628 = vsel %vm689, %v1615, -inf
    %1629 = vmax.xlane.f32.xlu0 %v1628
    %v1630 = vpop.xlane.xlu0 %1629
    %v1631 = vsel %vm689, %v1618, -inf
    %1632 = vmax.xlane.f32.xlu0 %v1631
    %v1633 = vpop.xlane.xlu0 %1632
    %v1634 = vsel %vm689, %v1623, -inf
    %1635 = vmax.xlane.f32.xlu0 %v1634
    %v1636 = vpop.xlane.xlu0 %1635
    %v1637 = vsub.f32 %v1615, %v1630
    %v1638 = vsub.f32 %v1618, %v1633
    %v1639 = vsub.f32 %v1623, %v1636
    %v1640 = vmul.f32 %v1637, 1.442695
    %v1641 = vpow.pop %v1640
    %v1642 = vmul.f32 %v1638, 1.442695
    %v1643 = vpow.pop %v1642
    %v1644 = vmul.f32 %v1639, 1.442695
    %v1645 = vpow.pop %v1644
    %v1646 = vsel %vm689, %v1641, 0.0
    %1647 = vadd.xlane.f32.xlu0 %v1646
    %v1648 = vpop.xlane.xlu0 %1647
    %v1649 = vsel %vm689, %v1643, 0.0
    %1650 = vadd.xlane.f32.xlu0 %v1649
    %v1651 = vpop.xlane.xlu0 %1650
    %v1652 = vsel %vm689, %v1645, 0.0
    %1653 = vadd.xlane.f32.xlu0 %v1652
    %v1654 = vpop.xlane.xlu0 %1653
    %v1655 = vrcp.pop %v1648
    %v1656 = vrcp.pop %v1651
    %v1657 = vrcp.pop %v1654
    %v1658 = vmul.f32 %v1641, %v1655
    %v1659 = vmul.f32 %v1643, %v1656
    %v1660 = vmul.f32 %v1645, %v1657
    %v1661 = vpack.c.bf16 %v1659, %v1658
    %v1662 = vpack.c.bf16 %v1660, %v1660
    %v1664 = vsel %vm689, %v1661, 0
    %v1667 = vsel %vm689, %v1662, 0
    %v1670 = vsel %vm731, %v1567, 0
    %1672 = vmatprep.subr.bf16.mxu0 0
    %1673 = vmatpush1.bf16.msra.mxu0 %v1566
    %1674 = vmatprep.subr.bf16.mxu0 0
    %1675 = vmatpush1.bf16.msra.mxu0 %v1670
    %1676 = vmatprep.subr.bf16.mxu0 0
    %1677 = vmatpush1.bf16.msra.mxu0 0
    %1678 = vmatprep.subr.bf16.mxu0 0
    %1679 = vmatpush1.bf16.msra.mxu0 0
    %1680 = vmatprep.subr.bf16.mxu0 0
    %1681 = vmatpush1.bf16.msra.mxu0 0
    %1682 = vmatprep.subr.bf16.mxu0 0
    %1683 = vmatpush1.bf16.msra.mxu0 0
    %1684 = vmatprep.subr.bf16.mxu0 0
    %1685 = vmatpush1.bf16.msra.mxu0 0
    %1686 = vmatprep.subr.bf16.mxu0 0
    %1687 = vmatpush1.bf16.msra.mxu0 0
    %1688 = vmatprep.subr.bf16.mxu0 0
    %1689 = vmatpush1.bf16.msra.mxu0 0
    %1690 = vmatprep.subr.bf16.mxu0 0
    %1691 = vmatpush1.bf16.msra.mxu0 0
    %1692 = vmatprep.subr.bf16.mxu0 0
    %1693 = vmatpush1.bf16.msra.mxu0 0
    %1694 = vmatprep.subr.bf16.mxu0 0
    %1695 = vmatpush1.bf16.msra.mxu0 0
    %1696 = vmatprep.subr.bf16.mxu0 0
    %1697 = vmatpush1.bf16.msra.mxu0 0
    %1698 = vmatprep.subr.bf16.mxu0 0
    %1699 = vmatpush1.bf16.msra.mxu0 0
    %1700 = vmatprep.subr.bf16.mxu0 0
    %1701 = vmatpush1.bf16.msra.mxu0 0
    %1702 = vmatprep.subr.bf16.mxu0 0
    %1703 = vmatpush1.bf16.msra.mxu0 0
    %1704 = vmatprep.mubr.bf16.mxu0 0
    %1705 = vmatmul.mubr.bf16.gmra.mrb[0].mxu0 %v1664
    %v1706 = vpop.f32.mrb[0].mxu0
    %v1707 = vadd.f32 0.0, %v1706
    %v1708 = vpop.f32.mrb[0].mxu0
    %v1709 = vpop.f32.mrb[0].mxu0
    %v1710 = vadd.f32 0.0, %v1709
    %v1711 = vpop.f32.mrb[0].mxu0
    %1712 = vmatprep.mubr.bf16.mxu0 0
    %1713 = vmatmul.mubr.bf16.gmra.mrb[0].mxu0 %v1667
    %v1714 = vpop.f32.mrb[0].mxu0
    %v1715 = vadd.f32 0.0, %v1714
    %v1716 = vpop.f32.mrb[0].mxu0
    %v1717 = vpop.f32.mrb[0].mxu0
    %v1718 = vpop.f32.mrb[0].mxu0
    %1719 = vdwg.mxu0
    %v1720 = vpack.c.bf16 %v1710, %v1707
    %v1721 = vpack.c.bf16 %v1715, %v1715
    %1724 = vrot.lane.b32.xlu0 %v1562, 96
    %v1725 = vpop.permute.xlu0 %1724
    %1726 = vrot.lane.b32.xlu0 %v1563, 96
    %v1727 = vpop.permute.xlu0 %1726
    %1730 = vrot.lane.b32.xlu0 %v1564, 96
    %v1731 = vpop.permute.xlu0 %1730
    %1732 = vrot.lane.b32.xlu0 %v1565, 96
    %v1733 = vpop.permute.xlu0 %1732
    %v1735 = vsel %vm628, %v1725, 0
    %v1738 = vsel %vm628, %v1727, 0
    %v1741 = vsel %vm628, %v1731, 0
    %v1744 = vsel %vm628, %v1733, 0
    %1746 = vmatprep.subr.bf16.mxu0 0
    %1747 = vmatpush1.bf16.xpose.msra.mxu0 %v1741
    %1748 = vmatprep.subr.bf16.mxu0 0
    %1749 = vmatpush1.bf16.xpose.msra.mxu0 %v1744
    %1750 = vmatprep.subr.bf16.mxu0 0
    %1751 = vmatpush1.bf16.xpose.msra.mxu0 0
    %1752 = vmatprep.subr.bf16.mxu0 0
    %1753 = vmatpush1.bf16.xpose.msra.mxu0 0
    %1754 = vmatprep.subr.bf16.mxu0 0
    %1755 = vmatpush1.bf16.xpose.msra.mxu0 0
    %1756 = vmatprep.subr.bf16.mxu0 0
    %1757 = vmatpush1.bf16.xpose.msra.mxu0 0
    %1758 = vmatprep.subr.bf16.mxu0 0
    %1759 = vmatpush1.bf16.xpose.msra.mxu0 0
    %1760 = vmatprep.subr.bf16.mxu0 0
    %1761 = vmatpush1.bf16.xpose.msra.mxu0 0
    %1762 = vmatprep.subr.bf16.mxu0 0
    %1763 = vmatpush1.bf16.xpose.msra.mxu0 0
    %1764 = vmatprep.subr.bf16.mxu0 0
    %1765 = vmatpush1.bf16.xpose.msra.mxu0 0
    %1766 = vmatprep.subr.bf16.mxu0 0
    %1767 = vmatpush1.bf16.xpose.msra.mxu0 0
    %1768 = vmatprep.subr.bf16.mxu0 0
    %1769 = vmatpush1.bf16.xpose.msra.mxu0 0
    %1770 = vmatprep.subr.bf16.mxu0 0
    %1771 = vmatpush1.bf16.xpose.msra.mxu0 0
    %1772 = vmatprep.subr.bf16.mxu0 0
    %1773 = vmatpush1.bf16.xpose.msra.mxu0 0
    %1774 = vmatprep.subr.bf16.mxu0 0
    %1775 = vmatpush1.bf16.xpose.msra.mxu0 0
    %1776 = vmatprep.subr.bf16.mxu0 0
    %1777 = vmatpush1.bf16.xpose.msra.mxu0 0
    %1778 = vmatprep.mubr.bf16.mxu0 0
    %1779 = vmatmul.mubr.bf16.gmra.mrb[0].mxu0 %v1735
    %v1780 = vpop.f32.mrb[0].mxu0
    %v1781 = vadd.f32 %v626, %v1780
    %v1782 = vpop.f32.mrb[0].mxu0
    %v1783 = vpop.f32.mrb[0].mxu0
    %v1784 = vadd.f32 %v626, %v1783
    %v1785 = vpop.f32.mrb[0].mxu0
    %1786 = vmatprep.mubr.bf16.mxu0 0
    %1787 = vmatmul.mubr.bf16.gmra.mrb[0].mxu0 %v1738
    %v1788 = vpop.f32.mrb[0].mxu0
    %v1789 = vadd.f32 %v626, %v1788
    %v1790 = vpop.f32.mrb[0].mxu0
    %v1791 = vpop.f32.mrb[0].mxu0
    %v1792 = vpop.f32.mrb[0].mxu0
    %1793 = vdwg.mxu0
    %v1794 = vsel %vm689, %v1781, -inf
    %1795 = vmax.xlane.f32.xlu0 %v1794
    %v1796 = vpop.xlane.xlu0 %1795
    %v1797 = vsel %vm689, %v1784, -inf
    %1798 = vmax.xlane.f32.xlu0 %v1797
    %v1799 = vpop.xlane.xlu0 %1798
    %v1800 = vsel %vm689, %v1789, -inf
    %1801 = vmax.xlane.f32.xlu0 %v1800
    %v1802 = vpop.xlane.xlu0 %1801
    %v1803 = vsub.f32 %v1781, %v1796
    %v1804 = vsub.f32 %v1784, %v1799
    %v1805 = vsub.f32 %v1789, %v1802
    %v1806 = vmul.f32 %v1803, 1.442695
    %v1807 = vpow.pop %v1806
    %v1808 = vmul.f32 %v1804, 1.442695
    %v1809 = vpow.pop %v1808
    %v1810 = vmul.f32 %v1805, 1.442695
    %v1811 = vpow.pop %v1810
    %v1812 = vsel %vm689, %v1807, 0.0
    %1813 = vadd.xlane.f32.xlu0 %v1812
    %v1814 = vpop.xlane.xlu0 %1813
    %v1815 = vsel %vm689, %v1809, 0.0
    %1816 = vadd.xlane.f32.xlu0 %v1815
    %v1817 = vpop.xlane.xlu0 %1816
    %v1818 = vsel %vm689, %v1811, 0.0
    %1819 = vadd.xlane.f32.xlu0 %v1818
    %v1820 = vpop.xlane.xlu0 %1819
    %v1821 = vrcp.pop %v1814
    %v1822 = vrcp.pop %v1817
    %v1823 = vrcp.pop %v1820
    %v1824 = vmul.f32 %v1807, %v1821
    %v1825 = vmul.f32 %v1809, %v1822
    %v1826 = vmul.f32 %v1811, %v1823
    %v1827 = vpack.c.bf16 %v1825, %v1824
    %v1828 = vpack.c.bf16 %v1826, %v1826
    %1831 = vrot.lane.b32.xlu0 %v1566, 96
    %v1832 = vpop.permute.xlu0 %1831
    %1833 = vrot.lane.b32.xlu0 %v1567, 96
    %v1834 = vpop.permute.xlu0 %1833
    %v1837 = vsel %vm689, %v1827, 0
    %v1840 = vsel %vm689, %v1828, 0
    %v1843 = vsel %vm731, %v1834, 0
    %1845 = vmatprep.subr.bf16.mxu0 0
    %1846 = vmatpush1.bf16.msra.mxu0 %v1832
    %1847 = vmatprep.subr.bf16.mxu0 0
    %1848 = vmatpush1.bf16.msra.mxu0 %v1843
    %1849 = vmatprep.subr.bf16.mxu0 0
    %1850 = vmatpush1.bf16.msra.mxu0 0
    %1851 = vmatprep.subr.bf16.mxu0 0
    %1852 = vmatpush1.bf16.msra.mxu0 0
    %1853 = vmatprep.subr.bf16.mxu0 0
    %1854 = vmatpush1.bf16.msra.mxu0 0
    %1855 = vmatprep.subr.bf16.mxu0 0
    %1856 = vmatpush1.bf16.msra.mxu0 0
    %1857 = vmatprep.subr.bf16.mxu0 0
    %1858 = vmatpush1.bf16.msra.mxu0 0
    %1859 = vmatprep.subr.bf16.mxu0 0
    %1860 = vmatpush1.bf16.msra.mxu0 0
    %1861 = vmatprep.subr.bf16.mxu0 0
    %1862 = vmatpush1.bf16.msra.mxu0 0
    %1863 = vmatprep.subr.bf16.mxu0 0
    %1864 = vmatpush1.bf16.msra.mxu0 0
    %1865 = vmatprep.subr.bf16.mxu0 0
    %1866 = vmatpush1.bf16.msra.mxu0 0
    %1867 = vmatprep.subr.bf16.mxu0 0
    %1868 = vmatpush1.bf16.msra.mxu0 0
    %1869 = vmatprep.subr.bf16.mxu0 0
    %1870 = vmatpush1.bf16.msra.mxu0 0
    %1871 = vmatprep.subr.bf16.mxu0 0
    %1872 = vmatpush1.bf16.msra.mxu0 0
    %1873 = vmatprep.subr.bf16.mxu0 0
    %1874 = vmatpush1.bf16.msra.mxu0 0
    %1875 = vmatprep.subr.bf16.mxu0 0
    %1876 = vmatpush1.bf16.msra.mxu0 0
    %1877 = vmatprep.mubr.bf16.mxu0 0
    %1878 = vmatmul.mubr.bf16.gmra.mrb[0].mxu0 %v1837
    %v1879 = vpop.f32.mrb[0].mxu0
    %v1880 = vadd.f32 0.0, %v1879
    %v1881 = vpop.f32.mrb[0].mxu0
    %v1882 = vpop.f32.mrb[0].mxu0
    %v1883 = vadd.f32 0.0, %v1882
    %v1884 = vpop.f32.mrb[0].mxu0
    %1885 = vmatprep.mubr.bf16.mxu0 0
    %1886 = vmatmul.mubr.bf16.gmra.mrb[0].mxu0 %v1840
    %v1887 = vpop.f32.mrb[0].mxu0
    %v1888 = vadd.f32 0.0, %v1887
    %v1889 = vpop.f32.mrb[0].mxu0
    %v1890 = vpop.f32.mrb[0].mxu0
    %v1891 = vpop.f32.mrb[0].mxu0
    %1892 = vdwg.mxu0
    %v1893 = vpack.c.bf16 %v1883, %v1880
    %v1894 = vpack.c.bf16 %v1888, %v1888
    %v1896 = vsel %vm628, %v1893, 0
    %v1899 = vsel %vm628, %v1894, 0
    %1901 = vmatprep.subr.bf16.mxu0 0
    %1902 = vmatpush1.bf16.msra.mxu0 %v966
    %1903 = vmatprep.subr.bf16.mxu0 0
    %1904 = vmatpush1.bf16.msra.mxu0 %v967
    %1905 = vmatprep.subr.bf16.mxu0 0
    %1906 = vmatpush1.bf16.msra.mxu0 0
    %1907 = vmatprep.subr.bf16.mxu0 0
    %1908 = vmatpush1.bf16.msra.mxu0 0
    %1909 = vmatprep.subr.bf16.mxu0 0
    %1910 = vmatpush1.bf16.msra.mxu0 0
    %1911 = vmatprep.subr.bf16.mxu0 0
    %1912 = vmatpush1.bf16.msra.mxu0 0
    %1913 = vmatprep.subr.bf16.mxu0 0
    %1914 = vmatpush1.bf16.msra.mxu0 0
    %1915 = vmatprep.subr.bf16.mxu0 0
    %1916 = vmatpush1.bf16.msra.mxu0 0
    %1917 = vmatprep.subr.bf16.mxu0 0
    %1918 = vmatpush1.bf16.msra.mxu0 0
    %1919 = vmatprep.subr.bf16.mxu0 0
    %1920 = vmatpush1.bf16.msra.mxu0 0
    %1921 = vmatprep.subr.bf16.mxu0 0
    %1922 = vmatpush1.bf16.msra.mxu0 0
    %1923 = vmatprep.subr.bf16.mxu0 0
    %1924 = vmatpush1.bf16.msra.mxu0 0
    %1925 = vmatprep.subr.bf16.mxu0 0
    %1926 = vmatpush1.bf16.msra.mxu0 0
    %1927 = vmatprep.subr.bf16.mxu0 0
    %1928 = vmatpush1.bf16.msra.mxu0 0
    %1929 = vmatprep.subr.bf16.mxu0 0
    %1930 = vmatpush1.bf16.msra.mxu0 0
    %1931 = vmatprep.subr.bf16.mxu0 0
    %1932 = vmatpush1.bf16.msra.mxu0 0
    %1933 = vmatprep.mubr.bf16.mxu0 0
    %1934 = vmatmul.mubr.bf16.gmra.mrb[0].mxu0 %v1896
    %v1935 = vpop.f32.mrb[0].mxu0
    %v1936 = vadd.f32 0.0, %v1935
    %v1937 = vpop.f32.mrb[0].mxu0
    %v1938 = vpop.f32.mrb[0].mxu0
    %v1939 = vadd.f32 0.0, %v1938
    %v1940 = vpop.f32.mrb[0].mxu0
    %1941 = vmatprep.mubr.bf16.mxu0 0
    %1942 = vmatmul.mubr.bf16.gmra.mrb[0].mxu0 %v1899
    %v1943 = vpop.f32.mrb[0].mxu0
    %v1944 = vadd.f32 0.0, %v1943
    %v1945 = vpop.f32.mrb[0].mxu0
    %v1946 = vpop.f32.mrb[0].mxu0
    %v1947 = vpop.f32.mrb[0].mxu0
    %1948 = vdwg.mxu0
    %v1950 = vsel %vm628, %v1720, 0
    %v1953 = vsel %vm628, %v1721, 0
    %1955 = vmatprep.subr.bf16.mxu0 0
    %1956 = vmatpush1.bf16.msra.mxu0 %v1032
    %1957 = vmatprep.subr.bf16.mxu0 0
    %1958 = vmatpush1.bf16.msra.mxu0 %v1033
    %1959 = vmatprep.subr.bf16.mxu0 0
    %1960 = vmatpush1.bf16.msra.mxu0 0
    %1961 = vmatprep.subr.bf16.mxu0 0
    %1962 = vmatpush1.bf16.msra.mxu0 0
    %1963 = vmatprep.subr.bf16.mxu0 0
    %1964 = vmatpush1.bf16.msra.mxu0 0
    %1965 = vmatprep.subr.bf16.mxu0 0
    %1966 = vmatpush1.bf16.msra.mxu0 0
    %1967 = vmatprep.subr.bf16.mxu0 0
    %1968 = vmatpush1.bf16.msra.mxu0 0
    %1969 = vmatprep.subr.bf16.mxu0 0
    %1970 = vmatpush1.bf16.msra.mxu0 0
    %1971 = vmatprep.subr.bf16.mxu0 0
    %1972 = vmatpush1.bf16.msra.mxu0 0
    %1973 = vmatprep.subr.bf16.mxu0 0
    %1974 = vmatpush1.bf16.msra.mxu0 0
    %1975 = vmatprep.subr.bf16.mxu0 0
    %1976 = vmatpush1.bf16.msra.mxu0 0
    %1977 = vmatprep.subr.bf16.mxu0 0
    %1978 = vmatpush1.bf16.msra.mxu0 0
    %1979 = vmatprep.subr.bf16.mxu0 0
    %1980 = vmatpush1.bf16.msra.mxu0 0
    %1981 = vmatprep.subr.bf16.mxu0 0
    %1982 = vmatpush1.bf16.msra.mxu0 0
    %1983 = vmatprep.subr.bf16.mxu0 0
    %1984 = vmatpush1.bf16.msra.mxu0 0
    %1985 = vmatprep.subr.bf16.mxu0 0
    %1986 = vmatpush1.bf16.msra.mxu0 0
    %1987 = vmatprep.mubr.bf16.mxu0 0
    %1988 = vmatmul.mubr.bf16.gmra.mrb[0].mxu0 %v1950
    %v1989 = vpop.f32.mrb[0].mxu0
    %v1990 = vadd.f32 %v1936, %v1989
    %v1991 = vpop.f32.mrb[0].mxu0
    %v1992 = vpop.f32.mrb[0].mxu0
    %v1993 = vadd.f32 %v1939, %v1992
    %v1994 = vpop.f32.mrb[0].mxu0
    %1995 = vmatprep.mubr.bf16.mxu0 0
    %1996 = vmatmul.mubr.bf16.gmra.mrb[0].mxu0 %v1953
    %v1997 = vpop.f32.mrb[0].mxu0
    %v1998 = vadd.f32 %v1944, %v1997
    %v1999 = vpop.f32.mrb[0].mxu0
    %v2000 = vpop.f32.mrb[0].mxu0
    %v2001 = vpop.f32.mrb[0].mxu0
    %2002 = vdwg.mxu0
    %2003 = vrot.lane.b32.xlu0 %v1562, 64
    %v2004 = vpop.permute.xlu0 %2003
    %2005 = vrot.lane.b32.xlu0 %v1563, 64
    %v2006 = vpop.permute.xlu0 %2005
    %2007 = vrot.lane.b32.xlu0 %v1564, 64
    %v2008 = vpop.permute.xlu0 %2007
    %2009 = vrot.lane.b32.xlu0 %v1565, 64
    %v2010 = vpop.permute.xlu0 %2009
    %v2012 = vsel %vm628, %v2004, 0
    %v2015 = vsel %vm628, %v2006, 0
    %v2018 = vsel %vm628, %v2008, 0
    %v2021 = vsel %vm628, %v2010, 0
    %2023 = vmatprep.subr.bf16.mxu0 0
    %2024 = vmatpush1.bf16.xpose.msra.mxu0 %v2018
    %2025 = vmatprep.subr.bf16.mxu0 0
    %2026 = vmatpush1.bf16.xpose.msra.mxu0 %v2021
    %2027 = vmatprep.subr.bf16.mxu0 0
    %2028 = vmatpush1.bf16.xpose.msra.mxu0 0
    %2029 = vmatprep.subr.bf16.mxu0 0
    %2030 = vmatpush1.bf16.xpose.msra.mxu0 0
    %2031 = vmatprep.subr.bf16.mxu0 0
    %2032 = vmatpush1.bf16.xpose.msra.mxu0 0
    %2033 = vmatprep.subr.bf16.mxu0 0
    %2034 = vmatpush1.bf16.xpose.msra.mxu0 0
    %2035 = vmatprep.subr.bf16.mxu0 0
    %2036 = vmatpush1.bf16.xpose.msra.mxu0 0
    %2037 = vmatprep.subr.bf16.mxu0 0
    %2038 = vmatpush1.bf16.xpose.msra.mxu0 0
    %2039 = vmatprep.subr.bf16.mxu0 0
    %2040 = vmatpush1.bf16.xpose.msra.mxu0 0
    %2041 = vmatprep.subr.bf16.mxu0 0
    %2042 = vmatpush1.bf16.xpose.msra.mxu0 0
    %2043 = vmatprep.subr.bf16.mxu0 0
    %2044 = vmatpush1.bf16.xpose.msra.mxu0 0
    %2045 = vmatprep.subr.bf16.mxu0 0
    %2046 = vmatpush1.bf16.xpose.msra.mxu0 0
    %2047 = vmatprep.subr.bf16.mxu0 0
    %2048 = vmatpush1.bf16.xpose.msra.mxu0 0
    %2049 = vmatprep.subr.bf16.mxu0 0
    %2050 = vmatpush1.bf16.xpose.msra.mxu0 0
    %2051 = vmatprep.subr.bf16.mxu0 0
    %2052 = vmatpush1.bf16.xpose.msra.mxu0 0
    %2053 = vmatprep.subr.bf16.mxu0 0
    %2054 = vmatpush1.bf16.xpose.msra.mxu0 0
    %2055 = vmatprep.mubr.bf16.mxu0 0
    %2056 = vmatmul.mubr.bf16.gmra.mrb[0].mxu0 %v2012
    %v2057 = vpop.f32.mrb[0].mxu0
    %v2058 = vadd.f32 %v626, %v2057
    %v2059 = vpop.f32.mrb[0].mxu0
    %v2060 = vpop.f32.mrb[0].mxu0
    %v2061 = vadd.f32 %v626, %v2060
    %v2062 = vpop.f32.mrb[0].mxu0
    %2063 = vmatprep.mubr.bf16.mxu0 0
    %2064 = vmatmul.mubr.bf16.gmra.mrb[0].mxu0 %v2015
    %v2065 = vpop.f32.mrb[0].mxu0
    %v2066 = vadd.f32 %v626, %v2065
    %v2067 = vpop.f32.mrb[0].mxu0
    %v2068 = vpop.f32.mrb[0].mxu0
    %v2069 = vpop.f32.mrb[0].mxu0
    %2070 = vdwg.mxu0
    %v2071 = vsel %vm689, %v2058, -inf
    %2072 = vmax.xlane.f32.xlu0 %v2071
    %v2073 = vpop.xlane.xlu0 %2072
    %v2074 = vsel %vm689, %v2061, -inf
    %2075 = vmax.xlane.f32.xlu0 %v2074
    %v2076 = vpop.xlane.xlu0 %2075
    %v2077 = vsel %vm689, %v2066, -inf
    %2078 = vmax.xlane.f32.xlu0 %v2077
    %v2079 = vpop.xlane.xlu0 %2078
    %v2080 = vsub.f32 %v2058, %v2073
    %v2081 = vsub.f32 %v2061, %v2076
    %v2082 = vsub.f32 %v2066, %v2079
    %v2083 = vmul.f32 %v2080, 1.442695
    %v2084 = vpow.pop %v2083
    %v2085 = vmul.f32 %v2081, 1.442695
    %v2086 = vpow.pop %v2085
    %v2087 = vmul.f32 %v2082, 1.442695
    %v2088 = vpow.pop %v2087
    %v2089 = vsel %vm689, %v2084, 0.0
    %2090 = vadd.xlane.f32.xlu0 %v2089
    %v2091 = vpop.xlane.xlu0 %2090
    %v2092 = vsel %vm689, %v2086, 0.0
    %2093 = vadd.xlane.f32.xlu0 %v2092
    %v2094 = vpop.xlane.xlu0 %2093
    %v2095 = vsel %vm689, %v2088, 0.0
    %2096 = vadd.xlane.f32.xlu0 %v2095
    %v2097 = vpop.xlane.xlu0 %2096
    %v2098 = vrcp.pop %v2091
    %v2099 = vrcp.pop %v2094
    %v2100 = vrcp.pop %v2097
    %v2101 = vmul.f32 %v2084, %v2098
    %v2102 = vmul.f32 %v2086, %v2099
    %v2103 = vmul.f32 %v2088, %v2100
    %v2104 = vpack.c.bf16 %v2102, %v2101
    %v2105 = vpack.c.bf16 %v2103, %v2103
    %2106 = vrot.lane.b32.xlu0 %v1566, 64
    %v2107 = vpop.permute.xlu0 %2106
    %2108 = vrot.lane.b32.xlu0 %v1567, 64
    %v2109 = vpop.permute.xlu0 %2108
    %v2112 = vsel %vm689, %v2104, 0
    %v2115 = vsel %vm689, %v2105, 0
    %v2118 = vsel %vm731, %v2109, 0
    %2120 = vmatprep.subr.bf16.mxu0 0
    %2121 = vmatpush1.bf16.msra.mxu0 %v2107
    %2122 = vmatprep.subr.bf16.mxu0 0
    %2123 = vmatpush1.bf16.msra.mxu0 %v2118
    %2124 = vmatprep.subr.bf16.mxu0 0
    %2125 = vmatpush1.bf16.msra.mxu0 0
    %2126 = vmatprep.subr.bf16.mxu0 0
    %2127 = vmatpush1.bf16.msra.mxu0 0
    %2128 = vmatprep.subr.bf16.mxu0 0
    %2129 = vmatpush1.bf16.msra.mxu0 0
    %2130 = vmatprep.subr.bf16.mxu0 0
    %2131 = vmatpush1.bf16.msra.mxu0 0
    %2132 = vmatprep.subr.bf16.mxu0 0
    %2133 = vmatpush1.bf16.msra.mxu0 0
    %2134 = vmatprep.subr.bf16.mxu0 0
    %2135 = vmatpush1.bf16.msra.mxu0 0
    %2136 = vmatprep.subr.bf16.mxu0 0
    %2137 = vmatpush1.bf16.msra.mxu0 0
    %2138 = vmatprep.subr.bf16.mxu0 0
    %2139 = vmatpush1.bf16.msra.mxu0 0
    %2140 = vmatprep.subr.bf16.mxu0 0
    %2141 = vmatpush1.bf16.msra.mxu0 0
    %2142 = vmatprep.subr.bf16.mxu0 0
    %2143 = vmatpush1.bf16.msra.mxu0 0
    %2144 = vmatprep.subr.bf16.mxu0 0
    %2145 = vmatpush1.bf16.msra.mxu0 0
    %2146 = vmatprep.subr.bf16.mxu0 0
    %2147 = vmatpush1.bf16.msra.mxu0 0
    %2148 = vmatprep.subr.bf16.mxu0 0
    %2149 = vmatpush1.bf16.msra.mxu0 0
    %2150 = vmatprep.subr.bf16.mxu0 0
    %2151 = vmatpush1.bf16.msra.mxu0 0
    %2152 = vmatprep.mubr.bf16.mxu0 0
    %2153 = vmatmul.mubr.bf16.gmra.mrb[0].mxu0 %v2112
    %v2154 = vpop.f32.mrb[0].mxu0
    %v2155 = vadd.f32 0.0, %v2154
    %v2156 = vpop.f32.mrb[0].mxu0
    %v2157 = vpop.f32.mrb[0].mxu0
    %v2158 = vadd.f32 0.0, %v2157
    %v2159 = vpop.f32.mrb[0].mxu0
    %2160 = vmatprep.mubr.bf16.mxu0 0
    %2161 = vmatmul.mubr.bf16.gmra.mrb[0].mxu0 %v2115
    %v2162 = vpop.f32.mrb[0].mxu0
    %v2163 = vadd.f32 0.0, %v2162
    %v2164 = vpop.f32.mrb[0].mxu0
    %v2165 = vpop.f32.mrb[0].mxu0
    %v2166 = vpop.f32.mrb[0].mxu0
    %2167 = vdwg.mxu0
    %v2168 = vpack.c.bf16 %v2158, %v2155
    %v2169 = vpack.c.bf16 %v2163, %v2163
    %v2171 = vsel %vm628, %v2168, 0
    %v2174 = vsel %vm628, %v2169, 0
    %2176 = vmatprep.subr.bf16.mxu0 0
    %2177 = vmatpush1.bf16.msra.mxu0 %v1265
    %2178 = vmatprep.subr.bf16.mxu0 0
    %2179 = vmatpush1.bf16.msra.mxu0 %v1266
    %2180 = vmatprep.subr.bf16.mxu0 0
    %2181 = vmatpush1.bf16.msra.mxu0 0
    %2182 = vmatprep.subr.bf16.mxu0 0
    %2183 = vmatpush1.bf16.msra.mxu0 0
    %2184 = vmatprep.subr.bf16.mxu0 0
    %2185 = vmatpush1.bf16.msra.mxu0 0
    %2186 = vmatprep.subr.bf16.mxu0 0
    %2187 = vmatpush1.bf16.msra.mxu0 0
    %2188 = vmatprep.subr.bf16.mxu0 0
    %2189 = vmatpush1.bf16.msra.mxu0 0
    %2190 = vmatprep.subr.bf16.mxu0 0
    %2191 = vmatpush1.bf16.msra.mxu0 0
    %2192 = vmatprep.subr.bf16.mxu0 0
    %2193 = vmatpush1.bf16.msra.mxu0 0
    %2194 = vmatprep.subr.bf16.mxu0 0
    %2195 = vmatpush1.bf16.msra.mxu0 0
    %2196 = vmatprep.subr.bf16.mxu0 0
    %2197 = vmatpush1.bf16.msra.mxu0 0
    %2198 = vmatprep.subr.bf16.mxu0 0
    %2199 = vmatpush1.bf16.msra.mxu0 0
    %2200 = vmatprep.subr.bf16.mxu0 0
    %2201 = vmatpush1.bf16.msra.mxu0 0
    %2202 = vmatprep.subr.bf16.mxu0 0
    %2203 = vmatpush1.bf16.msra.mxu0 0
    %2204 = vmatprep.subr.bf16.mxu0 0
    %2205 = vmatpush1.bf16.msra.mxu0 0
    %2206 = vmatprep.subr.bf16.mxu0 0
    %2207 = vmatpush1.bf16.msra.mxu0 0
    %2208 = vmatprep.mubr.bf16.mxu0 0
    %2209 = vmatmul.mubr.bf16.gmra.mrb[0].mxu0 %v2171
    %v2210 = vpop.f32.mrb[0].mxu0
    %v2211 = vadd.f32 0.0, %v2210
    %v2212 = vpop.f32.mrb[0].mxu0
    %v2213 = vpop.f32.mrb[0].mxu0
    %v2214 = vadd.f32 0.0, %v2213
    %v2215 = vpop.f32.mrb[0].mxu0
    %2216 = vmatprep.mubr.bf16.mxu0 0
    %2217 = vmatmul.mubr.bf16.gmra.mrb[0].mxu0 %v2174
    %v2218 = vpop.f32.mrb[0].mxu0
    %v2219 = vadd.f32 0.0, %v2218
    %v2220 = vpop.f32.mrb[0].mxu0
    %v2221 = vpop.f32.mrb[0].mxu0
    %v2222 = vpop.f32.mrb[0].mxu0
    %2223 = vdwg.mxu0
    %v2224 = vadd.f32 %v1990, %v2211
    %v2225 = vadd.f32 %v1993, %v2214
    %v2226 = vadd.f32 %v1998, %v2219
    %2227 = vrot.lane.b32.xlu0 %v1562, 32
    %v2228 = vpop.permute.xlu0 %2227
    %2229 = vrot.lane.b32.xlu0 %v1563, 32
    %v2230 = vpop.permute.xlu0 %2229
    %2231 = vrot.lane.b32.xlu0 %v1564, 32
    %v2232 = vpop.permute.xlu0 %2231
    %2233 = vrot.lane.b32.xlu0 %v1565, 32
    %v2234 = vpop.permute.xlu0 %2233
    %v2236 = vsel %vm628, %v2228, 0
    %v2239 = vsel %vm628, %v2230, 0
    %v2242 = vsel %vm628, %v2232, 0
    %v2245 = vsel %vm628, %v2234, 0
    %2247 = vmatprep.subr.bf16.mxu0 0
    %2248 = vmatpush1.bf16.xpose.msra.mxu0 %v2242
    %2249 = vmatprep.subr.bf16.mxu0 0
    %2250 = vmatpush1.bf16.xpose.msra.mxu0 %v2245
    %2251 = vmatprep.subr.bf16.mxu0 0
    %2252 = vmatpush1.bf16.xpose.msra.mxu0 0
    %2253 = vmatprep.subr.bf16.mxu0 0
    %2254 = vmatpush1.bf16.xpose.msra.mxu0 0
    %2255 = vmatprep.subr.bf16.mxu0 0
    %2256 = vmatpush1.bf16.xpose.msra.mxu0 0
    %2257 = vmatprep.subr.bf16.mxu0 0
    %2258 = vmatpush1.bf16.xpose.msra.mxu0 0
    %2259 = vmatprep.subr.bf16.mxu0 0
    %2260 = vmatpush1.bf16.xpose.msra.mxu0 0
    %2261 = vmatprep.subr.bf16.mxu0 0
    %2262 = vmatpush1.bf16.xpose.msra.mxu0 0
    %2263 = vmatprep.subr.bf16.mxu0 0
    %2264 = vmatpush1.bf16.xpose.msra.mxu0 0
    %2265 = vmatprep.subr.bf16.mxu0 0
    %2266 = vmatpush1.bf16.xpose.msra.mxu0 0
    %2267 = vmatprep.subr.bf16.mxu0 0
    %2268 = vmatpush1.bf16.xpose.msra.mxu0 0
    %2269 = vmatprep.subr.bf16.mxu0 0
    %2270 = vmatpush1.bf16.xpose.msra.mxu0 0
    %2271 = vmatprep.subr.bf16.mxu0 0
    %2272 = vmatpush1.bf16.xpose.msra.mxu0 0
    %2273 = vmatprep.subr.bf16.mxu0 0
    %2274 = vmatpush1.bf16.xpose.msra.mxu0 0
    %2275 = vmatprep.subr.bf16.mxu0 0
    %2276 = vmatpush1.bf16.xpose.msra.mxu0 0
    %2277 = vmatprep.subr.bf16.mxu0 0
    %2278 = vmatpush1.bf16.xpose.msra.mxu0 0
    %2279 = vmatprep.mubr.bf16.mxu0 0
    %2280 = vmatmul.mubr.bf16.gmra.mrb[0].mxu0 %v2236
    %v2281 = vpop.f32.mrb[0].mxu0
    %v2282 = vadd.f32 %v626, %v2281
    %v2283 = vpop.f32.mrb[0].mxu0
    %v2284 = vpop.f32.mrb[0].mxu0
    %v2285 = vadd.f32 %v626, %v2284
    %v2286 = vpop.f32.mrb[0].mxu0
    %2287 = vmatprep.mubr.bf16.mxu0 0
    %2288 = vmatmul.mubr.bf16.gmra.mrb[0].mxu0 %v2239
    %v2289 = vpop.f32.mrb[0].mxu0
    %v2290 = vadd.f32 %v626, %v2289
    %v2291 = vpop.f32.mrb[0].mxu0
    %v2292 = vpop.f32.mrb[0].mxu0
    %v2293 = vpop.f32.mrb[0].mxu0
    %2294 = vdwg.mxu0
    %v2295 = vsel %vm689, %v2282, -inf
    %2296 = vmax.xlane.f32.xlu0 %v2295
    %v2297 = vpop.xlane.xlu0 %2296
    %v2298 = vsel %vm689, %v2285, -inf
    %2299 = vmax.xlane.f32.xlu0 %v2298
    %v2300 = vpop.xlane.xlu0 %2299
    %v2301 = vsel %vm689, %v2290, -inf
    %2302 = vmax.xlane.f32.xlu0 %v2301
    %v2303 = vpop.xlane.xlu0 %2302
    %v2304 = vsub.f32 %v2282, %v2297
    %v2305 = vsub.f32 %v2285, %v2300
    %v2306 = vsub.f32 %v2290, %v2303
    %v2307 = vmul.f32 %v2304, 1.442695
    %v2308 = vpow.pop %v2307
    %v2309 = vmul.f32 %v2305, 1.442695
    %v2310 = vpow.pop %v2309
    %v2311 = vmul.f32 %v2306, 1.442695
    %v2312 = vpow.pop %v2311
    %v2313 = vsel %vm689, %v2308, 0.0
    %2314 = vadd.xlane.f32.xlu0 %v2313
    %v2315 = vpop.xlane.xlu0 %2314
    %v2316 = vsel %vm689, %v2310, 0.0
    %2317 = vadd.xlane.f32.xlu0 %v2316
    %v2318 = vpop.xlane.xlu0 %2317
    %v2319 = vsel %vm689, %v2312, 0.0
    %2320 = vadd.xlane.f32.xlu0 %v2319
    %v2321 = vpop.xlane.xlu0 %2320
    %v2322 = vrcp.pop %v2315
    %v2323 = vrcp.pop %v2318
    %v2324 = vrcp.pop %v2321
    %v2325 = vmul.f32 %v2308, %v2322
    %v2326 = vmul.f32 %v2310, %v2323
    %v2327 = vmul.f32 %v2312, %v2324
    %v2328 = vpack.c.bf16 %v2326, %v2325
    %v2329 = vpack.c.bf16 %v2327, %v2327
    %2330 = vrot.lane.b32.xlu0 %v1566, 32
    %v2331 = vpop.permute.xlu0 %2330
    %2332 = vrot.lane.b32.xlu0 %v1567, 32
    %v2333 = vpop.permute.xlu0 %2332
    %v2336 = vsel %vm689, %v2328, 0
    %v2339 = vsel %vm689, %v2329, 0
    %v2342 = vsel %vm731, %v2333, 0
    %2344 = vmatprep.subr.bf16.mxu0 0
    %2345 = vmatpush1.bf16.msra.mxu0 %v2331
    %2346 = vmatprep.subr.bf16.mxu0 0
    %2347 = vmatpush1.bf16.msra.mxu0 %v2342
    %2348 = vmatprep.subr.bf16.mxu0 0
    %2349 = vmatpush1.bf16.msra.mxu0 0
    %2350 = vmatprep.subr.bf16.mxu0 0
    %2351 = vmatpush1.bf16.msra.mxu0 0
    %2352 = vmatprep.subr.bf16.mxu0 0
    %2353 = vmatpush1.bf16.msra.mxu0 0
    %2354 = vmatprep.subr.bf16.mxu0 0
    %2355 = vmatpush1.bf16.msra.mxu0 0
    %2356 = vmatprep.subr.bf16.mxu0 0
    %2357 = vmatpush1.bf16.msra.mxu0 0
    %2358 = vmatprep.subr.bf16.mxu0 0
    %2359 = vmatpush1.bf16.msra.mxu0 0
    %2360 = vmatprep.subr.bf16.mxu0 0
    %2361 = vmatpush1.bf16.msra.mxu0 0
    %2362 = vmatprep.subr.bf16.mxu0 0
    %2363 = vmatpush1.bf16.msra.mxu0 0
    %2364 = vmatprep.subr.bf16.mxu0 0
    %2365 = vmatpush1.bf16.msra.mxu0 0
    %2366 = vmatprep.subr.bf16.mxu0 0
    %2367 = vmatpush1.bf16.msra.mxu0 0
    %2368 = vmatprep.subr.bf16.mxu0 0
    %2369 = vmatpush1.bf16.msra.mxu0 0
    %2370 = vmatprep.subr.bf16.mxu0 0
    %2371 = vmatpush1.bf16.msra.mxu0 0
    %2372 = vmatprep.subr.bf16.mxu0 0
    %2373 = vmatpush1.bf16.msra.mxu0 0
    %2374 = vmatprep.subr.bf16.mxu0 0
    %2375 = vmatpush1.bf16.msra.mxu0 0
    %2376 = vmatprep.mubr.bf16.mxu0 0
    %2377 = vmatmul.mubr.bf16.gmra.mrb[0].mxu0 %v2336
    %v2378 = vpop.f32.mrb[0].mxu0
    %v2379 = vadd.f32 0.0, %v2378
    %v2380 = vpop.f32.mrb[0].mxu0
    %v2381 = vpop.f32.mrb[0].mxu0
    %v2382 = vadd.f32 0.0, %v2381
    %v2383 = vpop.f32.mrb[0].mxu0
    %2384 = vmatprep.mubr.bf16.mxu0 0
    %2385 = vmatmul.mubr.bf16.gmra.mrb[0].mxu0 %v2339
    %v2386 = vpop.f32.mrb[0].mxu0
    %v2387 = vadd.f32 0.0, %v2386
    %v2388 = vpop.f32.mrb[0].mxu0
    %v2389 = vpop.f32.mrb[0].mxu0
    %v2390 = vpop.f32.mrb[0].mxu0
    %2391 = vdwg.mxu0
    %v2392 = vpack.c.bf16 %v2382, %v2379
    %v2393 = vpack.c.bf16 %v2387, %v2387
    %v2395 = vsel %vm628, %v2392, 0
    %v2398 = vsel %vm628, %v2393, 0
    %2400 = vmatprep.subr.bf16.mxu0 0
    %2401 = vmatpush1.bf16.msra.mxu0 %v1501
    %2402 = vmatprep.subr.bf16.mxu0 0
    %2403 = vmatpush1.bf16.msra.mxu0 %v1502
    %2404 = vmatprep.subr.bf16.mxu0 0
    %2405 = vmatpush1.bf16.msra.mxu0 0
    %2406 = vmatprep.subr.bf16.mxu0 0
    %2407 = vmatpush1.bf16.msra.mxu0 0
    %2408 = vmatprep.subr.bf16.mxu0 0
    %2409 = vmatpush1.bf16.msra.mxu0 0
    %2410 = vmatprep.subr.bf16.mxu0 0
    %2411 = vmatpush1.bf16.msra.mxu0 0
    %2412 = vmatprep.subr.bf16.mxu0 0
    %2413 = vmatpush1.bf16.msra.mxu0 0
    %2414 = vmatprep.subr.bf16.mxu0 0
    %2415 = vmatpush1.bf16.msra.mxu0 0
    %2416 = vmatprep.subr.bf16.mxu0 0
    %2417 = vmatpush1.bf16.msra.mxu0 0
    %2418 = vmatprep.subr.bf16.mxu0 0
    %2419 = vmatpush1.bf16.msra.mxu0 0
    %2420 = vmatprep.subr.bf16.mxu0 0
    %2421 = vmatpush1.bf16.msra.mxu0 0
    %2422 = vmatprep.subr.bf16.mxu0 0
    %2423 = vmatpush1.bf16.msra.mxu0 0
    %2424 = vmatprep.subr.bf16.mxu0 0
    %2425 = vmatpush1.bf16.msra.mxu0 0
    %2426 = vmatprep.subr.bf16.mxu0 0
    %2427 = vmatpush1.bf16.msra.mxu0 0
    %2428 = vmatprep.subr.bf16.mxu0 0
    %2429 = vmatpush1.bf16.msra.mxu0 0
    %2430 = vmatprep.subr.bf16.mxu0 0
    %2431 = vmatpush1.bf16.msra.mxu0 0
    %2432 = vmatprep.mubr.bf16.mxu0 0
    %2433 = vmatmul.mubr.bf16.gmra.mrb[0].mxu0 %v2395
    %v2434 = vpop.f32.mrb[0].mxu0
    %v2435 = vadd.f32 0.0, %v2434
    %v2436 = vpop.f32.mrb[0].mxu0
    %v2437 = vpop.f32.mrb[0].mxu0
    %v2438 = vadd.f32 0.0, %v2437
    %v2439 = vpop.f32.mrb[0].mxu0
    %2440 = vmatprep.mubr.bf16.mxu0 0
    %2441 = vmatmul.mubr.bf16.gmra.mrb[0].mxu0 %v2398
    %v2442 = vpop.f32.mrb[0].mxu0
    %v2443 = vadd.f32 0.0, %v2442
    %v2444 = vpop.f32.mrb[0].mxu0
    %v2445 = vpop.f32.mrb[0].mxu0
    %v2446 = vpop.f32.mrb[0].mxu0
    %2447 = vdwg.mxu0
    %v2448 = vadd.f32 %v2224, %v2435
    %v2449 = vadd.f32 %v2225, %v2438
    %v2450 = vadd.f32 %v2226, %v2443
    %v2451 = vadd.f32 %v184, %v1559
    %v2452 = vadd.f32 %v187, %v1560
    %v2453 = vadd.f32 %v192, %v1561
    %v2454 = vadd.f32 %v195, %v2448
    %v2455 = vadd.f32 %v200, %v2449
    %v2456 = vadd.f32 %v203, %v2450
    %v2457 = vld [vmem:[%s14] sm:$0x1]
    %v2459 = vlaneseq
    %v2460 = vshrl.u32 %v2459, 7
    %v2461 = vsub.s32 0, %v2460
    %v2462 = vrot.slane %v2457, %v2461
    %v2464 = vadd.f32 %v2451, %v2462
    %v2465 = vadd.f32 %v2452, %v2462
    %v2466 = vadd.f32 %v2453, %v2462
    %v2467 = vadd.f32 %v2454, %v2462
    %v2468 = vadd.f32 %v2455, %v2462
    %v2469 = vadd.f32 %v2456, %v2462
    %v2470 = vld [vmem:[%s15] sm:$0x1]
    %v2471 = vld [vmem:[%s16] sm:$0x1]
    %2472 = vadd.xlane.f32.xlu0 %v2464
    %v2473 = vpop.xlane.xlu0 %2472
    %2474 = vadd.xlane.f32.xlu0 %v2465
    %v2475 = vpop.xlane.xlu0 %2474
    %2476 = vadd.xlane.f32.xlu0 %v2466
    %v2477 = vpop.xlane.xlu0 %2476
    %2478 = vadd.xlane.f32.xlu0 %v2467
    %v2479 = vpop.xlane.xlu0 %2478
    %2480 = vadd.xlane.f32.xlu0 %v2468
    %v2481 = vpop.xlane.xlu0 %2480
    %2482 = vadd.xlane.f32.xlu0 %v2469
    %v2483 = vpop.xlane.xlu0 %2482
    %v2484 = vmul.f32 %v2473, %v221
    %v2485 = vmul.f32 %v2475, %v221
    %v2486 = vmul.f32 %v2477, %v221
    %v2487 = vmul.f32 %v2479, %v221
    %v2488 = vmul.f32 %v2481, %v221
    %v2489 = vmul.f32 %v2483, %v221
    %v2490 = vsub.f32 %v2464, %v2484
    %v2491 = vsub.f32 %v2465, %v2485
    %v2492 = vsub.f32 %v2466, %v2486
    %v2493 = vsub.f32 %v2467, %v2487
    %v2494 = vsub.f32 %v2468, %v2488
    %v2495 = vsub.f32 %v2469, %v2489
    %v2496 = vmul.f32 %v2490, %v2490
    %v2497 = vmul.f32 %v2491, %v2491
    %v2498 = vmul.f32 %v2492, %v2492
    %v2499 = vmul.f32 %v2493, %v2493
    %v2500 = vmul.f32 %v2494, %v2494
    %v2501 = vmul.f32 %v2495, %v2495
    %2502 = vadd.xlane.f32.xlu0 %v2496
    %v2503 = vpop.xlane.xlu0 %2502
    %2504 = vadd.xlane.f32.xlu0 %v2497
    %v2505 = vpop.xlane.xlu0 %2504
    %2506 = vadd.xlane.f32.xlu0 %v2498
    %v2507 = vpop.xlane.xlu0 %2506
    %2508 = vadd.xlane.f32.xlu0 %v2499
    %v2509 = vpop.xlane.xlu0 %2508
    %2510 = vadd.xlane.f32.xlu0 %v2500
    %v2511 = vpop.xlane.xlu0 %2510
    %2512 = vadd.xlane.f32.xlu0 %v2501
    %v2513 = vpop.xlane.xlu0 %2512
    %v2514 = vmul.f32 %v2503, %v221
    %v2515 = vmul.f32 %v2505, %v221
    %v2516 = vmul.f32 %v2507, %v221
    %v2517 = vmul.f32 %v2509, %v221
    %v2518 = vmul.f32 %v2511, %v221
    %v2519 = vmul.f32 %v2513, %v221
    %v2520 = vadd.f32 %v2514, 1e-12
    %v2521 = vadd.f32 %v2515, 1e-12
    %v2522 = vadd.f32 %v2516, 1e-12
    %v2523 = vadd.f32 %v2517, 1e-12
    %v2524 = vadd.f32 %v2518, 1e-12
    %v2525 = vadd.f32 %v2519, 1e-12
    %v2526 = vrsqrt.pop %v2520
    %v2527 = vrsqrt.pop %v2521
    %v2528 = vrsqrt.pop %v2522
    %v2529 = vrsqrt.pop %v2523
    %v2530 = vrsqrt.pop %v2524
    %v2531 = vrsqrt.pop %v2525
    %v2532 = vmul.f32 %v2490, %v2526
    %v2533 = vmul.f32 %v2491, %v2527
    %v2534 = vmul.f32 %v2492, %v2528
    %v2535 = vmul.f32 %v2493, %v2529
    %v2536 = vmul.f32 %v2494, %v2530
    %v2537 = vmul.f32 %v2495, %v2531
    %v2539 = vlaneseq
    %v2540 = vshrl.u32 %v2539, 7
    %v2541 = vsub.s32 0, %v2540
    %v2542 = vrot.slane %v2470, %v2541
    %v2544 = vmul.f32 %v2532, %v2542
    %v2545 = vmul.f32 %v2533, %v2542
    %v2546 = vmul.f32 %v2534, %v2542
    %v2547 = vmul.f32 %v2535, %v2542
    %v2548 = vmul.f32 %v2536, %v2542
    %v2549 = vmul.f32 %v2537, %v2542
    %v2551 = vlaneseq
    %v2552 = vshrl.u32 %v2551, 7
    %v2553 = vsub.s32 0, %v2552
    %v2554 = vrot.slane %v2471, %v2553
    %v2556 = vadd.f32 %v2544, %v2554
    %v2557 = vadd.f32 %v2545, %v2554
    %v2558 = vadd.f32 %v2546, %v2554
    %v2559 = vadd.f32 %v2547, %v2554
    %v2560 = vadd.f32 %v2548, %v2554
    %v2561 = vadd.f32 %v2549, %v2554
    %v2562 = vpack.c.bf16 %v2557, %v2556
    %v2563 = vpack.c.bf16 %v2559, %v2558
    %v2564 = vpack.c.bf16 %v2561, %v2560
    %v2565 = vld [vmem:[%s17] sm:$0xff]
    %v2566 = vld [vmem:[%s17 + $0x8] sm:$0xff]
    %v2567 = vld [vmem:[%s17 + $0x10] sm:$0xff]
    %v2568 = vld [vmem:[%s17 + $0x18] sm:$0xff]
    %v2569 = vld [vmem:[%s17 + $0x20] sm:$0xff]
    %v2570 = vld [vmem:[%s17 + $0x28] sm:$0xff]
    %v2571 = vld [vmem:[%s17 + $0x30] sm:$0xff]
    %v2572 = vld [vmem:[%s17 + $0x38] sm:$0xff]
    %v2573 = vld [vmem:[%s17 + $0x40] sm:$0xff]
    %v2574 = vld [vmem:[%s17 + $0x48] sm:$0xff]
    %v2575 = vld [vmem:[%s17 + $0x50] sm:$0xff]
    %v2576 = vld [vmem:[%s17 + $0x58] sm:$0xff]
    %v2577 = vld [vmem:[%s17 + $0x60] sm:$0xff]
    %v2578 = vld [vmem:[%s17 + $0x68] sm:$0xff]
    %v2579 = vld [vmem:[%s17 + $0x70] sm:$0xff]
    %v2580 = vld [vmem:[%s17 + $0x78] sm:$0xff]
    %v2581 = vld [vmem:[%s18] sm:$0x3]
    %v2583 = vlaneseq
    %v2584 = vshrl.u32 %v2583, 7
    %v2585 = vsub.s32 0, %v2584
    %v2586 = vrot.slane %v2581, %v2585
    %v2587 = vlaneseq
    %v2588 = vshrl.u32 %v2587, 7
    %v2589 = vsub.s32 1, %v2588
    %v2590 = vrot.slane %v2581, %v2589
    %v2609 = vunpack.c.l.b16 %v2565
    %v2610 = vunpack.c.h.b16 %v2565
    %v2611 = vunpack.c.l.b16 %v2566
    %v2612 = vunpack.c.h.b16 %v2566
    %v2613 = vunpack.c.l.b16 %v2567
    %v2614 = vunpack.c.h.b16 %v2567
    %v2615 = vunpack.c.l.b16 %v2568
    %v2616 = vunpack.c.h.b16 %v2568
    %v2617 = vunpack.c.l.b16 %v2569
    %v2618 = vunpack.c.h.b16 %v2569
    %v2619 = vunpack.c.l.b16 %v2570
    %v2620 = vunpack.c.h.b16 %v2570
    %v2621 = vunpack.c.l.b16 %v2571
    %v2622 = vunpack.c.h.b16 %v2571
    %v2623 = vunpack.c.l.b16 %v2572
    %v2624 = vunpack.c.h.b16 %v2572
    %v2625 = vunpack.c.l.b16 %v2573
    %v2626 = vunpack.c.h.b16 %v2573
    %v2627 = vunpack.c.l.b16 %v2574
    %v2628 = vunpack.c.h.b16 %v2574
    %v2629 = vunpack.c.l.b16 %v2575
    %v2630 = vunpack.c.h.b16 %v2575
    %v2631 = vunpack.c.l.b16 %v2576
    %v2632 = vunpack.c.h.b16 %v2576
    %v2633 = vunpack.c.l.b16 %v2577
    %v2634 = vunpack.c.h.b16 %v2577
    %v2635 = vunpack.c.l.b16 %v2578
    %v2636 = vunpack.c.h.b16 %v2578
    %v2637 = vunpack.c.l.b16 %v2579
    %v2638 = vunpack.c.h.b16 %v2579
    %v2639 = vunpack.c.l.b16 %v2580
    %v2640 = vunpack.c.h.b16 %v2580
    %v2641 = vpack.c.b16 %v2611, %v2609
    %v2642 = vpack.c.b16 %v2612, %v2610
    %v2643 = vpack.c.b16 %v2615, %v2613
    %v2644 = vpack.c.b16 %v2616, %v2614
    %v2645 = vpack.c.b16 %v2619, %v2617
    %v2646 = vpack.c.b16 %v2620, %v2618
    %v2647 = vpack.c.b16 %v2623, %v2621
    %v2648 = vpack.c.b16 %v2624, %v2622
    %v2649 = vpack.c.b16 %v2627, %v2625
    %v2650 = vpack.c.b16 %v2628, %v2626
    %v2651 = vpack.c.b16 %v2631, %v2629
    %v2652 = vpack.c.b16 %v2632, %v2630
    %v2653 = vpack.c.b16 %v2635, %v2633
    %v2654 = vpack.c.b16 %v2636, %v2634
    %v2655 = vpack.c.b16 %v2639, %v2637
    %v2656 = vpack.c.b16 %v2640, %v2638
    %2673 = vmatprep.subr.bf16.mxu0 %v2642
    %2674 = vmatpush1.bf16.msra.mxu0 %v2641
    %2675 = vmatprep.subr.bf16.mxu0 %v2644
    %2676 = vmatpush1.bf16.msra.mxu0 %v2643
    %2677 = vmatprep.subr.bf16.mxu0 %v2646
    %2678 = vmatpush1.bf16.msra.mxu0 %v2645
    %2679 = vmatprep.subr.bf16.mxu0 %v2648
    %2680 = vmatpush1.bf16.msra.mxu0 %v2647
    %2681 = vmatprep.subr.bf16.mxu0 %v2650
    %2682 = vmatpush1.bf16.msra.mxu0 %v2649
    %2683 = vmatprep.subr.bf16.mxu0 %v2652
    %2684 = vmatpush1.bf16.msra.mxu0 %v2651
    %2685 = vmatprep.subr.bf16.mxu0 %v2654
    %2686 = vmatpush1.bf16.msra.mxu0 %v2653
    %2687 = vmatprep.subr.bf16.mxu0 %v2656
    %2688 = vmatpush1.bf16.msra.mxu0 %v2655
    %2689 = vmatprep.subr.bf16.mxu0 0
    %2690 = vmatpush1.bf16.msra.mxu0 0
    %2691 = vmatprep.subr.bf16.mxu0 0
    %2692 = vmatpush1.bf16.msra.mxu0 0
    %2693 = vmatprep.subr.bf16.mxu0 0
    %2694 = vmatpush1.bf16.msra.mxu0 0
    %2695 = vmatprep.subr.bf16.mxu0 0
    %2696 = vmatpush1.bf16.msra.mxu0 0
    %2697 = vmatprep.subr.bf16.mxu0 0
    %2698 = vmatpush1.bf16.msra.mxu0 0
    %2699 = vmatprep.subr.bf16.mxu0 0
    %2700 = vmatpush1.bf16.msra.mxu0 0
    %2701 = vmatprep.subr.bf16.mxu0 0
    %2702 = vmatpush1.bf16.msra.mxu0 0
    %2703 = vmatprep.subr.bf16.mxu0 0
    %2704 = vmatpush1.bf16.msra.mxu0 0
    %2705 = vmatprep.mubr.bf16.mxu0 0
    %2706 = vmatmul.mubr.bf16.gmra.mrb[0].mxu0 %v2562
    %v2707 = vpop.f32.mrb[0].mxu0
    %v2708 = vadd.f32 %v2586, %v2707
    %v2709 = vpop.f32.mrb[0].mxu0
    %v2710 = vadd.f32 %v2590, %v2709
    %v2711 = vpop.f32.mrb[0].mxu0
    %v2712 = vadd.f32 %v2586, %v2711
    %v2713 = vpop.f32.mrb[0].mxu0
    %v2714 = vadd.f32 %v2590, %v2713
    %2715 = vmatprep.mubr.bf16.mxu0 0
    %2716 = vmatmul.mubr.bf16.gmra.mrb[0].mxu0 %v2563
    %v2717 = vpop.f32.mrb[0].mxu0
    %v2718 = vadd.f32 %v2586, %v2717
    %v2719 = vpop.f32.mrb[0].mxu0
    %v2720 = vadd.f32 %v2590, %v2719
    %v2721 = vpop.f32.mrb[0].mxu0
    %v2722 = vadd.f32 %v2586, %v2721
    %v2723 = vpop.f32.mrb[0].mxu0
    %v2724 = vadd.f32 %v2590, %v2723
    %2725 = vmatprep.mubr.bf16.mxu0 0
    %2726 = vmatmul.mubr.bf16.gmra.mrb[0].mxu0 %v2564
    %v2727 = vpop.f32.mrb[0].mxu0
    %v2728 = vadd.f32 %v2586, %v2727
    %v2729 = vpop.f32.mrb[0].mxu0
    %v2730 = vadd.f32 %v2590, %v2729
    %v2731 = vpop.f32.mrb[0].mxu0
    %v2732 = vadd.f32 %v2586, %v2731
    %v2733 = vpop.f32.mrb[0].mxu0
    %v2734 = vadd.f32 %v2590, %v2733
    %2735 = vdwg.mxu0
    %v2736 = vmul.f32 %v2708, %v2708
    %v2737 = vmul.f32 %v2710, %v2710
    %v2738 = vmul.f32 %v2712, %v2712
    %v2739 = vmul.f32 %v2714, %v2714
    %v2740 = vmul.f32 %v2718, %v2718
    %v2741 = vmul.f32 %v2720, %v2720
    %v2742 = vmul.f32 %v2722, %v2722
    %v2743 = vmul.f32 %v2724, %v2724
    %v2744 = vmul.f32 %v2728, %v2728
    %v2745 = vmul.f32 %v2730, %v2730
    %v2746 = vmul.f32 %v2732, %v2732
    %v2747 = vmul.f32 %v2734, %v2734
    %v2748 = vmul.f32 %v2708, %v2736
    %v2749 = vmul.f32 %v2710, %v2737
    %v2750 = vmul.f32 %v2712, %v2738
    %v2751 = vmul.f32 %v2714, %v2739
    %v2752 = vmul.f32 %v2718, %v2740
    %v2753 = vmul.f32 %v2720, %v2741
    %v2754 = vmul.f32 %v2722, %v2742
    %v2755 = vmul.f32 %v2724, %v2743
    %v2756 = vmul.f32 %v2728, %v2744
    %v2757 = vmul.f32 %v2730, %v2745
    %v2758 = vmul.f32 %v2732, %v2746
    %v2759 = vmul.f32 %v2734, %v2747
    %v2760 = vmul.f32 %v2748, 0.044715
    %v2761 = vmul.f32 %v2749, 0.044715
    %v2762 = vmul.f32 %v2750, 0.044715
    %v2763 = vmul.f32 %v2751, 0.044715
    %v2764 = vmul.f32 %v2752, 0.044715
    %v2765 = vmul.f32 %v2753, 0.044715
    %v2766 = vmul.f32 %v2754, 0.044715
    %v2767 = vmul.f32 %v2755, 0.044715
    %v2768 = vmul.f32 %v2756, 0.044715
    %v2769 = vmul.f32 %v2757, 0.044715
    %v2770 = vmul.f32 %v2758, 0.044715
    %v2771 = vmul.f32 %v2759, 0.044715
    %v2772 = vadd.f32 %v2708, %v2760
    %v2773 = vadd.f32 %v2710, %v2761
    %v2774 = vadd.f32 %v2712, %v2762
    %v2775 = vadd.f32 %v2714, %v2763
    %v2776 = vadd.f32 %v2718, %v2764
    %v2777 = vadd.f32 %v2720, %v2765
    %v2778 = vadd.f32 %v2722, %v2766
    %v2779 = vadd.f32 %v2724, %v2767
    %v2780 = vadd.f32 %v2728, %v2768
    %v2781 = vadd.f32 %v2730, %v2769
    %v2782 = vadd.f32 %v2732, %v2770
    %v2783 = vadd.f32 %v2734, %v2771
    %v2784 = vmul.f32 %v2772, 0.7978846
    %v2785 = vmul.f32 %v2773, 0.7978846
    %v2786 = vmul.f32 %v2774, 0.7978846
    %v2787 = vmul.f32 %v2775, 0.7978846
    %v2788 = vmul.f32 %v2776, 0.7978846
    %v2789 = vmul.f32 %v2777, 0.7978846
    %v2790 = vmul.f32 %v2778, 0.7978846
    %v2791 = vmul.f32 %v2779, 0.7978846
    %v2792 = vmul.f32 %v2780, 0.7978846
    %v2793 = vmul.f32 %v2781, 0.7978846
    %v2794 = vmul.f32 %v2782, 0.7978846
    %v2795 = vmul.f32 %v2783, 0.7978846
    %v2796 = vtanh.pop %v2784
    %v2797 = vtanh.pop %v2785
    %v2798 = vtanh.pop %v2786
    %v2799 = vtanh.pop %v2787
    %v2800 = vtanh.pop %v2788
    %v2801 = vtanh.pop %v2789
    %v2802 = vtanh.pop %v2790
    %v2803 = vtanh.pop %v2791
    %v2804 = vtanh.pop %v2792
    %v2805 = vtanh.pop %v2793
    %v2806 = vtanh.pop %v2794
    %v2807 = vtanh.pop %v2795
    %v2808 = vadd.f32 %v2796, 1.0
    %v2809 = vadd.f32 %v2797, 1.0
    %v2810 = vadd.f32 %v2798, 1.0
    %v2811 = vadd.f32 %v2799, 1.0
    %v2812 = vadd.f32 %v2800, 1.0
    %v2813 = vadd.f32 %v2801, 1.0
    %v2814 = vadd.f32 %v2802, 1.0
    %v2815 = vadd.f32 %v2803, 1.0
    %v2816 = vadd.f32 %v2804, 1.0
    %v2817 = vadd.f32 %v2805, 1.0
    %v2818 = vadd.f32 %v2806, 1.0
    %v2819 = vadd.f32 %v2807, 1.0
    %v2820 = vmul.f32 %v2808, 0.5
    %v2821 = vmul.f32 %v2809, 0.5
    %v2822 = vmul.f32 %v2810, 0.5
    %v2823 = vmul.f32 %v2811, 0.5
    %v2824 = vmul.f32 %v2812, 0.5
    %v2825 = vmul.f32 %v2813, 0.5
    %v2826 = vmul.f32 %v2814, 0.5
    %v2827 = vmul.f32 %v2815, 0.5
    %v2828 = vmul.f32 %v2816, 0.5
    %v2829 = vmul.f32 %v2817, 0.5
    %v2830 = vmul.f32 %v2818, 0.5
    %v2831 = vmul.f32 %v2819, 0.5
    %v2832 = vmul.f32 %v2708, %v2820
    %v2833 = vmul.f32 %v2710, %v2821
    %v2834 = vmul.f32 %v2712, %v2822
    %v2835 = vmul.f32 %v2714, %v2823
    %v2836 = vmul.f32 %v2718, %v2824
    %v2837 = vmul.f32 %v2720, %v2825
    %v2838 = vmul.f32 %v2722, %v2826
    %v2839 = vmul.f32 %v2724, %v2827
    %v2840 = vmul.f32 %v2728, %v2828
    %v2841 = vmul.f32 %v2730, %v2829
    %v2842 = vmul.f32 %v2732, %v2830
    %v2843 = vmul.f32 %v2734, %v2831
    %v2844 = vpack.c.bf16 %v2834, %v2832
    %v2845 = vpack.c.bf16 %v2835, %v2833
    %v2846 = vpack.c.bf16 %v2838, %v2836
    %v2847 = vpack.c.bf16 %v2839, %v2837
    %v2848 = vpack.c.bf16 %v2842, %v2840
    %v2849 = vpack.c.bf16 %v2843, %v2841
    %v2850 = vld [vmem:[%s19] sm:$0xf]
    %v2851 = vld [vmem:[%s19 + $0x4] sm:$0xf]
    %v2852 = vld [vmem:[%s19 + $0x8] sm:$0xf]
    %v2853 = vld [vmem:[%s19 + $0xc] sm:$0xf]
    %v2854 = vld [vmem:[%s19 + $0x10] sm:$0xf]
    %v2855 = vld [vmem:[%s19 + $0x14] sm:$0xf]
    %v2856 = vld [vmem:[%s19 + $0x18] sm:$0xf]
    %v2857 = vld [vmem:[%s19 + $0x1c] sm:$0xf]
    %v2858 = vld [vmem:[%s19 + $0x20] sm:$0xf]
    %v2859 = vld [vmem:[%s19 + $0x24] sm:$0xf]
    %v2860 = vld [vmem:[%s19 + $0x28] sm:$0xf]
    %v2861 = vld [vmem:[%s19 + $0x2c] sm:$0xf]
    %v2862 = vld [vmem:[%s19 + $0x30] sm:$0xf]
    %v2863 = vld [vmem:[%s19 + $0x34] sm:$0xf]
    %v2864 = vld [vmem:[%s19 + $0x38] sm:$0xf]
    %v2865 = vld [vmem:[%s19 + $0x3c] sm:$0xf]
    %v2866 = vld [vmem:[%s19 + $0x40] sm:$0xf]
    %v2867 = vld [vmem:[%s19 + $0x44] sm:$0xf]
    %v2868 = vld [vmem:[%s19 + $0x48] sm:$0xf]
    %v2869 = vld [vmem:[%s19 + $0x4c] sm:$0xf]
    %v2870 = vld [vmem:[%s19 + $0x50] sm:$0xf]
    %v2871 = vld [vmem:[%s19 + $0x54] sm:$0xf]
    %v2872 = vld [vmem:[%s19 + $0x58] sm:$0xf]
    %v2873 = vld [vmem:[%s19 + $0x5c] sm:$0xf]
    %v2874 = vld [vmem:[%s19 + $0x60] sm:$0xf]
    %v2875 = vld [vmem:[%s19 + $0x64] sm:$0xf]
    %v2876 = vld [vmem:[%s19 + $0x68] sm:$0xf]
    %v2877 = vld [vmem:[%s19 + $0x6c] sm:$0xf]
    %v2878 = vld [vmem:[%s19 + $0x70] sm:$0xf]
    %v2879 = vld [vmem:[%s19 + $0x74] sm:$0xf]
    %v2880 = vld [vmem:[%s19 + $0x78] sm:$0xf]
    %v2881 = vld [vmem:[%s19 + $0x7c] sm:$0xf]
    %v2914 = vunpack.c.l.b16 %v2850
    %v2915 = vunpack.c.l.b16 %v2851
    %v2916 = vunpack.c.l.b16 %v2852
    %v2917 = vunpack.c.l.b16 %v2853
    %v2918 = vunpack.c.l.b16 %v2854
    %v2919 = vunpack.c.l.b16 %v2855
    %v2920 = vunpack.c.l.b16 %v2856
    %v2921 = vunpack.c.l.b16 %v2857
    %v2922 = vunpack.c.l.b16 %v2858
    %v2923 = vunpack.c.l.b16 %v2859
    %v2924 = vunpack.c.l.b16 %v2860
    %v2925 = vunpack.c.l.b16 %v2861
    %v2926 = vunpack.c.l.b16 %v2862
    %v2927 = vunpack.c.l.b16 %v2863
    %v2928 = vunpack.c.l.b16 %v2864
    %v2929 = vunpack.c.l.b16 %v2865
    %v2930 = vunpack.c.l.b16 %v2866
    %v2931 = vunpack.c.l.b16 %v2867
    %v2932 = vunpack.c.l.b16 %v2868
    %v2933 = vunpack.c.l.b16 %v2869
    %v2934 = vunpack.c.l.b16 %v2870
    %v2935 = vunpack.c.l.b16 %v2871
    %v2936 = vunpack.c.l.b16 %v2872
    %v2937 = vunpack.c.l.b16 %v2873
    %v2938 = vunpack.c.l.b16 %v2874
    %v2939 = vunpack.c.l.b16 %v2875
    %v2940 = vunpack.c.l.b16 %v2876
    %v2941 = vunpack.c.l.b16 %v2877
    %v2942 = vunpack.c.l.b16 %v2878
    %v2943 = vunpack.c.l.b16 %v2879
    %v2944 = vunpack.c.l.b16 %v2880
    %v2945 = vunpack.c.l.b16 %v2881
    %v2946 = vpack.c.b16 %v2915, %v2914
    %v2947 = vpack.c.b16 %v2917, %v2916
    %v2948 = vpack.c.b16 %v2919, %v2918
    %v2949 = vpack.c.b16 %v2921, %v2920
    %v2950 = vpack.c.b16 %v2923, %v2922
    %v2951 = vpack.c.b16 %v2925, %v2924
    %v2952 = vpack.c.b16 %v2927, %v2926
    %v2953 = vpack.c.b16 %v2929, %v2928
    %v2954 = vpack.c.b16 %v2931, %v2930
    %v2955 = vpack.c.b16 %v2933, %v2932
    %v2956 = vpack.c.b16 %v2935, %v2934
    %v2957 = vpack.c.b16 %v2937, %v2936
    %v2958 = vpack.c.b16 %v2939, %v2938
    %v2959 = vpack.c.b16 %v2941, %v2940
    %v2960 = vpack.c.b16 %v2943, %v2942
    %v2961 = vpack.c.b16 %v2945, %v2944
    %2978 = vmatprep.subr.bf16.mxu0 0
    %2979 = vmatpush1.bf16.msra.mxu0 %v2946
    %2980 = vmatprep.subr.bf16.mxu0 0
    %2981 = vmatpush1.bf16.msra.mxu0 %v2947
    %2982 = vmatprep.subr.bf16.mxu0 0
    %2983 = vmatpush1.bf16.msra.mxu0 %v2948
    %2984 = vmatprep.subr.bf16.mxu0 0
    %2985 = vmatpush1.bf16.msra.mxu0 %v2949
    %2986 = vmatprep.subr.bf16.mxu0 0
    %2987 = vmatpush1.bf16.msra.mxu0 %v2950
    %2988 = vmatprep.subr.bf16.mxu0 0
    %2989 = vmatpush1.bf16.msra.mxu0 %v2951
    %2990 = vmatprep.subr.bf16.mxu0 0
    %2991 = vmatpush1.bf16.msra.mxu0 %v2952
    %2992 = vmatprep.subr.bf16.mxu0 0
    %2993 = vmatpush1.bf16.msra.mxu0 %v2953
    %2994 = vmatprep.subr.bf16.mxu0 0
    %2995 = vmatpush1.bf16.msra.mxu0 %v2954
    %2996 = vmatprep.subr.bf16.mxu0 0
    %2997 = vmatpush1.bf16.msra.mxu0 %v2955
    %2998 = vmatprep.subr.bf16.mxu0 0
    %2999 = vmatpush1.bf16.msra.mxu0 %v2956
    %3000 = vmatprep.subr.bf16.mxu0 0
    %3001 = vmatpush1.bf16.msra.mxu0 %v2957
    %3002 = vmatprep.subr.bf16.mxu0 0
    %3003 = vmatpush1.bf16.msra.mxu0 %v2958
    %3004 = vmatprep.subr.bf16.mxu0 0
    %3005 = vmatpush1.bf16.msra.mxu0 %v2959
    %3006 = vmatprep.subr.bf16.mxu0 0
    %3007 = vmatpush1.bf16.msra.mxu0 %v2960
    %3008 = vmatprep.subr.bf16.mxu0 0
    %3009 = vmatpush1.bf16.msra.mxu0 %v2961
    %3010 = vmatprep.mubr.bf16.mxu0 %v2845
    %3011 = vmatmul.mubr.bf16.gmra.mrb[0].mxu0 %v2844
    %v3012 = vpop.f32.mrb[0].mxu0
    %v3013 = vadd.f32 0.0, %v3012
    %v3014 = vpop.f32.mrb[0].mxu0
    %v3015 = vpop.f32.mrb[0].mxu0
    %v3016 = vadd.f32 0.0, %v3015
    %v3017 = vpop.f32.mrb[0].mxu0
    %3018 = vmatprep.mubr.bf16.mxu0 %v2847
    %3019 = vmatmul.mubr.bf16.gmra.mrb[0].mxu0 %v2846
    %v3020 = vpop.f32.mrb[0].mxu0
    %v3021 = vadd.f32 0.0, %v3020
    %v3022 = vpop.f32.mrb[0].mxu0
    %v3023 = vpop.f32.mrb[0].mxu0
    %v3024 = vadd.f32 0.0, %v3023
    %v3025 = vpop.f32.mrb[0].mxu0
    %3026 = vmatprep.mubr.bf16.mxu0 %v2849
    %3027 = vmatmul.mubr.bf16.gmra.mrb[0].mxu0 %v2848
    %v3028 = vpop.f32.mrb[0].mxu0
    %v3029 = vadd.f32 0.0, %v3028
    %v3030 = vpop.f32.mrb[0].mxu0
    %v3031 = vpop.f32.mrb[0].mxu0
    %v3032 = vadd.f32 0.0, %v3031
    %v3033 = vpop.f32.mrb[0].mxu0
    %3034 = vdwg.mxu0
    %v3035 = vadd.f32 %v2464, %v3013
    %v3036 = vadd.f32 %v2465, %v3016
    %v3037 = vadd.f32 %v2466, %v3021
    %v3038 = vadd.f32 %v2467, %v3024
    %v3039 = vadd.f32 %v2468, %v3029
    %v3040 = vadd.f32 %v2469, %v3032
    %v3041 = vld [vmem:[%s20] sm:$0x1]
    %v3043 = vlaneseq
    %v3044 = vshrl.u32 %v3043, 7
    %v3045 = vsub.s32 0, %v3044
    %v3046 = vrot.slane %v3041, %v3045
    %v3048 = vadd.f32 %v3035, %v3046
    %v3049 = vadd.f32 %v3036, %v3046
    %v3050 = vadd.f32 %v3037, %v3046
    %v3051 = vadd.f32 %v3038, %v3046
    %v3052 = vadd.f32 %v3039, %v3046
    %v3053 = vadd.f32 %v3040, %v3046
    %s3054 = scalar_lea.vmem %s9, 1
    %v3055 = vld [vmem:[%s3054] sm:$0x1]
    %s3056 = scalar_lea.vmem %s10, 1
    %v3057 = vld [vmem:[%s3056] sm:$0x1]
    %3058 = vadd.xlane.f32.xlu0 %v3048
    %v3059 = vpop.xlane.xlu0 %3058
    %3060 = vadd.xlane.f32.xlu0 %v3049
    %v3061 = vpop.xlane.xlu0 %3060
    %3062 = vadd.xlane.f32.xlu0 %v3050
    %v3063 = vpop.xlane.xlu0 %3062
    %3064 = vadd.xlane.f32.xlu0 %v3051
    %v3065 = vpop.xlane.xlu0 %3064
    %3066 = vadd.xlane.f32.xlu0 %v3052
    %v3067 = vpop.xlane.xlu0 %3066
    %3068 = vadd.xlane.f32.xlu0 %v3053
    %v3069 = vpop.xlane.xlu0 %3068
    %v3070 = vmul.f32 %v3059, %v221
    %v3071 = vmul.f32 %v3061, %v221
    %v3072 = vmul.f32 %v3063, %v221
    %v3073 = vmul.f32 %v3065, %v221
    %v3074 = vmul.f32 %v3067, %v221
    %v3075 = vmul.f32 %v3069, %v221
    %v3076 = vsub.f32 %v3048, %v3070
    %v3077 = vsub.f32 %v3049, %v3071
    %v3078 = vsub.f32 %v3050, %v3072
    %v3079 = vsub.f32 %v3051, %v3073
    %v3080 = vsub.f32 %v3052, %v3074
    %v3081 = vsub.f32 %v3053, %v3075
    %v3082 = vmul.f32 %v3076, %v3076
    %v3083 = vmul.f32 %v3077, %v3077
    %v3084 = vmul.f32 %v3078, %v3078
    %v3085 = vmul.f32 %v3079, %v3079
    %v3086 = vmul.f32 %v3080, %v3080
    %v3087 = vmul.f32 %v3081, %v3081
    %3088 = vadd.xlane.f32.xlu0 %v3082
    %v3089 = vpop.xlane.xlu0 %3088
    %3090 = vadd.xlane.f32.xlu0 %v3083
    %v3091 = vpop.xlane.xlu0 %3090
    %3092 = vadd.xlane.f32.xlu0 %v3084
    %v3093 = vpop.xlane.xlu0 %3092
    %3094 = vadd.xlane.f32.xlu0 %v3085
    %v3095 = vpop.xlane.xlu0 %3094
    %3096 = vadd.xlane.f32.xlu0 %v3086
    %v3097 = vpop.xlane.xlu0 %3096
    %3098 = vadd.xlane.f32.xlu0 %v3087
    %v3099 = vpop.xlane.xlu0 %3098
    %v3100 = vmul.f32 %v3089, %v221
    %v3101 = vmul.f32 %v3091, %v221
    %v3102 = vmul.f32 %v3093, %v221
    %v3103 = vmul.f32 %v3095, %v221
    %v3104 = vmul.f32 %v3097, %v221
    %v3105 = vmul.f32 %v3099, %v221
    %v3106 = vadd.f32 %v3100, 1e-12
    %v3107 = vadd.f32 %v3101, 1e-12
    %v3108 = vadd.f32 %v3102, 1e-12
    %v3109 = vadd.f32 %v3103, 1e-12
    %v3110 = vadd.f32 %v3104, 1e-12
    %v3111 = vadd.f32 %v3105, 1e-12
    %v3112 = vrsqrt.pop %v3106
    %v3113 = vrsqrt.pop %v3107
    %v3114 = vrsqrt.pop %v3108
    %v3115 = vrsqrt.pop %v3109
    %v3116 = vrsqrt.pop %v3110
    %v3117 = vrsqrt.pop %v3111
    %v3118 = vmul.f32 %v3076, %v3112
    %v3119 = vmul.f32 %v3077, %v3113
    %v3120 = vmul.f32 %v3078, %v3114
    %v3121 = vmul.f32 %v3079, %v3115
    %v3122 = vmul.f32 %v3080, %v3116
    %v3123 = vmul.f32 %v3081, %v3117
    %v3125 = vlaneseq
    %v3126 = vshrl.u32 %v3125, 7
    %v3127 = vsub.s32 0, %v3126
    %v3128 = vrot.slane %v3055, %v3127
    %v3130 = vmul.f32 %v3118, %v3128
    %v3131 = vmul.f32 %v3119, %v3128
    %v3132 = vmul.f32 %v3120, %v3128
    %v3133 = vmul.f32 %v3121, %v3128
    %v3134 = vmul.f32 %v3122, %v3128
    %v3135 = vmul.f32 %v3123, %v3128
    %v3137 = vlaneseq
    %v3138 = vshrl.u32 %v3137, 7
    %v3139 = vsub.s32 0, %v3138
    %v3140 = vrot.slane %v3057, %v3139
    %v3142 = vadd.f32 %v3130, %v3140
    %v3143 = vadd.f32 %v3131, %v3140
    %v3144 = vadd.f32 %v3132, %v3140
    %v3145 = vadd.f32 %v3133, %v3140
    %v3146 = vadd.f32 %v3134, %v3140
    %v3147 = vadd.f32 %v3135, %v3140
    %v3148 = vpack.c.bf16 %v3143, %v3142
    %v3149 = vpack.c.bf16 %v3145, %v3144
    %v3150 = vpack.c.bf16 %v3147, %v3146
    %s3151 = scalar_lea.vmem %s11, 192
    %v3152 = vld [vmem:[%s3151] sm:$0xff]
    %v3153 = vld [vmem:[%s3151 + $0x8] sm:$0xf]
    %v3154 = vld [vmem:[%s3151 + $0xc] sm:$0xff]
    %v3155 = vld [vmem:[%s3151 + $0x14] sm:$0xf]
    %v3156 = vld [vmem:[%s3151 + $0x18] sm:$0xff]
    %v3157 = vld [vmem:[%s3151 + $0x20] sm:$0xf]
    %v3158 = vld [vmem:[%s3151 + $0x24] sm:$0xff]
    %v3159 = vld [vmem:[%s3151 + $0x2c] sm:$0xf]
    %v3160 = vld [vmem:[%s3151 + $0x30] sm:$0xff]
    %v3161 = vld [vmem:[%s3151 + $0x38] sm:$0xf]
    %v3162 = vld [vmem:[%s3151 + $0x3c] sm:$0xff]
    %v3163 = vld [vmem:[%s3151 + $0x44] sm:$0xf]
    %v3164 = vld [vmem:[%s3151 + $0x48] sm:$0xff]
    %v3165 = vld [vmem:[%s3151 + $0x50] sm:$0xf]
    %v3166 = vld [vmem:[%s3151 + $0x54] sm:$0xff]
    %v3167 = vld [vmem:[%s3151 + $0x5c] sm:$0xf]
    %v3168 = vld [vmem:[%s3151 + $0x60] sm:$0xff]
    %v3169 = vld [vmem:[%s3151 + $0x68] sm:$0xf]
    %v3170 = vld [vmem:[%s3151 + $0x6c] sm:$0xff]
    %v3171 = vld [vmem:[%s3151 + $0x74] sm:$0xf]
    %v3172 = vld [vmem:[%s3151 + $0x78] sm:$0xff]
    %v3173 = vld [vmem:[%s3151 + $0x80] sm:$0xf]
    %v3174 = vld [vmem:[%s3151 + $0x84] sm:$0xff]
    %v3175 = vld [vmem:[%s3151 + $0x8c] sm:$0xf]
    %v3176 = vld [vmem:[%s3151 + $0x90] sm:$0xff]
    %v3177 = vld [vmem:[%s3151 + $0x98] sm:$0xf]
    %v3178 = vld [vmem:[%s3151 + $0x9c] sm:$0xff]
    %v3179 = vld [vmem:[%s3151 + $0xa4] sm:$0xf]
    %v3180 = vld [vmem:[%s3151 + $0xa8] sm:$0xff]
    %v3181 = vld [vmem:[%s3151 + $0xb0] sm:$0xf]
    %v3182 = vld [vmem:[%s3151 + $0xb4] sm:$0xff]
    %v3183 = vld [vmem:[%s3151 + $0xbc] sm:$0xf]
    %s3184 = scalar_lea.vmem %s12, 3
    %v3185 = vld [vmem:[%s3184] sm:$0x7]
    %v3187 = vlaneseq
    %v3188 = vshrl.u32 %v3187, 7
    %v3189 = vsub.s32 0, %v3188
    %v3190 = vrot.slane %v3185, %v3189
    %v3191 = vlaneseq
    %v3192 = vshrl.u32 %v3191, 7
    %v3193 = vsub.s32 1, %v3192
    %v3194 = vrot.slane %v3185, %v3193
    %v3195 = vlaneseq
    %v3196 = vshrl.u32 %v3195, 7
    %v3197 = vsub.s32 2, %v3196
    %v3198 = vrot.slane %v3185, %v3197
    %v3234 = vunpack.c.l.b16 %v3152
    %v3235 = vunpack.c.h.b16 %v3152
    %v3236 = vunpack.c.l.b16 %v3153
    %v3237 = vunpack.c.l.b16 %v3154
    %v3238 = vunpack.c.h.b16 %v3154
    %v3239 = vunpack.c.l.b16 %v3155
    %v3240 = vunpack.c.l.b16 %v3156
    %v3241 = vunpack.c.h.b16 %v3156
    %v3242 = vunpack.c.l.b16 %v3157
    %v3243 = vunpack.c.l.b16 %v3158
    %v3244 = vunpack.c.h.b16 %v3158
    %v3245 = vunpack.c.l.b16 %v3159
    %v3246 = vunpack.c.l.b16 %v3160
    %v3247 = vunpack.c.h.b16 %v3160
    %v3248 = vunpack.c.l.b16 %v3161
    %v3249 = vunpack.c.l.b16 %v3162
    %v3250 = vunpack.c.h.b16 %v3162
    %v3251 = vunpack.c.l.b16 %v3163
    %v3252 = vunpack.c.l.b16 %v3164
    %v3253 = vunpack.c.h.b16 %v3164
    %v3254 = vunpack.c.l.b16 %v3165
    %v3255 = vunpack.c.l.b16 %v3166
    %v3256 = vunpack.c.h.b16 %v3166
    %v3257 = vunpack.c.l.b16 %v3167
    %v3258 = vunpack.c.l.b16 %v3168
    %v3259 = vunpack.c.h.b16 %v3168
    %v3260 = vunpack.c.l.b16 %v3169
    %v3261 = vunpack.c.l.b16 %v3170
    %v3262 = vunpack.c.h.b16 %v3170
    %v3263 = vunpack.c.l.b16 %v3171
    %v3264 = vunpack.c.l.b16 %v3172
    %v3265 = vunpack.c.h.b16 %v3172
    %v3266 = vunpack.c.l.b16 %v3173
    %v3267 = vunpack.c.l.b16 %v3174
    %v3268 = vunpack.c.h.b16 %v3174
    %v3269 = vunpack.c.l.b16 %v3175
    %v3270 = vunpack.c.l.b16 %v3176
    %v3271 = vunpack.c.h.b16 %v3176
    %v3272 = vunpack.c.l.b16 %v3177
    %v3273 = vunpack.c.l.b16 %v3178
    %v3274 = vunpack.c.h.b16 %v3178
    %v3275 = vunpack.c.l.b16 %v3179
    %v3276 = vunpack.c.l.b16 %v3180
    %v3277 = vunpack.c.h.b16 %v3180
    %v3278 = vunpack.c.l.b16 %v3181
    %v3279 = vunpack.c.l.b16 %v3182
    %v3280 = vunpack.c.h.b16 %v3182
    %v3281 = vunpack.c.l.b16 %v3183
    %v3282 = vpack.c.b16 %v3237, %v3234
    %v3283 = vpack.c.b16 %v3238, %v3235
    %v3284 = vpack.c.b16 %v3239, %v3236
    %v3285 = vpack.c.b16 %v3243, %v3240
    %v3286 = vpack.c.b16 %v3244, %v3241
    %v3287 = vpack.c.b16 %v3245, %v3242
    %v3288 = vpack.c.b16 %v3249, %v3246
    %v3289 = vpack.c.b16 %v3250, %v3247
    %v3290 = vpack.c.b16 %v3251, %v3248
    %v3291 = vpack.c.b16 %v3255, %v3252
    %v3292 = vpack.c.b16 %v3256, %v3253
    %v3293 = vpack.c.b16 %v3257, %v3254
    %v3294 = vpack.c.b16 %v3261, %v3258
    %v3295 = vpack.c.b16 %v3262, %v3259
    %v3296 = vpack.c.b16 %v3263, %v3260
    %v3297 = vpack.c.b16 %v3267, %v3264
    %v3298 = vpack.c.b16 %v3268, %v3265
    %v3299 = vpack.c.b16 %v3269, %v3266
    %v3300 = vpack.c.b16 %v3273, %v3270
    %v3301 = vpack.c.b16 %v3274, %v3271
    %v3302 = vpack.c.b16 %v3275, %v3272
    %v3303 = vpack.c.b16 %v3279, %v3276
    %v3304 = vpack.c.b16 %v3280, %v3277
    %v3305 = vpack.c.b16 %v3281, %v3278
    %3330 = vmatprep.subr.bf16.mxu0 %v3283
    %3331 = vmatpush1.bf16.msra.mxu0 %v3282
    %3332 = vmatprep.subr.bf16.mxu0 %v3286
    %3333 = vmatpush1.bf16.msra.mxu0 %v3285
    %3334 = vmatprep.subr.bf16.mxu0 %v3289
    %3335 = vmatpush1.bf16.msra.mxu0 %v3288
    %3336 = vmatprep.subr.bf16.mxu0 %v3292
    %3337 = vmatpush1.bf16.msra.mxu0 %v3291
    %3338 = vmatprep.subr.bf16.mxu0 %v3295
    %3339 = vmatpush1.bf16.msra.mxu0 %v3294
    %3340 = vmatprep.subr.bf16.mxu0 %v3298
    %3341 = vmatpush1.bf16.msra.mxu0 %v3297
    %3342 = vmatprep.subr.bf16.mxu0 %v3301
    %3343 = vmatpush1.bf16.msra.mxu0 %v3300
    %3344 = vmatprep.subr.bf16.mxu0 %v3304
    %3345 = vmatpush1.bf16.msra.mxu0 %v3303
    %3346 = vmatprep.subr.bf16.mxu0 0
    %3347 = vmatpush1.bf16.msra.mxu0 0
    %3348 = vmatprep.subr.bf16.mxu0 0
    %3349 = vmatpush1.bf16.msra.mxu0 0
    %3350 = vmatprep.subr.bf16.mxu0 0
    %3351 = vmatpush1.bf16.msra.mxu0 0
    %3352 = vmatprep.subr.bf16.mxu0 0
    %3353 = vmatpush1.bf16.msra.mxu0 0
    %3354 = vmatprep.subr.bf16.mxu0 0
    %3355 = vmatpush1.bf16.msra.mxu0 0
    %3356 = vmatprep.subr.bf16.mxu0 0
    %3357 = vmatpush1.bf16.msra.mxu0 0
    %3358 = vmatprep.subr.bf16.mxu0 0
    %3359 = vmatpush1.bf16.msra.mxu0 0
    %3360 = vmatprep.subr.bf16.mxu0 0
    %3361 = vmatpush1.bf16.msra.mxu0 0
    %3362 = vmatprep.mubr.bf16.mxu0 0
    %3363 = vmatmul.mubr.bf16.gmra.mrb[0].mxu0 %v3148
    %v3364 = vpop.f32.mrb[0].mxu0
    %v3365 = vadd.f32 %v3190, %v3364
    %v3366 = vpop.f32.mrb[0].mxu0
    %v3367 = vadd.f32 %v3194, %v3366
    %v3368 = vpop.f32.mrb[0].mxu0
    %v3369 = vadd.f32 %v3190, %v3368
    %v3370 = vpop.f32.mrb[0].mxu0
    %v3371 = vadd.f32 %v3194, %v3370
    %3372 = vmatprep.mubr.bf16.mxu0 0
    %3373 = vmatmul.mubr.bf16.gmra.mrb[0].mxu0 %v3149
    %v3374 = vpop.f32.mrb[0].mxu0
    %v3375 = vadd.f32 %v3190, %v3374
    %v3376 = vpop.f32.mrb[0].mxu0
    %v3377 = vadd.f32 %v3194, %v3376
    %v3378 = vpop.f32.mrb[0].mxu0
    %v3379 = vadd.f32 %v3190, %v3378
    %v3380 = vpop.f32.mrb[0].mxu0
    %v3381 = vadd.f32 %v3194, %v3380
    %3382 = vmatprep.mubr.bf16.mxu0 0
    %3383 = vmatmul.mubr.bf16.gmra.mrb[0].mxu0 %v3150
    %v3384 = vpop.f32.mrb[0].mxu0
    %v3385 = vadd.f32 %v3190, %v3384
    %v3386 = vpop.f32.mrb[0].mxu0
    %v3387 = vadd.f32 %v3194, %v3386
    %v3388 = vpop.f32.mrb[0].mxu0
    %v3389 = vadd.f32 %v3190, %v3388
    %v3390 = vpop.f32.mrb[0].mxu0
    %v3391 = vadd.f32 %v3194, %v3390
    %3392 = vdwg.mxu0
    %3393 = vmatprep.subr.bf16.mxu0 0
    %3394 = vmatpush1.bf16.msra.mxu0 %v3284
    %3395 = vmatprep.subr.bf16.mxu0 0
    %3396 = vmatpush1.bf16.msra.mxu0 %v3287
    %3397 = vmatprep.subr.bf16.mxu0 0
    %3398 = vmatpush1.bf16.msra.mxu0 %v3290
    %3399 = vmatprep.subr.bf16.mxu0 0
    %3400 = vmatpush1.bf16.msra.mxu0 %v3293
    %3401 = vmatprep.subr.bf16.mxu0 0
    %3402 = vmatpush1.bf16.msra.mxu0 %v3296
    %3403 = vmatprep.subr.bf16.mxu0 0
    %3404 = vmatpush1.bf16.msra.mxu0 %v3299
    %3405 = vmatprep.subr.bf16.mxu0 0
    %3406 = vmatpush1.bf16.msra.mxu0 %v3302
    %3407 = vmatprep.subr.bf16.mxu0 0
    %3408 = vmatpush1.bf16.msra.mxu0 %v3305
    %3409 = vmatprep.subr.bf16.mxu0 0
    %3410 = vmatpush1.bf16.msra.mxu0 0
    %3411 = vmatprep.subr.bf16.mxu0 0
    %3412 = vmatpush1.bf16.msra.mxu0 0
    %3413 = vmatprep.subr.bf16.mxu0 0
    %3414 = vmatpush1.bf16.msra.mxu0 0
    %3415 = vmatprep.subr.bf16.mxu0 0
    %3416 = vmatpush1.bf16.msra.mxu0 0
    %3417 = vmatprep.subr.bf16.mxu0 0
    %3418 = vmatpush1.bf16.msra.mxu0 0
    %3419 = vmatprep.subr.bf16.mxu0 0
    %3420 = vmatpush1.bf16.msra.mxu0 0
    %3421 = vmatprep.subr.bf16.mxu0 0
    %3422 = vmatpush1.bf16.msra.mxu0 0
    %3423 = vmatprep.subr.bf16.mxu0 0
    %3424 = vmatpush1.bf16.msra.mxu0 0
    %3425 = vmatprep.mubr.bf16.mxu0 0
    %3426 = vmatmul.mubr.bf16.gmra.mrb[0].mxu0 %v3148
    %v3427 = vpop.f32.mrb[0].mxu0
    %v3428 = vadd.f32 %v3198, %v3427
    %v3429 = vpop.f32.mrb[0].mxu0
    %v3430 = vpop.f32.mrb[0].mxu0
    %v3431 = vadd.f32 %v3198, %v3430
    %v3432 = vpop.f32.mrb[0].mxu0
    %3433 = vmatprep.mubr.bf16.mxu0 0
    %3434 = vmatmul.mubr.bf16.gmra.mrb[0].mxu0 %v3149
    %v3435 = vpop.f32.mrb[0].mxu0
    %v3436 = vadd.f32 %v3198, %v3435
    %v3437 = vpop.f32.mrb[0].mxu0
    %v3438 = vpop.f32.mrb[0].mxu0
    %v3439 = vadd.f32 %v3198, %v3438
    %v3440 = vpop.f32.mrb[0].mxu0
    %3441 = vmatprep.mubr.bf16.mxu0 0
    %3442 = vmatmul.mubr.bf16.gmra.mrb[0].mxu0 %v3150
    %v3443 = vpop.f32.mrb[0].mxu0
    %v3444 = vadd.f32 %v3198, %v3443
    %v3445 = vpop.f32.mrb[0].mxu0
    %v3446 = vpop.f32.mrb[0].mxu0
    %v3447 = vadd.f32 %v3198, %v3446
    %v3448 = vpop.f32.mrb[0].mxu0
    %3449 = vdwg.mxu0
    %s3450 = scalar_lea.vmem %s13, 64
    %v3451 = vld [vmem:[%s3450] sm:$0xf]
    %v3452 = vld [vmem:[%s3450 + $0x4] sm:$0xf]
    %v3453 = vld [vmem:[%s3450 + $0x8] sm:$0xf]
    %v3454 = vld [vmem:[%s3450 + $0xc] sm:$0xf]
    %v3455 = vld [vmem:[%s3450 + $0x10] sm:$0xf]
    %v3456 = vld [vmem:[%s3450 + $0x14] sm:$0xf]
    %v3457 = vld [vmem:[%s3450 + $0x18] sm:$0xf]
    %v3458 = vld [vmem:[%s3450 + $0x1c] sm:$0xf]
    %v3459 = vld [vmem:[%s3450 + $0x20] sm:$0xf]
    %v3460 = vld [vmem:[%s3450 + $0x24] sm:$0xf]
    %v3461 = vld [vmem:[%s3450 + $0x28] sm:$0xf]
    %v3462 = vld [vmem:[%s3450 + $0x2c] sm:$0xf]
    %v3463 = vld [vmem:[%s3450 + $0x30] sm:$0xf]
    %v3464 = vld [vmem:[%s3450 + $0x34] sm:$0xf]
    %v3465 = vld [vmem:[%s3450 + $0x38] sm:$0xf]
    %v3466 = vld [vmem:[%s3450 + $0x3c] sm:$0xf]
    %v3467 = vpack.c.bf16 %v3369, %v3365
    %v3468 = vpack.c.bf16 %v3375, %v3375
    %v3469 = vpack.c.bf16 %v3371, %v3367
    %v3470 = vpack.c.bf16 %v3377, %v3377
    %v3471 = vpack.c.bf16 %v3431, %v3428
    %v3472 = vpack.c.bf16 %v3436, %v3436
    %v3474 = vsel %vm628, %v3467, 0
    %v3477 = vsel %vm628, %v3468, 0
    %v3480 = vsel %vm628, %v3469, 0
    %v3483 = vsel %vm628, %v3470, 0
    %3485 = vmatprep.subr.bf16.mxu0 0
    %3486 = vmatpush1.bf16.xpose.msra.mxu0 %v3480
    %3487 = vmatprep.subr.bf16.mxu0 0
    %3488 = vmatpush1.bf16.xpose.msra.mxu0 %v3483
    %3489 = vmatprep.subr.bf16.mxu0 0
    %3490 = vmatpush1.bf16.xpose.msra.mxu0 0
    %3491 = vmatprep.subr.bf16.mxu0 0
    %3492 = vmatpush1.bf16.xpose.msra.mxu0 0
    %3493 = vmatprep.subr.bf16.mxu0 0
    %3494 = vmatpush1.bf16.xpose.msra.mxu0 0
    %3495 = vmatprep.subr.bf16.mxu0 0
    %3496 = vmatpush1.bf16.xpose.msra.mxu0 0
    %3497 = vmatprep.subr.bf16.mxu0 0
    %3498 = vmatpush1.bf16.xpose.msra.mxu0 0
    %3499 = vmatprep.subr.bf16.mxu0 0
    %3500 = vmatpush1.bf16.xpose.msra.mxu0 0
    %3501 = vmatprep.subr.bf16.mxu0 0
    %3502 = vmatpush1.bf16.xpose.msra.mxu0 0
    %3503 = vmatprep.subr.bf16.mxu0 0
    %3504 = vmatpush1.bf16.xpose.msra.mxu0 0
    %3505 = vmatprep.subr.bf16.mxu0 0
    %3506 = vmatpush1.bf16.xpose.msra.mxu0 0
    %3507 = vmatprep.subr.bf16.mxu0 0
    %3508 = vmatpush1.bf16.xpose.msra.mxu0 0
    %3509 = vmatprep.subr.bf16.mxu0 0
    %3510 = vmatpush1.bf16.xpose.msra.mxu0 0
    %3511 = vmatprep.subr.bf16.mxu0 0
    %3512 = vmatpush1.bf16.xpose.msra.mxu0 0
    %3513 = vmatprep.subr.bf16.mxu0 0
    %3514 = vmatpush1.bf16.xpose.msra.mxu0 0
    %3515 = vmatprep.subr.bf16.mxu0 0
    %3516 = vmatpush1.bf16.xpose.msra.mxu0 0
    %3517 = vmatprep.mubr.bf16.mxu0 0
    %3518 = vmatmul.mubr.bf16.gmra.mrb[0].mxu0 %v3474
    %v3519 = vpop.f32.mrb[0].mxu0
    %v3520 = vadd.f32 %v626, %v3519
    %v3521 = vpop.f32.mrb[0].mxu0
    %v3522 = vpop.f32.mrb[0].mxu0
    %v3523 = vadd.f32 %v626, %v3522
    %v3524 = vpop.f32.mrb[0].mxu0
    %3525 = vmatprep.mubr.bf16.mxu0 0
    %3526 = vmatmul.mubr.bf16.gmra.mrb[0].mxu0 %v3477
    %v3527 = vpop.f32.mrb[0].mxu0
    %v3528 = vadd.f32 %v626, %v3527
    %v3529 = vpop.f32.mrb[0].mxu0
    %v3530 = vpop.f32.mrb[0].mxu0
    %v3531 = vpop.f32.mrb[0].mxu0
    %3532 = vdwg.mxu0
    %v3533 = vsel %vm689, %v3520, -inf
    %3534 = vmax.xlane.f32.xlu0 %v3533
    %v3535 = vpop.xlane.xlu0 %3534
    %v3536 = vsel %vm689, %v3523, -inf
    %3537 = vmax.xlane.f32.xlu0 %v3536
    %v3538 = vpop.xlane.xlu0 %3537
    %v3539 = vsel %vm689, %v3528, -inf
    %3540 = vmax.xlane.f32.xlu0 %v3539
    %v3541 = vpop.xlane.xlu0 %3540
    %v3542 = vsub.f32 %v3520, %v3535
    %v3543 = vsub.f32 %v3523, %v3538
    %v3544 = vsub.f32 %v3528, %v3541
    %v3545 = vmul.f32 %v3542, 1.442695
    %v3546 = vpow.pop %v3545
    %v3547 = vmul.f32 %v3543, 1.442695
    %v3548 = vpow.pop %v3547
    %v3549 = vmul.f32 %v3544, 1.442695
    %v3550 = vpow.pop %v3549
    %v3551 = vsel %vm689, %v3546, 0.0
    %3552 = vadd.xlane.f32.xlu0 %v3551
    %v3553 = vpop.xlane.xlu0 %3552
    %v3554 = vsel %vm689, %v3548, 0.0
    %3555 = vadd.xlane.f32.xlu0 %v3554
    %v3556 = vpop.xlane.xlu0 %3555
    %v3557 = vsel %vm689, %v3550, 0.0
    %3558 = vadd.xlane.f32.xlu0 %v3557
    %v3559 = vpop.xlane.xlu0 %3558
    %v3560 = vrcp.pop %v3553
    %v3561 = vrcp.pop %v3556
    %v3562 = vrcp.pop %v3559
    %v3563 = vmul.f32 %v3546, %v3560
    %v3564 = vmul.f32 %v3548, %v3561
    %v3565 = vmul.f32 %v3550, %v3562
    %v3566 = vpack.c.bf16 %v3564, %v3563
    %v3567 = vpack.c.bf16 %v3565, %v3565
    %v3569 = vsel %vm689, %v3566, 0
    %v3572 = vsel %vm689, %v3567, 0
    %v3575 = vsel %vm731, %v3472, 0
    %3577 = vmatprep.subr.bf16.mxu0 0
    %3578 = vmatpush1.bf16.msra.mxu0 %v3471
    %3579 = vmatprep.subr.bf16.mxu0 0
    %3580 = vmatpush1.bf16.msra.mxu0 %v3575
    %3581 = vmatprep.subr.bf16.mxu0 0
    %3582 = vmatpush1.bf16.msra.mxu0 0
    %3583 = vmatprep.subr.bf16.mxu0 0
    %3584 = vmatpush1.bf16.msra.mxu0 0
    %3585 = vmatprep.subr.bf16.mxu0 0
    %3586 = vmatpush1.bf16.msra.mxu0 0
    %3587 = vmatprep.subr.bf16.mxu0 0
    %3588 = vmatpush1.bf16.msra.mxu0 0
    %3589 = vmatprep.subr.bf16.mxu0 0
    %3590 = vmatpush1.bf16.msra.mxu0 0
    %3591 = vmatprep.subr.bf16.mxu0 0
    %3592 = vmatpush1.bf16.msra.mxu0 0
    %3593 = vmatprep.subr.bf16.mxu0 0
    %3594 = vmatpush1.bf16.msra.mxu0 0
    %3595 = vmatprep.subr.bf16.mxu0 0
    %3596 = vmatpush1.bf16.msra.mxu0 0
    %3597 = vmatprep.subr.bf16.mxu0 0
    %3598 = vmatpush1.bf16.msra.mxu0 0
    %3599 = vmatprep.subr.bf16.mxu0 0
    %3600 = vmatpush1.bf16.msra.mxu0 0
    %3601 = vmatprep.subr.bf16.mxu0 0
    %3602 = vmatpush1.bf16.msra.mxu0 0
    %3603 = vmatprep.subr.bf16.mxu0 0
    %3604 = vmatpush1.bf16.msra.mxu0 0
    %3605 = vmatprep.subr.bf16.mxu0 0
    %3606 = vmatpush1.bf16.msra.mxu0 0
    %3607 = vmatprep.subr.bf16.mxu0 0
    %3608 = vmatpush1.bf16.msra.mxu0 0
    %3609 = vmatprep.mubr.bf16.mxu0 0
    %3610 = vmatmul.mubr.bf16.gmra.mrb[0].mxu0 %v3569
    %v3611 = vpop.f32.mrb[0].mxu0
    %v3612 = vadd.f32 0.0, %v3611
    %v3613 = vpop.f32.mrb[0].mxu0
    %v3614 = vpop.f32.mrb[0].mxu0
    %v3615 = vadd.f32 0.0, %v3614
    %v3616 = vpop.f32.mrb[0].mxu0
    %3617 = vmatprep.mubr.bf16.mxu0 0
    %3618 = vmatmul.mubr.bf16.gmra.mrb[0].mxu0 %v3572
    %v3619 = vpop.f32.mrb[0].mxu0
    %v3620 = vadd.f32 0.0, %v3619
    %v3621 = vpop.f32.mrb[0].mxu0
    %v3622 = vpop.f32.mrb[0].mxu0
    %v3623 = vpop.f32.mrb[0].mxu0
    %3624 = vdwg.mxu0
    %v3625 = vpack.c.bf16 %v3615, %v3612
    %v3626 = vpack.c.bf16 %v3620, %v3620
    %3629 = vrot.lane.b32.xlu0 %v3467, 96
    %v3630 = vpop.permute.xlu0 %3629
    %3631 = vrot.lane.b32.xlu0 %v3468, 96
    %v3632 = vpop.permute.xlu0 %3631
    %3635 = vrot.lane.b32.xlu0 %v3469, 96
    %v3636 = vpop.permute.xlu0 %3635
    %3637 = vrot.lane.b32.xlu0 %v3470, 96
    %v3638 = vpop.permute.xlu0 %3637
    %v3640 = vsel %vm628, %v3630, 0
    %v3643 = vsel %vm628, %v3632, 0
    %v3646 = vsel %vm628, %v3636, 0
    %v3649 = vsel %vm628, %v3638, 0
    %3651 = vmatprep.subr.bf16.mxu0 0
    %3652 = vmatpush1.bf16.xpose.msra.mxu0 %v3646
    %3653 = vmatprep.subr.bf16.mxu0 0
    %3654 = vmatpush1.bf16.xpose.msra.mxu0 %v3649
    %3655 = vmatprep.subr.bf16.mxu0 0
    %3656 = vmatpush1.bf16.xpose.msra.mxu0 0
    %3657 = vmatprep.subr.bf16.mxu0 0
    %3658 = vmatpush1.bf16.xpose.msra.mxu0 0
    %3659 = vmatprep.subr.bf16.mxu0 0
    %3660 = vmatpush1.bf16.xpose.msra.mxu0 0
    %3661 = vmatprep.subr.bf16.mxu0 0
    %3662 = vmatpush1.bf16.xpose.msra.mxu0 0
    %3663 = vmatprep.subr.bf16.mxu0 0
    %3664 = vmatpush1.bf16.xpose.msra.mxu0 0
    %3665 = vmatprep.subr.bf16.mxu0 0
    %3666 = vmatpush1.bf16.xpose.msra.mxu0 0
    %3667 = vmatprep.subr.bf16.mxu0 0
    %3668 = vmatpush1.bf16.xpose.msra.mxu0 0
    %3669 = vmatprep.subr.bf16.mxu0 0
    %3670 = vmatpush1.bf16.xpose.msra.mxu0 0
    %3671 = vmatprep.subr.bf16.mxu0 0
    %3672 = vmatpush1.bf16.xpose.msra.mxu0 0
    %3673 = vmatprep.subr.bf16.mxu0 0
    %3674 = vmatpush1.bf16.xpose.msra.mxu0 0
    %3675 = vmatprep.subr.bf16.mxu0 0
    %3676 = vmatpush1.bf16.xpose.msra.mxu0 0
    %3677 = vmatprep.subr.bf16.mxu0 0
    %3678 = vmatpush1.bf16.xpose.msra.mxu0 0
    %3679 = vmatprep.subr.bf16.mxu0 0
    %3680 = vmatpush1.bf16.xpose.msra.mxu0 0
    %3681 = vmatprep.subr.bf16.mxu0 0
    %3682 = vmatpush1.bf16.xpose.msra.mxu0 0
    %3683 = vmatprep.mubr.bf16.mxu0 0
    %3684 = vmatmul.mubr.bf16.gmra.mrb[0].mxu0 %v3640
    %v3685 = vpop.f32.mrb[0].mxu0
    %v3686 = vadd.f32 %v626, %v3685
    %v3687 = vpop.f32.mrb[0].mxu0
    %v3688 = vpop.f32.mrb[0].mxu0
    %v3689 = vadd.f32 %v626, %v3688
    %v3690 = vpop.f32.mrb[0].mxu0
    %3691 = vmatprep.mubr.bf16.mxu0 0
    %3692 = vmatmul.mubr.bf16.gmra.mrb[0].mxu0 %v3643
    %v3693 = vpop.f32.mrb[0].mxu0
    %v3694 = vadd.f32 %v626, %v3693
    %v3695 = vpop.f32.mrb[0].mxu0
    %v3696 = vpop.f32.mrb[0].mxu0
    %v3697 = vpop.f32.mrb[0].mxu0
    %3698 = vdwg.mxu0
    %v3699 = vsel %vm689, %v3686, -inf
    %3700 = vmax.xlane.f32.xlu0 %v3699
    %v3701 = vpop.xlane.xlu0 %3700
    %v3702 = vsel %vm689, %v3689, -inf
    %3703 = vmax.xlane.f32.xlu0 %v3702
    %v3704 = vpop.xlane.xlu0 %3703
    %v3705 = vsel %vm689, %v3694, -inf
    %3706 = vmax.xlane.f32.xlu0 %v3705
    %v3707 = vpop.xlane.xlu0 %3706
    %v3708 = vsub.f32 %v3686, %v3701
    %v3709 = vsub.f32 %v3689, %v3704
    %v3710 = vsub.f32 %v3694, %v3707
    %v3711 = vmul.f32 %v3708, 1.442695
    %v3712 = vpow.pop %v3711
    %v3713 = vmul.f32 %v3709, 1.442695
    %v3714 = vpow.pop %v3713
    %v3715 = vmul.f32 %v3710, 1.442695
    %v3716 = vpow.pop %v3715
    %v3717 = vsel %vm689, %v3712, 0.0
    %3718 = vadd.xlane.f32.xlu0 %v3717
    %v3719 = vpop.xlane.xlu0 %3718
    %v3720 = vsel %vm689, %v3714, 0.0
    %3721 = vadd.xlane.f32.xlu0 %v3720
    %v3722 = vpop.xlane.xlu0 %3721
    %v3723 = vsel %vm689, %v3716, 0.0
    %3724 = vadd.xlane.f32.xlu0 %v3723
    %v3725 = vpop.xlane.xlu0 %3724
    %v3726 = vrcp.pop %v3719
    %v3727 = vrcp.pop %v3722
    %v3728 = vrcp.pop %v3725
    %v3729 = vmul.f32 %v3712, %v3726
    %v3730 = vmul.f32 %v3714, %v3727
    %v3731 = vmul.f32 %v3716, %v3728
    %v3732 = vpack.c.bf16 %v3730, %v3729
    %v3733 = vpack.c.bf16 %v3731, %v3731
    %3736 = vrot.lane.b32.xlu0 %v3471, 96
    %v3737 = vpop.permute.xlu0 %3736
    %3738 = vrot.lane.b32.xlu0 %v3472, 96
    %v3739 = vpop.permute.xlu0 %3738
    %v3742 = vsel %vm689, %v3732, 0
    %v3745 = vsel %vm689, %v3733, 0
    %v3748 = vsel %vm731, %v3739, 0
    %3750 = vmatprep.subr.bf16.mxu0 0
    %3751 = vmatpush1.bf16.msra.mxu0 %v3737
    %3752 = vmatprep.subr.bf16.mxu0 0
    %3753 = vmatpush1.bf16.msra.mxu0 %v3748
    %3754 = vmatprep.subr.bf16.mxu0 0
    %3755 = vmatpush1.bf16.msra.mxu0 0
    %3756 = vmatprep.subr.bf16.mxu0 0
    %3757 = vmatpush1.bf16.msra.mxu0 0
    %3758 = vmatprep.subr.bf16.mxu0 0
    %3759 = vmatpush1.bf16.msra.mxu0 0
    %3760 = vmatprep.subr.bf16.mxu0 0
    %3761 = vmatpush1.bf16.msra.mxu0 0
    %3762 = vmatprep.subr.bf16.mxu0 0
    %3763 = vmatpush1.bf16.msra.mxu0 0
    %3764 = vmatprep.subr.bf16.mxu0 0
    %3765 = vmatpush1.bf16.msra.mxu0 0
    %3766 = vmatprep.subr.bf16.mxu0 0
    %3767 = vmatpush1.bf16.msra.mxu0 0
    %3768 = vmatprep.subr.bf16.mxu0 0
    %3769 = vmatpush1.bf16.msra.mxu0 0
    %3770 = vmatprep.subr.bf16.mxu0 0
    %3771 = vmatpush1.bf16.msra.mxu0 0
    %3772 = vmatprep.subr.bf16.mxu0 0
    %3773 = vmatpush1.bf16.msra.mxu0 0
    %3774 = vmatprep.subr.bf16.mxu0 0
    %3775 = vmatpush1.bf16.msra.mxu0 0
    %3776 = vmatprep.subr.bf16.mxu0 0
    %3777 = vmatpush1.bf16.msra.mxu0 0
    %3778 = vmatprep.subr.bf16.mxu0 0
    %3779 = vmatpush1.bf16.msra.mxu0 0
    %3780 = vmatprep.subr.bf16.mxu0 0
    %3781 = vmatpush1.bf16.msra.mxu0 0
    %3782 = vmatprep.mubr.bf16.mxu0 0
    %3783 = vmatmul.mubr.bf16.gmra.mrb[0].mxu0 %v3742
    %v3784 = vpop.f32.mrb[0].mxu0
    %v3785 = vadd.f32 0.0, %v3784
    %v3786 = vpop.f32.mrb[0].mxu0
    %v3787 = vpop.f32.mrb[0].mxu0
    %v3788 = vadd.f32 0.0, %v3787
    %v3789 = vpop.f32.mrb[0].mxu0
    %3790 = vmatprep.mubr.bf16.mxu0 0
    %3791 = vmatmul.mubr.bf16.gmra.mrb[0].mxu0 %v3745
    %v3792 = vpop.f32.mrb[0].mxu0
    %v3793 = vadd.f32 0.0, %v3792
    %v3794 = vpop.f32.mrb[0].mxu0
    %v3795 = vpop.f32.mrb[0].mxu0
    %v3796 = vpop.f32.mrb[0].mxu0
    %3797 = vdwg.mxu0
    %v3798 = vpack.c.bf16 %v3788, %v3785
    %v3799 = vpack.c.bf16 %v3793, %v3793
    %v3804 = vunpack.c.l.b16 %v3455
    %v3805 = vunpack.c.l.b16 %v3456
    %v3806 = vunpack.c.l.b16 %v3457
    %v3807 = vunpack.c.l.b16 %v3458
    %v3808 = vpack.c.b16 %v3805, %v3804
    %v3809 = vpack.c.b16 %v3807, %v3806
    %v3813 = vsel %vm628, %v3798, 0
    %v3816 = vsel %vm628, %v3799, 0
    %3818 = vmatprep.subr.bf16.mxu0 0
    %3819 = vmatpush1.bf16.msra.mxu0 %v3808
    %3820 = vmatprep.subr.bf16.mxu0 0
    %3821 = vmatpush1.bf16.msra.mxu0 %v3809
    %3822 = vmatprep.subr.bf16.mxu0 0
    %3823 = vmatpush1.bf16.msra.mxu0 0
    %3824 = vmatprep.subr.bf16.mxu0 0
    %3825 = vmatpush1.bf16.msra.mxu0 0
    %3826 = vmatprep.subr.bf16.mxu0 0
    %3827 = vmatpush1.bf16.msra.mxu0 0
    %3828 = vmatprep.subr.bf16.mxu0 0
    %3829 = vmatpush1.bf16.msra.mxu0 0
    %3830 = vmatprep.subr.bf16.mxu0 0
    %3831 = vmatpush1.bf16.msra.mxu0 0
    %3832 = vmatprep.subr.bf16.mxu0 0
    %3833 = vmatpush1.bf16.msra.mxu0 0
    %3834 = vmatprep.subr.bf16.mxu0 0
    %3835 = vmatpush1.bf16.msra.mxu0 0
    %3836 = vmatprep.subr.bf16.mxu0 0
    %3837 = vmatpush1.bf16.msra.mxu0 0
    %3838 = vmatprep.subr.bf16.mxu0 0
    %3839 = vmatpush1.bf16.msra.mxu0 0
    %3840 = vmatprep.subr.bf16.mxu0 0
    %3841 = vmatpush1.bf16.msra.mxu0 0
    %3842 = vmatprep.subr.bf16.mxu0 0
    %3843 = vmatpush1.bf16.msra.mxu0 0
    %3844 = vmatprep.subr.bf16.mxu0 0
    %3845 = vmatpush1.bf16.msra.mxu0 0
    %3846 = vmatprep.subr.bf16.mxu0 0
    %3847 = vmatpush1.bf16.msra.mxu0 0
    %3848 = vmatprep.subr.bf16.mxu0 0
    %3849 = vmatpush1.bf16.msra.mxu0 0
    %3850 = vmatprep.mubr.bf16.mxu0 0
    %3851 = vmatmul.mubr.bf16.gmra.mrb[0].mxu0 %v3813
    %v3852 = vpop.f32.mrb[0].mxu0
    %v3853 = vadd.f32 0.0, %v3852
    %v3854 = vpop.f32.mrb[0].mxu0
    %v3855 = vpop.f32.mrb[0].mxu0
    %v3856 = vadd.f32 0.0, %v3855
    %v3857 = vpop.f32.mrb[0].mxu0
    %3858 = vmatprep.mubr.bf16.mxu0 0
    %3859 = vmatmul.mubr.bf16.gmra.mrb[0].mxu0 %v3816
    %v3860 = vpop.f32.mrb[0].mxu0
    %v3861 = vadd.f32 0.0, %v3860
    %v3862 = vpop.f32.mrb[0].mxu0
    %v3863 = vpop.f32.mrb[0].mxu0
    %v3864 = vpop.f32.mrb[0].mxu0
    %3865 = vdwg.mxu0
    %v3870 = vunpack.c.l.b16 %v3451
    %v3871 = vunpack.c.l.b16 %v3452
    %v3872 = vunpack.c.l.b16 %v3453
    %v3873 = vunpack.c.l.b16 %v3454
    %v3874 = vpack.c.b16 %v3871, %v3870
    %v3875 = vpack.c.b16 %v3873, %v3872
    %v3879 = vsel %vm628, %v3625, 0
    %v3882 = vsel %vm628, %v3626, 0
    %3884 = vmatprep.subr.bf16.mxu0 0
    %3885 = vmatpush1.bf16.msra.mxu0 %v3874
    %3886 = vmatprep.subr.bf16.mxu0 0
    %3887 = vmatpush1.bf16.msra.mxu0 %v3875
    %3888 = vmatprep.subr.bf16.mxu0 0
    %3889 = vmatpush1.bf16.msra.mxu0 0
    %3890 = vmatprep.subr.bf16.mxu0 0
    %3891 = vmatpush1.bf16.msra.mxu0 0
    %3892 = vmatprep.subr.bf16.mxu0 0
    %3893 = vmatpush1.bf16.msra.mxu0 0
    %3894 = vmatprep.subr.bf16.mxu0 0
    %3895 = vmatpush1.bf16.msra.mxu0 0
    %3896 = vmatprep.subr.bf16.mxu0 0
    %3897 = vmatpush1.bf16.msra.mxu0 0
    %3898 = vmatprep.subr.bf16.mxu0 0
    %3899 = vmatpush1.bf16.msra.mxu0 0
    %3900 = vmatprep.subr.bf16.mxu0 0
    %3901 = vmatpush1.bf16.msra.mxu0 0
    %3902 = vmatprep.subr.bf16.mxu0 0
    %3903 = vmatpush1.bf16.msra.mxu0 0
    %3904 = vmatprep.subr.bf16.mxu0 0
    %3905 = vmatpush1.bf16.msra.mxu0 0
    %3906 = vmatprep.subr.bf16.mxu0 0
    %3907 = vmatpush1.bf16.msra.mxu0 0
    %3908 = vmatprep.subr.bf16.mxu0 0
    %3909 = vmatpush1.bf16.msra.mxu0 0
    %3910 = vmatprep.subr.bf16.mxu0 0
    %3911 = vmatpush1.bf16.msra.mxu0 0
    %3912 = vmatprep.subr.bf16.mxu0 0
    %3913 = vmatpush1.bf16.msra.mxu0 0
    %3914 = vmatprep.subr.bf16.mxu0 0
    %3915 = vmatpush1.bf16.msra.mxu0 0
    %3916 = vmatprep.mubr.bf16.mxu0 0
    %3917 = vmatmul.mubr.bf16.gmra.mrb[0].mxu0 %v3879
    %v3918 = vpop.f32.mrb[0].mxu0
    %v3919 = vadd.f32 %v3853, %v3918
    %v3920 = vpop.f32.mrb[0].mxu0
    %v3921 = vpop.f32.mrb[0].mxu0
    %v3922 = vadd.f32 %v3856, %v3921
    %v3923 = vpop.f32.mrb[0].mxu0
    %3924 = vmatprep.mubr.bf16.mxu0 0
    %3925 = vmatmul.mubr.bf16.gmra.mrb[0].mxu0 %v3882
    %v3926 = vpop.f32.mrb[0].mxu0
    %v3927 = vadd.f32 %v3861, %v3926
    %v3928 = vpop.f32.mrb[0].mxu0
    %v3929 = vpop.f32.mrb[0].mxu0
    %v3930 = vpop.f32.mrb[0].mxu0
    %3931 = vdwg.mxu0
    %3932 = vrot.lane.b32.xlu0 %v3467, 64
    %v3933 = vpop.permute.xlu0 %3932
    %3934 = vrot.lane.b32.xlu0 %v3468, 64
    %v3935 = vpop.permute.xlu0 %3934
    %3936 = vrot.lane.b32.xlu0 %v3469, 64
    %v3937 = vpop.permute.xlu0 %3936
    %3938 = vrot.lane.b32.xlu0 %v3470, 64
    %v3939 = vpop.permute.xlu0 %3938
    %v3941 = vsel %vm628, %v3933, 0
    %v3944 = vsel %vm628, %v3935, 0
    %v3947 = vsel %vm628, %v3937, 0
    %v3950 = vsel %vm628, %v3939, 0
    %3952 = vmatprep.subr.bf16.mxu0 0
    %3953 = vmatpush1.bf16.xpose.msra.mxu0 %v3947
    %3954 = vmatprep.subr.bf16.mxu0 0
    %3955 = vmatpush1.bf16.xpose.msra.mxu0 %v3950
    %3956 = vmatprep.subr.bf16.mxu0 0
    %3957 = vmatpush1.bf16.xpose.msra.mxu0 0
    %3958 = vmatprep.subr.bf16.mxu0 0
    %3959 = vmatpush1.bf16.xpose.msra.mxu0 0
    %3960 = vmatprep.subr.bf16.mxu0 0
    %3961 = vmatpush1.bf16.xpose.msra.mxu0 0
    %3962 = vmatprep.subr.bf16.mxu0 0
    %3963 = vmatpush1.bf16.xpose.msra.mxu0 0
    %3964 = vmatprep.subr.bf16.mxu0 0
    %3965 = vmatpush1.bf16.xpose.msra.mxu0 0
    %3966 = vmatprep.subr.bf16.mxu0 0
    %3967 = vmatpush1.bf16.xpose.msra.mxu0 0
    %3968 = vmatprep.subr.bf16.mxu0 0
    %3969 = vmatpush1.bf16.xpose.msra.mxu0 0
    %3970 = vmatprep.subr.bf16.mxu0 0
    %3971 = vmatpush1.bf16.xpose.msra.mxu0 0
    %3972 = vmatprep.subr.bf16.mxu0 0
    %3973 = vmatpush1.bf16.xpose.msra.mxu0 0
    %3974 = vmatprep.subr.bf16.mxu0 0
    %3975 = vmatpush1.bf16.xpose.msra.mxu0 0
    %3976 = vmatprep.subr.bf16.mxu0 0
    %3977 = vmatpush1.bf16.xpose.msra.mxu0 0
    %3978 = vmatprep.subr.bf16.mxu0 0
    %3979 = vmatpush1.bf16.xpose.msra.mxu0 0
    %3980 = vmatprep.subr.bf16.mxu0 0
    %3981 = vmatpush1.bf16.xpose.msra.mxu0 0
    %3982 = vmatprep.subr.bf16.mxu0 0
    %3983 = vmatpush1.bf16.xpose.msra.mxu0 0
    %3984 = vmatprep.mubr.bf16.mxu0 0
    %3985 = vmatmul.mubr.bf16.gmra.mrb[0].mxu0 %v3941
    %v3986 = vpop.f32.mrb[0].mxu0
    %v3987 = vadd.f32 %v626, %v3986
    %v3988 = vpop.f32.mrb[0].mxu0
    %v3989 = vpop.f32.mrb[0].mxu0
    %v3990 = vadd.f32 %v626, %v3989
    %v3991 = vpop.f32.mrb[0].mxu0
    %3992 = vmatprep.mubr.bf16.mxu0 0
    %3993 = vmatmul.mubr.bf16.gmra.mrb[0].mxu0 %v3944
    %v3994 = vpop.f32.mrb[0].mxu0
    %v3995 = vadd.f32 %v626, %v3994
    %v3996 = vpop.f32.mrb[0].mxu0
    %v3997 = vpop.f32.mrb[0].mxu0
    %v3998 = vpop.f32.mrb[0].mxu0
    %3999 = vdwg.mxu0
    %v4000 = vsel %vm689, %v3987, -inf
    %4001 = vmax.xlane.f32.xlu0 %v4000
    %v4002 = vpop.xlane.xlu0 %4001
    %v4003 = vsel %vm689, %v3990, -inf
    %4004 = vmax.xlane.f32.xlu0 %v4003
    %v4005 = vpop.xlane.xlu0 %4004
    %v4006 = vsel %vm689, %v3995, -inf
    %4007 = vmax.xlane.f32.xlu0 %v4006
    %v4008 = vpop.xlane.xlu0 %4007
    %v4009 = vsub.f32 %v3987, %v4002
    %v4010 = vsub.f32 %v3990, %v4005
    %v4011 = vsub.f32 %v3995, %v4008
    %v4012 = vmul.f32 %v4009, 1.442695
    %v4013 = vpow.pop %v4012
    %v4014 = vmul.f32 %v4010, 1.442695
    %v4015 = vpow.pop %v4014
    %v4016 = vmul.f32 %v4011, 1.442695
    %v4017 = vpow.pop %v4016
    %v4018 = vsel %vm689, %v4013, 0.0
    %4019 = vadd.xlane.f32.xlu0 %v4018
    %v4020 = vpop.xlane.xlu0 %4019
    %v4021 = vsel %vm689, %v4015, 0.0
    %4022 = vadd.xlane.f32.xlu0 %v4021
    %v4023 = vpop.xlane.xlu0 %4022
    %v4024 = vsel %vm689, %v4017, 0.0
    %4025 = vadd.xlane.f32.xlu0 %v4024
    %v4026 = vpop.xlane.xlu0 %4025
    %v4027 = vrcp.pop %v4020
    %v4028 = vrcp.pop %v4023
    %v4029 = vrcp.pop %v4026
    %v4030 = vmul.f32 %v4013, %v4027
    %v4031 = vmul.f32 %v4015, %v4028
    %v4032 = vmul.f32 %v4017, %v4029
    %v4033 = vpack.c.bf16 %v4031, %v4030
    %v4034 = vpack.c.bf16 %v4032, %v4032
    %4035 = vrot.lane.b32.xlu0 %v3471, 64
    %v4036 = vpop.permute.xlu0 %4035
    %4037 = vrot.lane.b32.xlu0 %v3472, 64
    %v4038 = vpop.permute.xlu0 %4037
    %v4041 = vsel %vm689, %v4033, 0
    %v4044 = vsel %vm689, %v4034, 0
    %v4047 = vsel %vm731, %v4038, 0
    %4049 = vmatprep.subr.bf16.mxu0 0
    %4050 = vmatpush1.bf16.msra.mxu0 %v4036
    %4051 = vmatprep.subr.bf16.mxu0 0
    %4052 = vmatpush1.bf16.msra.mxu0 %v4047
    %4053 = vmatprep.subr.bf16.mxu0 0
    %4054 = vmatpush1.bf16.msra.mxu0 0
    %4055 = vmatprep.subr.bf16.mxu0 0
    %4056 = vmatpush1.bf16.msra.mxu0 0
    %4057 = vmatprep.subr.bf16.mxu0 0
    %4058 = vmatpush1.bf16.msra.mxu0 0
    %4059 = vmatprep.subr.bf16.mxu0 0
    %4060 = vmatpush1.bf16.msra.mxu0 0
    %4061 = vmatprep.subr.bf16.mxu0 0
    %4062 = vmatpush1.bf16.msra.mxu0 0
    %4063 = vmatprep.subr.bf16.mxu0 0
    %4064 = vmatpush1.bf16.msra.mxu0 0
    %4065 = vmatprep.subr.bf16.mxu0 0
    %4066 = vmatpush1.bf16.msra.mxu0 0
    %4067 = vmatprep.subr.bf16.mxu0 0
    %4068 = vmatpush1.bf16.msra.mxu0 0
    %4069 = vmatprep.subr.bf16.mxu0 0
    %4070 = vmatpush1.bf16.msra.mxu0 0
    %4071 = vmatprep.subr.bf16.mxu0 0
    %4072 = vmatpush1.bf16.msra.mxu0 0
    %4073 = vmatprep.subr.bf16.mxu0 0
    %4074 = vmatpush1.bf16.msra.mxu0 0
    %4075 = vmatprep.subr.bf16.mxu0 0
    %4076 = vmatpush1.bf16.msra.mxu0 0
    %4077 = vmatprep.subr.bf16.mxu0 0
    %4078 = vmatpush1.bf16.msra.mxu0 0
    %4079 = vmatprep.subr.bf16.mxu0 0
    %4080 = vmatpush1.bf16.msra.mxu0 0
    %4081 = vmatprep.mubr.bf16.mxu0 0
    %4082 = vmatmul.mubr.bf16.gmra.mrb[0].mxu0 %v4041
    %v4083 = vpop.f32.mrb[0].mxu0
    %v4084 = vadd.f32 0.0, %v4083
    %v4085 = vpop.f32.mrb[0].mxu0
    %v4086 = vpop.f32.mrb[0].mxu0
    %v4087 = vadd.f32 0.0, %v4086
    %v4088 = vpop.f32.mrb[0].mxu0
    %4089 = vmatprep.mubr.bf16.mxu0 0
    %4090 = vmatmul.mubr.bf16.gmra.mrb[0].mxu0 %v4044
    %v4091 = vpop.f32.mrb[0].mxu0
    %v4092 = vadd.f32 0.0, %v4091
    %v4093 = vpop.f32.mrb[0].mxu0
    %v4094 = vpop.f32.mrb[0].mxu0
    %v4095 = vpop.f32.mrb[0].mxu0
    %4096 = vdwg.mxu0
    %v4097 = vpack.c.bf16 %v4087, %v4084
    %v4098 = vpack.c.bf16 %v4092, %v4092
    %v4103 = vunpack.c.l.b16 %v3459
    %v4104 = vunpack.c.l.b16 %v3460
    %v4105 = vunpack.c.l.b16 %v3461
    %v4106 = vunpack.c.l.b16 %v3462
    %v4107 = vpack.c.b16 %v4104, %v4103
    %v4108 = vpack.c.b16 %v4106, %v4105
    %v4112 = vsel %vm628, %v4097, 0
    %v4115 = vsel %vm628, %v4098, 0
    %4117 = vmatprep.subr.bf16.mxu0 0
    %4118 = vmatpush1.bf16.msra.mxu0 %v4107
    %4119 = vmatprep.subr.bf16.mxu0 0
    %4120 = vmatpush1.bf16.msra.mxu0 %v4108
    %4121 = vmatprep.subr.bf16.mxu0 0
    %4122 = vmatpush1.bf16.msra.mxu0 0
    %4123 = vmatprep.subr.bf16.mxu0 0
    %4124 = vmatpush1.bf16.msra.mxu0 0
    %4125 = vmatprep.subr.bf16.mxu0 0
    %4126 = vmatpush1.bf16.msra.mxu0 0
    %4127 = vmatprep.subr.bf16.mxu0 0
    %4128 = vmatpush1.bf16.msra.mxu0 0
    %4129 = vmatprep.subr.bf16.mxu0 0
    %4130 = vmatpush1.bf16.msra.mxu0 0
    %4131 = vmatprep.subr.bf16.mxu0 0
    %4132 = vmatpush1.bf16.msra.mxu0 0
    %4133 = vmatprep.subr.bf16.mxu0 0
    %4134 = vmatpush1.bf16.msra.mxu0 0
    %4135 = vmatprep.subr.bf16.mxu0 0
    %4136 = vmatpush1.bf16.msra.mxu0 0
    %4137 = vmatprep.subr.bf16.mxu0 0
    %4138 = vmatpush1.bf16.msra.mxu0 0
    %4139 = vmatprep.subr.bf16.mxu0 0
    %4140 = vmatpush1.bf16.msra.mxu0 0
    %4141 = vmatprep.subr.bf16.mxu0 0
    %4142 = vmatpush1.bf16.msra.mxu0 0
    %4143 = vmatprep.subr.bf16.mxu0 0
    %4144 = vmatpush1.bf16.msra.mxu0 0
    %4145 = vmatprep.subr.bf16.mxu0 0
    %4146 = vmatpush1.bf16.msra.mxu0 0
    %4147 = vmatprep.subr.bf16.mxu0 0
    %4148 = vmatpush1.bf16.msra.mxu0 0
    %4149 = vmatprep.mubr.bf16.mxu0 0
    %4150 = vmatmul.mubr.bf16.gmra.mrb[0].mxu0 %v4112
    %v4151 = vpop.f32.mrb[0].mxu0
    %v4152 = vadd.f32 0.0, %v4151
    %v4153 = vpop.f32.mrb[0].mxu0
    %v4154 = vpop.f32.mrb[0].mxu0
    %v4155 = vadd.f32 0.0, %v4154
    %v4156 = vpop.f32.mrb[0].mxu0
    %4157 = vmatprep.mubr.bf16.mxu0 0
    %4158 = vmatmul.mubr.bf16.gmra.mrb[0].mxu0 %v4115
    %v4159 = vpop.f32.mrb[0].mxu0
    %v4160 = vadd.f32 0.0, %v4159
    %v4161 = vpop.f32.mrb[0].mxu0
    %v4162 = vpop.f32.mrb[0].mxu0
    %v4163 = vpop.f32.mrb[0].mxu0
    %4164 = vdwg.mxu0
    %v4165 = vadd.f32 %v3919, %v4152
    %v4166 = vadd.f32 %v3922, %v4155
    %v4167 = vadd.f32 %v3927, %v4160
    %4168 = vrot.lane.b32.xlu0 %v3467, 32
    %v4169 = vpop.permute.xlu0 %4168
    %4170 = vrot.lane.b32.xlu0 %v3468, 32
    %v4171 = vpop.permute.xlu0 %4170
    %4172 = vrot.lane.b32.xlu0 %v3469, 32
    %v4173 = vpop.permute.xlu0 %4172
    %4174 = vrot.lane.b32.xlu0 %v3470, 32
    %v4175 = vpop.permute.xlu0 %4174
    %v4177 = vsel %vm628, %v4169, 0
    %v4180 = vsel %vm628, %v4171, 0
    %v4183 = vsel %vm628, %v4173, 0
    %v4186 = vsel %vm628, %v4175, 0
    %4188 = vmatprep.subr.bf16.mxu0 0
    %4189 = vmatpush1.bf16.xpose.msra.mxu0 %v4183
    %4190 = vmatprep.subr.bf16.mxu0 0
    %4191 = vmatpush1.bf16.xpose.msra.mxu0 %v4186
    %4192 = vmatprep.subr.bf16.mxu0 0
    %4193 = vmatpush1.bf16.xpose.msra.mxu0 0
    %4194 = vmatprep.subr.bf16.mxu0 0
    %4195 = vmatpush1.bf16.xpose.msra.mxu0 0
    %4196 = vmatprep.subr.bf16.mxu0 0
    %4197 = vmatpush1.bf16.xpose.msra.mxu0 0
    %4198 = vmatprep.subr.bf16.mxu0 0
    %4199 = vmatpush1.bf16.xpose.msra.mxu0 0
    %4200 = vmatprep.subr.bf16.mxu0 0
    %4201 = vmatpush1.bf16.xpose.msra.mxu0 0
    %4202 = vmatprep.subr.bf16.mxu0 0
    %4203 = vmatpush1.bf16.xpose.msra.mxu0 0
    %4204 = vmatprep.subr.bf16.mxu0 0
    %4205 = vmatpush1.bf16.xpose.msra.mxu0 0
    %4206 = vmatprep.subr.bf16.mxu0 0
    %4207 = vmatpush1.bf16.xpose.msra.mxu0 0
    %4208 = vmatprep.subr.bf16.mxu0 0
    %4209 = vmatpush1.bf16.xpose.msra.mxu0 0
    %4210 = vmatprep.subr.bf16.mxu0 0
    %4211 = vmatpush1.bf16.xpose.msra.mxu0 0
    %4212 = vmatprep.subr.bf16.mxu0 0
    %4213 = vmatpush1.bf16.xpose.msra.mxu0 0
    %4214 = vmatprep.subr.bf16.mxu0 0
    %4215 = vmatpush1.bf16.xpose.msra.mxu0 0
    %4216 = vmatprep.subr.bf16.mxu0 0
    %4217 = vmatpush1.bf16.xpose.msra.mxu0 0
    %4218 = vmatprep.subr.bf16.mxu0 0
    %4219 = vmatpush1.bf16.xpose.msra.mxu0 0
    %4220 = vmatprep.mubr.bf16.mxu0 0
    %4221 = vmatmul.mubr.bf16.gmra.mrb[0].mxu0 %v4177
    %v4222 = vpop.f32.mrb[0].mxu0
    %v4223 = vadd.f32 %v626, %v4222
    %v4224 = vpop.f32.mrb[0].mxu0
    %v4225 = vpop.f32.mrb[0].mxu0
    %v4226 = vadd.f32 %v626, %v4225
    %v4227 = vpop.f32.mrb[0].mxu0
    %4228 = vmatprep.mubr.bf16.mxu0 0
    %4229 = vmatmul.mubr.bf16.gmra.mrb[0].mxu0 %v4180
    %v4230 = vpop.f32.mrb[0].mxu0
    %v4231 = vadd.f32 %v626, %v4230
    %v4232 = vpop.f32.mrb[0].mxu0
    %v4233 = vpop.f32.mrb[0].mxu0
    %v4234 = vpop.f32.mrb[0].mxu0
    %4235 = vdwg.mxu0
    %v4236 = vsel %vm689, %v4223, -inf
    %4237 = vmax.xlane.f32.xlu0 %v4236
    %v4238 = vpop.xlane.xlu0 %4237
    %v4239 = vsel %vm689, %v4226, -inf
    %4240 = vmax.xlane.f32.xlu0 %v4239
    %v4241 = vpop.xlane.xlu0 %4240
    %v4242 = vsel %vm689, %v4231, -inf
    %4243 = vmax.xlane.f32.xlu0 %v4242
    %v4244 = vpop.xlane.xlu0 %4243
    %v4245 = vsub.f32 %v4223, %v4238
    %v4246 = vsub.f32 %v4226, %v4241
    %v4247 = vsub.f32 %v4231, %v4244
    %v4248 = vmul.f32 %v4245, 1.442695
    %v4249 = vpow.pop %v4248
    %v4250 = vmul.f32 %v4246, 1.442695
    %v4251 = vpow.pop %v4250
    %v4252 = vmul.f32 %v4247, 1.442695
    %v4253 = vpow.pop %v4252
    %v4254 = vsel %vm689, %v4249, 0.0
    %4255 = vadd.xlane.f32.xlu0 %v4254
    %v4256 = vpop.xlane.xlu0 %4255
    %v4257 = vsel %vm689, %v4251, 0.0
    %4258 = vadd.xlane.f32.xlu0 %v4257
    %v4259 = vpop.xlane.xlu0 %4258
    %v4260 = vsel %vm689, %v4253, 0.0
    %4261 = vadd.xlane.f32.xlu0 %v4260
    %v4262 = vpop.xlane.xlu0 %4261
    %v4263 = vrcp.pop %v4256
    %v4264 = vrcp.pop %v4259
    %v4265 = vrcp.pop %v4262
    %v4266 = vmul.f32 %v4249, %v4263
    %v4267 = vmul.f32 %v4251, %v4264
    %v4268 = vmul.f32 %v4253, %v4265
    %v4269 = vpack.c.bf16 %v4267, %v4266
    %v4270 = vpack.c.bf16 %v4268, %v4268
    %4271 = vrot.lane.b32.xlu0 %v3471, 32
    %v4272 = vpop.permute.xlu0 %4271
    %4273 = vrot.lane.b32.xlu0 %v3472, 32
    %v4274 = vpop.permute.xlu0 %4273
    %v4277 = vsel %vm689, %v4269, 0
    %v4280 = vsel %vm689, %v4270, 0
    %v4283 = vsel %vm731, %v4274, 0
    %4285 = vmatprep.subr.bf16.mxu0 0
    %4286 = vmatpush1.bf16.msra.mxu0 %v4272
    %4287 = vmatprep.subr.bf16.mxu0 0
    %4288 = vmatpush1.bf16.msra.mxu0 %v4283
    %4289 = vmatprep.subr.bf16.mxu0 0
    %4290 = vmatpush1.bf16.msra.mxu0 0
    %4291 = vmatprep.subr.bf16.mxu0 0
    %4292 = vmatpush1.bf16.msra.mxu0 0
    %4293 = vmatprep.subr.bf16.mxu0 0
    %4294 = vmatpush1.bf16.msra.mxu0 0
    %4295 = vmatprep.subr.bf16.mxu0 0
    %4296 = vmatpush1.bf16.msra.mxu0 0
    %4297 = vmatprep.subr.bf16.mxu0 0
    %4298 = vmatpush1.bf16.msra.mxu0 0
    %4299 = vmatprep.subr.bf16.mxu0 0
    %4300 = vmatpush1.bf16.msra.mxu0 0
    %4301 = vmatprep.subr.bf16.mxu0 0
    %4302 = vmatpush1.bf16.msra.mxu0 0
    %4303 = vmatprep.subr.bf16.mxu0 0
    %4304 = vmatpush1.bf16.msra.mxu0 0
    %4305 = vmatprep.subr.bf16.mxu0 0
    %4306 = vmatpush1.bf16.msra.mxu0 0
    %4307 = vmatprep.subr.bf16.mxu0 0
    %4308 = vmatpush1.bf16.msra.mxu0 0
    %4309 = vmatprep.subr.bf16.mxu0 0
    %4310 = vmatpush1.bf16.msra.mxu0 0
    %4311 = vmatprep.subr.bf16.mxu0 0
    %4312 = vmatpush1.bf16.msra.mxu0 0
    %4313 = vmatprep.subr.bf16.mxu0 0
    %4314 = vmatpush1.bf16.msra.mxu0 0
    %4315 = vmatprep.subr.bf16.mxu0 0
    %4316 = vmatpush1.bf16.msra.mxu0 0
    %4317 = vmatprep.mubr.bf16.mxu0 0
    %4318 = vmatmul.mubr.bf16.gmra.mrb[0].mxu0 %v4277
    %v4319 = vpop.f32.mrb[0].mxu0
    %v4320 = vadd.f32 0.0, %v4319
    %v4321 = vpop.f32.mrb[0].mxu0
    %v4322 = vpop.f32.mrb[0].mxu0
    %v4323 = vadd.f32 0.0, %v4322
    %v4324 = vpop.f32.mrb[0].mxu0
    %4325 = vmatprep.mubr.bf16.mxu0 0
    %4326 = vmatmul.mubr.bf16.gmra.mrb[0].mxu0 %v4280
    %v4327 = vpop.f32.mrb[0].mxu0
    %v4328 = vadd.f32 0.0, %v4327
    %v4329 = vpop.f32.mrb[0].mxu0
    %v4330 = vpop.f32.mrb[0].mxu0
    %v4331 = vpop.f32.mrb[0].mxu0
    %4332 = vdwg.mxu0
    %v4333 = vpack.c.bf16 %v4323, %v4320
    %v4334 = vpack.c.bf16 %v4328, %v4328
    %v4339 = vunpack.c.l.b16 %v3463
    %v4340 = vunpack.c.l.b16 %v3464
    %v4341 = vunpack.c.l.b16 %v3465
    %v4342 = vunpack.c.l.b16 %v3466
    %v4343 = vpack.c.b16 %v4340, %v4339
    %v4344 = vpack.c.b16 %v4342, %v4341
    %v4348 = vsel %vm628, %v4333, 0
    %v4351 = vsel %vm628, %v4334, 0
    %4353 = vmatprep.subr.bf16.mxu0 0
    %4354 = vmatpush1.bf16.msra.mxu0 %v4343
    %4355 = vmatprep.subr.bf16.mxu0 0
    %4356 = vmatpush1.bf16.msra.mxu0 %v4344
    %4357 = vmatprep.subr.bf16.mxu0 0
    %4358 = vmatpush1.bf16.msra.mxu0 0
    %4359 = vmatprep.subr.bf16.mxu0 0
    %4360 = vmatpush1.bf16.msra.mxu0 0
    %4361 = vmatprep.subr.bf16.mxu0 0
    %4362 = vmatpush1.bf16.msra.mxu0 0
    %4363 = vmatprep.subr.bf16.mxu0 0
    %4364 = vmatpush1.bf16.msra.mxu0 0
    %4365 = vmatprep.subr.bf16.mxu0 0
    %4366 = vmatpush1.bf16.msra.mxu0 0
    %4367 = vmatprep.subr.bf16.mxu0 0
    %4368 = vmatpush1.bf16.msra.mxu0 0
    %4369 = vmatprep.subr.bf16.mxu0 0
    %4370 = vmatpush1.bf16.msra.mxu0 0
    %4371 = vmatprep.subr.bf16.mxu0 0
    %4372 = vmatpush1.bf16.msra.mxu0 0
    %4373 = vmatprep.subr.bf16.mxu0 0
    %4374 = vmatpush1.bf16.msra.mxu0 0
    %4375 = vmatprep.subr.bf16.mxu0 0
    %4376 = vmatpush1.bf16.msra.mxu0 0
    %4377 = vmatprep.subr.bf16.mxu0 0
    %4378 = vmatpush1.bf16.msra.mxu0 0
    %4379 = vmatprep.subr.bf16.mxu0 0
    %4380 = vmatpush1.bf16.msra.mxu0 0
    %4381 = vmatprep.subr.bf16.mxu0 0
    %4382 = vmatpush1.bf16.msra.mxu0 0
    %4383 = vmatprep.subr.bf16.mxu0 0
    %4384 = vmatpush1.bf16.msra.mxu0 0
    %4385 = vmatprep.mubr.bf16.mxu0 0
    %4386 = vmatmul.mubr.bf16.gmra.mrb[0].mxu0 %v4348
    %v4387 = vpop.f32.mrb[0].mxu0
    %v4388 = vadd.f32 0.0, %v4387
    %v4389 = vpop.f32.mrb[0].mxu0
    %v4390 = vpop.f32.mrb[0].mxu0
    %v4391 = vadd.f32 0.0, %v4390
    %v4392 = vpop.f32.mrb[0].mxu0
    %4393 = vmatprep.mubr.bf16.mxu0 0
    %4394 = vmatmul.mubr.bf16.gmra.mrb[0].mxu0 %v4351
    %v4395 = vpop.f32.mrb[0].mxu0
    %v4396 = vadd.f32 0.0, %v4395
    %v4397 = vpop.f32.mrb[0].mxu0
    %v4398 = vpop.f32.mrb[0].mxu0
    %v4399 = vpop.f32.mrb[0].mxu0
    %4400 = vdwg.mxu0
    %v4401 = vadd.f32 %v4165, %v4388
    %v4402 = vadd.f32 %v4166, %v4391
    %v4403 = vadd.f32 %v4167, %v4396
    %v4404 = vpack.c.bf16 %v3385, %v3379
    %v4405 = vpack.c.bf16 %v3389, %v3389
    %v4406 = vpack.c.bf16 %v3387, %v3381
    %v4407 = vpack.c.bf16 %v3391, %v3391
    %v4408 = vpack.c.bf16 %v3444, %v3439
    %v4409 = vpack.c.bf16 %v3447, %v3447
    %v4411 = vsel %vm628, %v4404, 0
    %v4414 = vsel %vm628, %v4405, 0
    %v4417 = vsel %vm628, %v4406, 0
    %v4420 = vsel %vm628, %v4407, 0
    %4422 = vmatprep.subr.bf16.mxu0 0
    %4423 = vmatpush1.bf16.xpose.msra.mxu0 %v4417
    %4424 = vmatprep.subr.bf16.mxu0 0
    %4425 = vmatpush1.bf16.xpose.msra.mxu0 %v4420
    %4426 = vmatprep.subr.bf16.mxu0 0
    %4427 = vmatpush1.bf16.xpose.msra.mxu0 0
    %4428 = vmatprep.subr.bf16.mxu0 0
    %4429 = vmatpush1.bf16.xpose.msra.mxu0 0
    %4430 = vmatprep.subr.bf16.mxu0 0
    %4431 = vmatpush1.bf16.xpose.msra.mxu0 0
    %4432 = vmatprep.subr.bf16.mxu0 0
    %4433 = vmatpush1.bf16.xpose.msra.mxu0 0
    %4434 = vmatprep.subr.bf16.mxu0 0
    %4435 = vmatpush1.bf16.xpose.msra.mxu0 0
    %4436 = vmatprep.subr.bf16.mxu0 0
    %4437 = vmatpush1.bf16.xpose.msra.mxu0 0
    %4438 = vmatprep.subr.bf16.mxu0 0
    %4439 = vmatpush1.bf16.xpose.msra.mxu0 0
    %4440 = vmatprep.subr.bf16.mxu0 0
    %4441 = vmatpush1.bf16.xpose.msra.mxu0 0
    %4442 = vmatprep.subr.bf16.mxu0 0
    %4443 = vmatpush1.bf16.xpose.msra.mxu0 0
    %4444 = vmatprep.subr.bf16.mxu0 0
    %4445 = vmatpush1.bf16.xpose.msra.mxu0 0
    %4446 = vmatprep.subr.bf16.mxu0 0
    %4447 = vmatpush1.bf16.xpose.msra.mxu0 0
    %4448 = vmatprep.subr.bf16.mxu0 0
    %4449 = vmatpush1.bf16.xpose.msra.mxu0 0
    %4450 = vmatprep.subr.bf16.mxu0 0
    %4451 = vmatpush1.bf16.xpose.msra.mxu0 0
    %4452 = vmatprep.subr.bf16.mxu0 0
    %4453 = vmatpush1.bf16.xpose.msra.mxu0 0
    %4454 = vmatprep.mubr.bf16.mxu0 0
    %4455 = vmatmul.mubr.bf16.gmra.mrb[0].mxu0 %v4411
    %v4456 = vpop.f32.mrb[0].mxu0
    %v4457 = vadd.f32 %v626, %v4456
    %v4458 = vpop.f32.mrb[0].mxu0
    %v4459 = vpop.f32.mrb[0].mxu0
    %v4460 = vadd.f32 %v626, %v4459
    %v4461 = vpop.f32.mrb[0].mxu0
    %4462 = vmatprep.mubr.bf16.mxu0 0
    %4463 = vmatmul.mubr.bf16.gmra.mrb[0].mxu0 %v4414
    %v4464 = vpop.f32.mrb[0].mxu0
    %v4465 = vadd.f32 %v626, %v4464
    %v4466 = vpop.f32.mrb[0].mxu0
    %v4467 = vpop.f32.mrb[0].mxu0
    %v4468 = vpop.f32.mrb[0].mxu0
    %4469 = vdwg.mxu0
    %v4470 = vsel %vm689, %v4457, -inf
    %4471 = vmax.xlane.f32.xlu0 %v4470
    %v4472 = vpop.xlane.xlu0 %4471
    %v4473 = vsel %vm689, %v4460, -inf
    %4474 = vmax.xlane.f32.xlu0 %v4473
    %v4475 = vpop.xlane.xlu0 %4474
    %v4476 = vsel %vm689, %v4465, -inf
    %4477 = vmax.xlane.f32.xlu0 %v4476
    %v4478 = vpop.xlane.xlu0 %4477
    %v4479 = vsub.f32 %v4457, %v4472
    %v4480 = vsub.f32 %v4460, %v4475
    %v4481 = vsub.f32 %v4465, %v4478
    %v4482 = vmul.f32 %v4479, 1.442695
    %v4483 = vpow.pop %v4482
    %v4484 = vmul.f32 %v4480, 1.442695
    %v4485 = vpow.pop %v4484
    %v4486 = vmul.f32 %v4481, 1.442695
    %v4487 = vpow.pop %v4486
    %v4488 = vsel %vm689, %v4483, 0.0
    %4489 = vadd.xlane.f32.xlu0 %v4488
    %v4490 = vpop.xlane.xlu0 %4489
    %v4491 = vsel %vm689, %v4485, 0.0
    %4492 = vadd.xlane.f32.xlu0 %v4491
    %v4493 = vpop.xlane.xlu0 %4492
    %v4494 = vsel %vm689, %v4487, 0.0
    %4495 = vadd.xlane.f32.xlu0 %v4494
    %v4496 = vpop.xlane.xlu0 %4495
    %v4497 = vrcp.pop %v4490
    %v4498 = vrcp.pop %v4493
    %v4499 = vrcp.pop %v4496
    %v4500 = vmul.f32 %v4483, %v4497
    %v4501 = vmul.f32 %v4485, %v4498
    %v4502 = vmul.f32 %v4487, %v4499
    %v4503 = vpack.c.bf16 %v4501, %v4500
    %v4504 = vpack.c.bf16 %v4502, %v4502
    %v4506 = vsel %vm689, %v4503, 0
    %v4509 = vsel %vm689, %v4504, 0
    %v4512 = vsel %vm731, %v4409, 0
    %4514 = vmatprep.subr.bf16.mxu0 0
    %4515 = vmatpush1.bf16.msra.mxu0 %v4408
    %4516 = vmatprep.subr.bf16.mxu0 0
    %4517 = vmatpush1.bf16.msra.mxu0 %v4512
    %4518 = vmatprep.subr.bf16.mxu0 0
    %4519 = vmatpush1.bf16.msra.mxu0 0
    %4520 = vmatprep.subr.bf16.mxu0 0
    %4521 = vmatpush1.bf16.msra.mxu0 0
    %4522 = vmatprep.subr.bf16.mxu0 0
    %4523 = vmatpush1.bf16.msra.mxu0 0
    %4524 = vmatprep.subr.bf16.mxu0 0
    %4525 = vmatpush1.bf16.msra.mxu0 0
    %4526 = vmatprep.subr.bf16.mxu0 0
    %4527 = vmatpush1.bf16.msra.mxu0 0
    %4528 = vmatprep.subr.bf16.mxu0 0
    %4529 = vmatpush1.bf16.msra.mxu0 0
    %4530 = vmatprep.subr.bf16.mxu0 0
    %4531 = vmatpush1.bf16.msra.mxu0 0
    %4532 = vmatprep.subr.bf16.mxu0 0
    %4533 = vmatpush1.bf16.msra.mxu0 0
    %4534 = vmatprep.subr.bf16.mxu0 0
    %4535 = vmatpush1.bf16.msra.mxu0 0
    %4536 = vmatprep.subr.bf16.mxu0 0
    %4537 = vmatpush1.bf16.msra.mxu0 0
    %4538 = vmatprep.subr.bf16.mxu0 0
    %4539 = vmatpush1.bf16.msra.mxu0 0
    %4540 = vmatprep.subr.bf16.mxu0 0
    %4541 = vmatpush1.bf16.msra.mxu0 0
    %4542 = vmatprep.subr.bf16.mxu0 0
    %4543 = vmatpush1.bf16.msra.mxu0 0
    %4544 = vmatprep.subr.bf16.mxu0 0
    %4545 = vmatpush1.bf16.msra.mxu0 0
    %4546 = vmatprep.mubr.bf16.mxu0 0
    %4547 = vmatmul.mubr.bf16.gmra.mrb[0].mxu0 %v4506
    %v4548 = vpop.f32.mrb[0].mxu0
    %v4549 = vadd.f32 0.0, %v4548
    %v4550 = vpop.f32.mrb[0].mxu0
    %v4551 = vpop.f32.mrb[0].mxu0
    %v4552 = vadd.f32 0.0, %v4551
    %v4553 = vpop.f32.mrb[0].mxu0
    %4554 = vmatprep.mubr.bf16.mxu0 0
    %4555 = vmatmul.mubr.bf16.gmra.mrb[0].mxu0 %v4509
    %v4556 = vpop.f32.mrb[0].mxu0
    %v4557 = vadd.f32 0.0, %v4556
    %v4558 = vpop.f32.mrb[0].mxu0
    %v4559 = vpop.f32.mrb[0].mxu0
    %v4560 = vpop.f32.mrb[0].mxu0
    %4561 = vdwg.mxu0
    %v4562 = vpack.c.bf16 %v4552, %v4549
    %v4563 = vpack.c.bf16 %v4557, %v4557
    %4566 = vrot.lane.b32.xlu0 %v4404, 96
    %v4567 = vpop.permute.xlu0 %4566
    %4568 = vrot.lane.b32.xlu0 %v4405, 96
    %v4569 = vpop.permute.xlu0 %4568
    %4572 = vrot.lane.b32.xlu0 %v4406, 96
    %v4573 = vpop.permute.xlu0 %4572
    %4574 = vrot.lane.b32.xlu0 %v4407, 96
    %v4575 = vpop.permute.xlu0 %4574
    %v4577 = vsel %vm628, %v4567, 0
    %v4580 = vsel %vm628, %v4569, 0
    %v4583 = vsel %vm628, %v4573, 0
    %v4586 = vsel %vm628, %v4575, 0
    %4588 = vmatprep.subr.bf16.mxu0 0
    %4589 = vmatpush1.bf16.xpose.msra.mxu0 %v4583
    %4590 = vmatprep.subr.bf16.mxu0 0
    %4591 = vmatpush1.bf16.xpose.msra.mxu0 %v4586
    %4592 = vmatprep.subr.bf16.mxu0 0
    %4593 = vmatpush1.bf16.xpose.msra.mxu0 0
    %4594 = vmatprep.subr.bf16.mxu0 0
    %4595 = vmatpush1.bf16.xpose.msra.mxu0 0
    %4596 = vmatprep.subr.bf16.mxu0 0
    %4597 = vmatpush1.bf16.xpose.msra.mxu0 0
    %4598 = vmatprep.subr.bf16.mxu0 0
    %4599 = vmatpush1.bf16.xpose.msra.mxu0 0
    %4600 = vmatprep.subr.bf16.mxu0 0
    %4601 = vmatpush1.bf16.xpose.msra.mxu0 0
    %4602 = vmatprep.subr.bf16.mxu0 0
    %4603 = vmatpush1.bf16.xpose.msra.mxu0 0
    %4604 = vmatprep.subr.bf16.mxu0 0
    %4605 = vmatpush1.bf16.xpose.msra.mxu0 0
    %4606 = vmatprep.subr.bf16.mxu0 0
    %4607 = vmatpush1.bf16.xpose.msra.mxu0 0
    %4608 = vmatprep.subr.bf16.mxu0 0
    %4609 = vmatpush1.bf16.xpose.msra.mxu0 0
    %4610 = vmatprep.subr.bf16.mxu0 0
    %4611 = vmatpush1.bf16.xpose.msra.mxu0 0
    %4612 = vmatprep.subr.bf16.mxu0 0
    %4613 = vmatpush1.bf16.xpose.msra.mxu0 0
    %4614 = vmatprep.subr.bf16.mxu0 0
    %4615 = vmatpush1.bf16.xpose.msra.mxu0 0
    %4616 = vmatprep.subr.bf16.mxu0 0
    %4617 = vmatpush1.bf16.xpose.msra.mxu0 0
    %4618 = vmatprep.subr.bf16.mxu0 0
    %4619 = vmatpush1.bf16.xpose.msra.mxu0 0
    %4620 = vmatprep.mubr.bf16.mxu0 0
    %4621 = vmatmul.mubr.bf16.gmra.mrb[0].mxu0 %v4577
    %v4622 = vpop.f32.mrb[0].mxu0
    %v4623 = vadd.f32 %v626, %v4622
    %v4624 = vpop.f32.mrb[0].mxu0
    %v4625 = vpop.f32.mrb[0].mxu0
    %v4626 = vadd.f32 %v626, %v4625
    %v4627 = vpop.f32.mrb[0].mxu0
    %4628 = vmatprep.mubr.bf16.mxu0 0
    %4629 = vmatmul.mubr.bf16.gmra.mrb[0].mxu0 %v4580
    %v4630 = vpop.f32.mrb[0].mxu0
    %v4631 = vadd.f32 %v626, %v4630
    %v4632 = vpop.f32.mrb[0].mxu0
    %v4633 = vpop.f32.mrb[0].mxu0
    %v4634 = vpop.f32.mrb[0].mxu0
    %4635 = vdwg.mxu0
    %v4636 = vsel %vm689, %v4623, -inf
    %4637 = vmax.xlane.f32.xlu0 %v4636
    %v4638 = vpop.xlane.xlu0 %4637
    %v4639 = vsel %vm689, %v4626, -inf
    %4640 = vmax.xlane.f32.xlu0 %v4639
    %v4641 = vpop.xlane.xlu0 %4640
    %v4642 = vsel %vm689, %v4631, -inf
    %4643 = vmax.xlane.f32.xlu0 %v4642
    %v4644 = vpop.xlane.xlu0 %4643
    %v4645 = vsub.f32 %v4623, %v4638
    %v4646 = vsub.f32 %v4626, %v4641
    %v4647 = vsub.f32 %v4631, %v4644
    %v4648 = vmul.f32 %v4645, 1.442695
    %v4649 = vpow.pop %v4648
    %v4650 = vmul.f32 %v4646, 1.442695
    %v4651 = vpow.pop %v4650
    %v4652 = vmul.f32 %v4647, 1.442695
    %v4653 = vpow.pop %v4652
    %v4654 = vsel %vm689, %v4649, 0.0
    %4655 = vadd.xlane.f32.xlu0 %v4654
    %v4656 = vpop.xlane.xlu0 %4655
    %v4657 = vsel %vm689, %v4651, 0.0
    %4658 = vadd.xlane.f32.xlu0 %v4657
    %v4659 = vpop.xlane.xlu0 %4658
    %v4660 = vsel %vm689, %v4653, 0.0
    %4661 = vadd.xlane.f32.xlu0 %v4660
    %v4662 = vpop.xlane.xlu0 %4661
    %v4663 = vrcp.pop %v4656
    %v4664 = vrcp.pop %v4659
    %v4665 = vrcp.pop %v4662
    %v4666 = vmul.f32 %v4649, %v4663
    %v4667 = vmul.f32 %v4651, %v4664
    %v4668 = vmul.f32 %v4653, %v4665
    %v4669 = vpack.c.bf16 %v4667, %v4666
    %v4670 = vpack.c.bf16 %v4668, %v4668
    %4673 = vrot.lane.b32.xlu0 %v4408, 96
    %v4674 = vpop.permute.xlu0 %4673
    %4675 = vrot.lane.b32.xlu0 %v4409, 96
    %v4676 = vpop.permute.xlu0 %4675
    %v4679 = vsel %vm689, %v4669, 0
    %v4682 = vsel %vm689, %v4670, 0
    %v4685 = vsel %vm731, %v4676, 0
    %4687 = vmatprep.subr.bf16.mxu0 0
    %4688 = vmatpush1.bf16.msra.mxu0 %v4674
    %4689 = vmatprep.subr.bf16.mxu0 0
    %4690 = vmatpush1.bf16.msra.mxu0 %v4685
    %4691 = vmatprep.subr.bf16.mxu0 0
    %4692 = vmatpush1.bf16.msra.mxu0 0
    %4693 = vmatprep.subr.bf16.mxu0 0
    %4694 = vmatpush1.bf16.msra.mxu0 0
    %4695 = vmatprep.subr.bf16.mxu0 0
    %4696 = vmatpush1.bf16.msra.mxu0 0
    %4697 = vmatprep.subr.bf16.mxu0 0
    %4698 = vmatpush1.bf16.msra.mxu0 0
    %4699 = vmatprep.subr.bf16.mxu0 0
    %4700 = vmatpush1.bf16.msra.mxu0 0
    %4701 = vmatprep.subr.bf16.mxu0 0
    %4702 = vmatpush1.bf16.msra.mxu0 0
    %4703 = vmatprep.subr.bf16.mxu0 0
    %4704 = vmatpush1.bf16.msra.mxu0 0
    %4705 = vmatprep.subr.bf16.mxu0 0
    %4706 = vmatpush1.bf16.msra.mxu0 0
    %4707 = vmatprep.subr.bf16.mxu0 0
    %4708 = vmatpush1.bf16.msra.mxu0 0
    %4709 = vmatprep.subr.bf16.mxu0 0
    %4710 = vmatpush1.bf16.msra.mxu0 0
    %4711 = vmatprep.subr.bf16.mxu0 0
    %4712 = vmatpush1.bf16.msra.mxu0 0
    %4713 = vmatprep.subr.bf16.mxu0 0
    %4714 = vmatpush1.bf16.msra.mxu0 0
    %4715 = vmatprep.subr.bf16.mxu0 0
    %4716 = vmatpush1.bf16.msra.mxu0 0
    %4717 = vmatprep.subr.bf16.mxu0 0
    %4718 = vmatpush1.bf16.msra.mxu0 0
    %4719 = vmatprep.mubr.bf16.mxu0 0
    %4720 = vmatmul.mubr.bf16.gmra.mrb[0].mxu0 %v4679
    %v4721 = vpop.f32.mrb[0].mxu0
    %v4722 = vadd.f32 0.0, %v4721
    %v4723 = vpop.f32.mrb[0].mxu0
    %v4724 = vpop.f32.mrb[0].mxu0
    %v4725 = vadd.f32 0.0, %v4724
    %v4726 = vpop.f32.mrb[0].mxu0
    %4727 = vmatprep.mubr.bf16.mxu0 0
    %4728 = vmatmul.mubr.bf16.gmra.mrb[0].mxu0 %v4682
    %v4729 = vpop.f32.mrb[0].mxu0
    %v4730 = vadd.f32 0.0, %v4729
    %v4731 = vpop.f32.mrb[0].mxu0
    %v4732 = vpop.f32.mrb[0].mxu0
    %v4733 = vpop.f32.mrb[0].mxu0
    %4734 = vdwg.mxu0
    %v4735 = vpack.c.bf16 %v4725, %v4722
    %v4736 = vpack.c.bf16 %v4730, %v4730
    %v4738 = vsel %vm628, %v4735, 0
    %v4741 = vsel %vm628, %v4736, 0
    %4743 = vmatprep.subr.bf16.mxu0 0
    %4744 = vmatpush1.bf16.msra.mxu0 %v3808
    %4745 = vmatprep.subr.bf16.mxu0 0
    %4746 = vmatpush1.bf16.msra.mxu0 %v3809
    %4747 = vmatprep.subr.bf16.mxu0 0
    %4748 = vmatpush1.bf16.msra.mxu0 0
    %4749 = vmatprep.subr.bf16.mxu0 0
    %4750 = vmatpush1.bf16.msra.mxu0 0
    %4751 = vmatprep.subr.bf16.mxu0 0
    %4752 = vmatpush1.bf16.msra.mxu0 0
    %4753 = vmatprep.subr.bf16.mxu0 0
    %4754 = vmatpush1.bf16.msra.mxu0 0
    %4755 = vmatprep.subr.bf16.mxu0 0
    %4756 = vmatpush1.bf16.msra.mxu0 0
    %4757 = vmatprep.subr.bf16.mxu0 0
    %4758 = vmatpush1.bf16.msra.mxu0 0
    %4759 = vmatprep.subr.bf16.mxu0 0
    %4760 = vmatpush1.bf16.msra.mxu0 0
    %4761 = vmatprep.subr.bf16.mxu0 0
    %4762 = vmatpush1.bf16.msra.mxu0 0
    %4763 = vmatprep.subr.bf16.mxu0 0
    %4764 = vmatpush1.bf16.msra.mxu0 0
    %4765 = vmatprep.subr.bf16.mxu0 0
    %4766 = vmatpush1.bf16.msra.mxu0 0
    %4767 = vmatprep.subr.bf16.mxu0 0
    %4768 = vmatpush1.bf16.msra.mxu0 0
    %4769 = vmatprep.subr.bf16.mxu0 0
    %4770 = vmatpush1.bf16.msra.mxu0 0
    %4771 = vmatprep.subr.bf16.mxu0 0
    %4772 = vmatpush1.bf16.msra.mxu0 0
    %4773 = vmatprep.subr.bf16.mxu0 0
    %4774 = vmatpush1.bf16.msra.mxu0 0
    %4775 = vmatprep.mubr.bf16.mxu0 0
    %4776 = vmatmul.mubr.bf16.gmra.mrb[0].mxu0 %v4738
    %v4777 = vpop.f32.mrb[0].mxu0
    %v4778 = vadd.f32 0.0, %v4777
    %v4779 = vpop.f32.mrb[0].mxu0
    %v4780 = vpop.f32.mrb[0].mxu0
    %v4781 = vadd.f32 0.0, %v4780
    %v4782 = vpop.f32.mrb[0].mxu0
    %4783 = vmatprep.mubr.bf16.mxu0 0
    %4784 = vmatmul.mubr.bf16.gmra.mrb[0].mxu0 %v4741
    %v4785 = vpop.f32.mrb[0].mxu0
    %v4786 = vadd.f32 0.0, %v4785
    %v4787 = vpop.f32.mrb[0].mxu0
    %v4788 = vpop.f32.mrb[0].mxu0
    %v4789 = vpop.f32.mrb[0].mxu0
    %4790 = vdwg.mxu0
    %v4792 = vsel %vm628, %v4562, 0
    %v4795 = vsel %vm628, %v4563, 0
    %4797 = vmatprep.subr.bf16.mxu0 0
    %4798 = vmatpush1.bf16.msra.mxu0 %v3874
    %4799 = vmatprep.subr.bf16.mxu0 0
    %4800 = vmatpush1.bf16.msra.mxu0 %v3875
    %4801 = vmatprep.subr.bf16.mxu0 0
    %4802 = vmatpush1.bf16.msra.mxu0 0
    %4803 = vmatprep.subr.bf16.mxu0 0
    %4804 = vmatpush1.bf16.msra.mxu0 0
    %4805 = vmatprep.subr.bf16.mxu0 0
    %4806 = vmatpush1.bf16.msra.mxu0 0
    %4807 = vmatprep.subr.bf16.mxu0 0
    %4808 = vmatpush1.bf16.msra.mxu0 0
    %4809 = vmatprep.subr.bf16.mxu0 0
    %4810 = vmatpush1.bf16.msra.mxu0 0
    %4811 = vmatprep.subr.bf16.mxu0 0
    %4812 = vmatpush1.bf16.msra.mxu0 0
    %4813 = vmatprep.subr.bf16.mxu0 0
    %4814 = vmatpush1.bf16.msra.mxu0 0
    %4815 = vmatprep.subr.bf16.mxu0 0
    %4816 = vmatpush1.bf16.msra.mxu0 0
    %4817 = vmatprep.subr.bf16.mxu0 0
    %4818 = vmatpush1.bf16.msra.mxu0 0
    %4819 = vmatprep.subr.bf16.mxu0 0
    %4820 = vmatpush1.bf16.msra.mxu0 0
    %4821 = vmatprep.subr.bf16.mxu0 0
    %4822 = vmatpush1.bf16.msra.mxu0 0
    %4823 = vmatprep.subr.bf16.mxu0 0
    %4824 = vmatpush1.bf16.msra.mxu0 0
    %4825 = vmatprep.subr.bf16.mxu0 0
    %4826 = vmatpush1.bf16.msra.mxu0 0
    %4827 = vmatprep.subr.bf16.mxu0 0
    %4828 = vmatpush1.bf16.msra.mxu0 0
    %4829 = vmatprep.mubr.bf16.mxu0 0
    %4830 = vmatmul.mubr.bf16.gmra.mrb[0].mxu0 %v4792
    %v4831 = vpop.f32.mrb[0].mxu0
    %v4832 = vadd.f32 %v4778, %v4831
    %v4833 = vpop.f32.mrb[0].mxu0
    %v4834 = vpop.f32.mrb[0].mxu0
    %v4835 = vadd.f32 %v4781, %v4834
    %v4836 = vpop.f32.mrb[0].mxu0
    %4837 = vmatprep.mubr.bf16.mxu0 0
    %4838 = vmatmul.mubr.bf16.gmra.mrb[0].mxu0 %v4795
    %v4839 = vpop.f32.mrb[0].mxu0
    %v4840 = vadd.f32 %v4786, %v4839
    %v4841 = vpop.f32.mrb[0].mxu0
    %v4842 = vpop.f32.mrb[0].mxu0
    %v4843 = vpop.f32.mrb[0].mxu0
    %4844 = vdwg.mxu0
    %4845 = vrot.lane.b32.xlu0 %v4404, 64
    %v4846 = vpop.permute.xlu0 %4845
    %4847 = vrot.lane.b32.xlu0 %v4405, 64
    %v4848 = vpop.permute.xlu0 %4847
    %4849 = vrot.lane.b32.xlu0 %v4406, 64
    %v4850 = vpop.permute.xlu0 %4849
    %4851 = vrot.lane.b32.xlu0 %v4407, 64
    %v4852 = vpop.permute.xlu0 %4851
    %v4854 = vsel %vm628, %v4846, 0
    %v4857 = vsel %vm628, %v4848, 0
    %v4860 = vsel %vm628, %v4850, 0
    %v4863 = vsel %vm628, %v4852, 0
    %4865 = vmatprep.subr.bf16.mxu0 0
    %4866 = vmatpush1.bf16.xpose.msra.mxu0 %v4860
    %4867 = vmatprep.subr.bf16.mxu0 0
    %4868 = vmatpush1.bf16.xpose.msra.mxu0 %v4863
    %4869 = vmatprep.subr.bf16.mxu0 0
    %4870 = vmatpush1.bf16.xpose.msra.mxu0 0
    %4871 = vmatprep.subr.bf16.mxu0 0
    %4872 = vmatpush1.bf16.xpose.msra.mxu0 0
    %4873 = vmatprep.subr.bf16.mxu0 0
    %4874 = vmatpush1.bf16.xpose.msra.mxu0 0
    %4875 = vmatprep.subr.bf16.mxu0 0
    %4876 = vmatpush1.bf16.xpose.msra.mxu0 0
    %4877 = vmatprep.subr.bf16.mxu0 0
    %4878 = vmatpush1.bf16.xpose.msra.mxu0 0
    %4879 = vmatprep.subr.bf16.mxu0 0
    %4880 = vmatpush1.bf16.xpose.msra.mxu0 0
    %4881 = vmatprep.subr.bf16.mxu0 0
    %4882 = vmatpush1.bf16.xpose.msra.mxu0 0
    %4883 = vmatprep.subr.bf16.mxu0 0
    %4884 = vmatpush1.bf16.xpose.msra.mxu0 0
    %4885 = vmatprep.subr.bf16.mxu0 0
    %4886 = vmatpush1.bf16.xpose.msra.mxu0 0
    %4887 = vmatprep.subr.bf16.mxu0 0
    %4888 = vmatpush1.bf16.xpose.msra.mxu0 0
    %4889 = vmatprep.subr.bf16.mxu0 0
    %4890 = vmatpush1.bf16.xpose.msra.mxu0 0
    %4891 = vmatprep.subr.bf16.mxu0 0
    %4892 = vmatpush1.bf16.xpose.msra.mxu0 0
    %4893 = vmatprep.subr.bf16.mxu0 0
    %4894 = vmatpush1.bf16.xpose.msra.mxu0 0
    %4895 = vmatprep.subr.bf16.mxu0 0
    %4896 = vmatpush1.bf16.xpose.msra.mxu0 0
    %4897 = vmatprep.mubr.bf16.mxu0 0
    %4898 = vmatmul.mubr.bf16.gmra.mrb[0].mxu0 %v4854
    %v4899 = vpop.f32.mrb[0].mxu0
    %v4900 = vadd.f32 %v626, %v4899
    %v4901 = vpop.f32.mrb[0].mxu0
    %v4902 = vpop.f32.mrb[0].mxu0
    %v4903 = vadd.f32 %v626, %v4902
    %v4904 = vpop.f32.mrb[0].mxu0
    %4905 = vmatprep.mubr.bf16.mxu0 0
    %4906 = vmatmul.mubr.bf16.gmra.mrb[0].mxu0 %v4857
    %v4907 = vpop.f32.mrb[0].mxu0
    %v4908 = vadd.f32 %v626, %v4907
    %v4909 = vpop.f32.mrb[0].mxu0
    %v4910 = vpop.f32.mrb[0].mxu0
    %v4911 = vpop.f32.mrb[0].mxu0
    %4912 = vdwg.mxu0
    %v4913 = vsel %vm689, %v4900, -inf
    %4914 = vmax.xlane.f32.xlu0 %v4913
    %v4915 = vpop.xlane.xlu0 %4914
    %v4916 = vsel %vm689, %v4903, -inf
    %4917 = vmax.xlane.f32.xlu0 %v4916
    %v4918 = vpop.xlane.xlu0 %4917
    %v4919 = vsel %vm689, %v4908, -inf
    %4920 = vmax.xlane.f32.xlu0 %v4919
    %v4921 = vpop.xlane.xlu0 %4920
    %v4922 = vsub.f32 %v4900, %v4915
    %v4923 = vsub.f32 %v4903, %v4918
    %v4924 = vsub.f32 %v4908, %v4921
    %v4925 = vmul.f32 %v4922, 1.442695
    %v4926 = vpow.pop %v4925
    %v4927 = vmul.f32 %v4923, 1.442695
    %v4928 = vpow.pop %v4927
    %v4929 = vmul.f32 %v4924, 1.442695
    %v4930 = vpow.pop %v4929
    %v4931 = vsel %vm689, %v4926, 0.0
    %4932 = vadd.xlane.f32.xlu0 %v4931
    %v4933 = vpop.xlane.xlu0 %4932
    %v4934 = vsel %vm689, %v4928, 0.0
    %4935 = vadd.xlane.f32.xlu0 %v4934
    %v4936 = vpop.xlane.xlu0 %4935
    %v4937 = vsel %vm689, %v4930, 0.0
    %4938 = vadd.xlane.f32.xlu0 %v4937
    %v4939 = vpop.xlane.xlu0 %4938
    %v4940 = vrcp.pop %v4933
    %v4941 = vrcp.pop %v4936
    %v4942 = vrcp.pop %v4939
    %v4943 = vmul.f32 %v4926, %v4940
    %v4944 = vmul.f32 %v4928, %v4941
    %v4945 = vmul.f32 %v4930, %v4942
    %v4946 = vpack.c.bf16 %v4944, %v4943
    %v4947 = vpack.c.bf16 %v4945, %v4945
    %4948 = vrot.lane.b32.xlu0 %v4408, 64
    %v4949 = vpop.permute.xlu0 %4948
    %4950 = vrot.lane.b32.xlu0 %v4409, 64
    %v4951 = vpop.permute.xlu0 %4950
    %v4954 = vsel %vm689, %v4946, 0
    %v4957 = vsel %vm689, %v4947, 0
    %v4960 = vsel %vm731, %v4951, 0
    %4962 = vmatprep.subr.bf16.mxu0 0
    %4963 = vmatpush1.bf16.msra.mxu0 %v4949
    %4964 = vmatprep.subr.bf16.mxu0 0
    %4965 = vmatpush1.bf16.msra.mxu0 %v4960
    %4966 = vmatprep.subr.bf16.mxu0 0
    %4967 = vmatpush1.bf16.msra.mxu0 0
    %4968 = vmatprep.subr.bf16.mxu0 0
    %4969 = vmatpush1.bf16.msra.mxu0 0
    %4970 = vmatprep.subr.bf16.mxu0 0
    %4971 = vmatpush1.bf16.msra.mxu0 0
    %4972 = vmatprep.subr.bf16.mxu0 0
    %4973 = vmatpush1.bf16.msra.mxu0 0
    %4974 = vmatprep.subr.bf16.mxu0 0
    %4975 = vmatpush1.bf16.msra.mxu0 0
    %4976 = vmatprep.subr.bf16.mxu0 0
    %4977 = vmatpush1.bf16.msra.mxu0 0
    %4978 = vmatprep.subr.bf16.mxu0 0
    %4979 = vmatpush1.bf16.msra.mxu0 0
    %4980 = vmatprep.subr.bf16.mxu0 0
    %4981 = vmatpush1.bf16.msra.mxu0 0
    %4982 = vmatprep.subr.bf16.mxu0 0
    %4983 = vmatpush1.bf16.msra.mxu0 0
    %4984 = vmatprep.subr.bf16.mxu0 0
    %4985 = vmatpush1.bf16.msra.mxu0 0
    %4986 = vmatprep.subr.bf16.mxu0 0
    %4987 = vmatpush1.bf16.msra.mxu0 0
    %4988 = vmatprep.subr.bf16.mxu0 0
    %4989 = vmatpush1.bf16.msra.mxu0 0
    %4990 = vmatprep.subr.bf16.mxu0 0
    %4991 = vmatpush1.bf16.msra.mxu0 0
    %4992 = vmatprep.subr.bf16.mxu0 0
    %4993 = vmatpush1.bf16.msra.mxu0 0
    %4994 = vmatprep.mubr.bf16.mxu0 0
    %4995 = vmatmul.mubr.bf16.gmra.mrb[0].mxu0 %v4954
    %v4996 = vpop.f32.mrb[0].mxu0
    %v4997 = vadd.f32 0.0, %v4996
    %v4998 = vpop.f32.mrb[0].mxu0
    %v4999 = vpop.f32.mrb[0].mxu0
    %v5000 = vadd.f32 0.0, %v4999
    %v5001 = vpop.f32.mrb[0].mxu0
    %5002 = vmatprep.mubr.bf16.mxu0 0
    %5003 = vmatmul.mubr.bf16.gmra.mrb[0].mxu0 %v4957
    %v5004 = vpop.f32.mrb[0].mxu0
    %v5005 = vadd.f32 0.0, %v5004
    %v5006 = vpop.f32.mrb[0].mxu0
    %v5007 = vpop.f32.mrb[0].mxu0
    %v5008 = vpop.f32.mrb[0].mxu0
    %5009 = vdwg.mxu0
    %v5010 = vpack.c.bf16 %v5000, %v4997
    %v5011 = vpack.c.bf16 %v5005, %v5005
    %v5013 = vsel %vm628, %v5010, 0
    %v5016 = vsel %vm628, %v5011, 0
    %5018 = vmatprep.subr.bf16.mxu0 0
    %5019 = vmatpush1.bf16.msra.mxu0 %v4107
    %5020 = vmatprep.subr.bf16.mxu0 0
    %5021 = vmatpush1.bf16.msra.mxu0 %v4108
    %5022 = vmatprep.subr.bf16.mxu0 0
    %5023 = vmatpush1.bf16.msra.mxu0 0
    %5024 = vmatprep.subr.bf16.mxu0 0
    %5025 = vmatpush1.bf16.msra.mxu0 0
    %5026 = vmatprep.subr.bf16.mxu0 0
    %5027 = vmatpush1.bf16.msra.mxu0 0
    %5028 = vmatprep.subr.bf16.mxu0 0
    %5029 = vmatpush1.bf16.msra.mxu0 0
    %5030 = vmatprep.subr.bf16.mxu0 0
    %5031 = vmatpush1.bf16.msra.mxu0 0
    %5032 = vmatprep.subr.bf16.mxu0 0
    %5033 = vmatpush1.bf16.msra.mxu0 0
    %5034 = vmatprep.subr.bf16.mxu0 0
    %5035 = vmatpush1.bf16.msra.mxu0 0
    %5036 = vmatprep.subr.bf16.mxu0 0
    %5037 = vmatpush1.bf16.msra.mxu0 0
    %5038 = vmatprep.subr.bf16.mxu0 0
    %5039 = vmatpush1.bf16.msra.mxu0 0
    %5040 = vmatprep.subr.bf16.mxu0 0
    %5041 = vmatpush1.bf16.msra.mxu0 0
    %5042 = vmatprep.subr.bf16.mxu0 0
    %5043 = vmatpush1.bf16.msra.mxu0 0
    %5044 = vmatprep.subr.bf16.mxu0 0
    %5045 = vmatpush1.bf16.msra.mxu0 0
    %5046 = vmatprep.subr.bf16.mxu0 0
    %5047 = vmatpush1.bf16.msra.mxu0 0
    %5048 = vmatprep.subr.bf16.mxu0 0
    %5049 = vmatpush1.bf16.msra.mxu0 0
    %5050 = vmatprep.mubr.bf16.mxu0 0
    %5051 = vmatmul.mubr.bf16.gmra.mrb[0].mxu0 %v5013
    %v5052 = vpop.f32.mrb[0].mxu0
    %v5053 = vadd.f32 0.0, %v5052
    %v5054 = vpop.f32.mrb[0].mxu0
    %v5055 = vpop.f32.mrb[0].mxu0
    %v5056 = vadd.f32 0.0, %v5055
    %v5057 = vpop.f32.mrb[0].mxu0
    %5058 = vmatprep.mubr.bf16.mxu0 0
    %5059 = vmatmul.mubr.bf16.gmra.mrb[0].mxu0 %v5016
    %v5060 = vpop.f32.mrb[0].mxu0
    %v5061 = vadd.f32 0.0, %v5060
    %v5062 = vpop.f32.mrb[0].mxu0
    %v5063 = vpop.f32.mrb[0].mxu0
    %v5064 = vpop.f32.mrb[0].mxu0
    %5065 = vdwg.mxu0
    %v5066 = vadd.f32 %v4832, %v5053
    %v5067 = vadd.f32 %v4835, %v5056
    %v5068 = vadd.f32 %v4840, %v5061
    %5069 = vrot.lane.b32.xlu0 %v4404, 32
    %v5070 = vpop.permute.xlu0 %5069
    %5071 = vrot.lane.b32.xlu0 %v4405, 32
    %v5072 = vpop.permute.xlu0 %5071
    %5073 = vrot.lane.b32.xlu0 %v4406, 32
    %v5074 = vpop.permute.xlu0 %5073
    %5075 = vrot.lane.b32.xlu0 %v4407, 32
    %v5076 = vpop.permute.xlu0 %5075
    %v5078 = vsel %vm628, %v5070, 0
    %v5081 = vsel %vm628, %v5072, 0
    %v5084 = vsel %vm628, %v5074, 0
    %v5087 = vsel %vm628, %v5076, 0
    %5089 = vmatprep.subr.bf16.mxu0 0
    %5090 = vmatpush1.bf16.xpose.msra.mxu0 %v5084
    %5091 = vmatprep.subr.bf16.mxu0 0
    %5092 = vmatpush1.bf16.xpose.msra.mxu0 %v5087
    %5093 = vmatprep.subr.bf16.mxu0 0
    %5094 = vmatpush1.bf16.xpose.msra.mxu0 0
    %5095 = vmatprep.subr.bf16.mxu0 0
    %5096 = vmatpush1.bf16.xpose.msra.mxu0 0
    %5097 = vmatprep.subr.bf16.mxu0 0
    %5098 = vmatpush1.bf16.xpose.msra.mxu0 0
    %5099 = vmatprep.subr.bf16.mxu0 0
    %5100 = vmatpush1.bf16.xpose.msra.mxu0 0
    %5101 = vmatprep.subr.bf16.mxu0 0
    %5102 = vmatpush1.bf16.xpose.msra.mxu0 0
    %5103 = vmatprep.subr.bf16.mxu0 0
    %5104 = vmatpush1.bf16.xpose.msra.mxu0 0
    %5105 = vmatprep.subr.bf16.mxu0 0
    %5106 = vmatpush1.bf16.xpose.msra.mxu0 0
    %5107 = vmatprep.subr.bf16.mxu0 0
    %5108 = vmatpush1.bf16.xpose.msra.mxu0 0
    %5109 = vmatprep.subr.bf16.mxu0 0
    %5110 = vmatpush1.bf16.xpose.msra.mxu0 0
    %5111 = vmatprep.subr.bf16.mxu0 0
    %5112 = vmatpush1.bf16.xpose.msra.mxu0 0
    %5113 = vmatprep.subr.bf16.mxu0 0
    %5114 = vmatpush1.bf16.xpose.msra.mxu0 0
    %5115 = vmatprep.subr.bf16.mxu0 0
    %5116 = vmatpush1.bf16.xpose.msra.mxu0 0
    %5117 = vmatprep.subr.bf16.mxu0 0
    %5118 = vmatpush1.bf16.xpose.msra.mxu0 0
    %5119 = vmatprep.subr.bf16.mxu0 0
    %5120 = vmatpush1.bf16.xpose.msra.mxu0 0
    %5121 = vmatprep.mubr.bf16.mxu0 0
    %5122 = vmatmul.mubr.bf16.gmra.mrb[0].mxu0 %v5078
    %v5123 = vpop.f32.mrb[0].mxu0
    %v5124 = vadd.f32 %v626, %v5123
    %v5125 = vpop.f32.mrb[0].mxu0
    %v5126 = vpop.f32.mrb[0].mxu0
    %v5127 = vadd.f32 %v626, %v5126
    %v5128 = vpop.f32.mrb[0].mxu0
    %5129 = vmatprep.mubr.bf16.mxu0 0
    %5130 = vmatmul.mubr.bf16.gmra.mrb[0].mxu0 %v5081
    %v5131 = vpop.f32.mrb[0].mxu0
    %v5132 = vadd.f32 %v626, %v5131
    %v5133 = vpop.f32.mrb[0].mxu0
    %v5134 = vpop.f32.mrb[0].mxu0
    %v5135 = vpop.f32.mrb[0].mxu0
    %5136 = vdwg.mxu0
    %v5137 = vsel %vm689, %v5124, -inf
    %5138 = vmax.xlane.f32.xlu0 %v5137
    %v5139 = vpop.xlane.xlu0 %5138
    %v5140 = vsel %vm689, %v5127, -inf
    %5141 = vmax.xlane.f32.xlu0 %v5140
    %v5142 = vpop.xlane.xlu0 %5141
    %v5143 = vsel %vm689, %v5132, -inf
    %5144 = vmax.xlane.f32.xlu0 %v5143
    %v5145 = vpop.xlane.xlu0 %5144
    %v5146 = vsub.f32 %v5124, %v5139
    %v5147 = vsub.f32 %v5127, %v5142
    %v5148 = vsub.f32 %v5132, %v5145
    %v5149 = vmul.f32 %v5146, 1.442695
    %v5150 = vpow.pop %v5149
    %v5151 = vmul.f32 %v5147, 1.442695
    %v5152 = vpow.pop %v5151
    %v5153 = vmul.f32 %v5148, 1.442695
    %v5154 = vpow.pop %v5153
    %v5155 = vsel %vm689, %v5150, 0.0
    %5156 = vadd.xlane.f32.xlu0 %v5155
    %v5157 = vpop.xlane.xlu0 %5156
    %v5158 = vsel %vm689, %v5152, 0.0
    %5159 = vadd.xlane.f32.xlu0 %v5158
    %v5160 = vpop.xlane.xlu0 %5159
    %v5161 = vsel %vm689, %v5154, 0.0
    %5162 = vadd.xlane.f32.xlu0 %v5161
    %v5163 = vpop.xlane.xlu0 %5162
    %v5164 = vrcp.pop %v5157
    %v5165 = vrcp.pop %v5160
    %v5166 = vrcp.pop %v5163
    %v5167 = vmul.f32 %v5150, %v5164
    %v5168 = vmul.f32 %v5152, %v5165
    %v5169 = vmul.f32 %v5154, %v5166
    %v5170 = vpack.c.bf16 %v5168, %v5167
    %v5171 = vpack.c.bf16 %v5169, %v5169
    %5172 = vrot.lane.b32.xlu0 %v4408, 32
    %v5173 = vpop.permute.xlu0 %5172
    %5174 = vrot.lane.b32.xlu0 %v4409, 32
    %v5175 = vpop.permute.xlu0 %5174
    %v5178 = vsel %vm689, %v5170, 0
    %v5181 = vsel %vm689, %v5171, 0
    %v5184 = vsel %vm731, %v5175, 0
    %5186 = vmatprep.subr.bf16.mxu0 0
    %5187 = vmatpush1.bf16.msra.mxu0 %v5173
    %5188 = vmatprep.subr.bf16.mxu0 0
    %5189 = vmatpush1.bf16.msra.mxu0 %v5184
    %5190 = vmatprep.subr.bf16.mxu0 0
    %5191 = vmatpush1.bf16.msra.mxu0 0
    %5192 = vmatprep.subr.bf16.mxu0 0
    %5193 = vmatpush1.bf16.msra.mxu0 0
    %5194 = vmatprep.subr.bf16.mxu0 0
    %5195 = vmatpush1.bf16.msra.mxu0 0
    %5196 = vmatprep.subr.bf16.mxu0 0
    %5197 = vmatpush1.bf16.msra.mxu0 0
    %5198 = vmatprep.subr.bf16.mxu0 0
    %5199 = vmatpush1.bf16.msra.mxu0 0
    %5200 = vmatprep.subr.bf16.mxu0 0
    %5201 = vmatpush1.bf16.msra.mxu0 0
    %5202 = vmatprep.subr.bf16.mxu0 0
    %5203 = vmatpush1.bf16.msra.mxu0 0
    %5204 = vmatprep.subr.bf16.mxu0 0
    %5205 = vmatpush1.bf16.msra.mxu0 0
    %5206 = vmatprep.subr.bf16.mxu0 0
    %5207 = vmatpush1.bf16.msra.mxu0 0
    %5208 = vmatprep.subr.bf16.mxu0 0
    %5209 = vmatpush1.bf16.msra.mxu0 0
    %5210 = vmatprep.subr.bf16.mxu0 0
    %5211 = vmatpush1.bf16.msra.mxu0 0
    %5212 = vmatprep.subr.bf16.mxu0 0
    %5213 = vmatpush1.bf16.msra.mxu0 0
    %5214 = vmatprep.subr.bf16.mxu0 0
    %5215 = vmatpush1.bf16.msra.mxu0 0
    %5216 = vmatprep.subr.bf16.mxu0 0
    %5217 = vmatpush1.bf16.msra.mxu0 0
    %5218 = vmatprep.mubr.bf16.mxu0 0
    %5219 = vmatmul.mubr.bf16.gmra.mrb[0].mxu0 %v5178
    %v5220 = vpop.f32.mrb[0].mxu0
    %v5221 = vadd.f32 0.0, %v5220
    %v5222 = vpop.f32.mrb[0].mxu0
    %v5223 = vpop.f32.mrb[0].mxu0
    %v5224 = vadd.f32 0.0, %v5223
    %v5225 = vpop.f32.mrb[0].mxu0
    %5226 = vmatprep.mubr.bf16.mxu0 0
    %5227 = vmatmul.mubr.bf16.gmra.mrb[0].mxu0 %v5181
    %v5228 = vpop.f32.mrb[0].mxu0
    %v5229 = vadd.f32 0.0, %v5228
    %v5230 = vpop.f32.mrb[0].mxu0
    %v5231 = vpop.f32.mrb[0].mxu0
    %v5232 = vpop.f32.mrb[0].mxu0
    %5233 = vdwg.mxu0
    %v5234 = vpack.c.bf16 %v5224, %v5221
    %v5235 = vpack.c.bf16 %v5229, %v5229
    %v5237 = vsel %vm628, %v5234, 0
    %v5240 = vsel %vm628, %v5235, 0
    %5242 = vmatprep.subr.bf16.mxu0 0
    %5243 = vmatpush1.bf16.msra.mxu0 %v4343
    %5244 = vmatprep.subr.bf16.mxu0 0
    %5245 = vmatpush1.bf16.msra.mxu0 %v4344
    %5246 = vmatprep.subr.bf16.mxu0 0
    %5247 = vmatpush1.bf16.msra.mxu0 0
    %5248 = vmatprep.subr.bf16.mxu0 0
    %5249 = vmatpush1.bf16.msra.mxu0 0
    %5250 = vmatprep.subr.bf16.mxu0 0
    %5251 = vmatpush1.bf16.msra.mxu0 0
    %5252 = vmatprep.subr.bf16.mxu0 0
    %5253 = vmatpush1.bf16.msra.mxu0 0
    %5254 = vmatprep.subr.bf16.mxu0 0
    %5255 = vmatpush1.bf16.msra.mxu0 0
    %5256 = vmatprep.subr.bf16.mxu0 0
    %5257 = vmatpush1.bf16.msra.mxu0 0
    %5258 = vmatprep.subr.bf16.mxu0 0
    %5259 = vmatpush1.bf16.msra.mxu0 0
    %5260 = vmatprep.subr.bf16.mxu0 0
    %5261 = vmatpush1.bf16.msra.mxu0 0
    %5262 = vmatprep.subr.bf16.mxu0 0
    %5263 = vmatpush1.bf16.msra.mxu0 0
    %5264 = vmatprep.subr.bf16.mxu0 0
    %5265 = vmatpush1.bf16.msra.mxu0 0
    %5266 = vmatprep.subr.bf16.mxu0 0
    %5267 = vmatpush1.bf16.msra.mxu0 0
    %5268 = vmatprep.subr.bf16.mxu0 0
    %5269 = vmatpush1.bf16.msra.mxu0 0
    %5270 = vmatprep.subr.bf16.mxu0 0
    %5271 = vmatpush1.bf16.msra.mxu0 0
    %5272 = vmatprep.subr.bf16.mxu0 0
    %5273 = vmatpush1.bf16.msra.mxu0 0
    %5274 = vmatprep.mubr.bf16.mxu0 0
    %5275 = vmatmul.mubr.bf16.gmra.mrb[0].mxu0 %v5237
    %v5276 = vpop.f32.mrb[0].mxu0
    %v5277 = vadd.f32 0.0, %v5276
    %v5278 = vpop.f32.mrb[0].mxu0
    %v5279 = vpop.f32.mrb[0].mxu0
    %v5280 = vadd.f32 0.0, %v5279
    %v5281 = vpop.f32.mrb[0].mxu0
    %5282 = vmatprep.mubr.bf16.mxu0 0
    %5283 = vmatmul.mubr.bf16.gmra.mrb[0].mxu0 %v5240
    %v5284 = vpop.f32.mrb[0].mxu0
    %v5285 = vadd.f32 0.0, %v5284
    %v5286 = vpop.f32.mrb[0].mxu0
    %v5287 = vpop.f32.mrb[0].mxu0
    %v5288 = vpop.f32.mrb[0].mxu0
    %5289 = vdwg.mxu0
    %v5290 = vadd.f32 %v5066, %v5277
    %v5291 = vadd.f32 %v5067, %v5280
    %v5292 = vadd.f32 %v5068, %v5285
    %v5293 = vadd.f32 %v3048, %v4401
    %v5294 = vadd.f32 %v3049, %v4402
    %v5295 = vadd.f32 %v3050, %v4403
    %v5296 = vadd.f32 %v3051, %v5290
    %v5297 = vadd.f32 %v3052, %v5291
    %v5298 = vadd.f32 %v3053, %v5292
    %s5299 = scalar_lea.vmem %s14, 1
    %v5300 = vld [vmem:[%s5299] sm:$0x1]
    %v5302 = vlaneseq
    %v5303 = vshrl.u32 %v5302, 7
    %v5304 = vsub.s32 0, %v5303
    %v5305 = vrot.slane %v5300, %v5304
    %v5307 = vadd.f32 %v5293, %v5305
    %v5308 = vadd.f32 %v5294, %v5305
    %v5309 = vadd.f32 %v5295, %v5305
    %v5310 = vadd.f32 %v5296, %v5305
    %v5311 = vadd.f32 %v5297, %v5305
    %v5312 = vadd.f32 %v5298, %v5305
    %s5313 = scalar_lea.vmem %s15, 1
    %v5314 = vld [vmem:[%s5313] sm:$0x1]
    %s5315 = scalar_lea.vmem %s16, 1
    %v5316 = vld [vmem:[%s5315] sm:$0x1]
    %5317 = vadd.xlane.f32.xlu0 %v5307
    %v5318 = vpop.xlane.xlu0 %5317
    %5319 = vadd.xlane.f32.xlu0 %v5308
    %v5320 = vpop.xlane.xlu0 %5319
    %5321 = vadd.xlane.f32.xlu0 %v5309
    %v5322 = vpop.xlane.xlu0 %5321
    %5323 = vadd.xlane.f32.xlu0 %v5310
    %v5324 = vpop.xlane.xlu0 %5323
    %5325 = vadd.xlane.f32.xlu0 %v5311
    %v5326 = vpop.xlane.xlu0 %5325
    %5327 = vadd.xlane.f32.xlu0 %v5312
    %v5328 = vpop.xlane.xlu0 %5327
    %v5329 = vmul.f32 %v5318, %v221
    %v5330 = vmul.f32 %v5320, %v221
    %v5331 = vmul.f32 %v5322, %v221
    %v5332 = vmul.f32 %v5324, %v221
    %v5333 = vmul.f32 %v5326, %v221
    %v5334 = vmul.f32 %v5328, %v221
    %v5335 = vsub.f32 %v5307, %v5329
    %v5336 = vsub.f32 %v5308, %v5330
    %v5337 = vsub.f32 %v5309, %v5331
    %v5338 = vsub.f32 %v5310, %v5332
    %v5339 = vsub.f32 %v5311, %v5333
    %v5340 = vsub.f32 %v5312, %v5334
    %v5341 = vmul.f32 %v5335, %v5335
    %v5342 = vmul.f32 %v5336, %v5336
    %v5343 = vmul.f32 %v5337, %v5337
    %v5344 = vmul.f32 %v5338, %v5338
    %v5345 = vmul.f32 %v5339, %v5339
    %v5346 = vmul.f32 %v5340, %v5340
    %5347 = vadd.xlane.f32.xlu0 %v5341
    %v5348 = vpop.xlane.xlu0 %5347
    %5349 = vadd.xlane.f32.xlu0 %v5342
    %v5350 = vpop.xlane.xlu0 %5349
    %5351 = vadd.xlane.f32.xlu0 %v5343
    %v5352 = vpop.xlane.xlu0 %5351
    %5353 = vadd.xlane.f32.xlu0 %v5344
    %v5354 = vpop.xlane.xlu0 %5353
    %5355 = vadd.xlane.f32.xlu0 %v5345
    %v5356 = vpop.xlane.xlu0 %5355
    %5357 = vadd.xlane.f32.xlu0 %v5346
    %v5358 = vpop.xlane.xlu0 %5357
    %v5359 = vmul.f32 %v5348, %v221
    %v5360 = vmul.f32 %v5350, %v221
    %v5361 = vmul.f32 %v5352, %v221
    %v5362 = vmul.f32 %v5354, %v221
    %v5363 = vmul.f32 %v5356, %v221
    %v5364 = vmul.f32 %v5358, %v221
    %v5365 = vadd.f32 %v5359, 1e-12
    %v5366 = vadd.f32 %v5360, 1e-12
    %v5367 = vadd.f32 %v5361, 1e-12
    %v5368 = vadd.f32 %v5362, 1e-12
    %v5369 = vadd.f32 %v5363, 1e-12
    %v5370 = vadd.f32 %v5364, 1e-12
    %v5371 = vrsqrt.pop %v5365
    %v5372 = vrsqrt.pop %v5366
    %v5373 = vrsqrt.pop %v5367
    %v5374 = vrsqrt.pop %v5368
    %v5375 = vrsqrt.pop %v5369
    %v5376 = vrsqrt.pop %v5370
    %v5377 = vmul.f32 %v5335, %v5371
    %v5378 = vmul.f32 %v5336, %v5372
    %v5379 = vmul.f32 %v5337, %v5373
    %v5380 = vmul.f32 %v5338, %v5374
    %v5381 = vmul.f32 %v5339, %v5375
    %v5382 = vmul.f32 %v5340, %v5376
    %v5384 = vlaneseq
    %v5385 = vshrl.u32 %v5384, 7
    %v5386 = vsub.s32 0, %v5385
    %v5387 = vrot.slane %v5314, %v5386
    %v5389 = vmul.f32 %v5377, %v5387
    %v5390 = vmul.f32 %v5378, %v5387
    %v5391 = vmul.f32 %v5379, %v5387
    %v5392 = vmul.f32 %v5380, %v5387
    %v5393 = vmul.f32 %v5381, %v5387
    %v5394 = vmul.f32 %v5382, %v5387
    %v5396 = vlaneseq
    %v5397 = vshrl.u32 %v5396, 7
    %v5398 = vsub.s32 0, %v5397
    %v5399 = vrot.slane %v5316, %v5398
    %v5401 = vadd.f32 %v5389, %v5399
    %v5402 = vadd.f32 %v5390, %v5399
    %v5403 = vadd.f32 %v5391, %v5399
    %v5404 = vadd.f32 %v5392, %v5399
    %v5405 = vadd.f32 %v5393, %v5399
    %v5406 = vadd.f32 %v5394, %v5399
    %v5407 = vpack.c.bf16 %v5402, %v5401
    %v5408 = vpack.c.bf16 %v5404, %v5403
    %v5409 = vpack.c.bf16 %v5406, %v5405
    %s5410 = scalar_lea.vmem %s17, 128
    %v5411 = vld [vmem:[%s5410] sm:$0xff]
    %v5412 = vld [vmem:[%s5410 + $0x8] sm:$0xff]
    %v5413 = vld [vmem:[%s5410 + $0x10] sm:$0xff]
    %v5414 = vld [vmem:[%s5410 + $0x18] sm:$0xff]
    %v5415 = vld [vmem:[%s5410 + $0x20] sm:$0xff]
    %v5416 = vld [vmem:[%s5410 + $0x28] sm:$0xff]
    %v5417 = vld [vmem:[%s5410 + $0x30] sm:$0xff]
    %v5418 = vld [vmem:[%s5410 + $0x38] sm:$0xff]
    %v5419 = vld [vmem:[%s5410 + $0x40] sm:$0xff]
    %v5420 = vld [vmem:[%s5410 + $0x48] sm:$0xff]
    %v5421 = vld [vmem:[%s5410 + $0x50] sm:$0xff]
    %v5422 = vld [vmem:[%s5410 + $0x58] sm:$0xff]
    %v5423 = vld [vmem:[%s5410 + $0x60] sm:$0xff]
    %v5424 = vld [vmem:[%s5410 + $0x68] sm:$0xff]
    %v5425 = vld [vmem:[%s5410 + $0x70] sm:$0xff]
    %v5426 = vld [vmem:[%s5410 + $0x78] sm:$0xff]
    %s5427 = scalar_lea.vmem %s18, 2
    %v5428 = vld [vmem:[%s5427] sm:$0x3]
    %v5430 = vlaneseq
    %v5431 = vshrl.u32 %v5430, 7
    %v5432 = vsub.s32 0, %v5431
    %v5433 = vrot.slane %v5428, %v5432
    %v5434 = vlaneseq
    %v5435 = vshrl.u32 %v5434, 7
    %v5436 = vsub.s32 1, %v5435
    %v5437 = vrot.slane %v5428, %v5436
    %v5456 = vunpack.c.l.b16 %v5411
    %v5457 = vunpack.c.h.b16 %v5411
    %v5458 = vunpack.c.l.b16 %v5412
    %v5459 = vunpack.c.h.b16 %v5412
    %v5460 = vunpack.c.l.b16 %v5413
    %v5461 = vunpack.c.h.b16 %v5413
    %v5462 = vunpack.c.l.b16 %v5414
    %v5463 = vunpack.c.h.b16 %v5414
    %v5464 = vunpack.c.l.b16 %v5415
    %v5465 = vunpack.c.h.b16 %v5415
    %v5466 = vunpack.c.l.b16 %v5416
    %v5467 = vunpack.c.h.b16 %v5416
    %v5468 = vunpack.c.l.b16 %v5417
    %v5469 = vunpack.c.h.b16 %v5417
    %v5470 = vunpack.c.l.b16 %v5418
    %v5471 = vunpack.c.h.b16 %v5418
    %v5472 = vunpack.c.l.b16 %v5419
    %v5473 = vunpack.c.h.b16 %v5419
    %v5474 = vunpack.c.l.b16 %v5420
    %v5475 = vunpack.c.h.b16 %v5420
    %v5476 = vunpack.c.l.b16 %v5421
    %v5477 = vunpack.c.h.b16 %v5421
    %v5478 = vunpack.c.l.b16 %v5422
    %v5479 = vunpack.c.h.b16 %v5422
    %v5480 = vunpack.c.l.b16 %v5423
    %v5481 = vunpack.c.h.b16 %v5423
    %v5482 = vunpack.c.l.b16 %v5424
    %v5483 = vunpack.c.h.b16 %v5424
    %v5484 = vunpack.c.l.b16 %v5425
    %v5485 = vunpack.c.h.b16 %v5425
    %v5486 = vunpack.c.l.b16 %v5426
    %v5487 = vunpack.c.h.b16 %v5426
    %v5488 = vpack.c.b16 %v5458, %v5456
    %v5489 = vpack.c.b16 %v5459, %v5457
    %v5490 = vpack.c.b16 %v5462, %v5460
    %v5491 = vpack.c.b16 %v5463, %v5461
    %v5492 = vpack.c.b16 %v5466, %v5464
    %v5493 = vpack.c.b16 %v5467, %v5465
    %v5494 = vpack.c.b16 %v5470, %v5468
    %v5495 = vpack.c.b16 %v5471, %v5469
    %v5496 = vpack.c.b16 %v5474, %v5472
    %v5497 = vpack.c.b16 %v5475, %v5473
    %v5498 = vpack.c.b16 %v5478, %v5476
    %v5499 = vpack.c.b16 %v5479, %v5477
    %v5500 = vpack.c.b16 %v5482, %v5480
    %v5501 = vpack.c.b16 %v5483, %v5481
    %v5502 = vpack.c.b16 %v5486, %v5484
    %v5503 = vpack.c.b16 %v5487, %v5485
    %5520 = vmatprep.subr.bf16.mxu0 %v5489
    %5521 = vmatpush1.bf16.msra.mxu0 %v5488
    %5522 = vmatprep.subr.bf16.mxu0 %v5491
    %5523 = vmatpush1.bf16.msra.mxu0 %v5490
    %5524 = vmatprep.subr.bf16.mxu0 %v5493
    %5525 = vmatpush1.bf16.msra.mxu0 %v5492
    %5526 = vmatprep.subr.bf16.mxu0 %v5495
    %5527 = vmatpush1.bf16.msra.mxu0 %v5494
    %5528 = vmatprep.subr.bf16.mxu0 %v5497
    %5529 = vmatpush1.bf16.msra.mxu0 %v5496
    %5530 = vmatprep.subr.bf16.mxu0 %v5499
    %5531 = vmatpush1.bf16.msra.mxu0 %v5498
    %5532 = vmatprep.subr.bf16.mxu0 %v5501
    %5533 = vmatpush1.bf16.msra.mxu0 %v5500
    %5534 = vmatprep.subr.bf16.mxu0 %v5503
    %5535 = vmatpush1.bf16.msra.mxu0 %v5502
    %5536 = vmatprep.subr.bf16.mxu0 0
    %5537 = vmatpush1.bf16.msra.mxu0 0
    %5538 = vmatprep.subr.bf16.mxu0 0
    %5539 = vmatpush1.bf16.msra.mxu0 0
    %5540 = vmatprep.subr.bf16.mxu0 0
    %5541 = vmatpush1.bf16.msra.mxu0 0
    %5542 = vmatprep.subr.bf16.mxu0 0
    %5543 = vmatpush1.bf16.msra.mxu0 0
    %5544 = vmatprep.subr.bf16.mxu0 0
    %5545 = vmatpush1.bf16.msra.mxu0 0
    %5546 = vmatprep.subr.bf16.mxu0 0
    %5547 = vmatpush1.bf16.msra.mxu0 0
    %5548 = vmatprep.subr.bf16.mxu0 0
    %5549 = vmatpush1.bf16.msra.mxu0 0
    %5550 = vmatprep.subr.bf16.mxu0 0
    %5551 = vmatpush1.bf16.msra.mxu0 0
    %5552 = vmatprep.mubr.bf16.mxu0 0
    %5553 = vmatmul.mubr.bf16.gmra.mrb[0].mxu0 %v5407
    %v5554 = vpop.f32.mrb[0].mxu0
    %v5555 = vadd.f32 %v5433, %v5554
    %v5556 = vpop.f32.mrb[0].mxu0
    %v5557 = vadd.f32 %v5437, %v5556
    %v5558 = vpop.f32.mrb[0].mxu0
    %v5559 = vadd.f32 %v5433, %v5558
    %v5560 = vpop.f32.mrb[0].mxu0
    %v5561 = vadd.f32 %v5437, %v5560
    %5562 = vmatprep.mubr.bf16.mxu0 0
    %5563 = vmatmul.mubr.bf16.gmra.mrb[0].mxu0 %v5408
    %v5564 = vpop.f32.mrb[0].mxu0
    %v5565 = vadd.f32 %v5433, %v5564
    %v5566 = vpop.f32.mrb[0].mxu0
    %v5567 = vadd.f32 %v5437, %v5566
    %v5568 = vpop.f32.mrb[0].mxu0
    %v5569 = vadd.f32 %v5433, %v5568
    %v5570 = vpop.f32.mrb[0].mxu0
    %v5571 = vadd.f32 %v5437, %v5570
    %5572 = vmatprep.mubr.bf16.mxu0 0
    %5573 = vmatmul.mubr.bf16.gmra.mrb[0].mxu0 %v5409
    %v5574 = vpop.f32.mrb[0].mxu0
    %v5575 = vadd.f32 %v5433, %v5574
    %v5576 = vpop.f32.mrb[0].mxu0
    %v5577 = vadd.f32 %v5437, %v5576
    %v5578 = vpop.f32.mrb[0].mxu0
    %v5579 = vadd.f32 %v5433, %v5578
    %v5580 = vpop.f32.mrb[0].mxu0
    %v5581 = vadd.f32 %v5437, %v5580
    %5582 = vdwg.mxu0
    %v5583 = vmul.f32 %v5555, %v5555
    %v5584 = vmul.f32 %v5557, %v5557
    %v5585 = vmul.f32 %v5559, %v5559
    %v5586 = vmul.f32 %v5561, %v5561
    %v5587 = vmul.f32 %v5565, %v5565
    %v5588 = vmul.f32 %v5567, %v5567
    %v5589 = vmul.f32 %v5569, %v5569
    %v5590 = vmul.f32 %v5571, %v5571
    %v5591 = vmul.f32 %v5575, %v5575
    %v5592 = vmul.f32 %v5577, %v5577
    %v5593 = vmul.f32 %v5579, %v5579
    %v5594 = vmul.f32 %v5581, %v5581
    %v5595 = vmul.f32 %v5555, %v5583
    %v5596 = vmul.f32 %v5557, %v5584
    %v5597 = vmul.f32 %v5559, %v5585
    %v5598 = vmul.f32 %v5561, %v5586
    %v5599 = vmul.f32 %v5565, %v5587
    %v5600 = vmul.f32 %v5567, %v5588
    %v5601 = vmul.f32 %v5569, %v5589
    %v5602 = vmul.f32 %v5571, %v5590
    %v5603 = vmul.f32 %v5575, %v5591
    %v5604 = vmul.f32 %v5577, %v5592
    %v5605 = vmul.f32 %v5579, %v5593
    %v5606 = vmul.f32 %v5581, %v5594
    %v5607 = vmul.f32 %v5595, 0.044715
    %v5608 = vmul.f32 %v5596, 0.044715
    %v5609 = vmul.f32 %v5597, 0.044715
    %v5610 = vmul.f32 %v5598, 0.044715
    %v5611 = vmul.f32 %v5599, 0.044715
    %v5612 = vmul.f32 %v5600, 0.044715
    %v5613 = vmul.f32 %v5601, 0.044715
    %v5614 = vmul.f32 %v5602, 0.044715
    %v5615 = vmul.f32 %v5603, 0.044715
    %v5616 = vmul.f32 %v5604, 0.044715
    %v5617 = vmul.f32 %v5605, 0.044715
    %v5618 = vmul.f32 %v5606, 0.044715
    %v5619 = vadd.f32 %v5555, %v5607
    %v5620 = vadd.f32 %v5557, %v5608
    %v5621 = vadd.f32 %v5559, %v5609
    %v5622 = vadd.f32 %v5561, %v5610
    %v5623 = vadd.f32 %v5565, %v5611
    %v5624 = vadd.f32 %v5567, %v5612
    %v5625 = vadd.f32 %v5569, %v5613
    %v5626 = vadd.f32 %v5571, %v5614
    %v5627 = vadd.f32 %v5575, %v5615
    %v5628 = vadd.f32 %v5577, %v5616
    %v5629 = vadd.f32 %v5579, %v5617
    %v5630 = vadd.f32 %v5581, %v5618
    %v5631 = vmul.f32 %v5619, 0.7978846
    %v5632 = vmul.f32 %v5620, 0.7978846
    %v5633 = vmul.f32 %v5621, 0.7978846
    %v5634 = vmul.f32 %v5622, 0.7978846
    %v5635 = vmul.f32 %v5623, 0.7978846
    %v5636 = vmul.f32 %v5624, 0.7978846
    %v5637 = vmul.f32 %v5625, 0.7978846
    %v5638 = vmul.f32 %v5626, 0.7978846
    %v5639 = vmul.f32 %v5627, 0.7978846
    %v5640 = vmul.f32 %v5628, 0.7978846
    %v5641 = vmul.f32 %v5629, 0.7978846
    %v5642 = vmul.f32 %v5630, 0.7978846
    %v5643 = vtanh.pop %v5631
    %v5644 = vtanh.pop %v5632
    %v5645 = vtanh.pop %v5633
    %v5646 = vtanh.pop %v5634
    %v5647 = vtanh.pop %v5635
    %v5648 = vtanh.pop %v5636
    %v5649 = vtanh.pop %v5637
    %v5650 = vtanh.pop %v5638
    %v5651 = vtanh.pop %v5639
    %v5652 = vtanh.pop %v5640
    %v5653 = vtanh.pop %v5641
    %v5654 = vtanh.pop %v5642
    %v5655 = vadd.f32 %v5643, 1.0
    %v5656 = vadd.f32 %v5644, 1.0
    %v5657 = vadd.f32 %v5645, 1.0
    %v5658 = vadd.f32 %v5646, 1.0
    %v5659 = vadd.f32 %v5647, 1.0
    %v5660 = vadd.f32 %v5648, 1.0
    %v5661 = vadd.f32 %v5649, 1.0
    %v5662 = vadd.f32 %v5650, 1.0
    %v5663 = vadd.f32 %v5651, 1.0
    %v5664 = vadd.f32 %v5652, 1.0
    %v5665 = vadd.f32 %v5653, 1.0
    %v5666 = vadd.f32 %v5654, 1.0
    %v5667 = vmul.f32 %v5655, 0.5
    %v5668 = vmul.f32 %v5656, 0.5
    %v5669 = vmul.f32 %v5657, 0.5
    %v5670 = vmul.f32 %v5658, 0.5
    %v5671 = vmul.f32 %v5659, 0.5
    %v5672 = vmul.f32 %v5660, 0.5
    %v5673 = vmul.f32 %v5661, 0.5
    %v5674 = vmul.f32 %v5662, 0.5
    %v5675 = vmul.f32 %v5663, 0.5
    %v5676 = vmul.f32 %v5664, 0.5
    %v5677 = vmul.f32 %v5665, 0.5
    %v5678 = vmul.f32 %v5666, 0.5
    %v5679 = vmul.f32 %v5555, %v5667
    %v5680 = vmul.f32 %v5557, %v5668
    %v5681 = vmul.f32 %v5559, %v5669
    %v5682 = vmul.f32 %v5561, %v5670
    %v5683 = vmul.f32 %v5565, %v5671
    %v5684 = vmul.f32 %v5567, %v5672
    %v5685 = vmul.f32 %v5569, %v5673
    %v5686 = vmul.f32 %v5571, %v5674
    %v5687 = vmul.f32 %v5575, %v5675
    %v5688 = vmul.f32 %v5577, %v5676
    %v5689 = vmul.f32 %v5579, %v5677
    %v5690 = vmul.f32 %v5581, %v5678
    %v5691 = vpack.c.bf16 %v5681, %v5679
    %v5692 = vpack.c.bf16 %v5682, %v5680
    %v5693 = vpack.c.bf16 %v5685, %v5683
    %v5694 = vpack.c.bf16 %v5686, %v5684
    %v5695 = vpack.c.bf16 %v5689, %v5687
    %v5696 = vpack.c.bf16 %v5690, %v5688
    %s5697 = scalar_lea.vmem %s19, 128
    %v5698 = vld [vmem:[%s5697] sm:$0xf]
    %v5699 = vld [vmem:[%s5697 + $0x4] sm:$0xf]
    %v5700 = vld [vmem:[%s5697 + $0x8] sm:$0xf]
    %v5701 = vld [vmem:[%s5697 + $0xc] sm:$0xf]
    %v5702 = vld [vmem:[%s5697 + $0x10] sm:$0xf]
    %v5703 = vld [vmem:[%s5697 + $0x14] sm:$0xf]
    %v5704 = vld [vmem:[%s5697 + $0x18] sm:$0xf]
    %v5705 = vld [vmem:[%s5697 + $0x1c] sm:$0xf]
    %v5706 = vld [vmem:[%s5697 + $0x20] sm:$0xf]
    %v5707 = vld [vmem:[%s5697 + $0x24] sm:$0xf]
    %v5708 = vld [vmem:[%s5697 + $0x28] sm:$0xf]
    %v5709 = vld [vmem:[%s5697 + $0x2c] sm:$0xf]
    %v5710 = vld [vmem:[%s5697 + $0x30] sm:$0xf]
    %v5711 = vld [vmem:[%s5697 + $0x34] sm:$0xf]
    %v5712 = vld [vmem:[%s5697 + $0x38] sm:$0xf]
    %v5713 = vld [vmem:[%s5697 + $0x3c] sm:$0xf]
    %v5714 = vld [vmem:[%s5697 + $0x40] sm:$0xf]
    %v5715 = vld [vmem:[%s5697 + $0x44] sm:$0xf]
    %v5716 = vld [vmem:[%s5697 + $0x48] sm:$0xf]
    %v5717 = vld [vmem:[%s5697 + $0x4c] sm:$0xf]
    %v5718 = vld [vmem:[%s5697 + $0x50] sm:$0xf]
    %v5719 = vld [vmem:[%s5697 + $0x54] sm:$0xf]
    %v5720 = vld [vmem:[%s5697 + $0x58] sm:$0xf]
    %v5721 = vld [vmem:[%s5697 + $0x5c] sm:$0xf]
    %v5722 = vld [vmem:[%s5697 + $0x60] sm:$0xf]
    %v5723 = vld [vmem:[%s5697 + $0x64] sm:$0xf]
    %v5724 = vld [vmem:[%s5697 + $0x68] sm:$0xf]
    %v5725 = vld [vmem:[%s5697 + $0x6c] sm:$0xf]
    %v5726 = vld [vmem:[%s5697 + $0x70] sm:$0xf]
    %v5727 = vld [vmem:[%s5697 + $0x74] sm:$0xf]
    %v5728 = vld [vmem:[%s5697 + $0x78] sm:$0xf]
    %v5729 = vld [vmem:[%s5697 + $0x7c] sm:$0xf]
    %v5762 = vunpack.c.l.b16 %v5698
    %v5763 = vunpack.c.l.b16 %v5699
    %v5764 = vunpack.c.l.b16 %v5700
    %v5765 = vunpack.c.l.b16 %v5701
    %v5766 = vunpack.c.l.b16 %v5702
    %v5767 = vunpack.c.l.b16 %v5703
    %v5768 = vunpack.c.l.b16 %v5704
    %v5769 = vunpack.c.l.b16 %v5705
    %v5770 = vunpack.c.l.b16 %v5706
    %v5771 = vunpack.c.l.b16 %v5707
    %v5772 = vunpack.c.l.b16 %v5708
    %v5773 = vunpack.c.l.b16 %v5709
    %v5774 = vunpack.c.l.b16 %v5710
    %v5775 = vunpack.c.l.b16 %v5711
    %v5776 = vunpack.c.l.b16 %v5712
    %v5777 = vunpack.c.l.b16 %v5713
    %v5778 = vunpack.c.l.b16 %v5714
    %v5779 = vunpack.c.l.b16 %v5715
    %v5780 = vunpack.c.l.b16 %v5716
    %v5781 = vunpack.c.l.b16 %v5717
    %v5782 = vunpack.c.l.b16 %v5718
    %v5783 = vunpack.c.l.b16 %v5719
    %v5784 = vunpack.c.l.b16 %v5720
    %v5785 = vunpack.c.l.b16 %v5721
    %v5786 = vunpack.c.l.b16 %v5722
    %v5787 = vunpack.c.l.b16 %v5723
    %v5788 = vunpack.c.l.b16 %v5724
    %v5789 = vunpack.c.l.b16 %v5725
    %v5790 = vunpack.c.l.b16 %v5726
    %v5791 = vunpack.c.l.b16 %v5727
    %v5792 = vunpack.c.l.b16 %v5728
    %v5793 = vunpack.c.l.b16 %v5729
    %v5794 = vpack.c.b16 %v5763, %v5762
    %v5795 = vpack.c.b16 %v5765, %v5764
    %v5796 = vpack.c.b16 %v5767, %v5766
    %v5797 = vpack.c.b16 %v5769, %v5768
    %v5798 = vpack.c.b16 %v5771, %v5770
    %v5799 = vpack.c.b16 %v5773, %v5772
    %v5800 = vpack.c.b16 %v5775, %v5774
    %v5801 = vpack.c.b16 %v5777, %v5776
    %v5802 = vpack.c.b16 %v5779, %v5778
    %v5803 = vpack.c.b16 %v5781, %v5780
    %v5804 = vpack.c.b16 %v5783, %v5782
    %v5805 = vpack.c.b16 %v5785, %v5784
    %v5806 = vpack.c.b16 %v5787, %v5786
    %v5807 = vpack.c.b16 %v5789, %v5788
    %v5808 = vpack.c.b16 %v5791, %v5790
    %v5809 = vpack.c.b16 %v5793, %v5792
    %5826 = vmatprep.subr.bf16.mxu0 0
    %5827 = vmatpush1.bf16.msra.mxu0 %v5794
    %5828 = vmatprep.subr.bf16.mxu0 0
    %5829 = vmatpush1.bf16.msra.mxu0 %v5795
    %5830 = vmatprep.subr.bf16.mxu0 0
    %5831 = vmatpush1.bf16.msra.mxu0 %v5796
    %5832 = vmatprep.subr.bf16.mxu0 0
    %5833 = vmatpush1.bf16.msra.mxu0 %v5797
    %5834 = vmatprep.subr.bf16.mxu0 0
    %5835 = vmatpush1.bf16.msra.mxu0 %v5798
    %5836 = vmatprep.subr.bf16.mxu0 0
    %5837 = vmatpush1.bf16.msra.mxu0 %v5799
    %5838 = vmatprep.subr.bf16.mxu0 0
    %5839 = vmatpush1.bf16.msra.mxu0 %v5800
    %5840 = vmatprep.subr.bf16.mxu0 0
    %5841 = vmatpush1.bf16.msra.mxu0 %v5801
    %5842 = vmatprep.subr.bf16.mxu0 0
    %5843 = vmatpush1.bf16.msra.mxu0 %v5802
    %5844 = vmatprep.subr.bf16.mxu0 0
    %5845 = vmatpush1.bf16.msra.mxu0 %v5803
    %5846 = vmatprep.subr.bf16.mxu0 0
    %5847 = vmatpush1.bf16.msra.mxu0 %v5804
    %5848 = vmatprep.subr.bf16.mxu0 0
    %5849 = vmatpush1.bf16.msra.mxu0 %v5805
    %5850 = vmatprep.subr.bf16.mxu0 0
    %5851 = vmatpush1.bf16.msra.mxu0 %v5806
    %5852 = vmatprep.subr.bf16.mxu0 0
    %5853 = vmatpush1.bf16.msra.mxu0 %v5807
    %5854 = vmatprep.subr.bf16.mxu0 0
    %5855 = vmatpush1.bf16.msra.mxu0 %v5808
    %5856 = vmatprep.subr.bf16.mxu0 0
    %5857 = vmatpush1.bf16.msra.mxu0 %v5809
    %5858 = vmatprep.mubr.bf16.mxu0 %v5692
    %5859 = vmatmul.mubr.bf16.gmra.mrb[0].mxu0 %v5691
    %v5860 = vpop.f32.mrb[0].mxu0
    %v5861 = vadd.f32 0.0, %v5860
    %v5862 = vpop.f32.mrb[0].mxu0
    %v5863 = vpop.f32.mrb[0].mxu0
    %v5864 = vadd.f32 0.0, %v5863
    %v5865 = vpop.f32.mrb[0].mxu0
    %5866 = vmatprep.mubr.bf16.mxu0 %v5694
    %5867 = vmatmul.mubr.bf16.gmra.mrb[0].mxu0 %v5693
    %v5868 = vpop.f32.mrb[0].mxu0
    %v5869 = vadd.f32 0.0, %v5868
    %v5870 = vpop.f32.mrb[0].mxu0
    %v5871 = vpop.f32.mrb[0].mxu0
    %v5872 = vadd.f32 0.0, %v5871
    %v5873 = vpop.f32.mrb[0].mxu0
    %5874 = vmatprep.mubr.bf16.mxu0 %v5696
    %5875 = vmatmul.mubr.bf16.gmra.mrb[0].mxu0 %v5695
    %v5876 = vpop.f32.mrb[0].mxu0
    %v5877 = vadd.f32 0.0, %v5876
    %v5878 = vpop.f32.mrb[0].mxu0
    %v5879 = vpop.f32.mrb[0].mxu0
    %v5880 = vadd.f32 0.0, %v5879
    %v5881 = vpop.f32.mrb[0].mxu0
    %5882 = vdwg.mxu0
    %v5883 = vadd.f32 %v5307, %v5861
    %v5884 = vadd.f32 %v5308, %v5864
    %v5885 = vadd.f32 %v5309, %v5869
    %v5886 = vadd.f32 %v5310, %v5872
    %v5887 = vadd.f32 %v5311, %v5877
    %v5888 = vadd.f32 %v5312, %v5880
    %s5889 = scalar_lea.vmem %s20, 1
    %v5890 = vld [vmem:[%s5889] sm:$0x1]
    %v5892 = vlaneseq
    %v5893 = vshrl.u32 %v5892, 7
    %v5894 = vsub.s32 0, %v5893
    %v5895 = vrot.slane %v5890, %v5894
    %v5897 = vadd.f32 %v5883, %v5895
    %v5898 = vadd.f32 %v5884, %v5895
    %v5899 = vadd.f32 %v5885, %v5895
    %v5900 = vadd.f32 %v5886, %v5895
    %v5901 = vadd.f32 %v5887, %v5895
    %v5902 = vadd.f32 %v5888, %v5895
    %v5903 = vld [vmem:[%s5] sm:$0x1]
    %v5904 = vld [vmem:[%s6] sm:$0x1]
    %5905 = vadd.xlane.f32.xlu0 %v5897
    %v5906 = vpop.xlane.xlu0 %5905
    %5907 = vadd.xlane.f32.xlu0 %v5898
    %v5908 = vpop.xlane.xlu0 %5907
    %5909 = vadd.xlane.f32.xlu0 %v5899
    %v5910 = vpop.xlane.xlu0 %5909
    %5911 = vadd.xlane.f32.xlu0 %v5900
    %v5912 = vpop.xlane.xlu0 %5911
    %5913 = vadd.xlane.f32.xlu0 %v5901
    %v5914 = vpop.xlane.xlu0 %5913
    %5915 = vadd.xlane.f32.xlu0 %v5902
    %v5916 = vpop.xlane.xlu0 %5915
    %v5917 = vmul.f32 %v5906, %v221
    %v5918 = vmul.f32 %v5908, %v221
    %v5919 = vmul.f32 %v5910, %v221
    %v5920 = vmul.f32 %v5912, %v221
    %v5921 = vmul.f32 %v5914, %v221
    %v5922 = vmul.f32 %v5916, %v221
    %v5923 = vsub.f32 %v5897, %v5917
    %v5924 = vsub.f32 %v5898, %v5918
    %v5925 = vsub.f32 %v5899, %v5919
    %v5926 = vsub.f32 %v5900, %v5920
    %v5927 = vsub.f32 %v5901, %v5921
    %v5928 = vsub.f32 %v5902, %v5922
    %v5929 = vmul.f32 %v5923, %v5923
    %v5930 = vmul.f32 %v5924, %v5924
    %v5931 = vmul.f32 %v5925, %v5925
    %v5932 = vmul.f32 %v5926, %v5926
    %v5933 = vmul.f32 %v5927, %v5927
    %v5934 = vmul.f32 %v5928, %v5928
    %5935 = vadd.xlane.f32.xlu0 %v5929
    %v5936 = vpop.xlane.xlu0 %5935
    %5937 = vadd.xlane.f32.xlu0 %v5930
    %v5938 = vpop.xlane.xlu0 %5937
    %5939 = vadd.xlane.f32.xlu0 %v5931
    %v5940 = vpop.xlane.xlu0 %5939
    %5941 = vadd.xlane.f32.xlu0 %v5932
    %v5942 = vpop.xlane.xlu0 %5941
    %5943 = vadd.xlane.f32.xlu0 %v5933
    %v5944 = vpop.xlane.xlu0 %5943
    %5945 = vadd.xlane.f32.xlu0 %v5934
    %v5946 = vpop.xlane.xlu0 %5945
    %v5947 = vmul.f32 %v5936, %v221
    %v5948 = vmul.f32 %v5938, %v221
    %v5949 = vmul.f32 %v5940, %v221
    %v5950 = vmul.f32 %v5942, %v221
    %v5951 = vmul.f32 %v5944, %v221
    %v5952 = vmul.f32 %v5946, %v221
    %v5953 = vadd.f32 %v5947, 1e-12
    %v5954 = vadd.f32 %v5948, 1e-12
    %v5955 = vadd.f32 %v5949, 1e-12
    %v5956 = vadd.f32 %v5950, 1e-12
    %v5957 = vadd.f32 %v5951, 1e-12
    %v5958 = vadd.f32 %v5952, 1e-12
    %v5959 = vrsqrt.pop %v5953
    %v5960 = vrsqrt.pop %v5954
    %v5961 = vrsqrt.pop %v5955
    %v5962 = vrsqrt.pop %v5956
    %v5963 = vrsqrt.pop %v5957
    %v5964 = vrsqrt.pop %v5958
    %v5965 = vmul.f32 %v5923, %v5959
    %v5966 = vmul.f32 %v5924, %v5960
    %v5967 = vmul.f32 %v5925, %v5961
    %v5968 = vmul.f32 %v5926, %v5962
    %v5969 = vmul.f32 %v5927, %v5963
    %v5970 = vmul.f32 %v5928, %v5964
    %v5972 = vlaneseq
    %v5973 = vshrl.u32 %v5972, 7
    %v5974 = vsub.s32 0, %v5973
    %v5975 = vrot.slane %v5903, %v5974
    %v5977 = vmul.f32 %v5965, %v5975
    %v5978 = vmul.f32 %v5966, %v5975
    %v5979 = vmul.f32 %v5967, %v5975
    %v5980 = vmul.f32 %v5968, %v5975
    %v5981 = vmul.f32 %v5969, %v5975
    %v5982 = vmul.f32 %v5970, %v5975
    %v5984 = vlaneseq
    %v5985 = vshrl.u32 %v5984, 7
    %v5986 = vsub.s32 0, %v5985
    %v5987 = vrot.slane %v5904, %v5986
    %v5989 = vadd.f32 %v5977, %v5987
    %v5990 = vadd.f32 %v5978, %v5987
    %v5991 = vadd.f32 %v5979, %v5987
    %v5992 = vadd.f32 %v5980, %v5987
    %v5993 = vadd.f32 %v5981, %v5987
    %v5994 = vadd.f32 %v5982, %v5987
    %v5995 = vld [vmem:[%s4] sm:$0x3]
    %vm5996 = vcmask 392192
    %v5998 = vsel %vm5996, %v5995, 0
    %6000 = vmatprep.subr.mxu0 0.0
    %6001 = vmatpush1.msra.mxu0 %v5989
    %6002 = vmatprep.subr.mxu0 0.0
    %6003 = vmatpush1.msra.mxu0 %v5990
    %6004 = vmatprep.subr.mxu0 0.0
    %6005 = vmatpush1.msra.mxu0 %v5991
    %6006 = vmatprep.subr.mxu0 0.0
    %6007 = vmatpush1.msra.mxu0 %v5992
    %6008 = vmatprep.subr.mxu0 0.0
    %6009 = vmatpush1.msra.mxu0 %v5993
    %6010 = vmatprep.subr.mxu0 0.0
    %6011 = vmatpush1.msra.mxu0 %v5994
    %6012 = vmatprep.subr.mxu0 0.0
    %6013 = vmatpush1.msra.mxu0 0.0
    %6014 = vmatprep.subr.mxu0 0.0
    %6015 = vmatpush1.msra.mxu0 0.0
    %6016 = vmatprep.subr.mxu0 0.0
    %6017 = vmatpush1.msra.mxu0 0.0
    %6018 = vmatprep.subr.mxu0 0.0
    %6019 = vmatpush1.msra.mxu0 0.0
    %6020 = vmatprep.subr.mxu0 0.0
    %6021 = vmatpush1.msra.mxu0 0.0
    %6022 = vmatprep.subr.mxu0 0.0
    %6023 = vmatpush1.msra.mxu0 0.0
    %6024 = vmatprep.subr.mxu0 0.0
    %6025 = vmatpush1.msra.mxu0 0.0
    %6026 = vmatprep.subr.mxu0 0.0
    %6027 = vmatpush1.msra.mxu0 0.0
    %6028 = vmatprep.subr.mxu0 0.0
    %6029 = vmatpush1.msra.mxu0 0.0
    %6030 = vmatprep.subr.mxu0 0.0
    %6031 = vmatpush1.msra.mxu0 0.0
    %6032 = vmatprep.subr.mxu0 0.0
    %6033 = vmatpush1.msra.mxu0 0.0
    %6034 = vmatprep.subr.mxu0 0.0
    %6035 = vmatpush1.msra.mxu0 0.0
    %6036 = vmatprep.subr.mxu0 0.0
    %6037 = vmatpush1.msra.mxu0 0.0
    %6038 = vmatprep.subr.mxu0 0.0
    %6039 = vmatpush1.msra.mxu0 0.0
    %6040 = vmatprep.subr.mxu0 0.0
    %6041 = vmatpush1.msra.mxu0 0.0
    %6042 = vmatprep.subr.mxu0 0.0
    %6043 = vmatpush1.msra.mxu0 0.0
    %6044 = vmatprep.subr.mxu0 0.0
    %6045 = vmatpush1.msra.mxu0 0.0
    %6046 = vmatprep.subr.mxu0 0.0
    %6047 = vmatpush1.msra.mxu0 0.0
    %6048 = vmatprep.subr.mxu0 0.0
    %6049 = vmatpush1.msra.mxu0 0.0
    %6050 = vmatprep.subr.mxu0 0.0
    %6051 = vmatpush1.msra.mxu0 0.0
    %6052 = vmatprep.subr.mxu0 0.0
    %6053 = vmatpush1.msra.mxu0 0.0
    %6054 = vmatprep.subr.mxu0 0.0
    %6055 = vmatpush1.msra.mxu0 0.0
    %6056 = vmatprep.subr.mxu0 0.0
    %6057 = vmatpush1.msra.mxu0 0.0
    %6058 = vmatprep.subr.mxu0 0.0
    %6059 = vmatpush1.msra.mxu0 0.0
    %6060 = vmatprep.subr.mxu0 0.0
    %6061 = vmatpush1.msra.mxu0 0.0
    %6062 = vmatprep.subr.mxu0 0.0
    %6063 = vmatpush1.msra.mxu0 0.0
    %6064 = vmatprep.mubr.f32.mxu0 0.0
    %6065 = vmatmul.mubr.f32.gmra.mrb[0].mxu0 %v5998
    %v6066 = vpop.f32.mrb[0].mxu0
    %v6067 = vadd.f32 0.0, %v6066
    %v6068 = vpop.f32.mrb[0].mxu0
    %6069 = vdwg.mxu0
    %v6070 = vld [vmem:[%s7] sm:$0xff]
    %v6071 = vld [vmem:[%s7 + $0x8] sm:$0xff]
    %v6072 = vld [vmem:[%s7 + $0x10] sm:$0xff]
    %v6073 = vld [vmem:[%s7 + $0x18] sm:$0xff]
    %v6074 = vld [vmem:[%s7 + $0x20] sm:$0xff]
    %v6075 = vld [vmem:[%s7 + $0x28] sm:$0xff]
    %v6076 = vld [vmem:[%s7 + $0x30] sm:$0xff]
    %v6077 = vld [vmem:[%s7 + $0x38] sm:$0xff]
    %v6078 = vld [vmem:[%s7 + $0x40] sm:$0xff]
    %v6079 = vld [vmem:[%s7 + $0x48] sm:$0xff]
    %v6080 = vld [vmem:[%s7 + $0x50] sm:$0xff]
    %v6081 = vld [vmem:[%s7 + $0x58] sm:$0xff]
    %v6082 = vld [vmem:[%s7 + $0x60] sm:$0xff]
    %v6083 = vld [vmem:[%s7 + $0x68] sm:$0xff]
    %v6084 = vld [vmem:[%s7 + $0x70] sm:$0xff]
    %v6085 = vld [vmem:[%s7 + $0x78] sm:$0xff]
    %v6086 = vld [vmem:[%s8] sm:$0x1]
    %v6088 = vlaneseq
    %v6089 = vshrl.u32 %v6088, 7
    %v6090 = vsub.s32 0, %v6089
    %v6091 = vrot.slane %v6086, %v6090
    %6093 = vmatprep.subr.mxu0 0.0
    %6094 = vmatpush1.msra.mxu0 %v6070
    %6095 = vmatprep.subr.mxu0 0.0
    %6096 = vmatpush1.msra.mxu0 %v6071
    %6097 = vmatprep.subr.mxu0 0.0
    %6098 = vmatpush1.msra.mxu0 %v6072
    %6099 = vmatprep.subr.mxu0 0.0
    %6100 = vmatpush1.msra.mxu0 %v6073
    %6101 = vmatprep.subr.mxu0 0.0
    %6102 = vmatpush1.msra.mxu0 %v6074
    %6103 = vmatprep.subr.mxu0 0.0
    %6104 = vmatpush1.msra.mxu0 %v6075
    %6105 = vmatprep.subr.mxu0 0.0
    %6106 = vmatpush1.msra.mxu0 %v6076
    %6107 = vmatprep.subr.mxu0 0.0
    %6108 = vmatpush1.msra.mxu0 %v6077
    %6109 = vmatprep.subr.mxu0 0.0
    %6110 = vmatpush1.msra.mxu0 %v6078
    %6111 = vmatprep.subr.mxu0 0.0
    %6112 = vmatpush1.msra.mxu0 %v6079
    %6113 = vmatprep.subr.mxu0 0.0
    %6114 = vmatpush1.msra.mxu0 %v6080
    %6115 = vmatprep.subr.mxu0 0.0
    %6116 = vmatpush1.msra.mxu0 %v6081
    %6117 = vmatprep.subr.mxu0 0.0
    %6118 = vmatpush1.msra.mxu0 %v6082
    %6119 = vmatprep.subr.mxu0 0.0
    %6120 = vmatpush1.msra.mxu0 %v6083
    %6121 = vmatprep.subr.mxu0 0.0
    %6122 = vmatpush1.msra.mxu0 %v6084
    %6123 = vmatprep.subr.mxu0 0.0
    %6124 = vmatpush1.msra.mxu0 %v6085
    %6125 = vmatprep.subr.mxu0 0.0
    %6126 = vmatpush1.msra.mxu0 0.0
    %6127 = vmatprep.subr.mxu0 0.0
    %6128 = vmatpush1.msra.mxu0 0.0
    %6129 = vmatprep.subr.mxu0 0.0
    %6130 = vmatpush1.msra.mxu0 0.0
    %6131 = vmatprep.subr.mxu0 0.0
    %6132 = vmatpush1.msra.mxu0 0.0
    %6133 = vmatprep.subr.mxu0 0.0
    %6134 = vmatpush1.msra.mxu0 0.0
    %6135 = vmatprep.subr.mxu0 0.0
    %6136 = vmatpush1.msra.mxu0 0.0
    %6137 = vmatprep.subr.mxu0 0.0
    %6138 = vmatpush1.msra.mxu0 0.0
    %6139 = vmatprep.subr.mxu0 0.0
    %6140 = vmatpush1.msra.mxu0 0.0
    %6141 = vmatprep.subr.mxu0 0.0
    %6142 = vmatpush1.msra.mxu0 0.0
    %6143 = vmatprep.subr.mxu0 0.0
    %6144 = vmatpush1.msra.mxu0 0.0
    %6145 = vmatprep.subr.mxu0 0.0
    %6146 = vmatpush1.msra.mxu0 0.0
    %6147 = vmatprep.subr.mxu0 0.0
    %6148 = vmatpush1.msra.mxu0 0.0
    %6149 = vmatprep.subr.mxu0 0.0
    %6150 = vmatpush1.msra.mxu0 0.0
    %6151 = vmatprep.subr.mxu0 0.0
    %6152 = vmatpush1.msra.mxu0 0.0
    %6153 = vmatprep.subr.mxu0 0.0
    %6154 = vmatpush1.msra.mxu0 0.0
    %6155 = vmatprep.subr.mxu0 0.0
    %6156 = vmatpush1.msra.mxu0 0.0
    %6157 = vmatprep.mubr.f32.mxu0 0.0
    %6158 = vmatmul.mubr.f32.gmra.mrb[0].mxu0 %v6067
    %v6159 = vpop.f32.mrb[0].mxu0
    %v6160 = vadd.f32 %v6091, %v6159
    %v6161 = vpop.f32.mrb[0].mxu0
    %6162 = vdwg.mxu0
    %6163 = vst [vmem:[#allocation2] sm:$0x3] %v6160
    // Predicated region
    $region86: #{_forward_impl.1} parent=1 // pred_check
      _
    $region87: #{_forward_impl.1} parent=1 // pred_check_branch
      %6165 = sbr.rel (0) target = $region89
    $region88: #{_forward_impl.1} parent=1 // pred_region
      %s6167 = ssub.s32 32, 32
      %6168 = vsyncadd [#allocation3], %s6167
      %s6170 = sshll.u32 [#allocation2], 4
      %s6171 = int_to_ptr.vmem [resolvable:$true] %s6170
      %6173 = dma.vmem_to_hbm [thread:$0]  %s6171, 32, %s21, [#allocation3]
    $region89: #{_forward_impl.1} parent=1 // pred_fallthru
      _
    // Predicated region
    $region90: #{_forward_impl.1} parent=1 // pred_check
      _
    $region91: #{_forward_impl.1} parent=1 // pred_check_branch
      %6175 = sbr.rel (0) target = $region93
    $region92: #{_forward_impl.1} parent=1 // pred_region
      %6176 = dma.done [#allocation3], 32
    $region93: #{_forward_impl.1} parent=1 // pred_fallthru
      _
    %6177 = vsyncpa [#allocation3], 1

</llo_original>
